<compile_context>
chip_gen: v7x
topology: tpu7x:2x2x1
jax: 0.10.0
libtpu: 0.0.40
codegen_flags: <defaults>
</compile_context>

<pallas_src>
import functools

import numpy as np
import jax
import jax.numpy as jnp
from jax.experimental import pallas as pl
from jax.experimental.pallas import tpu as pltpu

PAD_ID = 0
_LANE = 128
_BATCH_ALIGN = 16           # bf16 packs 16 rows/vreg -> fully packed recurrent LHS
_VMEM_BUDGET = 48 * 2**20   # v7x-safe working-set target (64 MiB physical VMEM)


def _round_up(x, m):
    return (x + m - 1) // m * m


# ---------------------------------------------------------------------------
# Kernel: one LSTM layer, both directions interleaved, time-blocked.
# ---------------------------------------------------------------------------
def _lstm_layer_kernel(*refs, blk_t, h_pad, n_dirs, n_srcs, unroll):
    # refs = [mask_d...,  x_{d,src}...,  wx_src...,  wh,  bias,
    #         out_d...,  h_scr, c_scr,  gx_scr_d...]
    idx = 0
    msk_refs = refs[idx:idx + n_dirs]; idx += n_dirs
    x_refs = refs[idx:idx + n_dirs * n_srcs]; idx += n_dirs * n_srcs
    wx_refs = refs[idx:idx + n_srcs]; idx += n_srcs
    wh_ref = refs[idx]; idx += 1
    b_ref = refs[idx]; idx += 1
    out_refs = refs[idx:idx + n_dirs]; idx += n_dirs
    h_ref = refs[idx]
    c_ref = refs[idx + 1]
    gx_refs = refs[idx + 2:idx + 2 + n_dirs]

    tb = pl.program_id(1)

    @pl.when(tb == 0)
    def _init():
        h_ref[...] = jnp.zeros_like(h_ref)
        c_ref[...] = jnp.zeros_like(c_ref)

    b_blk = x_refs[0].shape[1]

    # Non-recurrent input projection: one large MXU matmul per (direction,
    # source) per time block (bf16 operands, f32 accumulation), amortizing the
    # MXU fill over blk_t * b_blk rows.
    for d in range(n_dirs):
        gx = b_ref[d].astype(jnp.float32)                 # (1, 4*h_pad) broadcast
        for k in range(n_srcs):
            xb = x_refs[d * n_srcs + k][...]
            xb = xb.reshape(blk_t * b_blk, xb.shape[-1])
            gx = gx + jnp.dot(xb, wx_refs[k][d],
                              preferred_element_type=jnp.float32)
        gx_refs[d][...] = gx.reshape(blk_t, b_blk, 4 * h_pad)

    def step(s, carry):
        # Both direction chains interleaved in one body: on a single TC
        # (v5e/v6e) one chain's MXU/EUP work hides behind the other's VPU work.
        for d in range(n_dirs):
            s_in = s if d == 0 else blk_t - 1 - s         # fwd ascending / bwd descending
            h = h_ref[d]
            c = c_ref[d]
            # Only this small recurrent matmul is on the serial critical path.
            gates = gx_refs[d][s_in] + jnp.dot(
                h.astype(jnp.bfloat16), wh_ref[d],
                preferred_element_type=jnp.float32)
            i_g = jax.nn.sigmoid(gates[:, 0 * h_pad:1 * h_pad])
            f_g = jax.nn.sigmoid(gates[:, 1 * h_pad:2 * h_pad])
            g_g = jnp.tanh(gates[:, 2 * h_pad:3 * h_pad])
            o_g = jax.nn.sigmoid(gates[:, 3 * h_pad:4 * h_pad])
            c_new = f_g * c + i_g * g_g
            h_new = o_g * jnp.tanh(c_new)
            # Packed-sequence semantics via the precomputed {0,1} activity mask
            # (hoisted out of the loop into an input block): state only
            # advances while t < length[b]; padded positions output zero.
            act = msk_refs[d][s_in]                       # (b_blk, 1) f32
            h_ref[d] = h + act * (h_new - h)
            c_ref[d] = c + act * (c_new - c)
            out_refs[d][s_in] = (act * h_new).astype(out_refs[d].dtype)
        return carry

    # Partial unroll: LLO scheduling visibility without vreg-live-range blowup
    # when blk_t is large.
    jax.lax.fori_loop(0, blk_t, step, 0, unroll=min(blk_t, unroll))


# ---------------------------------------------------------------------------
# VMEM budgeting (v7x-safe) and layer driver.
# ---------------------------------------------------------------------------
def _layer_vmem_bytes(blk_t, b_blk, src_feats, h_pad, n_dirs):
    g4 = 4 * h_pad
    stream = 0
    for f in src_feats:
        stream += 2 * n_dirs * blk_t * b_blk * f * 2       # x blocks, bf16, 2-deep
    stream += 2 * n_dirs * blk_t * b_blk * _LANE * 4       # mask blocks (lane-padded)
    stream += 2 * n_dirs * blk_t * b_blk * h_pad * 2       # out blocks, bf16, 2-deep
    weights = 2 * n_dirs * (sum(src_feats) * g4 * 2 + h_pad * g4 * 2 + 8 * g4 * 4)
    scratch = 2 * n_dirs * b_blk * h_pad * 4 + n_dirs * blk_t * b_blk * g4 * 4
    return stream + weights + scratch


def _choose_blk_t(requested, t_out, b_blk, i_pad, h_pad, n_dirs):
    blk = max(8, min(requested, _round_up(t_out, 8)))
    while blk > 8:
        worst = max(
            _layer_vmem_bytes(blk, b_blk, [i_pad], h_pad, n_dirs),
            _layer_vmem_bytes(blk, b_blk, [h_pad] * n_dirs, h_pad, n_dirs))
        if worst <= _VMEM_BUDGET:
            break
        blk = max(8, blk // 2)
    return blk


def _run_lstm_layer(xs, masks_f, layer_params, h_pad, blk_t):
    """xs: list of per-source (T_pad, B_pad, feat) bf16 activations.
    Returns list of per-direction (T_pad, B_pad, H_pad) bf16 outputs."""
    t_pad, b_pad = int(xs[0].shape[0]), int(xs[0].shape[1])
    src_feats = [int(x.shape[2]) for x in xs]
    n_srcs = len(xs)
    n_dirs = len(layer_params)
    n_tb = t_pad // blk_t
    # Optional batch-split axis: keeps v7x's second TensorCore busy even though
    # both direction chains are fused into one kernel.
    n_bgrp = 2 if b_pad % (2 * _BATCH_ALIGN) == 0 else 1
    b_blk = b_pad // n_bgrp

    wx_srcs = [jnp.stack([p[0][s] for p in layer_params]) for s in range(n_srcs)]
    wh = jnp.stack([p[1] for p in layer_params])            # (n_dirs, H_pad, 4*H_pad) bf16
    bias = jnp.stack([p[2] for p in layer_params])          # (n_dirs, 1, 4*H_pad) f32

    def tmap(d):
        if d == 0:
            return lambda g, t: (t, g, 0)                    # forward walks blocks 0..n_tb-1
        return lambda g, t: (n_tb - 1 - t, g, 0)             # reverse walks them backwards

    in_specs, operands = [], []
    for d in range(n_dirs):                                  # activity masks
        in_specs.append(pl.BlockSpec((blk_t, b_blk, 1), tmap(d)))
        operands.append(masks_f)
    for d in range(n_dirs):                                  # layer inputs per source
        for s in range(n_srcs):
            in_specs.append(pl.BlockSpec((blk_t, b_blk, src_feats[s]), tmap(d)))
            operands.append(xs[s])
    for s in range(n_srcs):                                  # W_x (grid-invariant)
        in_specs.append(pl.BlockSpec((n_dirs, src_feats[s], 4 * h_pad),
                                     lambda g, t: (0, 0, 0)))
        operands.append(wx_srcs[s])
    in_specs.append(pl.BlockSpec((n_dirs, h_pad, 4 * h_pad), lambda g, t: (0, 0, 0)))
    operands.append(wh)
    in_specs.append(pl.BlockSpec((n_dirs, 1, 4 * h_pad), lambda g, t: (0, 0, 0)))
    operands.append(bias)

    out_specs = tuple(pl.BlockSpec((blk_t, b_blk, h_pad), tmap(d))
                      for d in range(n_dirs))
    out_shape = tuple(jax.ShapeDtypeStruct((t_pad, b_pad, h_pad), jnp.bfloat16)
                      for _ in range(n_dirs))

    vmem_bytes = _layer_vmem_bytes(blk_t, b_blk, src_feats, h_pad, n_dirs)
    vmem_limit = int(min(max(1.3 * vmem_bytes, 32 * 2**20), 64 * 2**20))

    kernel = functools.partial(_lstm_layer_kernel, blk_t=blk_t, h_pad=h_pad,
                               n_dirs=n_dirs, n_srcs=n_srcs, unroll=8)

    outs = pl.pallas_call(
        kernel,
        out_shape=out_shape,
        grid=(n_bgrp, n_tb),
        in_specs=in_specs,
        out_specs=out_specs,
        scratch_shapes=(
            [pltpu.VMEM((n_dirs, b_blk, h_pad), jnp.float32),     # h state
             pltpu.VMEM((n_dirs, b_blk, h_pad), jnp.float32)]     # c state
            + [pltpu.VMEM((blk_t, b_blk, 4 * h_pad), jnp.float32)  # x @ W_x per dir
               for _ in range(n_dirs)]),
        compiler_params=pltpu.CompilerParams(
            dimension_semantics=("parallel", "arbitrary"),
            vmem_limit_bytes=vmem_limit),
    )(*operands)
    return list(outs)


# ---------------------------------------------------------------------------
# Parameters (PyTorch nn.LSTM layout) and TPU-friendly padding/pre-transpose.
# ---------------------------------------------------------------------------
def init_lstm_params(key, input_size, hidden_size, n_layers, bidirectional):
    """PyTorch nn.LSTM parameter shapes, uniform(-1/sqrt(H), 1/sqrt(H))."""
    n_dirs = 2 if bidirectional else 1
    bound = 1.0 / float(hidden_size) ** 0.5
    params = []
    for layer in range(n_layers):
        layer_in = input_size if layer == 0 else hidden_size * n_dirs
        dirs = []
        for _ in range(n_dirs):
            key, k1, k2, k3, k4 = jax.random.split(key, 5)
            w_ih = jax.random.uniform(k1, (4 * hidden_size, layer_in),
                                      jnp.float32, -bound, bound)
            w_hh = jax.random.uniform(k2, (4 * hidden_size, hidden_size),
                                      jnp.float32, -bound, bound)
            b_ih = jax.random.uniform(k3, (4 * hidden_size,),
                                      jnp.float32, -bound, bound)
            b_hh = jax.random.uniform(k4, (4 * hidden_size,),
                                      jnp.float32, -bound, bound)
            dirs.append((w_ih, w_hh, b_ih, b_hh))
        params.append(dirs)
    return params


def prepare_params(raw_params, input_size, hidden_size, bidirectional):
    """Pad gate/feature dims to lane multiples, pre-transpose, split W_x per
    input source, cast matmul operands to bf16.  Padded rows/cols are zero so
    padded hidden units stay exactly 0."""
    h = hidden_size
    h_pad = _round_up(h, _LANE)
    i_pad = _round_up(input_size, _LANE)
    n_dirs = 2 if bidirectional else 1

    def pad_gate_axis(w):
        # (4H, ...) -> (4H_pad, ...), keeping PyTorch gate order i, f, g, o.
        pads = [(0, h_pad - h)] + [(0, 0)] * (w.ndim - 1)
        return jnp.concatenate(
            [jnp.pad(w[g * h:(g + 1) * h], pads) for g in range(4)], axis=0)

    prepared = []
    for layer_idx, layer in enumerate(raw_params):
        in_segs = [(input_size, i_pad)] if layer_idx == 0 else [(h, h_pad)] * n_dirs
        dirs = []
        for (w_ih, w_hh, b_ih, b_hh) in layer:
            w_g = pad_gate_axis(w_ih)                       # (4*H_pad, raw_in)
            wx_parts, off = [], 0
            for real, padded in in_segs:
                part = jnp.pad(w_g[:, off:off + real], ((0, 0), (0, padded - real)))
                wx_parts.append(part.T.astype(jnp.bfloat16))   # (padded, 4*H_pad)
                off += real
            whp = jnp.pad(pad_gate_axis(w_hh), ((0, 0), (0, h_pad - h)))
            whp = whp.T.astype(jnp.bfloat16)                   # (H_pad, 4*H_pad)
            bias = pad_gate_axis((b_ih + b_hh)[:, None]).reshape(1, 4 * h_pad)
            dirs.append((tuple(wx_parts), whp, bias))
        prepared.append(dirs)
    return prepared, h_pad, i_pad


# ---------------------------------------------------------------------------
# Forward pass (replicates RNN.forward in eval mode).
# ---------------------------------------------------------------------------
def rnn_forward(embeddings, masks, prepared_params, hidden_size, bidirectional,
                h_pad, i_pad, blk_t=32):
    """Returns {'rnn': (B, max_len, n_dirs*H)} matching the PyTorch module."""
    # lengths exactly as in the module: lengths[b] = #(masks[b] == PAD_ID).
    # The torch module also syncs lengths to host via list(...), so host-side
    # numpy is faithful and keeps output shapes static.
    masks_np = np.asarray(masks)
    lengths_np = (masks_np == PAD_ID).astype(np.int32).sum(axis=1)
    t_out = int(lengths_np.max())              # pad_packed_sequence output length

    b, _, in_size = embeddings.shape
    h = hidden_size
    n_dirs = 2 if bidirectional else 1

    b_pad = _round_up(b, _BATCH_ALIGN)
    n_bgrp = 2 if b_pad % (2 * _BATCH_ALIGN) == 0 else 1
    blk_t = _choose_blk_t(blk_t, t_out, b_pad // n_bgrp, i_pad, h_pad, n_dirs)
    t_pad = _round_up(t_out, blk_t)

    # Single transpose to time-major; inter-layer activations stay time-major,
    # lane/sublane padded and bf16 (halves HBM + VMEM traffic of every layer).
    x0 = jnp.transpose(embeddings[:, :t_out, :].astype(jnp.bfloat16), (1, 0, 2))
    x0 = jnp.pad(x0, ((0, t_pad - t_out), (0, b_pad - b), (0, i_pad - in_size)))

    # Precomputed activity mask (pack_padded semantics): 1.0 where t < length[b].
    mask_np = np.zeros((t_pad, b_pad, 1), np.float32)
    mask_np[:, :b, 0] = (np.arange(t_pad)[:, None] < lengths_np[None, :]
                         ).astype(np.float32)
    masks_f = jnp.asarray(mask_np)

    xs = [x0]
    for layer_params in prepared_params:
        xs = _run_lstm_layer(xs, masks_f, layer_params, h_pad, blk_t)
        # TODO(synk): inter-layer LSTM dropout omitted (only active in training mode).

    outs = [x[:t_out, :b, :h].astype(jnp.float32) for x in xs]
    out = outs[0] if n_dirs == 1 else jnp.concatenate(outs, axis=-1)
    out = jnp.transpose(out, (1, 0, 2))                      # (B, t_out, n_dirs*H)
    # self._dropout is identity in eval/inference mode.
    return {'rnn': out}


# ---------------------------------------------------------------------------
# Pure numpy reference (packed/padded LSTM semantics) for validation.
# ---------------------------------------------------------------------------
def _sigmoid(x):
    return 1.0 / (1.0 + np.exp(-x))


def lstm_reference(embeddings, masks, raw_params, hidden_size):
    emb = np.asarray(embeddings, np.float32)
    lengths = (np.asarray(masks) == PAD_ID).sum(axis=1)
    b = emb.shape[0]
    h = hidden_size
    t_out = int(lengths.max())
    x = emb[:, :t_out]
    for layer in raw_params:
        outs = []
        for d, (w_ih, w_hh, b_ih, b_hh) in enumerate(layer):
            w_ih = np.asarray(w_ih); w_hh = np.asarray(w_hh)
            bias = np.asarray(b_ih) + np.asarray(b_hh)
            out = np.zeros((b, t_out, h), np.float32)
            for bi in range(b):
                hv = np.zeros(h, np.float32); cv = np.zeros(h, np.float32)
                ts = (range(int(lengths[bi])) if d == 0
                      else range(int(lengths[bi]) - 1, -1, -1))
                for t in ts:
                    g = w_ih @ x[bi, t] + w_hh @ hv + bias
                    i = _sigmoid(g[:h]); f = _sigmoid(g[h:2 * h])
                    gg = np.tanh(g[2 * h:3 * h]); o = _sigmoid(g[3 * h:])
                    cv = f * cv + i * gg
                    hv = o * np.tanh(cv)
                    out[bi, t] = hv
            outs.append(out)
        x = np.concatenate(outs, axis=-1) if len(layer) == 2 else outs[0]
    return x


if __name__ == "__main__":
    B, T, INPUT_SIZE, HIDDEN_SIZE = 2, 8, 32, 32
    N_LAYERS, BIDIRECTIONAL = 2, True

    key = jax.random.PRNGKey(0)
    k_emb, k_par = jax.random.split(key)

    embeddings = jax.random.normal(k_emb, (B, T, INPUT_SIZE), jnp.float32)
    # masks convention from the module: lengths[b] = #(masks[b] == PAD_ID).
    # Sequence lengths: [8, 5] (sorted descending, as pack_padded_sequence requires).
    masks = jnp.array([[0, 0, 0, 0, 0, 0, 0, 0],
                       [0, 0, 0, 0, 0, 1, 1, 1]], dtype=jnp.int32)

    raw_params = init_lstm_params(k_par, INPUT_SIZE, HIDDEN_SIZE,
                                  N_LAYERS, BIDIRECTIONAL)
    prepared, h_pad, i_pad = prepare_params(raw_params, INPUT_SIZE,
                                            HIDDEN_SIZE, BIDIRECTIONAL)

    result = rnn_forward(embeddings, masks, prepared, HIDDEN_SIZE,
                         BIDIRECTIONAL, h_pad, i_pad, blk_t=32)
    out = jax.block_until_ready(result['rnn'])
    assert out.shape == (B, T, 2 * HIDDEN_SIZE), out.shape

    ref = lstm_reference(embeddings, masks, raw_params, HIDDEN_SIZE)
    np.testing.assert_allclose(np.asarray(out), ref, atol=5e-2, rtol=5e-2)
    print("KERNEL_OK")
</pallas_src>

<mosaic_0001>
module attributes {stable_mosaic.version = 11 : i64} {
  func.func @_lstm_layer_kernel(%arg0: i32, %arg1: i32, %arg2: memref<8x16x1xf32, #tpu.memory_space<vmem>>, %arg3: memref<8x16x1xf32, #tpu.memory_space<vmem>>, %arg4: memref<8x16x128xbf16, #tpu.memory_space<vmem>>, %arg5: memref<8x16x128xbf16, #tpu.memory_space<vmem>>, %arg6: memref<2x128x512xbf16, #tpu.memory_space<vmem>>, %arg7: memref<2x128x512xbf16, #tpu.memory_space<vmem>>, %arg8: memref<2x1x512xf32, #tpu.memory_space<vmem>>, %arg9: memref<8x16x128xbf16, #tpu.memory_space<vmem>>, %arg10: memref<8x16x128xbf16, #tpu.memory_space<vmem>>, %arg11: memref<2x16x128xf32, #tpu.memory_space<vmem>>, %arg12: memref<2x16x128xf32, #tpu.memory_space<vmem>>, %arg13: memref<8x16x512xf32, #tpu.memory_space<vmem>>, %arg14: memref<8x16x512xf32, #tpu.memory_space<vmem>>) attributes {dimension_semantics = [#tpu.dimension_semantics<parallel>, #tpu.dimension_semantics<arbitrary>], iteration_bounds = array<i64: 1, 1>, scalar_prefetch = 0 : i64, scratch_operands = 4 : i64, tpu.core_type = #tpu.core_type<tc>, window_params = [{transform_indices = @transform_0, window_bounds = array<i64: 8, 16, 1>}, {transform_indices = @transform_1, window_bounds = array<i64: 8, 16, 1>}, {transform_indices = @transform_2, window_bounds = array<i64: 8, 16, 128>}, {transform_indices = @transform_3, window_bounds = array<i64: 8, 16, 128>}, {pipeline_mode = #tpu.pipeline_mode<synchronous>, transform_indices = @transform_4, window_bounds = array<i64: 2, 128, 512>}, {pipeline_mode = #tpu.pipeline_mode<synchronous>, transform_indices = @transform_5, window_bounds = array<i64: 2, 128, 512>}, {pipeline_mode = #tpu.pipeline_mode<synchronous>, transform_indices = @transform_6, window_bounds = array<i64: 2, 1, 512>}, {transform_indices = @transform_7, window_bounds = array<i64: 8, 16, 128>}, {transform_indices = @transform_8, window_bounds = array<i64: 8, 16, 128>}]} {
    %c0_i32 = arith.constant 0 : i32
    %0 = arith.cmpi eq, %arg1, %c0_i32 : i32
    %1 = arith.extui %0 : i1 to i32
    %c0_i32_0 = arith.constant 0 : i32
    %2 = arith.cmpi ne, %1, %c0_i32_0 : i32
    scf.if %2 {
      %cst_433 = arith.constant 0.000000e+00 : f32
      %1009 = vector.broadcast %cst_433 : f32 to vector<2x16x128xf32>
      %c0_434 = arith.constant 0 : index
      %c0_435 = arith.constant 0 : index
      %c0_436 = arith.constant 0 : index
      %1010 = vector.load %arg11[%c0_434, %c0_435, %c0_436] : memref<2x16x128xf32, #tpu.memory_space<vmem>>, vector<2x16x128xf32>
      tpu.vector_store %arg11[%c0_434, %c0_435, %c0_436], %1009 {strides = array<i32>} : memref<2x16x128xf32, #tpu.memory_space<vmem>>, vector<2x16x128xf32>,
      %cst_437 = arith.constant 0.000000e+00 : f32
      %1011 = vector.broadcast %cst_437 : f32 to vector<2x16x128xf32>
      %c0_438 = arith.constant 0 : index
      %c0_439 = arith.constant 0 : index
      %c0_440 = arith.constant 0 : index
      %1012 = vector.load %arg12[%c0_438, %c0_439, %c0_440] : memref<2x16x128xf32, #tpu.memory_space<vmem>>, vector<2x16x128xf32>
      tpu.vector_store %arg12[%c0_438, %c0_439, %c0_440], %1011 {strides = array<i32>} : memref<2x16x128xf32, #tpu.memory_space<vmem>>, vector<2x16x128xf32>,
    } else {
    }
    %c0 = arith.constant 0 : index
    %c0_1 = arith.constant 0 : index
    %c0_2 = arith.constant 0 : index
    %3 = vector.load %arg8[%c0, %c0_1, %c0_2] : memref<2x1x512xf32, #tpu.memory_space<vmem>>, vector<1x1x512xf32>
    %4 = vector.shape_cast %3 : vector<1x1x512xf32> to vector<1x512xf32>
    %c0_3 = arith.constant 0 : index
    %c0_4 = arith.constant 0 : index
    %c0_5 = arith.constant 0 : index
    %5 = vector.load %arg4[%c0_3, %c0_4, %c0_5] : memref<8x16x128xbf16, #tpu.memory_space<vmem>>, vector<8x16x128xbf16>
    %6 = vector.shape_cast %5 : vector<8x16x128xbf16> to vector<128x128xbf16>
    %c0_6 = arith.constant 0 : index
    %c0_7 = arith.constant 0 : index
    %c0_8 = arith.constant 0 : index
    %7 = vector.load %arg6[%c0_6, %c0_7, %c0_8] : memref<2x128x512xbf16, #tpu.memory_space<vmem>>, vector<1x128x512xbf16>
    %8 = vector.shape_cast %7 : vector<1x128x512xbf16> to vector<128x512xbf16>
    %cst = arith.constant dense<0.000000e+00> : vector<128x512xf32>
    %9 = tpu.matmul %6, %8, %cst {dimension_numbers = #tpu.dot_dimension_numbers<[1], [0], [0], [1], [0, 0, 1, 1], [], []>} : vector<128x128xbf16>, vector<128x512xbf16>, vector<128x512xf32> -> vector<128x512xf32>
    %10 = vector.broadcast %4 : vector<1x512xf32> to vector<128x512xf32>
    %11 = arith.addf %10, %9 : vector<128x512xf32>
    %12 = vector.shape_cast %11 : vector<128x512xf32> to vector<8x16x512xf32>
    %c0_9 = arith.constant 0 : index
    %c0_10 = arith.constant 0 : index
    %c0_11 = arith.constant 0 : index
    %13 = vector.load %arg13[%c0_9, %c0_10, %c0_11] : memref<8x16x512xf32, #tpu.memory_space<vmem>>, vector<8x16x512xf32>
    tpu.vector_store %arg13[%c0_9, %c0_10, %c0_11], %12 {strides = array<i32>} : memref<8x16x512xf32, #tpu.memory_space<vmem>>, vector<8x16x512xf32>,
    %c1 = arith.constant 1 : index
    %c0_12 = arith.constant 0 : index
    %c0_13 = arith.constant 0 : index
    %14 = vector.load %arg8[%c1, %c0_12, %c0_13] : memref<2x1x512xf32, #tpu.memory_space<vmem>>, vector<1x1x512xf32>
    %15 = vector.shape_cast %14 : vector<1x1x512xf32> to vector<1x512xf32>
    %c0_14 = arith.constant 0 : index
    %c0_15 = arith.constant 0 : index
    %c0_16 = arith.constant 0 : index
    %16 = vector.load %arg5[%c0_14, %c0_15, %c0_16] : memref<8x16x128xbf16, #tpu.memory_space<vmem>>, vector<8x16x128xbf16>
    %17 = vector.shape_cast %16 : vector<8x16x128xbf16> to vector<128x128xbf16>
    %c1_17 = arith.constant 1 : index
    %c0_18 = arith.constant 0 : index
    %c0_19 = arith.constant 0 : index
    %18 = vector.load %arg6[%c1_17, %c0_18, %c0_19] : memref<2x128x512xbf16, #tpu.memory_space<vmem>>, vector<1x128x512xbf16>
    %19 = vector.shape_cast %18 : vector<1x128x512xbf16> to vector<128x512xbf16>
    %cst_20 = arith.constant dense<0.000000e+00> : vector<128x512xf32>
    %20 = tpu.matmul %17, %19, %cst_20 {dimension_numbers = #tpu.dot_dimension_numbers<[1], [0], [0], [1], [0, 0, 1, 1], [], []>} : vector<128x128xbf16>, vector<128x512xbf16>, vector<128x512xf32> -> vector<128x512xf32>
    %21 = vector.broadcast %15 : vector<1x512xf32> to vector<128x512xf32>
    %22 = arith.addf %21, %20 : vector<128x512xf32>
    %23 = vector.shape_cast %22 : vector<128x512xf32> to vector<8x16x512xf32>
    %c0_21 = arith.constant 0 : index
    %c0_22 = arith.constant 0 : index
    %c0_23 = arith.constant 0 : index
    %24 = vector.load %arg14[%c0_21, %c0_22, %c0_23] : memref<8x16x512xf32, #tpu.memory_space<vmem>>, vector<8x16x512xf32>
    tpu.vector_store %arg14[%c0_21, %c0_22, %c0_23], %23 {strides = array<i32>} : memref<8x16x512xf32, #tpu.memory_space<vmem>>, vector<8x16x512xf32>,
    %c0_i32_24 = arith.constant 0 : i32
    %c0_25 = arith.constant 0 : index
    %c0_26 = arith.constant 0 : index
    %c0_27 = arith.constant 0 : index
    %25 = vector.load %arg11[%c0_25, %c0_26, %c0_27] : memref<2x16x128xf32, #tpu.memory_space<vmem>>, vector<1x16x128xf32>
    %26 = vector.shape_cast %25 : vector<1x16x128xf32> to vector<16x128xf32>
    %c0_28 = arith.constant 0 : index
    %c0_29 = arith.constant 0 : index
    %c0_30 = arith.constant 0 : index
    %27 = vector.load %arg12[%c0_28, %c0_29, %c0_30] : memref<2x16x128xf32, #tpu.memory_space<vmem>>, vector<1x16x128xf32>
    %28 = vector.shape_cast %27 : vector<1x16x128xf32> to vector<16x128xf32>
    %29 = arith.index_cast %c0_i32_24 : i32 to index
    %c0_31 = arith.constant 0 : index
    %c0_32 = arith.constant 0 : index
    %30 = vector.load %arg13[%29, %c0_31, %c0_32] : memref<8x16x512xf32, #tpu.memory_space<vmem>>, vector<1x16x512xf32>
    %31 = vector.shape_cast %30 : vector<1x16x512xf32> to vector<16x512xf32>
    %32 = arith.truncf %26 : vector<16x128xf32> to vector<16x128xbf16>
    %c0_33 = arith.constant 0 : index
    %c0_34 = arith.constant 0 : index
    %c0_35 = arith.constant 0 : index
    %33 = vector.load %arg7[%c0_33, %c0_34, %c0_35] : memref<2x128x512xbf16, #tpu.memory_space<vmem>>, vector<1x128x512xbf16>
    %34 = vector.shape_cast %33 : vector<1x128x512xbf16> to vector<128x512xbf16>
    %cst_36 = arith.constant dense<0.000000e+00> : vector<16x512xf32>
    %35 = tpu.matmul %32, %34, %cst_36 {dimension_numbers = #tpu.dot_dimension_numbers<[1], [0], [0], [1], [0, 0, 1, 1], [], []>} : vector<16x128xbf16>, vector<128x512xbf16>, vector<16x512xf32> -> vector<16x512xf32>
    %36 = arith.addf %31, %35 : vector<16x512xf32>
    %37 = vector.extract_strided_slice %36 {offsets = [0, 0], sizes = [16, 128], strides = [1, 1]} : vector<16x512xf32> to vector<16x128xf32>
    %38 = arith.negf %37 : vector<16x128xf32>
    %39 = math.exp %38 : vector<16x128xf32>
    %cst_37 = arith.constant 1.000000e+00 : f32
    %40 = vector.broadcast %cst_37 : f32 to vector<16x128xf32>
    %41 = arith.addf %40, %39 : vector<16x128xf32>
    %42 = arith.divf %40, %41 : vector<16x128xf32>
    %43 = vector.extract_strided_slice %36 {offsets = [0, 128], sizes = [16, 128], strides = [1, 1]} : vector<16x512xf32> to vector<16x128xf32>
    %44 = arith.negf %43 : vector<16x128xf32>
    %45 = math.exp %44 : vector<16x128xf32>
    %cst_38 = arith.constant 1.000000e+00 : f32
    %46 = vector.broadcast %cst_38 : f32 to vector<16x128xf32>
    %47 = arith.addf %46, %45 : vector<16x128xf32>
    %48 = arith.divf %46, %47 : vector<16x128xf32>
    %49 = vector.extract_strided_slice %36 {offsets = [0, 256], sizes = [16, 128], strides = [1, 1]} : vector<16x512xf32> to vector<16x128xf32>
    %50 = math.tanh %49 : vector<16x128xf32>
    %51 = vector.extract_strided_slice %36 {offsets = [0, 384], sizes = [16, 128], strides = [1, 1]} : vector<16x512xf32> to vector<16x128xf32>
    %52 = arith.negf %51 : vector<16x128xf32>
    %53 = math.exp %52 : vector<16x128xf32>
    %cst_39 = arith.constant 1.000000e+00 : f32
    %54 = vector.broadcast %cst_39 : f32 to vector<16x128xf32>
    %55 = arith.addf %54, %53 : vector<16x128xf32>
    %56 = arith.divf %54, %55 : vector<16x128xf32>
    %57 = arith.mulf %48, %28 : vector<16x128xf32>
    %58 = arith.mulf %42, %50 : vector<16x128xf32>
    %59 = arith.addf %57, %58 : vector<16x128xf32>
    %60 = math.tanh %59 : vector<16x128xf32>
    %61 = arith.mulf %56, %60 : vector<16x128xf32>
    %62 = arith.index_cast %c0_i32_24 : i32 to index
    %c0_40 = arith.constant 0 : index
    %c0_41 = arith.constant 0 : index
    %63 = vector.load %arg2[%62, %c0_40, %c0_41] : memref<8x16x1xf32, #tpu.memory_space<vmem>>, vector<1x16x1xf32>
    %64 = vector.shape_cast %63 : vector<1x16x1xf32> to vector<16x1xf32>
    %65 = arith.subf %61, %26 : vector<16x128xf32>
    %66 = vector.broadcast %64 : vector<16x1xf32> to vector<16x128xf32>
    %67 = arith.mulf %66, %65 : vector<16x128xf32>
    %68 = arith.addf %26, %67 : vector<16x128xf32>
    %c0_42 = arith.constant 0 : index
    %c0_43 = arith.constant 0 : index
    %c0_44 = arith.constant 0 : index
    %69 = vector.load %arg11[%c0_42, %c0_43, %c0_44] : memref<2x16x128xf32, #tpu.memory_space<vmem>>, vector<1x16x128xf32>
    %70 = vector.shape_cast %69 : vector<1x16x128xf32> to vector<16x128xf32>
    %71 = vector.shape_cast %68 : vector<16x128xf32> to vector<1x16x128xf32>
    tpu.vector_store %arg11[%c0_42, %c0_43, %c0_44], %71 {strides = array<i32>} : memref<2x16x128xf32, #tpu.memory_space<vmem>>, vector<1x16x128xf32>,
    %72 = arith.subf %59, %28 : vector<16x128xf32>
    %73 = vector.broadcast %64 : vector<16x1xf32> to vector<16x128xf32>
    %74 = arith.mulf %73, %72 : vector<16x128xf32>
    %75 = arith.addf %28, %74 : vector<16x128xf32>
    %c0_45 = arith.constant 0 : index
    %c0_46 = arith.constant 0 : index
    %c0_47 = arith.constant 0 : index
    %76 = vector.load %arg12[%c0_45, %c0_46, %c0_47] : memref<2x16x128xf32, #tpu.memory_space<vmem>>, vector<1x16x128xf32>
    %77 = vector.shape_cast %76 : vector<1x16x128xf32> to vector<16x128xf32>
    %78 = vector.shape_cast %75 : vector<16x128xf32> to vector<1x16x128xf32>
    tpu.vector_store %arg12[%c0_45, %c0_46, %c0_47], %78 {strides = array<i32>} : memref<2x16x128xf32, #tpu.memory_space<vmem>>, vector<1x16x128xf32>,
    %79 = vector.broadcast %64 : vector<16x1xf32> to vector<16x128xf32>
    %80 = arith.mulf %79, %61 : vector<16x128xf32>
    %81 = arith.truncf %80 : vector<16x128xf32> to vector<16x128xbf16>
    %82 = arith.index_cast %c0_i32_24 : i32 to index
    %c0_48 = arith.constant 0 : index
    %c0_49 = arith.constant 0 : index
    %83 = vector.load %arg9[%82, %c0_48, %c0_49] : memref<8x16x128xbf16, #tpu.memory_space<vmem>>, vector<1x16x128xbf16>
    %84 = vector.shape_cast %83 : vector<1x16x128xbf16> to vector<16x128xbf16>
    %85 = vector.shape_cast %81 : vector<16x128xbf16> to vector<1x16x128xbf16>
    tpu.vector_store %arg9[%82, %c0_48, %c0_49], %85 {strides = array<i32>} : memref<8x16x128xbf16, #tpu.memory_space<vmem>>, vector<1x16x128xbf16>,
    %c7_i32 = arith.constant 7 : i32
    %86 = arith.subi %c7_i32, %c0_i32_24 : i32
    %c1_50 = arith.constant 1 : index
    %c0_51 = arith.constant 0 : index
    %c0_52 = arith.constant 0 : index
    %87 = vector.load %arg11[%c1_50, %c0_51, %c0_52] : memref<2x16x128xf32, #tpu.memory_space<vmem>>, vector<1x16x128xf32>
    %88 = vector.shape_cast %87 : vector<1x16x128xf32> to vector<16x128xf32>
    %c1_53 = arith.constant 1 : index
    %c0_54 = arith.constant 0 : index
    %c0_55 = arith.constant 0 : index
    %89 = vector.load %arg12[%c1_53, %c0_54, %c0_55] : memref<2x16x128xf32, #tpu.memory_space<vmem>>, vector<1x16x128xf32>
    %90 = vector.shape_cast %89 : vector<1x16x128xf32> to vector<16x128xf32>
    %91 = arith.index_cast %86 : i32 to index
    %c0_56 = arith.constant 0 : index
    %c0_57 = arith.constant 0 : index
    %92 = vector.load %arg14[%91, %c0_56, %c0_57] : memref<8x16x512xf32, #tpu.memory_space<vmem>>, vector<1x16x512xf32>
    %93 = vector.shape_cast %92 : vector<1x16x512xf32> to vector<16x512xf32>
    %94 = arith.truncf %88 : vector<16x128xf32> to vector<16x128xbf16>
    %c1_58 = arith.constant 1 : index
    %c0_59 = arith.constant 0 : index
    %c0_60 = arith.constant 0 : index
    %95 = vector.load %arg7[%c1_58, %c0_59, %c0_60] : memref<2x128x512xbf16, #tpu.memory_space<vmem>>, vector<1x128x512xbf16>
    %96 = vector.shape_cast %95 : vector<1x128x512xbf16> to vector<128x512xbf16>
    %cst_61 = arith.constant dense<0.000000e+00> : vector<16x512xf32>
    %97 = tpu.matmul %94, %96, %cst_61 {dimension_numbers = #tpu.dot_dimension_numbers<[1], [0], [0], [1], [0, 0, 1, 1], [], []>} : vector<16x128xbf16>, vector<128x512xbf16>, vector<16x512xf32> -> vector<16x512xf32>
    %98 = arith.addf %93, %97 : vector<16x512xf32>
    %99 = vector.extract_strided_slice %98 {offsets = [0, 0], sizes = [16, 128], strides = [1, 1]} : vector<16x512xf32> to vector<16x128xf32>
    %100 = arith.negf %99 : vector<16x128xf32>
    %101 = math.exp %100 : vector<16x128xf32>
    %cst_62 = arith.constant 1.000000e+00 : f32
    %102 = vector.broadcast %cst_62 : f32 to vector<16x128xf32>
    %103 = arith.addf %102, %101 : vector<16x128xf32>
    %104 = arith.divf %102, %103 : vector<16x128xf32>
    %105 = vector.extract_strided_slice %98 {offsets = [0, 128], sizes = [16, 128], strides = [1, 1]} : vector<16x512xf32> to vector<16x128xf32>
    %106 = arith.negf %105 : vector<16x128xf32>
    %107 = math.exp %106 : vector<16x128xf32>
    %cst_63 = arith.constant 1.000000e+00 : f32
    %108 = vector.broadcast %cst_63 : f32 to vector<16x128xf32>
    %109 = arith.addf %108, %107 : vector<16x128xf32>
    %110 = arith.divf %108, %109 : vector<16x128xf32>
    %111 = vector.extract_strided_slice %98 {offsets = [0, 256], sizes = [16, 128], strides = [1, 1]} : vector<16x512xf32> to vector<16x128xf32>
    %112 = math.tanh %111 : vector<16x128xf32>
    %113 = vector.extract_strided_slice %98 {offsets = [0, 384], sizes = [16, 128], strides = [1, 1]} : vector<16x512xf32> to vector<16x128xf32>
    %114 = arith.negf %113 : vector<16x128xf32>
    %115 = math.exp %114 : vector<16x128xf32>
    %cst_64 = arith.constant 1.000000e+00 : f32
    %116 = vector.broadcast %cst_64 : f32 to vector<16x128xf32>
    %117 = arith.addf %116, %115 : vector<16x128xf32>
    %118 = arith.divf %116, %117 : vector<16x128xf32>
    %119 = arith.mulf %110, %90 : vector<16x128xf32>
    %120 = arith.mulf %104, %112 : vector<16x128xf32>
    %121 = arith.addf %119, %120 : vector<16x128xf32>
    %122 = math.tanh %121 : vector<16x128xf32>
    %123 = arith.mulf %118, %122 : vector<16x128xf32>
    %124 = arith.index_cast %86 : i32 to index
    %c0_65 = arith.constant 0 : index
    %c0_66 = arith.constant 0 : index
    %125 = vector.load %arg3[%124, %c0_65, %c0_66] : memref<8x16x1xf32, #tpu.memory_space<vmem>>, vector<1x16x1xf32>
    %126 = vector.shape_cast %125 : vector<1x16x1xf32> to vector<16x1xf32>
    %127 = arith.subf %123, %88 : vector<16x128xf32>
    %128 = vector.broadcast %126 : vector<16x1xf32> to vector<16x128xf32>
    %129 = arith.mulf %128, %127 : vector<16x128xf32>
    %130 = arith.addf %88, %129 : vector<16x128xf32>
    %c1_67 = arith.constant 1 : index
    %c0_68 = arith.constant 0 : index
    %c0_69 = arith.constant 0 : index
    %131 = vector.load %arg11[%c1_67, %c0_68, %c0_69] : memref<2x16x128xf32, #tpu.memory_space<vmem>>, vector<1x16x128xf32>
    %132 = vector.shape_cast %131 : vector<1x16x128xf32> to vector<16x128xf32>
    %133 = vector.shape_cast %130 : vector<16x128xf32> to vector<1x16x128xf32>
    tpu.vector_store %arg11[%c1_67, %c0_68, %c0_69], %133 {strides = array<i32>} : memref<2x16x128xf32, #tpu.memory_space<vmem>>, vector<1x16x128xf32>,
    %134 = arith.subf %121, %90 : vector<16x128xf32>
    %135 = vector.broadcast %126 : vector<16x1xf32> to vector<16x128xf32>
    %136 = arith.mulf %135, %134 : vector<16x128xf32>
    %137 = arith.addf %90, %136 : vector<16x128xf32>
    %c1_70 = arith.constant 1 : index
    %c0_71 = arith.constant 0 : index
    %c0_72 = arith.constant 0 : index
    %138 = vector.load %arg12[%c1_70, %c0_71, %c0_72] : memref<2x16x128xf32, #tpu.memory_space<vmem>>, vector<1x16x128xf32>
    %139 = vector.shape_cast %138 : vector<1x16x128xf32> to vector<16x128xf32>
    %140 = vector.shape_cast %137 : vector<16x128xf32> to vector<1x16x128xf32>
    tpu.vector_store %arg12[%c1_70, %c0_71, %c0_72], %140 {strides = array<i32>} : memref<2x16x128xf32, #tpu.memory_space<vmem>>, vector<1x16x128xf32>,
    %141 = vector.broadcast %126 : vector<16x1xf32> to vector<16x128xf32>
    %142 = arith.mulf %141, %123 : vector<16x128xf32>
    %143 = arith.truncf %142 : vector<16x128xf32> to vector<16x128xbf16>
    %144 = arith.index_cast %86 : i32 to index
    %c0_73 = arith.constant 0 : index
    %c0_74 = arith.constant 0 : index
    %145 = vector.load %arg10[%144, %c0_73, %c0_74] : memref<8x16x128xbf16, #tpu.memory_space<vmem>>, vector<1x16x128xbf16>
    %146 = vector.shape_cast %145 : vector<1x16x128xbf16> to vector<16x128xbf16>
    %147 = vector.shape_cast %143 : vector<16x128xbf16> to vector<1x16x128xbf16>
    tpu.vector_store %arg10[%144, %c0_73, %c0_74], %147 {strides = array<i32>} : memref<8x16x128xbf16, #tpu.memory_space<vmem>>, vector<1x16x128xbf16>,
    %c1_i32 = arith.constant 1 : i32
    %c0_75 = arith.constant 0 : index
    %c0_76 = arith.constant 0 : index
    %c0_77 = arith.constant 0 : index
    %148 = vector.load %arg11[%c0_75, %c0_76, %c0_77] : memref<2x16x128xf32, #tpu.memory_space<vmem>>, vector<1x16x128xf32>
    %149 = vector.shape_cast %148 : vector<1x16x128xf32> to vector<16x128xf32>
    %c0_78 = arith.constant 0 : index
    %c0_79 = arith.constant 0 : index
    %c0_80 = arith.constant 0 : index
    %150 = vector.load %arg12[%c0_78, %c0_79, %c0_80] : memref<2x16x128xf32, #tpu.memory_space<vmem>>, vector<1x16x128xf32>
    %151 = vector.shape_cast %150 : vector<1x16x128xf32> to vector<16x128xf32>
    %152 = arith.index_cast %c1_i32 : i32 to index
    %c0_81 = arith.constant 0 : index
    %c0_82 = arith.constant 0 : index
    %153 = vector.load %arg13[%152, %c0_81, %c0_82] : memref<8x16x512xf32, #tpu.memory_space<vmem>>, vector<1x16x512xf32>
    %154 = vector.shape_cast %153 : vector<1x16x512xf32> to vector<16x512xf32>
    %155 = arith.truncf %149 : vector<16x128xf32> to vector<16x128xbf16>
    %c0_83 = arith.constant 0 : index
    %c0_84 = arith.constant 0 : index
    %c0_85 = arith.constant 0 : index
    %156 = vector.load %arg7[%c0_83, %c0_84, %c0_85] : memref<2x128x512xbf16, #tpu.memory_space<vmem>>, vector<1x128x512xbf16>
    %157 = vector.shape_cast %156 : vector<1x128x512xbf16> to vector<128x512xbf16>
    %cst_86 = arith.constant dense<0.000000e+00> : vector<16x512xf32>
    %158 = tpu.matmul %155, %157, %cst_86 {dimension_numbers = #tpu.dot_dimension_numbers<[1], [0], [0], [1], [0, 0, 1, 1], [], []>} : vector<16x128xbf16>, vector<128x512xbf16>, vector<16x512xf32> -> vector<16x512xf32>
    %159 = arith.addf %154, %158 : vector<16x512xf32>
    %160 = vector.extract_strided_slice %159 {offsets = [0, 0], sizes = [16, 128], strides = [1, 1]} : vector<16x512xf32> to vector<16x128xf32>
    %161 = arith.negf %160 : vector<16x128xf32>
    %162 = math.exp %161 : vector<16x128xf32>
    %cst_87 = arith.constant 1.000000e+00 : f32
    %163 = vector.broadcast %cst_87 : f32 to vector<16x128xf32>
    %164 = arith.addf %163, %162 : vector<16x128xf32>
    %165 = arith.divf %163, %164 : vector<16x128xf32>
    %166 = vector.extract_strided_slice %159 {offsets = [0, 128], sizes = [16, 128], strides = [1, 1]} : vector<16x512xf32> to vector<16x128xf32>
    %167 = arith.negf %166 : vector<16x128xf32>
    %168 = math.exp %167 : vector<16x128xf32>
    %cst_88 = arith.constant 1.000000e+00 : f32
    %169 = vector.broadcast %cst_88 : f32 to vector<16x128xf32>
    %170 = arith.addf %169, %168 : vector<16x128xf32>
    %171 = arith.divf %169, %170 : vector<16x128xf32>
    %172 = vector.extract_strided_slice %159 {offsets = [0, 256], sizes = [16, 128], strides = [1, 1]} : vector<16x512xf32> to vector<16x128xf32>
    %173 = math.tanh %172 : vector<16x128xf32>
    %174 = vector.extract_strided_slice %159 {offsets = [0, 384], sizes = [16, 128], strides = [1, 1]} : vector<16x512xf32> to vector<16x128xf32>
    %175 = arith.negf %174 : vector<16x128xf32>
    %176 = math.exp %175 : vector<16x128xf32>
    %cst_89 = arith.constant 1.000000e+00 : f32
    %177 = vector.broadcast %cst_89 : f32 to vector<16x128xf32>
    %178 = arith.addf %177, %176 : vector<16x128xf32>
    %179 = arith.divf %177, %178 : vector<16x128xf32>
    %180 = arith.mulf %171, %151 : vector<16x128xf32>
    %181 = arith.mulf %165, %173 : vector<16x128xf32>
    %182 = arith.addf %180, %181 : vector<16x128xf32>
    %183 = math.tanh %182 : vector<16x128xf32>
    %184 = arith.mulf %179, %183 : vector<16x128xf32>
    %185 = arith.index_cast %c1_i32 : i32 to index
    %c0_90 = arith.constant 0 : index
    %c0_91 = arith.constant 0 : index
    %186 = vector.load %arg2[%185, %c0_90, %c0_91] : memref<8x16x1xf32, #tpu.memory_space<vmem>>, vector<1x16x1xf32>
    %187 = vector.shape_cast %186 : vector<1x16x1xf32> to vector<16x1xf32>
    %188 = arith.subf %184, %149 : vector<16x128xf32>
    %189 = vector.broadcast %187 : vector<16x1xf32> to vector<16x128xf32>
    %190 = arith.mulf %189, %188 : vector<16x128xf32>
    %191 = arith.addf %149, %190 : vector<16x128xf32>
    %c0_92 = arith.constant 0 : index
    %c0_93 = arith.constant 0 : index
    %c0_94 = arith.constant 0 : index
    %192 = vector.load %arg11[%c0_92, %c0_93, %c0_94] : memref<2x16x128xf32, #tpu.memory_space<vmem>>, vector<1x16x128xf32>
    %193 = vector.shape_cast %192 : vector<1x16x128xf32> to vector<16x128xf32>
    %194 = vector.shape_cast %191 : vector<16x128xf32> to vector<1x16x128xf32>
    tpu.vector_store %arg11[%c0_92, %c0_93, %c0_94], %194 {strides = array<i32>} : memref<2x16x128xf32, #tpu.memory_space<vmem>>, vector<1x16x128xf32>,
    %195 = arith.subf %182, %151 : vector<16x128xf32>
    %196 = vector.broadcast %187 : vector<16x1xf32> to vector<16x128xf32>
    %197 = arith.mulf %196, %195 : vector<16x128xf32>
    %198 = arith.addf %151, %197 : vector<16x128xf32>
    %c0_95 = arith.constant 0 : index
    %c0_96 = arith.constant 0 : index
    %c0_97 = arith.constant 0 : index
    %199 = vector.load %arg12[%c0_95, %c0_96, %c0_97] : memref<2x16x128xf32, #tpu.memory_space<vmem>>, vector<1x16x128xf32>
    %200 = vector.shape_cast %199 : vector<1x16x128xf32> to vector<16x128xf32>
    %201 = vector.shape_cast %198 : vector<16x128xf32> to vector<1x16x128xf32>
    tpu.vector_store %arg12[%c0_95, %c0_96, %c0_97], %201 {strides = array<i32>} : memref<2x16x128xf32, #tpu.memory_space<vmem>>, vector<1x16x128xf32>,
    %202 = vector.broadcast %187 : vector<16x1xf32> to vector<16x128xf32>
    %203 = arith.mulf %202, %184 : vector<16x128xf32>
    %204 = arith.truncf %203 : vector<16x128xf32> to vector<16x128xbf16>
    %205 = arith.index_cast %c1_i32 : i32 to index
    %c0_98 = arith.constant 0 : index
    %c0_99 = arith.constant 0 : index
    %206 = vector.load %arg9[%205, %c0_98, %c0_99] : memref<8x16x128xbf16, #tpu.memory_space<vmem>>, vector<1x16x128xbf16>
    %207 = vector.shape_cast %206 : vector<1x16x128xbf16> to vector<16x128xbf16>
    %208 = vector.shape_cast %204 : vector<16x128xbf16> to vector<1x16x128xbf16>
    tpu.vector_store %arg9[%205, %c0_98, %c0_99], %208 {strides = array<i32>} : memref<8x16x128xbf16, #tpu.memory_space<vmem>>, vector<1x16x128xbf16>,
    %c7_i32_100 = arith.constant 7 : i32
    %209 = arith.subi %c7_i32_100, %c1_i32 : i32
    %c1_101 = arith.constant 1 : index
    %c0_102 = arith.constant 0 : index
    %c0_103 = arith.constant 0 : index
    %210 = vector.load %arg11[%c1_101, %c0_102, %c0_103] : memref<2x16x128xf32, #tpu.memory_space<vmem>>, vector<1x16x128xf32>
    %211 = vector.shape_cast %210 : vector<1x16x128xf32> to vector<16x128xf32>
    %c1_104 = arith.constant 1 : index
    %c0_105 = arith.constant 0 : index
    %c0_106 = arith.constant 0 : index
    %212 = vector.load %arg12[%c1_104, %c0_105, %c0_106] : memref<2x16x128xf32, #tpu.memory_space<vmem>>, vector<1x16x128xf32>
    %213 = vector.shape_cast %212 : vector<1x16x128xf32> to vector<16x128xf32>
    %214 = arith.index_cast %209 : i32 to index
    %c0_107 = arith.constant 0 : index
    %c0_108 = arith.constant 0 : index
    %215 = vector.load %arg14[%214, %c0_107, %c0_108] : memref<8x16x512xf32, #tpu.memory_space<vmem>>, vector<1x16x512xf32>
    %216 = vector.shape_cast %215 : vector<1x16x512xf32> to vector<16x512xf32>
    %217 = arith.truncf %211 : vector<16x128xf32> to vector<16x128xbf16>
    %c1_109 = arith.constant 1 : index
    %c0_110 = arith.constant 0 : index
    %c0_111 = arith.constant 0 : index
    %218 = vector.load %arg7[%c1_109, %c0_110, %c0_111] : memref<2x128x512xbf16, #tpu.memory_space<vmem>>, vector<1x128x512xbf16>
    %219 = vector.shape_cast %218 : vector<1x128x512xbf16> to vector<128x512xbf16>
    %cst_112 = arith.constant dense<0.000000e+00> : vector<16x512xf32>
    %220 = tpu.matmul %217, %219, %cst_112 {dimension_numbers = #tpu.dot_dimension_numbers<[1], [0], [0], [1], [0, 0, 1, 1], [], []>} : vector<16x128xbf16>, vector<128x512xbf16>, vector<16x512xf32> -> vector<16x512xf32>
    %221 = arith.addf %216, %220 : vector<16x512xf32>
    %222 = vector.extract_strided_slice %221 {offsets = [0, 0], sizes = [16, 128], strides = [1, 1]} : vector<16x512xf32> to vector<16x128xf32>
    %223 = arith.negf %222 : vector<16x128xf32>
    %224 = math.exp %223 : vector<16x128xf32>
    %cst_113 = arith.constant 1.000000e+00 : f32
    %225 = vector.broadcast %cst_113 : f32 to vector<16x128xf32>
    %226 = arith.addf %225, %224 : vector<16x128xf32>
    %227 = arith.divf %225, %226 : vector<16x128xf32>
    %228 = vector.extract_strided_slice %221 {offsets = [0, 128], sizes = [16, 128], strides = [1, 1]} : vector<16x512xf32> to vector<16x128xf32>
    %229 = arith.negf %228 : vector<16x128xf32>
    %230 = math.exp %229 : vector<16x128xf32>
    %cst_114 = arith.constant 1.000000e+00 : f32
    %231 = vector.broadcast %cst_114 : f32 to vector<16x128xf32>
    %232 = arith.addf %231, %230 : vector<16x128xf32>
    %233 = arith.divf %231, %232 : vector<16x128xf32>
    %234 = vector.extract_strided_slice %221 {offsets = [0, 256], sizes = [16, 128], strides = [1, 1]} : vector<16x512xf32> to vector<16x128xf32>
    %235 = math.tanh %234 : vector<16x128xf32>
    %236 = vector.extract_strided_slice %221 {offsets = [0, 384], sizes = [16, 128], strides = [1, 1]} : vector<16x512xf32> to vector<16x128xf32>
    %237 = arith.negf %236 : vector<16x128xf32>
    %238 = math.exp %237 : vector<16x128xf32>
    %cst_115 = arith.constant 1.000000e+00 : f32
    %239 = vector.broadcast %cst_115 : f32 to vector<16x128xf32>
    %240 = arith.addf %239, %238 : vector<16x128xf32>
    %241 = arith.divf %239, %240 : vector<16x128xf32>
    %242 = arith.mulf %233, %213 : vector<16x128xf32>
    %243 = arith.mulf %227, %235 : vector<16x128xf32>
    %244 = arith.addf %242, %243 : vector<16x128xf32>
    %245 = math.tanh %244 : vector<16x128xf32>
    %246 = arith.mulf %241, %245 : vector<16x128xf32>
    %247 = arith.index_cast %209 : i32 to index
    %c0_116 = arith.constant 0 : index
    %c0_117 = arith.constant 0 : index
    %248 = vector.load %arg3[%247, %c0_116, %c0_117] : memref<8x16x1xf32, #tpu.memory_space<vmem>>, vector<1x16x1xf32>
    %249 = vector.shape_cast %248 : vector<1x16x1xf32> to vector<16x1xf32>
    %250 = arith.subf %246, %211 : vector<16x128xf32>
    %251 = vector.broadcast %249 : vector<16x1xf32> to vector<16x128xf32>
    %252 = arith.mulf %251, %250 : vector<16x128xf32>
    %253 = arith.addf %211, %252 : vector<16x128xf32>
    %c1_118 = arith.constant 1 : index
    %c0_119 = arith.constant 0 : index
    %c0_120 = arith.constant 0 : index
    %254 = vector.load %arg11[%c1_118, %c0_119, %c0_120] : memref<2x16x128xf32, #tpu.memory_space<vmem>>, vector<1x16x128xf32>
    %255 = vector.shape_cast %254 : vector<1x16x128xf32> to vector<16x128xf32>
    %256 = vector.shape_cast %253 : vector<16x128xf32> to vector<1x16x128xf32>
    tpu.vector_store %arg11[%c1_118, %c0_119, %c0_120], %256 {strides = array<i32>} : memref<2x16x128xf32, #tpu.memory_space<vmem>>, vector<1x16x128xf32>,
    %257 = arith.subf %244, %213 : vector<16x128xf32>
    %258 = vector.broadcast %249 : vector<16x1xf32> to vector<16x128xf32>
    %259 = arith.mulf %258, %257 : vector<16x128xf32>
    %260 = arith.addf %213, %259 : vector<16x128xf32>
    %c1_121 = arith.constant 1 : index
    %c0_122 = arith.constant 0 : index
    %c0_123 = arith.constant 0 : index
    %261 = vector.load %arg12[%c1_121, %c0_122, %c0_123] : memref<2x16x128xf32, #tpu.memory_space<vmem>>, vector<1x16x128xf32>
    %262 = vector.shape_cast %261 : vector<1x16x128xf32> to vector<16x128xf32>
    %263 = vector.shape_cast %260 : vector<16x128xf32> to vector<1x16x128xf32>
    tpu.vector_store %arg12[%c1_121, %c0_122, %c0_123], %263 {strides = array<i32>} : memref<2x16x128xf32, #tpu.memory_space<vmem>>, vector<1x16x128xf32>,
    %264 = vector.broadcast %249 : vector<16x1xf32> to vector<16x128xf32>
    %265 = arith.mulf %264, %246 : vector<16x128xf32>
    %266 = arith.truncf %265 : vector<16x128xf32> to vector<16x128xbf16>
    %267 = arith.index_cast %209 : i32 to index
    %c0_124 = arith.constant 0 : index
    %c0_125 = arith.constant 0 : index
    %268 = vector.load %arg10[%267, %c0_124, %c0_125] : memref<8x16x128xbf16, #tpu.memory_space<vmem>>, vector<1x16x128xbf16>
    %269 = vector.shape_cast %268 : vector<1x16x128xbf16> to vector<16x128xbf16>
    %270 = vector.shape_cast %266 : vector<16x128xbf16> to vector<1x16x128xbf16>
    tpu.vector_store %arg10[%267, %c0_124, %c0_125], %270 {strides = array<i32>} : memref<8x16x128xbf16, #tpu.memory_space<vmem>>, vector<1x16x128xbf16>,
    %c2_i32 = arith.constant 2 : i32
    %c0_126 = arith.constant 0 : index
    %c0_127 = arith.constant 0 : index
    %c0_128 = arith.constant 0 : index
    %271 = vector.load %arg11[%c0_126, %c0_127, %c0_128] : memref<2x16x128xf32, #tpu.memory_space<vmem>>, vector<1x16x128xf32>
    %272 = vector.shape_cast %271 : vector<1x16x128xf32> to vector<16x128xf32>
    %c0_129 = arith.constant 0 : index
    %c0_130 = arith.constant 0 : index
    %c0_131 = arith.constant 0 : index
    %273 = vector.load %arg12[%c0_129, %c0_130, %c0_131] : memref<2x16x128xf32, #tpu.memory_space<vmem>>, vector<1x16x128xf32>
    %274 = vector.shape_cast %273 : vector<1x16x128xf32> to vector<16x128xf32>
    %275 = arith.index_cast %c2_i32 : i32 to index
    %c0_132 = arith.constant 0 : index
    %c0_133 = arith.constant 0 : index
    %276 = vector.load %arg13[%275, %c0_132, %c0_133] : memref<8x16x512xf32, #tpu.memory_space<vmem>>, vector<1x16x512xf32>
    %277 = vector.shape_cast %276 : vector<1x16x512xf32> to vector<16x512xf32>
    %278 = arith.truncf %272 : vector<16x128xf32> to vector<16x128xbf16>
    %c0_134 = arith.constant 0 : index
    %c0_135 = arith.constant 0 : index
    %c0_136 = arith.constant 0 : index
    %279 = vector.load %arg7[%c0_134, %c0_135, %c0_136] : memref<2x128x512xbf16, #tpu.memory_space<vmem>>, vector<1x128x512xbf16>
    %280 = vector.shape_cast %279 : vector<1x128x512xbf16> to vector<128x512xbf16>
    %cst_137 = arith.constant dense<0.000000e+00> : vector<16x512xf32>
    %281 = tpu.matmul %278, %280, %cst_137 {dimension_numbers = #tpu.dot_dimension_numbers<[1], [0], [0], [1], [0, 0, 1, 1], [], []>} : vector<16x128xbf16>, vector<128x512xbf16>, vector<16x512xf32> -> vector<16x512xf32>
    %282 = arith.addf %277, %281 : vector<16x512xf32>
    %283 = vector.extract_strided_slice %282 {offsets = [0, 0], sizes = [16, 128], strides = [1, 1]} : vector<16x512xf32> to vector<16x128xf32>
    %284 = arith.negf %283 : vector<16x128xf32>
    %285 = math.exp %284 : vector<16x128xf32>
    %cst_138 = arith.constant 1.000000e+00 : f32
    %286 = vector.broadcast %cst_138 : f32 to vector<16x128xf32>
    %287 = arith.addf %286, %285 : vector<16x128xf32>
    %288 = arith.divf %286, %287 : vector<16x128xf32>
    %289 = vector.extract_strided_slice %282 {offsets = [0, 128], sizes = [16, 128], strides = [1, 1]} : vector<16x512xf32> to vector<16x128xf32>
    %290 = arith.negf %289 : vector<16x128xf32>
    %291 = math.exp %290 : vector<16x128xf32>
    %cst_139 = arith.constant 1.000000e+00 : f32
    %292 = vector.broadcast %cst_139 : f32 to vector<16x128xf32>
    %293 = arith.addf %292, %291 : vector<16x128xf32>
    %294 = arith.divf %292, %293 : vector<16x128xf32>
    %295 = vector.extract_strided_slice %282 {offsets = [0, 256], sizes = [16, 128], strides = [1, 1]} : vector<16x512xf32> to vector<16x128xf32>
    %296 = math.tanh %295 : vector<16x128xf32>
    %297 = vector.extract_strided_slice %282 {offsets = [0, 384], sizes = [16, 128], strides = [1, 1]} : vector<16x512xf32> to vector<16x128xf32>
    %298 = arith.negf %297 : vector<16x128xf32>
    %299 = math.exp %298 : vector<16x128xf32>
    %cst_140 = arith.constant 1.000000e+00 : f32
    %300 = vector.broadcast %cst_140 : f32 to vector<16x128xf32>
    %301 = arith.addf %300, %299 : vector<16x128xf32>
    %302 = arith.divf %300, %301 : vector<16x128xf32>
    %303 = arith.mulf %294, %274 : vector<16x128xf32>
    %304 = arith.mulf %288, %296 : vector<16x128xf32>
    %305 = arith.addf %303, %304 : vector<16x128xf32>
    %306 = math.tanh %305 : vector<16x128xf32>
    %307 = arith.mulf %302, %306 : vector<16x128xf32>
    %308 = arith.index_cast %c2_i32 : i32 to index
    %c0_141 = arith.constant 0 : index
    %c0_142 = arith.constant 0 : index
    %309 = vector.load %arg2[%308, %c0_141, %c0_142] : memref<8x16x1xf32, #tpu.memory_space<vmem>>, vector<1x16x1xf32>
    %310 = vector.shape_cast %309 : vector<1x16x1xf32> to vector<16x1xf32>
    %311 = arith.subf %307, %272 : vector<16x128xf32>
    %312 = vector.broadcast %310 : vector<16x1xf32> to vector<16x128xf32>
    %313 = arith.mulf %312, %311 : vector<16x128xf32>
    %314 = arith.addf %272, %313 : vector<16x128xf32>
    %c0_143 = arith.constant 0 : index
    %c0_144 = arith.constant 0 : index
    %c0_145 = arith.constant 0 : index
    %315 = vector.load %arg11[%c0_143, %c0_144, %c0_145] : memref<2x16x128xf32, #tpu.memory_space<vmem>>, vector<1x16x128xf32>
    %316 = vector.shape_cast %315 : vector<1x16x128xf32> to vector<16x128xf32>
    %317 = vector.shape_cast %314 : vector<16x128xf32> to vector<1x16x128xf32>
    tpu.vector_store %arg11[%c0_143, %c0_144, %c0_145], %317 {strides = array<i32>} : memref<2x16x128xf32, #tpu.memory_space<vmem>>, vector<1x16x128xf32>,
    %318 = arith.subf %305, %274 : vector<16x128xf32>
    %319 = vector.broadcast %310 : vector<16x1xf32> to vector<16x128xf32>
    %320 = arith.mulf %319, %318 : vector<16x128xf32>
    %321 = arith.addf %274, %320 : vector<16x128xf32>
    %c0_146 = arith.constant 0 : index
    %c0_147 = arith.constant 0 : index
    %c0_148 = arith.constant 0 : index
    %322 = vector.load %arg12[%c0_146, %c0_147, %c0_148] : memref<2x16x128xf32, #tpu.memory_space<vmem>>, vector<1x16x128xf32>
    %323 = vector.shape_cast %322 : vector<1x16x128xf32> to vector<16x128xf32>
    %324 = vector.shape_cast %321 : vector<16x128xf32> to vector<1x16x128xf32>
    tpu.vector_store %arg12[%c0_146, %c0_147, %c0_148], %324 {strides = array<i32>} : memref<2x16x128xf32, #tpu.memory_space<vmem>>, vector<1x16x128xf32>,
    %325 = vector.broadcast %310 : vector<16x1xf32> to vector<16x128xf32>
    %326 = arith.mulf %325, %307 : vector<16x128xf32>
    %327 = arith.truncf %326 : vector<16x128xf32> to vector<16x128xbf16>
    %328 = arith.index_cast %c2_i32 : i32 to index
    %c0_149 = arith.constant 0 : index
    %c0_150 = arith.constant 0 : index
    %329 = vector.load %arg9[%328, %c0_149, %c0_150] : memref<8x16x128xbf16, #tpu.memory_space<vmem>>, vector<1x16x128xbf16>
    %330 = vector.shape_cast %329 : vector<1x16x128xbf16> to vector<16x128xbf16>
    %331 = vector.shape_cast %327 : vector<16x128xbf16> to vector<1x16x128xbf16>
    tpu.vector_store %arg9[%328, %c0_149, %c0_150], %331 {strides = array<i32>} : memref<8x16x128xbf16, #tpu.memory_space<vmem>>, vector<1x16x128xbf16>,
    %c7_i32_151 = arith.constant 7 : i32
    %332 = arith.subi %c7_i32_151, %c2_i32 : i32
    %c1_152 = arith.constant 1 : index
    %c0_153 = arith.constant 0 : index
    %c0_154 = arith.constant 0 : index
    %333 = vector.load %arg11[%c1_152, %c0_153, %c0_154] : memref<2x16x128xf32, #tpu.memory_space<vmem>>, vector<1x16x128xf32>
    %334 = vector.shape_cast %333 : vector<1x16x128xf32> to vector<16x128xf32>
    %c1_155 = arith.constant 1 : index
    %c0_156 = arith.constant 0 : index
    %c0_157 = arith.constant 0 : index
    %335 = vector.load %arg12[%c1_155, %c0_156, %c0_157] : memref<2x16x128xf32, #tpu.memory_space<vmem>>, vector<1x16x128xf32>
    %336 = vector.shape_cast %335 : vector<1x16x128xf32> to vector<16x128xf32>
    %337 = arith.index_cast %332 : i32 to index
    %c0_158 = arith.constant 0 : index
    %c0_159 = arith.constant 0 : index
    %338 = vector.load %arg14[%337, %c0_158, %c0_159] : memref<8x16x512xf32, #tpu.memory_space<vmem>>, vector<1x16x512xf32>
    %339 = vector.shape_cast %338 : vector<1x16x512xf32> to vector<16x512xf32>
    %340 = arith.truncf %334 : vector<16x128xf32> to vector<16x128xbf16>
    %c1_160 = arith.constant 1 : index
    %c0_161 = arith.constant 0 : index
    %c0_162 = arith.constant 0 : index
    %341 = vector.load %arg7[%c1_160, %c0_161, %c0_162] : memref<2x128x512xbf16, #tpu.memory_space<vmem>>, vector<1x128x512xbf16>
    %342 = vector.shape_cast %341 : vector<1x128x512xbf16> to vector<128x512xbf16>
    %cst_163 = arith.constant dense<0.000000e+00> : vector<16x512xf32>
    %343 = tpu.matmul %340, %342, %cst_163 {dimension_numbers = #tpu.dot_dimension_numbers<[1], [0], [0], [1], [0, 0, 1, 1], [], []>} : vector<16x128xbf16>, vector<128x512xbf16>, vector<16x512xf32> -> vector<16x512xf32>
    %344 = arith.addf %339, %343 : vector<16x512xf32>
    %345 = vector.extract_strided_slice %344 {offsets = [0, 0], sizes = [16, 128], strides = [1, 1]} : vector<16x512xf32> to vector<16x128xf32>
    %346 = arith.negf %345 : vector<16x128xf32>
    %347 = math.exp %346 : vector<16x128xf32>
    %cst_164 = arith.constant 1.000000e+00 : f32
    %348 = vector.broadcast %cst_164 : f32 to vector<16x128xf32>
    %349 = arith.addf %348, %347 : vector<16x128xf32>
    %350 = arith.divf %348, %349 : vector<16x128xf32>
    %351 = vector.extract_strided_slice %344 {offsets = [0, 128], sizes = [16, 128], strides = [1, 1]} : vector<16x512xf32> to vector<16x128xf32>
    %352 = arith.negf %351 : vector<16x128xf32>
    %353 = math.exp %352 : vector<16x128xf32>
    %cst_165 = arith.constant 1.000000e+00 : f32
    %354 = vector.broadcast %cst_165 : f32 to vector<16x128xf32>
    %355 = arith.addf %354, %353 : vector<16x128xf32>
    %356 = arith.divf %354, %355 : vector<16x128xf32>
    %357 = vector.extract_strided_slice %344 {offsets = [0, 256], sizes = [16, 128], strides = [1, 1]} : vector<16x512xf32> to vector<16x128xf32>
    %358 = math.tanh %357 : vector<16x128xf32>
    %359 = vector.extract_strided_slice %344 {offsets = [0, 384], sizes = [16, 128], strides = [1, 1]} : vector<16x512xf32> to vector<16x128xf32>
    %360 = arith.negf %359 : vector<16x128xf32>
    %361 = math.exp %360 : vector<16x128xf32>
    %cst_166 = arith.constant 1.000000e+00 : f32
    %362 = vector.broadcast %cst_166 : f32 to vector<16x128xf32>
    %363 = arith.addf %362, %361 : vector<16x128xf32>
    %364 = arith.divf %362, %363 : vector<16x128xf32>
    %365 = arith.mulf %356, %336 : vector<16x128xf32>
    %366 = arith.mulf %350, %358 : vector<16x128xf32>
    %367 = arith.addf %365, %366 : vector<16x128xf32>
    %368 = math.tanh %367 : vector<16x128xf32>
    %369 = arith.mulf %364, %368 : vector<16x128xf32>
    %370 = arith.index_cast %332 : i32 to index
    %c0_167 = arith.constant 0 : index
    %c0_168 = arith.constant 0 : index
    %371 = vector.load %arg3[%370, %c0_167, %c0_168] : memref<8x16x1xf32, #tpu.memory_space<vmem>>, vector<1x16x1xf32>
    %372 = vector.shape_cast %371 : vector<1x16x1xf32> to vector<16x1xf32>
    %373 = arith.subf %369, %334 : vector<16x128xf32>
    %374 = vector.broadcast %372 : vector<16x1xf32> to vector<16x128xf32>
    %375 = arith.mulf %374, %373 : vector<16x128xf32>
    %376 = arith.addf %334, %375 : vector<16x128xf32>
    %c1_169 = arith.constant 1 : index
    %c0_170 = arith.constant 0 : index
    %c0_171 = arith.constant 0 : index
    %377 = vector.load %arg11[%c1_169, %c0_170, %c0_171] : memref<2x16x128xf32, #tpu.memory_space<vmem>>, vector<1x16x128xf32>
    %378 = vector.shape_cast %377 : vector<1x16x128xf32> to vector<16x128xf32>
    %379 = vector.shape_cast %376 : vector<16x128xf32> to vector<1x16x128xf32>
    tpu.vector_store %arg11[%c1_169, %c0_170, %c0_171], %379 {strides = array<i32>} : memref<2x16x128xf32, #tpu.memory_space<vmem>>, vector<1x16x128xf32>,
    %380 = arith.subf %367, %336 : vector<16x128xf32>
    %381 = vector.broadcast %372 : vector<16x1xf32> to vector<16x128xf32>
    %382 = arith.mulf %381, %380 : vector<16x128xf32>
    %383 = arith.addf %336, %382 : vector<16x128xf32>
    %c1_172 = arith.constant 1 : index
    %c0_173 = arith.constant 0 : index
    %c0_174 = arith.constant 0 : index
    %384 = vector.load %arg12[%c1_172, %c0_173, %c0_174] : memref<2x16x128xf32, #tpu.memory_space<vmem>>, vector<1x16x128xf32>
    %385 = vector.shape_cast %384 : vector<1x16x128xf32> to vector<16x128xf32>
    %386 = vector.shape_cast %383 : vector<16x128xf32> to vector<1x16x128xf32>
    tpu.vector_store %arg12[%c1_172, %c0_173, %c0_174], %386 {strides = array<i32>} : memref<2x16x128xf32, #tpu.memory_space<vmem>>, vector<1x16x128xf32>,
    %387 = vector.broadcast %372 : vector<16x1xf32> to vector<16x128xf32>
    %388 = arith.mulf %387, %369 : vector<16x128xf32>
    %389 = arith.truncf %388 : vector<16x128xf32> to vector<16x128xbf16>
    %390 = arith.index_cast %332 : i32 to index
    %c0_175 = arith.constant 0 : index
    %c0_176 = arith.constant 0 : index
    %391 = vector.load %arg10[%390, %c0_175, %c0_176] : memref<8x16x128xbf16, #tpu.memory_space<vmem>>, vector<1x16x128xbf16>
    %392 = vector.shape_cast %391 : vector<1x16x128xbf16> to vector<16x128xbf16>
    %393 = vector.shape_cast %389 : vector<16x128xbf16> to vector<1x16x128xbf16>
    tpu.vector_store %arg10[%390, %c0_175, %c0_176], %393 {strides = array<i32>} : memref<8x16x128xbf16, #tpu.memory_space<vmem>>, vector<1x16x128xbf16>,
    %c3_i32 = arith.constant 3 : i32
    %c0_177 = arith.constant 0 : index
    %c0_178 = arith.constant 0 : index
    %c0_179 = arith.constant 0 : index
    %394 = vector.load %arg11[%c0_177, %c0_178, %c0_179] : memref<2x16x128xf32, #tpu.memory_space<vmem>>, vector<1x16x128xf32>
    %395 = vector.shape_cast %394 : vector<1x16x128xf32> to vector<16x128xf32>
    %c0_180 = arith.constant 0 : index
    %c0_181 = arith.constant 0 : index
    %c0_182 = arith.constant 0 : index
    %396 = vector.load %arg12[%c0_180, %c0_181, %c0_182] : memref<2x16x128xf32, #tpu.memory_space<vmem>>, vector<1x16x128xf32>
    %397 = vector.shape_cast %396 : vector<1x16x128xf32> to vector<16x128xf32>
    %398 = arith.index_cast %c3_i32 : i32 to index
    %c0_183 = arith.constant 0 : index
    %c0_184 = arith.constant 0 : index
    %399 = vector.load %arg13[%398, %c0_183, %c0_184] : memref<8x16x512xf32, #tpu.memory_space<vmem>>, vector<1x16x512xf32>
    %400 = vector.shape_cast %399 : vector<1x16x512xf32> to vector<16x512xf32>
    %401 = arith.truncf %395 : vector<16x128xf32> to vector<16x128xbf16>
    %c0_185 = arith.constant 0 : index
    %c0_186 = arith.constant 0 : index
    %c0_187 = arith.constant 0 : index
    %402 = vector.load %arg7[%c0_185, %c0_186, %c0_187] : memref<2x128x512xbf16, #tpu.memory_space<vmem>>, vector<1x128x512xbf16>
    %403 = vector.shape_cast %402 : vector<1x128x512xbf16> to vector<128x512xbf16>
    %cst_188 = arith.constant dense<0.000000e+00> : vector<16x512xf32>
    %404 = tpu.matmul %401, %403, %cst_188 {dimension_numbers = #tpu.dot_dimension_numbers<[1], [0], [0], [1], [0, 0, 1, 1], [], []>} : vector<16x128xbf16>, vector<128x512xbf16>, vector<16x512xf32> -> vector<16x512xf32>
    %405 = arith.addf %400, %404 : vector<16x512xf32>
    %406 = vector.extract_strided_slice %405 {offsets = [0, 0], sizes = [16, 128], strides = [1, 1]} : vector<16x512xf32> to vector<16x128xf32>
    %407 = arith.negf %406 : vector<16x128xf32>
    %408 = math.exp %407 : vector<16x128xf32>
    %cst_189 = arith.constant 1.000000e+00 : f32
    %409 = vector.broadcast %cst_189 : f32 to vector<16x128xf32>
    %410 = arith.addf %409, %408 : vector<16x128xf32>
    %411 = arith.divf %409, %410 : vector<16x128xf32>
    %412 = vector.extract_strided_slice %405 {offsets = [0, 128], sizes = [16, 128], strides = [1, 1]} : vector<16x512xf32> to vector<16x128xf32>
    %413 = arith.negf %412 : vector<16x128xf32>
    %414 = math.exp %413 : vector<16x128xf32>
    %cst_190 = arith.constant 1.000000e+00 : f32
    %415 = vector.broadcast %cst_190 : f32 to vector<16x128xf32>
    %416 = arith.addf %415, %414 : vector<16x128xf32>
    %417 = arith.divf %415, %416 : vector<16x128xf32>
    %418 = vector.extract_strided_slice %405 {offsets = [0, 256], sizes = [16, 128], strides = [1, 1]} : vector<16x512xf32> to vector<16x128xf32>
    %419 = math.tanh %418 : vector<16x128xf32>
    %420 = vector.extract_strided_slice %405 {offsets = [0, 384], sizes = [16, 128], strides = [1, 1]} : vector<16x512xf32> to vector<16x128xf32>
    %421 = arith.negf %420 : vector<16x128xf32>
    %422 = math.exp %421 : vector<16x128xf32>
    %cst_191 = arith.constant 1.000000e+00 : f32
    %423 = vector.broadcast %cst_191 : f32 to vector<16x128xf32>
    %424 = arith.addf %423, %422 : vector<16x128xf32>
    %425 = arith.divf %423, %424 : vector<16x128xf32>
    %426 = arith.mulf %417, %397 : vector<16x128xf32>
    %427 = arith.mulf %411, %419 : vector<16x128xf32>
    %428 = arith.addf %426, %427 : vector<16x128xf32>
    %429 = math.tanh %428 : vector<16x128xf32>
    %430 = arith.mulf %425, %429 : vector<16x128xf32>
    %431 = arith.index_cast %c3_i32 : i32 to index
    %c0_192 = arith.constant 0 : index
    %c0_193 = arith.constant 0 : index
    %432 = vector.load %arg2[%431, %c0_192, %c0_193] : memref<8x16x1xf32, #tpu.memory_space<vmem>>, vector<1x16x1xf32>
    %433 = vector.shape_cast %432 : vector<1x16x1xf32> to vector<16x1xf32>
    %434 = arith.subf %430, %395 : vector<16x128xf32>
    %435 = vector.broadcast %433 : vector<16x1xf32> to vector<16x128xf32>
    %436 = arith.mulf %435, %434 : vector<16x128xf32>
    %437 = arith.addf %395, %436 : vector<16x128xf32>
    %c0_194 = arith.constant 0 : index
    %c0_195 = arith.constant 0 : index
    %c0_196 = arith.constant 0 : index
    %438 = vector.load %arg11[%c0_194, %c0_195, %c0_196] : memref<2x16x128xf32, #tpu.memory_space<vmem>>, vector<1x16x128xf32>
    %439 = vector.shape_cast %438 : vector<1x16x128xf32> to vector<16x128xf32>
    %440 = vector.shape_cast %437 : vector<16x128xf32> to vector<1x16x128xf32>
    tpu.vector_store %arg11[%c0_194, %c0_195, %c0_196], %440 {strides = array<i32>} : memref<2x16x128xf32, #tpu.memory_space<vmem>>, vector<1x16x128xf32>,
    %441 = arith.subf %428, %397 : vector<16x128xf32>
    %442 = vector.broadcast %433 : vector<16x1xf32> to vector<16x128xf32>
    %443 = arith.mulf %442, %441 : vector<16x128xf32>
    %444 = arith.addf %397, %443 : vector<16x128xf32>
    %c0_197 = arith.constant 0 : index
    %c0_198 = arith.constant 0 : index
    %c0_199 = arith.constant 0 : index
    %445 = vector.load %arg12[%c0_197, %c0_198, %c0_199] : memref<2x16x128xf32, #tpu.memory_space<vmem>>, vector<1x16x128xf32>
    %446 = vector.shape_cast %445 : vector<1x16x128xf32> to vector<16x128xf32>
    %447 = vector.shape_cast %444 : vector<16x128xf32> to vector<1x16x128xf32>
    tpu.vector_store %arg12[%c0_197, %c0_198, %c0_199], %447 {strides = array<i32>} : memref<2x16x128xf32, #tpu.memory_space<vmem>>, vector<1x16x128xf32>,
    %448 = vector.broadcast %433 : vector<16x1xf32> to vector<16x128xf32>
    %449 = arith.mulf %448, %430 : vector<16x128xf32>
    %450 = arith.truncf %449 : vector<16x128xf32> to vector<16x128xbf16>
    %451 = arith.index_cast %c3_i32 : i32 to index
    %c0_200 = arith.constant 0 : index
    %c0_201 = arith.constant 0 : index
    %452 = vector.load %arg9[%451, %c0_200, %c0_201] : memref<8x16x128xbf16, #tpu.memory_space<vmem>>, vector<1x16x128xbf16>
    %453 = vector.shape_cast %452 : vector<1x16x128xbf16> to vector<16x128xbf16>
    %454 = vector.shape_cast %450 : vector<16x128xbf16> to vector<1x16x128xbf16>
    tpu.vector_store %arg9[%451, %c0_200, %c0_201], %454 {strides = array<i32>} : memref<8x16x128xbf16, #tpu.memory_space<vmem>>, vector<1x16x128xbf16>,
    %c7_i32_202 = arith.constant 7 : i32
    %455 = arith.subi %c7_i32_202, %c3_i32 : i32
    %c1_203 = arith.constant 1 : index
    %c0_204 = arith.constant 0 : index
    %c0_205 = arith.constant 0 : index
    %456 = vector.load %arg11[%c1_203, %c0_204, %c0_205] : memref<2x16x128xf32, #tpu.memory_space<vmem>>, vector<1x16x128xf32>
    %457 = vector.shape_cast %456 : vector<1x16x128xf32> to vector<16x128xf32>
    %c1_206 = arith.constant 1 : index
    %c0_207 = arith.constant 0 : index
    %c0_208 = arith.constant 0 : index
    %458 = vector.load %arg12[%c1_206, %c0_207, %c0_208] : memref<2x16x128xf32, #tpu.memory_space<vmem>>, vector<1x16x128xf32>
    %459 = vector.shape_cast %458 : vector<1x16x128xf32> to vector<16x128xf32>
    %460 = arith.index_cast %455 : i32 to index
    %c0_209 = arith.constant 0 : index
    %c0_210 = arith.constant 0 : index
    %461 = vector.load %arg14[%460, %c0_209, %c0_210] : memref<8x16x512xf32, #tpu.memory_space<vmem>>, vector<1x16x512xf32>
    %462 = vector.shape_cast %461 : vector<1x16x512xf32> to vector<16x512xf32>
    %463 = arith.truncf %457 : vector<16x128xf32> to vector<16x128xbf16>
    %c1_211 = arith.constant 1 : index
    %c0_212 = arith.constant 0 : index
    %c0_213 = arith.constant 0 : index
    %464 = vector.load %arg7[%c1_211, %c0_212, %c0_213] : memref<2x128x512xbf16, #tpu.memory_space<vmem>>, vector<1x128x512xbf16>
    %465 = vector.shape_cast %464 : vector<1x128x512xbf16> to vector<128x512xbf16>
    %cst_214 = arith.constant dense<0.000000e+00> : vector<16x512xf32>
    %466 = tpu.matmul %463, %465, %cst_214 {dimension_numbers = #tpu.dot_dimension_numbers<[1], [0], [0], [1], [0, 0, 1, 1], [], []>} : vector<16x128xbf16>, vector<128x512xbf16>, vector<16x512xf32> -> vector<16x512xf32>
    %467 = arith.addf %462, %466 : vector<16x512xf32>
    %468 = vector.extract_strided_slice %467 {offsets = [0, 0], sizes = [16, 128], strides = [1, 1]} : vector<16x512xf32> to vector<16x128xf32>
    %469 = arith.negf %468 : vector<16x128xf32>
    %470 = math.exp %469 : vector<16x128xf32>
    %cst_215 = arith.constant 1.000000e+00 : f32
    %471 = vector.broadcast %cst_215 : f32 to vector<16x128xf32>
    %472 = arith.addf %471, %470 : vector<16x128xf32>
    %473 = arith.divf %471, %472 : vector<16x128xf32>
    %474 = vector.extract_strided_slice %467 {offsets = [0, 128], sizes = [16, 128], strides = [1, 1]} : vector<16x512xf32> to vector<16x128xf32>
    %475 = arith.negf %474 : vector<16x128xf32>
    %476 = math.exp %475 : vector<16x128xf32>
    %cst_216 = arith.constant 1.000000e+00 : f32
    %477 = vector.broadcast %cst_216 : f32 to vector<16x128xf32>
    %478 = arith.addf %477, %476 : vector<16x128xf32>
    %479 = arith.divf %477, %478 : vector<16x128xf32>
    %480 = vector.extract_strided_slice %467 {offsets = [0, 256], sizes = [16, 128], strides = [1, 1]} : vector<16x512xf32> to vector<16x128xf32>
    %481 = math.tanh %480 : vector<16x128xf32>
    %482 = vector.extract_strided_slice %467 {offsets = [0, 384], sizes = [16, 128], strides = [1, 1]} : vector<16x512xf32> to vector<16x128xf32>
    %483 = arith.negf %482 : vector<16x128xf32>
    %484 = math.exp %483 : vector<16x128xf32>
    %cst_217 = arith.constant 1.000000e+00 : f32
    %485 = vector.broadcast %cst_217 : f32 to vector<16x128xf32>
    %486 = arith.addf %485, %484 : vector<16x128xf32>
    %487 = arith.divf %485, %486 : vector<16x128xf32>
    %488 = arith.mulf %479, %459 : vector<16x128xf32>
    %489 = arith.mulf %473, %481 : vector<16x128xf32>
    %490 = arith.addf %488, %489 : vector<16x128xf32>
    %491 = math.tanh %490 : vector<16x128xf32>
    %492 = arith.mulf %487, %491 : vector<16x128xf32>
    %493 = arith.index_cast %455 : i32 to index
    %c0_218 = arith.constant 0 : index
    %c0_219 = arith.constant 0 : index
    %494 = vector.load %arg3[%493, %c0_218, %c0_219] : memref<8x16x1xf32, #tpu.memory_space<vmem>>, vector<1x16x1xf32>
    %495 = vector.shape_cast %494 : vector<1x16x1xf32> to vector<16x1xf32>
    %496 = arith.subf %492, %457 : vector<16x128xf32>
    %497 = vector.broadcast %495 : vector<16x1xf32> to vector<16x128xf32>
    %498 = arith.mulf %497, %496 : vector<16x128xf32>
    %499 = arith.addf %457, %498 : vector<16x128xf32>
    %c1_220 = arith.constant 1 : index
    %c0_221 = arith.constant 0 : index
    %c0_222 = arith.constant 0 : index
    %500 = vector.load %arg11[%c1_220, %c0_221, %c0_222] : memref<2x16x128xf32, #tpu.memory_space<vmem>>, vector<1x16x128xf32>
    %501 = vector.shape_cast %500 : vector<1x16x128xf32> to vector<16x128xf32>
    %502 = vector.shape_cast %499 : vector<16x128xf32> to vector<1x16x128xf32>
    tpu.vector_store %arg11[%c1_220, %c0_221, %c0_222], %502 {strides = array<i32>} : memref<2x16x128xf32, #tpu.memory_space<vmem>>, vector<1x16x128xf32>,
    %503 = arith.subf %490, %459 : vector<16x128xf32>
    %504 = vector.broadcast %495 : vector<16x1xf32> to vector<16x128xf32>
    %505 = arith.mulf %504, %503 : vector<16x128xf32>
    %506 = arith.addf %459, %505 : vector<16x128xf32>
    %c1_223 = arith.constant 1 : index
    %c0_224 = arith.constant 0 : index
    %c0_225 = arith.constant 0 : index
    %507 = vector.load %arg12[%c1_223, %c0_224, %c0_225] : memref<2x16x128xf32, #tpu.memory_space<vmem>>, vector<1x16x128xf32>
    %508 = vector.shape_cast %507 : vector<1x16x128xf32> to vector<16x128xf32>
    %509 = vector.shape_cast %506 : vector<16x128xf32> to vector<1x16x128xf32>
    tpu.vector_store %arg12[%c1_223, %c0_224, %c0_225], %509 {strides = array<i32>} : memref<2x16x128xf32, #tpu.memory_space<vmem>>, vector<1x16x128xf32>,
    %510 = vector.broadcast %495 : vector<16x1xf32> to vector<16x128xf32>
    %511 = arith.mulf %510, %492 : vector<16x128xf32>
    %512 = arith.truncf %511 : vector<16x128xf32> to vector<16x128xbf16>
    %513 = arith.index_cast %455 : i32 to index
    %c0_226 = arith.constant 0 : index
    %c0_227 = arith.constant 0 : index
    %514 = vector.load %arg10[%513, %c0_226, %c0_227] : memref<8x16x128xbf16, #tpu.memory_space<vmem>>, vector<1x16x128xbf16>
    %515 = vector.shape_cast %514 : vector<1x16x128xbf16> to vector<16x128xbf16>
    %516 = vector.shape_cast %512 : vector<16x128xbf16> to vector<1x16x128xbf16>
    tpu.vector_store %arg10[%513, %c0_226, %c0_227], %516 {strides = array<i32>} : memref<8x16x128xbf16, #tpu.memory_space<vmem>>, vector<1x16x128xbf16>,
    %c4_i32 = arith.constant 4 : i32
    %c0_228 = arith.constant 0 : index
    %c0_229 = arith.constant 0 : index
    %c0_230 = arith.constant 0 : index
    %517 = vector.load %arg11[%c0_228, %c0_229, %c0_230] : memref<2x16x128xf32, #tpu.memory_space<vmem>>, vector<1x16x128xf32>
    %518 = vector.shape_cast %517 : vector<1x16x128xf32> to vector<16x128xf32>
    %c0_231 = arith.constant 0 : index
    %c0_232 = arith.constant 0 : index
    %c0_233 = arith.constant 0 : index
    %519 = vector.load %arg12[%c0_231, %c0_232, %c0_233] : memref<2x16x128xf32, #tpu.memory_space<vmem>>, vector<1x16x128xf32>
    %520 = vector.shape_cast %519 : vector<1x16x128xf32> to vector<16x128xf32>
    %521 = arith.index_cast %c4_i32 : i32 to index
    %c0_234 = arith.constant 0 : index
    %c0_235 = arith.constant 0 : index
    %522 = vector.load %arg13[%521, %c0_234, %c0_235] : memref<8x16x512xf32, #tpu.memory_space<vmem>>, vector<1x16x512xf32>
    %523 = vector.shape_cast %522 : vector<1x16x512xf32> to vector<16x512xf32>
    %524 = arith.truncf %518 : vector<16x128xf32> to vector<16x128xbf16>
    %c0_236 = arith.constant 0 : index
    %c0_237 = arith.constant 0 : index
    %c0_238 = arith.constant 0 : index
    %525 = vector.load %arg7[%c0_236, %c0_237, %c0_238] : memref<2x128x512xbf16, #tpu.memory_space<vmem>>, vector<1x128x512xbf16>
    %526 = vector.shape_cast %525 : vector<1x128x512xbf16> to vector<128x512xbf16>
    %cst_239 = arith.constant dense<0.000000e+00> : vector<16x512xf32>
    %527 = tpu.matmul %524, %526, %cst_239 {dimension_numbers = #tpu.dot_dimension_numbers<[1], [0], [0], [1], [0, 0, 1, 1], [], []>} : vector<16x128xbf16>, vector<128x512xbf16>, vector<16x512xf32> -> vector<16x512xf32>
    %528 = arith.addf %523, %527 : vector<16x512xf32>
    %529 = vector.extract_strided_slice %528 {offsets = [0, 0], sizes = [16, 128], strides = [1, 1]} : vector<16x512xf32> to vector<16x128xf32>
    %530 = arith.negf %529 : vector<16x128xf32>
    %531 = math.exp %530 : vector<16x128xf32>
    %cst_240 = arith.constant 1.000000e+00 : f32
    %532 = vector.broadcast %cst_240 : f32 to vector<16x128xf32>
    %533 = arith.addf %532, %531 : vector<16x128xf32>
    %534 = arith.divf %532, %533 : vector<16x128xf32>
    %535 = vector.extract_strided_slice %528 {offsets = [0, 128], sizes = [16, 128], strides = [1, 1]} : vector<16x512xf32> to vector<16x128xf32>
    %536 = arith.negf %535 : vector<16x128xf32>
    %537 = math.exp %536 : vector<16x128xf32>
    %cst_241 = arith.constant 1.000000e+00 : f32
    %538 = vector.broadcast %cst_241 : f32 to vector<16x128xf32>
    %539 = arith.addf %538, %537 : vector<16x128xf32>
    %540 = arith.divf %538, %539 : vector<16x128xf32>
    %541 = vector.extract_strided_slice %528 {offsets = [0, 256], sizes = [16, 128], strides = [1, 1]} : vector<16x512xf32> to vector<16x128xf32>
    %542 = math.tanh %541 : vector<16x128xf32>
    %543 = vector.extract_strided_slice %528 {offsets = [0, 384], sizes = [16, 128], strides = [1, 1]} : vector<16x512xf32> to vector<16x128xf32>
    %544 = arith.negf %543 : vector<16x128xf32>
    %545 = math.exp %544 : vector<16x128xf32>
    %cst_242 = arith.constant 1.000000e+00 : f32
    %546 = vector.broadcast %cst_242 : f32 to vector<16x128xf32>
    %547 = arith.addf %546, %545 : vector<16x128xf32>
    %548 = arith.divf %546, %547 : vector<16x128xf32>
    %549 = arith.mulf %540, %520 : vector<16x128xf32>
    %550 = arith.mulf %534, %542 : vector<16x128xf32>
    %551 = arith.addf %549, %550 : vector<16x128xf32>
    %552 = math.tanh %551 : vector<16x128xf32>
    %553 = arith.mulf %548, %552 : vector<16x128xf32>
    %554 = arith.index_cast %c4_i32 : i32 to index
    %c0_243 = arith.constant 0 : index
    %c0_244 = arith.constant 0 : index
    %555 = vector.load %arg2[%554, %c0_243, %c0_244] : memref<8x16x1xf32, #tpu.memory_space<vmem>>, vector<1x16x1xf32>
    %556 = vector.shape_cast %555 : vector<1x16x1xf32> to vector<16x1xf32>
    %557 = arith.subf %553, %518 : vector<16x128xf32>
    %558 = vector.broadcast %556 : vector<16x1xf32> to vector<16x128xf32>
    %559 = arith.mulf %558, %557 : vector<16x128xf32>
    %560 = arith.addf %518, %559 : vector<16x128xf32>
    %c0_245 = arith.constant 0 : index
    %c0_246 = arith.constant 0 : index
    %c0_247 = arith.constant 0 : index
    %561 = vector.load %arg11[%c0_245, %c0_246, %c0_247] : memref<2x16x128xf32, #tpu.memory_space<vmem>>, vector<1x16x128xf32>
    %562 = vector.shape_cast %561 : vector<1x16x128xf32> to vector<16x128xf32>
    %563 = vector.shape_cast %560 : vector<16x128xf32> to vector<1x16x128xf32>
    tpu.vector_store %arg11[%c0_245, %c0_246, %c0_247], %563 {strides = array<i32>} : memref<2x16x128xf32, #tpu.memory_space<vmem>>, vector<1x16x128xf32>,
    %564 = arith.subf %551, %520 : vector<16x128xf32>
    %565 = vector.broadcast %556 : vector<16x1xf32> to vector<16x128xf32>
    %566 = arith.mulf %565, %564 : vector<16x128xf32>
    %567 = arith.addf %520, %566 : vector<16x128xf32>
    %c0_248 = arith.constant 0 : index
    %c0_249 = arith.constant 0 : index
    %c0_250 = arith.constant 0 : index
    %568 = vector.load %arg12[%c0_248, %c0_249, %c0_250] : memref<2x16x128xf32, #tpu.memory_space<vmem>>, vector<1x16x128xf32>
    %569 = vector.shape_cast %568 : vector<1x16x128xf32> to vector<16x128xf32>
    %570 = vector.shape_cast %567 : vector<16x128xf32> to vector<1x16x128xf32>
    tpu.vector_store %arg12[%c0_248, %c0_249, %c0_250], %570 {strides = array<i32>} : memref<2x16x128xf32, #tpu.memory_space<vmem>>, vector<1x16x128xf32>,
    %571 = vector.broadcast %556 : vector<16x1xf32> to vector<16x128xf32>
    %572 = arith.mulf %571, %553 : vector<16x128xf32>
    %573 = arith.truncf %572 : vector<16x128xf32> to vector<16x128xbf16>
    %574 = arith.index_cast %c4_i32 : i32 to index
    %c0_251 = arith.constant 0 : index
    %c0_252 = arith.constant 0 : index
    %575 = vector.load %arg9[%574, %c0_251, %c0_252] : memref<8x16x128xbf16, #tpu.memory_space<vmem>>, vector<1x16x128xbf16>
    %576 = vector.shape_cast %575 : vector<1x16x128xbf16> to vector<16x128xbf16>
    %577 = vector.shape_cast %573 : vector<16x128xbf16> to vector<1x16x128xbf16>
    tpu.vector_store %arg9[%574, %c0_251, %c0_252], %577 {strides = array<i32>} : memref<8x16x128xbf16, #tpu.memory_space<vmem>>, vector<1x16x128xbf16>,
    %c7_i32_253 = arith.constant 7 : i32
    %578 = arith.subi %c7_i32_253, %c4_i32 : i32
    %c1_254 = arith.constant 1 : index
    %c0_255 = arith.constant 0 : index
    %c0_256 = arith.constant 0 : index
    %579 = vector.load %arg11[%c1_254, %c0_255, %c0_256] : memref<2x16x128xf32, #tpu.memory_space<vmem>>, vector<1x16x128xf32>
    %580 = vector.shape_cast %579 : vector<1x16x128xf32> to vector<16x128xf32>
    %c1_257 = arith.constant 1 : index
    %c0_258 = arith.constant 0 : index
    %c0_259 = arith.constant 0 : index
    %581 = vector.load %arg12[%c1_257, %c0_258, %c0_259] : memref<2x16x128xf32, #tpu.memory_space<vmem>>, vector<1x16x128xf32>
    %582 = vector.shape_cast %581 : vector<1x16x128xf32> to vector<16x128xf32>
    %583 = arith.index_cast %578 : i32 to index
    %c0_260 = arith.constant 0 : index
    %c0_261 = arith.constant 0 : index
    %584 = vector.load %arg14[%583, %c0_260, %c0_261] : memref<8x16x512xf32, #tpu.memory_space<vmem>>, vector<1x16x512xf32>
    %585 = vector.shape_cast %584 : vector<1x16x512xf32> to vector<16x512xf32>
    %586 = arith.truncf %580 : vector<16x128xf32> to vector<16x128xbf16>
    %c1_262 = arith.constant 1 : index
    %c0_263 = arith.constant 0 : index
    %c0_264 = arith.constant 0 : index
    %587 = vector.load %arg7[%c1_262, %c0_263, %c0_264] : memref<2x128x512xbf16, #tpu.memory_space<vmem>>, vector<1x128x512xbf16>
    %588 = vector.shape_cast %587 : vector<1x128x512xbf16> to vector<128x512xbf16>
    %cst_265 = arith.constant dense<0.000000e+00> : vector<16x512xf32>
    %589 = tpu.matmul %586, %588, %cst_265 {dimension_numbers = #tpu.dot_dimension_numbers<[1], [0], [0], [1], [0, 0, 1, 1], [], []>} : vector<16x128xbf16>, vector<128x512xbf16>, vector<16x512xf32> -> vector<16x512xf32>
    %590 = arith.addf %585, %589 : vector<16x512xf32>
    %591 = vector.extract_strided_slice %590 {offsets = [0, 0], sizes = [16, 128], strides = [1, 1]} : vector<16x512xf32> to vector<16x128xf32>
    %592 = arith.negf %591 : vector<16x128xf32>
    %593 = math.exp %592 : vector<16x128xf32>
    %cst_266 = arith.constant 1.000000e+00 : f32
    %594 = vector.broadcast %cst_266 : f32 to vector<16x128xf32>
    %595 = arith.addf %594, %593 : vector<16x128xf32>
    %596 = arith.divf %594, %595 : vector<16x128xf32>
    %597 = vector.extract_strided_slice %590 {offsets = [0, 128], sizes = [16, 128], strides = [1, 1]} : vector<16x512xf32> to vector<16x128xf32>
    %598 = arith.negf %597 : vector<16x128xf32>
    %599 = math.exp %598 : vector<16x128xf32>
    %cst_267 = arith.constant 1.000000e+00 : f32
    %600 = vector.broadcast %cst_267 : f32 to vector<16x128xf32>
    %601 = arith.addf %600, %599 : vector<16x128xf32>
    %602 = arith.divf %600, %601 : vector<16x128xf32>
    %603 = vector.extract_strided_slice %590 {offsets = [0, 256], sizes = [16, 128], strides = [1, 1]} : vector<16x512xf32> to vector<16x128xf32>
    %604 = math.tanh %603 : vector<16x128xf32>
    %605 = vector.extract_strided_slice %590 {offsets = [0, 384], sizes = [16, 128], strides = [1, 1]} : vector<16x512xf32> to vector<16x128xf32>
    %606 = arith.negf %605 : vector<16x128xf32>
    %607 = math.exp %606 : vector<16x128xf32>
    %cst_268 = arith.constant 1.000000e+00 : f32
    %608 = vector.broadcast %cst_268 : f32 to vector<16x128xf32>
    %609 = arith.addf %608, %607 : vector<16x128xf32>
    %610 = arith.divf %608, %609 : vector<16x128xf32>
    %611 = arith.mulf %602, %582 : vector<16x128xf32>
    %612 = arith.mulf %596, %604 : vector<16x128xf32>
    %613 = arith.addf %611, %612 : vector<16x128xf32>
    %614 = math.tanh %613 : vector<16x128xf32>
    %615 = arith.mulf %610, %614 : vector<16x128xf32>
    %616 = arith.index_cast %578 : i32 to index
    %c0_269 = arith.constant 0 : index
    %c0_270 = arith.constant 0 : index
    %617 = vector.load %arg3[%616, %c0_269, %c0_270] : memref<8x16x1xf32, #tpu.memory_space<vmem>>, vector<1x16x1xf32>
    %618 = vector.shape_cast %617 : vector<1x16x1xf32> to vector<16x1xf32>
    %619 = arith.subf %615, %580 : vector<16x128xf32>
    %620 = vector.broadcast %618 : vector<16x1xf32> to vector<16x128xf32>
    %621 = arith.mulf %620, %619 : vector<16x128xf32>
    %622 = arith.addf %580, %621 : vector<16x128xf32>
    %c1_271 = arith.constant 1 : index
    %c0_272 = arith.constant 0 : index
    %c0_273 = arith.constant 0 : index
    %623 = vector.load %arg11[%c1_271, %c0_272, %c0_273] : memref<2x16x128xf32, #tpu.memory_space<vmem>>, vector<1x16x128xf32>
    %624 = vector.shape_cast %623 : vector<1x16x128xf32> to vector<16x128xf32>
    %625 = vector.shape_cast %622 : vector<16x128xf32> to vector<1x16x128xf32>
    tpu.vector_store %arg11[%c1_271, %c0_272, %c0_273], %625 {strides = array<i32>} : memref<2x16x128xf32, #tpu.memory_space<vmem>>, vector<1x16x128xf32>,
    %626 = arith.subf %613, %582 : vector<16x128xf32>
    %627 = vector.broadcast %618 : vector<16x1xf32> to vector<16x128xf32>
    %628 = arith.mulf %627, %626 : vector<16x128xf32>
    %629 = arith.addf %582, %628 : vector<16x128xf32>
    %c1_274 = arith.constant 1 : index
    %c0_275 = arith.constant 0 : index
    %c0_276 = arith.constant 0 : index
    %630 = vector.load %arg12[%c1_274, %c0_275, %c0_276] : memref<2x16x128xf32, #tpu.memory_space<vmem>>, vector<1x16x128xf32>
    %631 = vector.shape_cast %630 : vector<1x16x128xf32> to vector<16x128xf32>
    %632 = vector.shape_cast %629 : vector<16x128xf32> to vector<1x16x128xf32>
    tpu.vector_store %arg12[%c1_274, %c0_275, %c0_276], %632 {strides = array<i32>} : memref<2x16x128xf32, #tpu.memory_space<vmem>>, vector<1x16x128xf32>,
    %633 = vector.broadcast %618 : vector<16x1xf32> to vector<16x128xf32>
    %634 = arith.mulf %633, %615 : vector<16x128xf32>
    %635 = arith.truncf %634 : vector<16x128xf32> to vector<16x128xbf16>
    %636 = arith.index_cast %578 : i32 to index
    %c0_277 = arith.constant 0 : index
    %c0_278 = arith.constant 0 : index
    %637 = vector.load %arg10[%636, %c0_277, %c0_278] : memref<8x16x128xbf16, #tpu.memory_space<vmem>>, vector<1x16x128xbf16>
    %638 = vector.shape_cast %637 : vector<1x16x128xbf16> to vector<16x128xbf16>
    %639 = vector.shape_cast %635 : vector<16x128xbf16> to vector<1x16x128xbf16>
    tpu.vector_store %arg10[%636, %c0_277, %c0_278], %639 {strides = array<i32>} : memref<8x16x128xbf16, #tpu.memory_space<vmem>>, vector<1x16x128xbf16>,
    %c5_i32 = arith.constant 5 : i32
    %c0_279 = arith.constant 0 : index
    %c0_280 = arith.constant 0 : index
    %c0_281 = arith.constant 0 : index
    %640 = vector.load %arg11[%c0_279, %c0_280, %c0_281] : memref<2x16x128xf32, #tpu.memory_space<vmem>>, vector<1x16x128xf32>
    %641 = vector.shape_cast %640 : vector<1x16x128xf32> to vector<16x128xf32>
    %c0_282 = arith.constant 0 : index
    %c0_283 = arith.constant 0 : index
    %c0_284 = arith.constant 0 : index
    %642 = vector.load %arg12[%c0_282, %c0_283, %c0_284] : memref<2x16x128xf32, #tpu.memory_space<vmem>>, vector<1x16x128xf32>
    %643 = vector.shape_cast %642 : vector<1x16x128xf32> to vector<16x128xf32>
    %644 = arith.index_cast %c5_i32 : i32 to index
    %c0_285 = arith.constant 0 : index
    %c0_286 = arith.constant 0 : index
    %645 = vector.load %arg13[%644, %c0_285, %c0_286] : memref<8x16x512xf32, #tpu.memory_space<vmem>>, vector<1x16x512xf32>
    %646 = vector.shape_cast %645 : vector<1x16x512xf32> to vector<16x512xf32>
    %647 = arith.truncf %641 : vector<16x128xf32> to vector<16x128xbf16>
    %c0_287 = arith.constant 0 : index
    %c0_288 = arith.constant 0 : index
    %c0_289 = arith.constant 0 : index
    %648 = vector.load %arg7[%c0_287, %c0_288, %c0_289] : memref<2x128x512xbf16, #tpu.memory_space<vmem>>, vector<1x128x512xbf16>
    %649 = vector.shape_cast %648 : vector<1x128x512xbf16> to vector<128x512xbf16>
    %cst_290 = arith.constant dense<0.000000e+00> : vector<16x512xf32>
    %650 = tpu.matmul %647, %649, %cst_290 {dimension_numbers = #tpu.dot_dimension_numbers<[1], [0], [0], [1], [0, 0, 1, 1], [], []>} : vector<16x128xbf16>, vector<128x512xbf16>, vector<16x512xf32> -> vector<16x512xf32>
    %651 = arith.addf %646, %650 : vector<16x512xf32>
    %652 = vector.extract_strided_slice %651 {offsets = [0, 0], sizes = [16, 128], strides = [1, 1]} : vector<16x512xf32> to vector<16x128xf32>
    %653 = arith.negf %652 : vector<16x128xf32>
    %654 = math.exp %653 : vector<16x128xf32>
    %cst_291 = arith.constant 1.000000e+00 : f32
    %655 = vector.broadcast %cst_291 : f32 to vector<16x128xf32>
    %656 = arith.addf %655, %654 : vector<16x128xf32>
    %657 = arith.divf %655, %656 : vector<16x128xf32>
    %658 = vector.extract_strided_slice %651 {offsets = [0, 128], sizes = [16, 128], strides = [1, 1]} : vector<16x512xf32> to vector<16x128xf32>
    %659 = arith.negf %658 : vector<16x128xf32>
    %660 = math.exp %659 : vector<16x128xf32>
    %cst_292 = arith.constant 1.000000e+00 : f32
    %661 = vector.broadcast %cst_292 : f32 to vector<16x128xf32>
    %662 = arith.addf %661, %660 : vector<16x128xf32>
    %663 = arith.divf %661, %662 : vector<16x128xf32>
    %664 = vector.extract_strided_slice %651 {offsets = [0, 256], sizes = [16, 128], strides = [1, 1]} : vector<16x512xf32> to vector<16x128xf32>
    %665 = math.tanh %664 : vector<16x128xf32>
    %666 = vector.extract_strided_slice %651 {offsets = [0, 384], sizes = [16, 128], strides = [1, 1]} : vector<16x512xf32> to vector<16x128xf32>
    %667 = arith.negf %666 : vector<16x128xf32>
    %668 = math.exp %667 : vector<16x128xf32>
    %cst_293 = arith.constant 1.000000e+00 : f32
    %669 = vector.broadcast %cst_293 : f32 to vector<16x128xf32>
    %670 = arith.addf %669, %668 : vector<16x128xf32>
    %671 = arith.divf %669, %670 : vector<16x128xf32>
    %672 = arith.mulf %663, %643 : vector<16x128xf32>
    %673 = arith.mulf %657, %665 : vector<16x128xf32>
    %674 = arith.addf %672, %673 : vector<16x128xf32>
    %675 = math.tanh %674 : vector<16x128xf32>
    %676 = arith.mulf %671, %675 : vector<16x128xf32>
    %677 = arith.index_cast %c5_i32 : i32 to index
    %c0_294 = arith.constant 0 : index
    %c0_295 = arith.constant 0 : index
    %678 = vector.load %arg2[%677, %c0_294, %c0_295] : memref<8x16x1xf32, #tpu.memory_space<vmem>>, vector<1x16x1xf32>
    %679 = vector.shape_cast %678 : vector<1x16x1xf32> to vector<16x1xf32>
    %680 = arith.subf %676, %641 : vector<16x128xf32>
    %681 = vector.broadcast %679 : vector<16x1xf32> to vector<16x128xf32>
    %682 = arith.mulf %681, %680 : vector<16x128xf32>
    %683 = arith.addf %641, %682 : vector<16x128xf32>
    %c0_296 = arith.constant 0 : index
    %c0_297 = arith.constant 0 : index
    %c0_298 = arith.constant 0 : index
    %684 = vector.load %arg11[%c0_296, %c0_297, %c0_298] : memref<2x16x128xf32, #tpu.memory_space<vmem>>, vector<1x16x128xf32>
    %685 = vector.shape_cast %684 : vector<1x16x128xf32> to vector<16x128xf32>
    %686 = vector.shape_cast %683 : vector<16x128xf32> to vector<1x16x128xf32>
    tpu.vector_store %arg11[%c0_296, %c0_297, %c0_298], %686 {strides = array<i32>} : memref<2x16x128xf32, #tpu.memory_space<vmem>>, vector<1x16x128xf32>,
    %687 = arith.subf %674, %643 : vector<16x128xf32>
    %688 = vector.broadcast %679 : vector<16x1xf32> to vector<16x128xf32>
    %689 = arith.mulf %688, %687 : vector<16x128xf32>
    %690 = arith.addf %643, %689 : vector<16x128xf32>
    %c0_299 = arith.constant 0 : index
    %c0_300 = arith.constant 0 : index
    %c0_301 = arith.constant 0 : index
    %691 = vector.load %arg12[%c0_299, %c0_300, %c0_301] : memref<2x16x128xf32, #tpu.memory_space<vmem>>, vector<1x16x128xf32>
    %692 = vector.shape_cast %691 : vector<1x16x128xf32> to vector<16x128xf32>
    %693 = vector.shape_cast %690 : vector<16x128xf32> to vector<1x16x128xf32>
    tpu.vector_store %arg12[%c0_299, %c0_300, %c0_301], %693 {strides = array<i32>} : memref<2x16x128xf32, #tpu.memory_space<vmem>>, vector<1x16x128xf32>,
    %694 = vector.broadcast %679 : vector<16x1xf32> to vector<16x128xf32>
    %695 = arith.mulf %694, %676 : vector<16x128xf32>
    %696 = arith.truncf %695 : vector<16x128xf32> to vector<16x128xbf16>
    %697 = arith.index_cast %c5_i32 : i32 to index
    %c0_302 = arith.constant 0 : index
    %c0_303 = arith.constant 0 : index
    %698 = vector.load %arg9[%697, %c0_302, %c0_303] : memref<8x16x128xbf16, #tpu.memory_space<vmem>>, vector<1x16x128xbf16>
    %699 = vector.shape_cast %698 : vector<1x16x128xbf16> to vector<16x128xbf16>
    %700 = vector.shape_cast %696 : vector<16x128xbf16> to vector<1x16x128xbf16>
    tpu.vector_store %arg9[%697, %c0_302, %c0_303], %700 {strides = array<i32>} : memref<8x16x128xbf16, #tpu.memory_space<vmem>>, vector<1x16x128xbf16>,
    %c7_i32_304 = arith.constant 7 : i32
    %701 = arith.subi %c7_i32_304, %c5_i32 : i32
    %c1_305 = arith.constant 1 : index
    %c0_306 = arith.constant 0 : index
    %c0_307 = arith.constant 0 : index
    %702 = vector.load %arg11[%c1_305, %c0_306, %c0_307] : memref<2x16x128xf32, #tpu.memory_space<vmem>>, vector<1x16x128xf32>
    %703 = vector.shape_cast %702 : vector<1x16x128xf32> to vector<16x128xf32>
    %c1_308 = arith.constant 1 : index
    %c0_309 = arith.constant 0 : index
    %c0_310 = arith.constant 0 : index
    %704 = vector.load %arg12[%c1_308, %c0_309, %c0_310] : memref<2x16x128xf32, #tpu.memory_space<vmem>>, vector<1x16x128xf32>
    %705 = vector.shape_cast %704 : vector<1x16x128xf32> to vector<16x128xf32>
    %706 = arith.index_cast %701 : i32 to index
    %c0_311 = arith.constant 0 : index
    %c0_312 = arith.constant 0 : index
    %707 = vector.load %arg14[%706, %c0_311, %c0_312] : memref<8x16x512xf32, #tpu.memory_space<vmem>>, vector<1x16x512xf32>
    %708 = vector.shape_cast %707 : vector<1x16x512xf32> to vector<16x512xf32>
    %709 = arith.truncf %703 : vector<16x128xf32> to vector<16x128xbf16>
    %c1_313 = arith.constant 1 : index
    %c0_314 = arith.constant 0 : index
    %c0_315 = arith.constant 0 : index
    %710 = vector.load %arg7[%c1_313, %c0_314, %c0_315] : memref<2x128x512xbf16, #tpu.memory_space<vmem>>, vector<1x128x512xbf16>
    %711 = vector.shape_cast %710 : vector<1x128x512xbf16> to vector<128x512xbf16>
    %cst_316 = arith.constant dense<0.000000e+00> : vector<16x512xf32>
    %712 = tpu.matmul %709, %711, %cst_316 {dimension_numbers = #tpu.dot_dimension_numbers<[1], [0], [0], [1], [0, 0, 1, 1], [], []>} : vector<16x128xbf16>, vector<128x512xbf16>, vector<16x512xf32> -> vector<16x512xf32>
    %713 = arith.addf %708, %712 : vector<16x512xf32>
    %714 = vector.extract_strided_slice %713 {offsets = [0, 0], sizes = [16, 128], strides = [1, 1]} : vector<16x512xf32> to vector<16x128xf32>
    %715 = arith.negf %714 : vector<16x128xf32>
    %716 = math.exp %715 : vector<16x128xf32>
    %cst_317 = arith.constant 1.000000e+00 : f32
    %717 = vector.broadcast %cst_317 : f32 to vector<16x128xf32>
    %718 = arith.addf %717, %716 : vector<16x128xf32>
    %719 = arith.divf %717, %718 : vector<16x128xf32>
    %720 = vector.extract_strided_slice %713 {offsets = [0, 128], sizes = [16, 128], strides = [1, 1]} : vector<16x512xf32> to vector<16x128xf32>
    %721 = arith.negf %720 : vector<16x128xf32>
    %722 = math.exp %721 : vector<16x128xf32>
    %cst_318 = arith.constant 1.000000e+00 : f32
    %723 = vector.broadcast %cst_318 : f32 to vector<16x128xf32>
    %724 = arith.addf %723, %722 : vector<16x128xf32>
    %725 = arith.divf %723, %724 : vector<16x128xf32>
    %726 = vector.extract_strided_slice %713 {offsets = [0, 256], sizes = [16, 128], strides = [1, 1]} : vector<16x512xf32> to vector<16x128xf32>
    %727 = math.tanh %726 : vector<16x128xf32>
    %728 = vector.extract_strided_slice %713 {offsets = [0, 384], sizes = [16, 128], strides = [1, 1]} : vector<16x512xf32> to vector<16x128xf32>
    %729 = arith.negf %728 : vector<16x128xf32>
    %730 = math.exp %729 : vector<16x128xf32>
    %cst_319 = arith.constant 1.000000e+00 : f32
    %731 = vector.broadcast %cst_319 : f32 to vector<16x128xf32>
    %732 = arith.addf %731, %730 : vector<16x128xf32>
    %733 = arith.divf %731, %732 : vector<16x128xf32>
    %734 = arith.mulf %725, %705 : vector<16x128xf32>
    %735 = arith.mulf %719, %727 : vector<16x128xf32>
    %736 = arith.addf %734, %735 : vector<16x128xf32>
    %737 = math.tanh %736 : vector<16x128xf32>
    %738 = arith.mulf %733, %737 : vector<16x128xf32>
    %739 = arith.index_cast %701 : i32 to index
    %c0_320 = arith.constant 0 : index
    %c0_321 = arith.constant 0 : index
    %740 = vector.load %arg3[%739, %c0_320, %c0_321] : memref<8x16x1xf32, #tpu.memory_space<vmem>>, vector<1x16x1xf32>
    %741 = vector.shape_cast %740 : vector<1x16x1xf32> to vector<16x1xf32>
    %742 = arith.subf %738, %703 : vector<16x128xf32>
    %743 = vector.broadcast %741 : vector<16x1xf32> to vector<16x128xf32>
    %744 = arith.mulf %743, %742 : vector<16x128xf32>
    %745 = arith.addf %703, %744 : vector<16x128xf32>
    %c1_322 = arith.constant 1 : index
    %c0_323 = arith.constant 0 : index
    %c0_324 = arith.constant 0 : index
    %746 = vector.load %arg11[%c1_322, %c0_323, %c0_324] : memref<2x16x128xf32, #tpu.memory_space<vmem>>, vector<1x16x128xf32>
    %747 = vector.shape_cast %746 : vector<1x16x128xf32> to vector<16x128xf32>
    %748 = vector.shape_cast %745 : vector<16x128xf32> to vector<1x16x128xf32>
    tpu.vector_store %arg11[%c1_322, %c0_323, %c0_324], %748 {strides = array<i32>} : memref<2x16x128xf32, #tpu.memory_space<vmem>>, vector<1x16x128xf32>,
    %749 = arith.subf %736, %705 : vector<16x128xf32>
    %750 = vector.broadcast %741 : vector<16x1xf32> to vector<16x128xf32>
    %751 = arith.mulf %750, %749 : vector<16x128xf32>
    %752 = arith.addf %705, %751 : vector<16x128xf32>
    %c1_325 = arith.constant 1 : index
    %c0_326 = arith.constant 0 : index
    %c0_327 = arith.constant 0 : index
    %753 = vector.load %arg12[%c1_325, %c0_326, %c0_327] : memref<2x16x128xf32, #tpu.memory_space<vmem>>, vector<1x16x128xf32>
    %754 = vector.shape_cast %753 : vector<1x16x128xf32> to vector<16x128xf32>
    %755 = vector.shape_cast %752 : vector<16x128xf32> to vector<1x16x128xf32>
    tpu.vector_store %arg12[%c1_325, %c0_326, %c0_327], %755 {strides = array<i32>} : memref<2x16x128xf32, #tpu.memory_space<vmem>>, vector<1x16x128xf32>,
    %756 = vector.broadcast %741 : vector<16x1xf32> to vector<16x128xf32>
    %757 = arith.mulf %756, %738 : vector<16x128xf32>
    %758 = arith.truncf %757 : vector<16x128xf32> to vector<16x128xbf16>
    %759 = arith.index_cast %701 : i32 to index
    %c0_328 = arith.constant 0 : index
    %c0_329 = arith.constant 0 : index
    %760 = vector.load %arg10[%759, %c0_328, %c0_329] : memref<8x16x128xbf16, #tpu.memory_space<vmem>>, vector<1x16x128xbf16>
    %761 = vector.shape_cast %760 : vector<1x16x128xbf16> to vector<16x128xbf16>
    %762 = vector.shape_cast %758 : vector<16x128xbf16> to vector<1x16x128xbf16>
    tpu.vector_store %arg10[%759, %c0_328, %c0_329], %762 {strides = array<i32>} : memref<8x16x128xbf16, #tpu.memory_space<vmem>>, vector<1x16x128xbf16>,
    %c6_i32 = arith.constant 6 : i32
    %c0_330 = arith.constant 0 : index
    %c0_331 = arith.constant 0 : index
    %c0_332 = arith.constant 0 : index
    %763 = vector.load %arg11[%c0_330, %c0_331, %c0_332] : memref<2x16x128xf32, #tpu.memory_space<vmem>>, vector<1x16x128xf32>
    %764 = vector.shape_cast %763 : vector<1x16x128xf32> to vector<16x128xf32>
    %c0_333 = arith.constant 0 : index
    %c0_334 = arith.constant 0 : index
    %c0_335 = arith.constant 0 : index
    %765 = vector.load %arg12[%c0_333, %c0_334, %c0_335] : memref<2x16x128xf32, #tpu.memory_space<vmem>>, vector<1x16x128xf32>
    %766 = vector.shape_cast %765 : vector<1x16x128xf32> to vector<16x128xf32>
    %767 = arith.index_cast %c6_i32 : i32 to index
    %c0_336 = arith.constant 0 : index
    %c0_337 = arith.constant 0 : index
    %768 = vector.load %arg13[%767, %c0_336, %c0_337] : memref<8x16x512xf32, #tpu.memory_space<vmem>>, vector<1x16x512xf32>
    %769 = vector.shape_cast %768 : vector<1x16x512xf32> to vector<16x512xf32>
    %770 = arith.truncf %764 : vector<16x128xf32> to vector<16x128xbf16>
    %c0_338 = arith.constant 0 : index
    %c0_339 = arith.constant 0 : index
    %c0_340 = arith.constant 0 : index
    %771 = vector.load %arg7[%c0_338, %c0_339, %c0_340] : memref<2x128x512xbf16, #tpu.memory_space<vmem>>, vector<1x128x512xbf16>
    %772 = vector.shape_cast %771 : vector<1x128x512xbf16> to vector<128x512xbf16>
    %cst_341 = arith.constant dense<0.000000e+00> : vector<16x512xf32>
    %773 = tpu.matmul %770, %772, %cst_341 {dimension_numbers = #tpu.dot_dimension_numbers<[1], [0], [0], [1], [0, 0, 1, 1], [], []>} : vector<16x128xbf16>, vector<128x512xbf16>, vector<16x512xf32> -> vector<16x512xf32>
    %774 = arith.addf %769, %773 : vector<16x512xf32>
    %775 = vector.extract_strided_slice %774 {offsets = [0, 0], sizes = [16, 128], strides = [1, 1]} : vector<16x512xf32> to vector<16x128xf32>
    %776 = arith.negf %775 : vector<16x128xf32>
    %777 = math.exp %776 : vector<16x128xf32>
    %cst_342 = arith.constant 1.000000e+00 : f32
    %778 = vector.broadcast %cst_342 : f32 to vector<16x128xf32>
    %779 = arith.addf %778, %777 : vector<16x128xf32>
    %780 = arith.divf %778, %779 : vector<16x128xf32>
    %781 = vector.extract_strided_slice %774 {offsets = [0, 128], sizes = [16, 128], strides = [1, 1]} : vector<16x512xf32> to vector<16x128xf32>
    %782 = arith.negf %781 : vector<16x128xf32>
    %783 = math.exp %782 : vector<16x128xf32>
    %cst_343 = arith.constant 1.000000e+00 : f32
    %784 = vector.broadcast %cst_343 : f32 to vector<16x128xf32>
    %785 = arith.addf %784, %783 : vector<16x128xf32>
    %786 = arith.divf %784, %785 : vector<16x128xf32>
    %787 = vector.extract_strided_slice %774 {offsets = [0, 256], sizes = [16, 128], strides = [1, 1]} : vector<16x512xf32> to vector<16x128xf32>
    %788 = math.tanh %787 : vector<16x128xf32>
    %789 = vector.extract_strided_slice %774 {offsets = [0, 384], sizes = [16, 128], strides = [1, 1]} : vector<16x512xf32> to vector<16x128xf32>
    %790 = arith.negf %789 : vector<16x128xf32>
    %791 = math.exp %790 : vector<16x128xf32>
    %cst_344 = arith.constant 1.000000e+00 : f32
    %792 = vector.broadcast %cst_344 : f32 to vector<16x128xf32>
    %793 = arith.addf %792, %791 : vector<16x128xf32>
    %794 = arith.divf %792, %793 : vector<16x128xf32>
    %795 = arith.mulf %786, %766 : vector<16x128xf32>
    %796 = arith.mulf %780, %788 : vector<16x128xf32>
    %797 = arith.addf %795, %796 : vector<16x128xf32>
    %798 = math.tanh %797 : vector<16x128xf32>
    %799 = arith.mulf %794, %798 : vector<16x128xf32>
    %800 = arith.index_cast %c6_i32 : i32 to index
    %c0_345 = arith.constant 0 : index
    %c0_346 = arith.constant 0 : index
    %801 = vector.load %arg2[%800, %c0_345, %c0_346] : memref<8x16x1xf32, #tpu.memory_space<vmem>>, vector<1x16x1xf32>
    %802 = vector.shape_cast %801 : vector<1x16x1xf32> to vector<16x1xf32>
    %803 = arith.subf %799, %764 : vector<16x128xf32>
    %804 = vector.broadcast %802 : vector<16x1xf32> to vector<16x128xf32>
    %805 = arith.mulf %804, %803 : vector<16x128xf32>
    %806 = arith.addf %764, %805 : vector<16x128xf32>
    %c0_347 = arith.constant 0 : index
    %c0_348 = arith.constant 0 : index
    %c0_349 = arith.constant 0 : index
    %807 = vector.load %arg11[%c0_347, %c0_348, %c0_349] : memref<2x16x128xf32, #tpu.memory_space<vmem>>, vector<1x16x128xf32>
    %808 = vector.shape_cast %807 : vector<1x16x128xf32> to vector<16x128xf32>
    %809 = vector.shape_cast %806 : vector<16x128xf32> to vector<1x16x128xf32>
    tpu.vector_store %arg11[%c0_347, %c0_348, %c0_349], %809 {strides = array<i32>} : memref<2x16x128xf32, #tpu.memory_space<vmem>>, vector<1x16x128xf32>,
    %810 = arith.subf %797, %766 : vector<16x128xf32>
    %811 = vector.broadcast %802 : vector<16x1xf32> to vector<16x128xf32>
    %812 = arith.mulf %811, %810 : vector<16x128xf32>
    %813 = arith.addf %766, %812 : vector<16x128xf32>
    %c0_350 = arith.constant 0 : index
    %c0_351 = arith.constant 0 : index
    %c0_352 = arith.constant 0 : index
    %814 = vector.load %arg12[%c0_350, %c0_351, %c0_352] : memref<2x16x128xf32, #tpu.memory_space<vmem>>, vector<1x16x128xf32>
    %815 = vector.shape_cast %814 : vector<1x16x128xf32> to vector<16x128xf32>
    %816 = vector.shape_cast %813 : vector<16x128xf32> to vector<1x16x128xf32>
    tpu.vector_store %arg12[%c0_350, %c0_351, %c0_352], %816 {strides = array<i32>} : memref<2x16x128xf32, #tpu.memory_space<vmem>>, vector<1x16x128xf32>,
    %817 = vector.broadcast %802 : vector<16x1xf32> to vector<16x128xf32>
    %818 = arith.mulf %817, %799 : vector<16x128xf32>
    %819 = arith.truncf %818 : vector<16x128xf32> to vector<16x128xbf16>
    %820 = arith.index_cast %c6_i32 : i32 to index
    %c0_353 = arith.constant 0 : index
    %c0_354 = arith.constant 0 : index
    %821 = vector.load %arg9[%820, %c0_353, %c0_354] : memref<8x16x128xbf16, #tpu.memory_space<vmem>>, vector<1x16x128xbf16>
    %822 = vector.shape_cast %821 : vector<1x16x128xbf16> to vector<16x128xbf16>
    %823 = vector.shape_cast %819 : vector<16x128xbf16> to vector<1x16x128xbf16>
    tpu.vector_store %arg9[%820, %c0_353, %c0_354], %823 {strides = array<i32>} : memref<8x16x128xbf16, #tpu.memory_space<vmem>>, vector<1x16x128xbf16>,
    %c7_i32_355 = arith.constant 7 : i32
    %824 = arith.subi %c7_i32_355, %c6_i32 : i32
    %c1_356 = arith.constant 1 : index
    %c0_357 = arith.constant 0 : index
    %c0_358 = arith.constant 0 : index
    %825 = vector.load %arg11[%c1_356, %c0_357, %c0_358] : memref<2x16x128xf32, #tpu.memory_space<vmem>>, vector<1x16x128xf32>
    %826 = vector.shape_cast %825 : vector<1x16x128xf32> to vector<16x128xf32>
    %c1_359 = arith.constant 1 : index
    %c0_360 = arith.constant 0 : index
    %c0_361 = arith.constant 0 : index
    %827 = vector.load %arg12[%c1_359, %c0_360, %c0_361] : memref<2x16x128xf32, #tpu.memory_space<vmem>>, vector<1x16x128xf32>
    %828 = vector.shape_cast %827 : vector<1x16x128xf32> to vector<16x128xf32>
    %829 = arith.index_cast %824 : i32 to index
    %c0_362 = arith.constant 0 : index
    %c0_363 = arith.constant 0 : index
    %830 = vector.load %arg14[%829, %c0_362, %c0_363] : memref<8x16x512xf32, #tpu.memory_space<vmem>>, vector<1x16x512xf32>
    %831 = vector.shape_cast %830 : vector<1x16x512xf32> to vector<16x512xf32>
    %832 = arith.truncf %826 : vector<16x128xf32> to vector<16x128xbf16>
    %c1_364 = arith.constant 1 : index
    %c0_365 = arith.constant 0 : index
    %c0_366 = arith.constant 0 : index
    %833 = vector.load %arg7[%c1_364, %c0_365, %c0_366] : memref<2x128x512xbf16, #tpu.memory_space<vmem>>, vector<1x128x512xbf16>
    %834 = vector.shape_cast %833 : vector<1x128x512xbf16> to vector<128x512xbf16>
    %cst_367 = arith.constant dense<0.000000e+00> : vector<16x512xf32>
    %835 = tpu.matmul %832, %834, %cst_367 {dimension_numbers = #tpu.dot_dimension_numbers<[1], [0], [0], [1], [0, 0, 1, 1], [], []>} : vector<16x128xbf16>, vector<128x512xbf16>, vector<16x512xf32> -> vector<16x512xf32>
    %836 = arith.addf %831, %835 : vector<16x512xf32>
    %837 = vector.extract_strided_slice %836 {offsets = [0, 0], sizes = [16, 128], strides = [1, 1]} : vector<16x512xf32> to vector<16x128xf32>
    %838 = arith.negf %837 : vector<16x128xf32>
    %839 = math.exp %838 : vector<16x128xf32>
    %cst_368 = arith.constant 1.000000e+00 : f32
    %840 = vector.broadcast %cst_368 : f32 to vector<16x128xf32>
    %841 = arith.addf %840, %839 : vector<16x128xf32>
    %842 = arith.divf %840, %841 : vector<16x128xf32>
    %843 = vector.extract_strided_slice %836 {offsets = [0, 128], sizes = [16, 128], strides = [1, 1]} : vector<16x512xf32> to vector<16x128xf32>
    %844 = arith.negf %843 : vector<16x128xf32>
    %845 = math.exp %844 : vector<16x128xf32>
    %cst_369 = arith.constant 1.000000e+00 : f32
    %846 = vector.broadcast %cst_369 : f32 to vector<16x128xf32>
    %847 = arith.addf %846, %845 : vector<16x128xf32>
    %848 = arith.divf %846, %847 : vector<16x128xf32>
    %849 = vector.extract_strided_slice %836 {offsets = [0, 256], sizes = [16, 128], strides = [1, 1]} : vector<16x512xf32> to vector<16x128xf32>
    %850 = math.tanh %849 : vector<16x128xf32>
    %851 = vector.extract_strided_slice %836 {offsets = [0, 384], sizes = [16, 128], strides = [1, 1]} : vector<16x512xf32> to vector<16x128xf32>
    %852 = arith.negf %851 : vector<16x128xf32>
    %853 = math.exp %852 : vector<16x128xf32>
    %cst_370 = arith.constant 1.000000e+00 : f32
    %854 = vector.broadcast %cst_370 : f32 to vector<16x128xf32>
    %855 = arith.addf %854, %853 : vector<16x128xf32>
    %856 = arith.divf %854, %855 : vector<16x128xf32>
    %857 = arith.mulf %848, %828 : vector<16x128xf32>
    %858 = arith.mulf %842, %850 : vector<16x128xf32>
    %859 = arith.addf %857, %858 : vector<16x128xf32>
    %860 = math.tanh %859 : vector<16x128xf32>
    %861 = arith.mulf %856, %860 : vector<16x128xf32>
    %862 = arith.index_cast %824 : i32 to index
    %c0_371 = arith.constant 0 : index
    %c0_372 = arith.constant 0 : index
    %863 = vector.load %arg3[%862, %c0_371, %c0_372] : memref<8x16x1xf32, #tpu.memory_space<vmem>>, vector<1x16x1xf32>
    %864 = vector.shape_cast %863 : vector<1x16x1xf32> to vector<16x1xf32>
    %865 = arith.subf %861, %826 : vector<16x128xf32>
    %866 = vector.broadcast %864 : vector<16x1xf32> to vector<16x128xf32>
    %867 = arith.mulf %866, %865 : vector<16x128xf32>
    %868 = arith.addf %826, %867 : vector<16x128xf32>
    %c1_373 = arith.constant 1 : index
    %c0_374 = arith.constant 0 : index
    %c0_375 = arith.constant 0 : index
    %869 = vector.load %arg11[%c1_373, %c0_374, %c0_375] : memref<2x16x128xf32, #tpu.memory_space<vmem>>, vector<1x16x128xf32>
    %870 = vector.shape_cast %869 : vector<1x16x128xf32> to vector<16x128xf32>
    %871 = vector.shape_cast %868 : vector<16x128xf32> to vector<1x16x128xf32>
    tpu.vector_store %arg11[%c1_373, %c0_374, %c0_375], %871 {strides = array<i32>} : memref<2x16x128xf32, #tpu.memory_space<vmem>>, vector<1x16x128xf32>,
    %872 = arith.subf %859, %828 : vector<16x128xf32>
    %873 = vector.broadcast %864 : vector<16x1xf32> to vector<16x128xf32>
    %874 = arith.mulf %873, %872 : vector<16x128xf32>
    %875 = arith.addf %828, %874 : vector<16x128xf32>
    %c1_376 = arith.constant 1 : index
    %c0_377 = arith.constant 0 : index
    %c0_378 = arith.constant 0 : index
    %876 = vector.load %arg12[%c1_376, %c0_377, %c0_378] : memref<2x16x128xf32, #tpu.memory_space<vmem>>, vector<1x16x128xf32>
    %877 = vector.shape_cast %876 : vector<1x16x128xf32> to vector<16x128xf32>
    %878 = vector.shape_cast %875 : vector<16x128xf32> to vector<1x16x128xf32>
    tpu.vector_store %arg12[%c1_376, %c0_377, %c0_378], %878 {strides = array<i32>} : memref<2x16x128xf32, #tpu.memory_space<vmem>>, vector<1x16x128xf32>,
    %879 = vector.broadcast %864 : vector<16x1xf32> to vector<16x128xf32>
    %880 = arith.mulf %879, %861 : vector<16x128xf32>
    %881 = arith.truncf %880 : vector<16x128xf32> to vector<16x128xbf16>
    %882 = arith.index_cast %824 : i32 to index
    %c0_379 = arith.constant 0 : index
    %c0_380 = arith.constant 0 : index
    %883 = vector.load %arg10[%882, %c0_379, %c0_380] : memref<8x16x128xbf16, #tpu.memory_space<vmem>>, vector<1x16x128xbf16>
    %884 = vector.shape_cast %883 : vector<1x16x128xbf16> to vector<16x128xbf16>
    %885 = vector.shape_cast %881 : vector<16x128xbf16> to vector<1x16x128xbf16>
    tpu.vector_store %arg10[%882, %c0_379, %c0_380], %885 {strides = array<i32>} : memref<8x16x128xbf16, #tpu.memory_space<vmem>>, vector<1x16x128xbf16>,
    %c7_i32_381 = arith.constant 7 : i32
    %c0_382 = arith.constant 0 : index
    %c0_383 = arith.constant 0 : index
    %c0_384 = arith.constant 0 : index
    %886 = vector.load %arg11[%c0_382, %c0_383, %c0_384] : memref<2x16x128xf32, #tpu.memory_space<vmem>>, vector<1x16x128xf32>
    %887 = vector.shape_cast %886 : vector<1x16x128xf32> to vector<16x128xf32>
    %c0_385 = arith.constant 0 : index
    %c0_386 = arith.constant 0 : index
    %c0_387 = arith.constant 0 : index
    %888 = vector.load %arg12[%c0_385, %c0_386, %c0_387] : memref<2x16x128xf32, #tpu.memory_space<vmem>>, vector<1x16x128xf32>
    %889 = vector.shape_cast %888 : vector<1x16x128xf32> to vector<16x128xf32>
    %890 = arith.index_cast %c7_i32_381 : i32 to index
    %c0_388 = arith.constant 0 : index
    %c0_389 = arith.constant 0 : index
    %891 = vector.load %arg13[%890, %c0_388, %c0_389] : memref<8x16x512xf32, #tpu.memory_space<vmem>>, vector<1x16x512xf32>
    %892 = vector.shape_cast %891 : vector<1x16x512xf32> to vector<16x512xf32>
    %893 = arith.truncf %887 : vector<16x128xf32> to vector<16x128xbf16>
    %c0_390 = arith.constant 0 : index
    %c0_391 = arith.constant 0 : index
    %c0_392 = arith.constant 0 : index
    %894 = vector.load %arg7[%c0_390, %c0_391, %c0_392] : memref<2x128x512xbf16, #tpu.memory_space<vmem>>, vector<1x128x512xbf16>
    %895 = vector.shape_cast %894 : vector<1x128x512xbf16> to vector<128x512xbf16>
    %cst_393 = arith.constant dense<0.000000e+00> : vector<16x512xf32>
    %896 = tpu.matmul %893, %895, %cst_393 {dimension_numbers = #tpu.dot_dimension_numbers<[1], [0], [0], [1], [0, 0, 1, 1], [], []>} : vector<16x128xbf16>, vector<128x512xbf16>, vector<16x512xf32> -> vector<16x512xf32>
    %897 = arith.addf %892, %896 : vector<16x512xf32>
    %898 = vector.extract_strided_slice %897 {offsets = [0, 0], sizes = [16, 128], strides = [1, 1]} : vector<16x512xf32> to vector<16x128xf32>
    %899 = arith.negf %898 : vector<16x128xf32>
    %900 = math.exp %899 : vector<16x128xf32>
    %cst_394 = arith.constant 1.000000e+00 : f32
    %901 = vector.broadcast %cst_394 : f32 to vector<16x128xf32>
    %902 = arith.addf %901, %900 : vector<16x128xf32>
    %903 = arith.divf %901, %902 : vector<16x128xf32>
    %904 = vector.extract_strided_slice %897 {offsets = [0, 128], sizes = [16, 128], strides = [1, 1]} : vector<16x512xf32> to vector<16x128xf32>
    %905 = arith.negf %904 : vector<16x128xf32>
    %906 = math.exp %905 : vector<16x128xf32>
    %cst_395 = arith.constant 1.000000e+00 : f32
    %907 = vector.broadcast %cst_395 : f32 to vector<16x128xf32>
    %908 = arith.addf %907, %906 : vector<16x128xf32>
    %909 = arith.divf %907, %908 : vector<16x128xf32>
    %910 = vector.extract_strided_slice %897 {offsets = [0, 256], sizes = [16, 128], strides = [1, 1]} : vector<16x512xf32> to vector<16x128xf32>
    %911 = math.tanh %910 : vector<16x128xf32>
    %912 = vector.extract_strided_slice %897 {offsets = [0, 384], sizes = [16, 128], strides = [1, 1]} : vector<16x512xf32> to vector<16x128xf32>
    %913 = arith.negf %912 : vector<16x128xf32>
    %914 = math.exp %913 : vector<16x128xf32>
    %cst_396 = arith.constant 1.000000e+00 : f32
    %915 = vector.broadcast %cst_396 : f32 to vector<16x128xf32>
    %916 = arith.addf %915, %914 : vector<16x128xf32>
    %917 = arith.divf %915, %916 : vector<16x128xf32>
    %918 = arith.mulf %909, %889 : vector<16x128xf32>
    %919 = arith.mulf %903, %911 : vector<16x128xf32>
    %920 = arith.addf %918, %919 : vector<16x128xf32>
    %921 = math.tanh %920 : vector<16x128xf32>
    %922 = arith.mulf %917, %921 : vector<16x128xf32>
    %923 = arith.index_cast %c7_i32_381 : i32 to index
    %c0_397 = arith.constant 0 : index
    %c0_398 = arith.constant 0 : index
    %924 = vector.load %arg2[%923, %c0_397, %c0_398] : memref<8x16x1xf32, #tpu.memory_space<vmem>>, vector<1x16x1xf32>
    %925 = vector.shape_cast %924 : vector<1x16x1xf32> to vector<16x1xf32>
    %926 = arith.subf %922, %887 : vector<16x128xf32>
    %927 = vector.broadcast %925 : vector<16x1xf32> to vector<16x128xf32>
    %928 = arith.mulf %927, %926 : vector<16x128xf32>
    %929 = arith.addf %887, %928 : vector<16x128xf32>
    %c0_399 = arith.constant 0 : index
    %c0_400 = arith.constant 0 : index
    %c0_401 = arith.constant 0 : index
    %930 = vector.load %arg11[%c0_399, %c0_400, %c0_401] : memref<2x16x128xf32, #tpu.memory_space<vmem>>, vector<1x16x128xf32>
    %931 = vector.shape_cast %930 : vector<1x16x128xf32> to vector<16x128xf32>
    %932 = vector.shape_cast %929 : vector<16x128xf32> to vector<1x16x128xf32>
    tpu.vector_store %arg11[%c0_399, %c0_400, %c0_401], %932 {strides = array<i32>} : memref<2x16x128xf32, #tpu.memory_space<vmem>>, vector<1x16x128xf32>,
    %933 = arith.subf %920, %889 : vector<16x128xf32>
    %934 = vector.broadcast %925 : vector<16x1xf32> to vector<16x128xf32>
    %935 = arith.mulf %934, %933 : vector<16x128xf32>
    %936 = arith.addf %889, %935 : vector<16x128xf32>
    %c0_402 = arith.constant 0 : index
    %c0_403 = arith.constant 0 : index
    %c0_404 = arith.constant 0 : index
    %937 = vector.load %arg12[%c0_402, %c0_403, %c0_404] : memref<2x16x128xf32, #tpu.memory_space<vmem>>, vector<1x16x128xf32>
    %938 = vector.shape_cast %937 : vector<1x16x128xf32> to vector<16x128xf32>
    %939 = vector.shape_cast %936 : vector<16x128xf32> to vector<1x16x128xf32>
    tpu.vector_store %arg12[%c0_402, %c0_403, %c0_404], %939 {strides = array<i32>} : memref<2x16x128xf32, #tpu.memory_space<vmem>>, vector<1x16x128xf32>,
    %940 = vector.broadcast %925 : vector<16x1xf32> to vector<16x128xf32>
    %941 = arith.mulf %940, %922 : vector<16x128xf32>
    %942 = arith.truncf %941 : vector<16x128xf32> to vector<16x128xbf16>
    %943 = arith.index_cast %c7_i32_381 : i32 to index
    %c0_405 = arith.constant 0 : index
    %c0_406 = arith.constant 0 : index
    %944 = vector.load %arg9[%943, %c0_405, %c0_406] : memref<8x16x128xbf16, #tpu.memory_space<vmem>>, vector<1x16x128xbf16>
    %945 = vector.shape_cast %944 : vector<1x16x128xbf16> to vector<16x128xbf16>
    %946 = vector.shape_cast %942 : vector<16x128xbf16> to vector<1x16x128xbf16>
    tpu.vector_store %arg9[%943, %c0_405, %c0_406], %946 {strides = array<i32>} : memref<8x16x128xbf16, #tpu.memory_space<vmem>>, vector<1x16x128xbf16>,
    %c7_i32_407 = arith.constant 7 : i32
    %947 = arith.subi %c7_i32_407, %c7_i32_381 : i32
    %c1_408 = arith.constant 1 : index
    %c0_409 = arith.constant 0 : index
    %c0_410 = arith.constant 0 : index
    %948 = vector.load %arg11[%c1_408, %c0_409, %c0_410] : memref<2x16x128xf32, #tpu.memory_space<vmem>>, vector<1x16x128xf32>
    %949 = vector.shape_cast %948 : vector<1x16x128xf32> to vector<16x128xf32>
    %c1_411 = arith.constant 1 : index
    %c0_412 = arith.constant 0 : index
    %c0_413 = arith.constant 0 : index
    %950 = vector.load %arg12[%c1_411, %c0_412, %c0_413] : memref<2x16x128xf32, #tpu.memory_space<vmem>>, vector<1x16x128xf32>
    %951 = vector.shape_cast %950 : vector<1x16x128xf32> to vector<16x128xf32>
    %952 = arith.index_cast %947 : i32 to index
    %c0_414 = arith.constant 0 : index
    %c0_415 = arith.constant 0 : index
    %953 = vector.load %arg14[%952, %c0_414, %c0_415] : memref<8x16x512xf32, #tpu.memory_space<vmem>>, vector<1x16x512xf32>
    %954 = vector.shape_cast %953 : vector<1x16x512xf32> to vector<16x512xf32>
    %955 = arith.truncf %949 : vector<16x128xf32> to vector<16x128xbf16>
    %c1_416 = arith.constant 1 : index
    %c0_417 = arith.constant 0 : index
    %c0_418 = arith.constant 0 : index
    %956 = vector.load %arg7[%c1_416, %c0_417, %c0_418] : memref<2x128x512xbf16, #tpu.memory_space<vmem>>, vector<1x128x512xbf16>
    %957 = vector.shape_cast %956 : vector<1x128x512xbf16> to vector<128x512xbf16>
    %cst_419 = arith.constant dense<0.000000e+00> : vector<16x512xf32>
    %958 = tpu.matmul %955, %957, %cst_419 {dimension_numbers = #tpu.dot_dimension_numbers<[1], [0], [0], [1], [0, 0, 1, 1], [], []>} : vector<16x128xbf16>, vector<128x512xbf16>, vector<16x512xf32> -> vector<16x512xf32>
    %959 = arith.addf %954, %958 : vector<16x512xf32>
    %960 = vector.extract_strided_slice %959 {offsets = [0, 0], sizes = [16, 128], strides = [1, 1]} : vector<16x512xf32> to vector<16x128xf32>
    %961 = arith.negf %960 : vector<16x128xf32>
    %962 = math.exp %961 : vector<16x128xf32>
    %cst_420 = arith.constant 1.000000e+00 : f32
    %963 = vector.broadcast %cst_420 : f32 to vector<16x128xf32>
    %964 = arith.addf %963, %962 : vector<16x128xf32>
    %965 = arith.divf %963, %964 : vector<16x128xf32>
    %966 = vector.extract_strided_slice %959 {offsets = [0, 128], sizes = [16, 128], strides = [1, 1]} : vector<16x512xf32> to vector<16x128xf32>
    %967 = arith.negf %966 : vector<16x128xf32>
    %968 = math.exp %967 : vector<16x128xf32>
    %cst_421 = arith.constant 1.000000e+00 : f32
    %969 = vector.broadcast %cst_421 : f32 to vector<16x128xf32>
    %970 = arith.addf %969, %968 : vector<16x128xf32>
    %971 = arith.divf %969, %970 : vector<16x128xf32>
    %972 = vector.extract_strided_slice %959 {offsets = [0, 256], sizes = [16, 128], strides = [1, 1]} : vector<16x512xf32> to vector<16x128xf32>
    %973 = math.tanh %972 : vector<16x128xf32>
    %974 = vector.extract_strided_slice %959 {offsets = [0, 384], sizes = [16, 128], strides = [1, 1]} : vector<16x512xf32> to vector<16x128xf32>
    %975 = arith.negf %974 : vector<16x128xf32>
    %976 = math.exp %975 : vector<16x128xf32>
    %cst_422 = arith.constant 1.000000e+00 : f32
    %977 = vector.broadcast %cst_422 : f32 to vector<16x128xf32>
    %978 = arith.addf %977, %976 : vector<16x128xf32>
    %979 = arith.divf %977, %978 : vector<16x128xf32>
    %980 = arith.mulf %971, %951 : vector<16x128xf32>
    %981 = arith.mulf %965, %973 : vector<16x128xf32>
    %982 = arith.addf %980, %981 : vector<16x128xf32>
    %983 = math.tanh %982 : vector<16x128xf32>
    %984 = arith.mulf %979, %983 : vector<16x128xf32>
    %985 = arith.index_cast %947 : i32 to index
    %c0_423 = arith.constant 0 : index
    %c0_424 = arith.constant 0 : index
    %986 = vector.load %arg3[%985, %c0_423, %c0_424] : memref<8x16x1xf32, #tpu.memory_space<vmem>>, vector<1x16x1xf32>
    %987 = vector.shape_cast %986 : vector<1x16x1xf32> to vector<16x1xf32>
    %988 = arith.subf %984, %949 : vector<16x128xf32>
    %989 = vector.broadcast %987 : vector<16x1xf32> to vector<16x128xf32>
    %990 = arith.mulf %989, %988 : vector<16x128xf32>
    %991 = arith.addf %949, %990 : vector<16x128xf32>
    %c1_425 = arith.constant 1 : index
    %c0_426 = arith.constant 0 : index
    %c0_427 = arith.constant 0 : index
    %992 = vector.load %arg11[%c1_425, %c0_426, %c0_427] : memref<2x16x128xf32, #tpu.memory_space<vmem>>, vector<1x16x128xf32>
    %993 = vector.shape_cast %992 : vector<1x16x128xf32> to vector<16x128xf32>
    %994 = vector.shape_cast %991 : vector<16x128xf32> to vector<1x16x128xf32>
    tpu.vector_store %arg11[%c1_425, %c0_426, %c0_427], %994 {strides = array<i32>} : memref<2x16x128xf32, #tpu.memory_space<vmem>>, vector<1x16x128xf32>,
    %995 = arith.subf %982, %951 : vector<16x128xf32>
    %996 = vector.broadcast %987 : vector<16x1xf32> to vector<16x128xf32>
    %997 = arith.mulf %996, %995 : vector<16x128xf32>
    %998 = arith.addf %951, %997 : vector<16x128xf32>
    %c1_428 = arith.constant 1 : index
    %c0_429 = arith.constant 0 : index
    %c0_430 = arith.constant 0 : index
    %999 = vector.load %arg12[%c1_428, %c0_429, %c0_430] : memref<2x16x128xf32, #tpu.memory_space<vmem>>, vector<1x16x128xf32>
    %1000 = vector.shape_cast %999 : vector<1x16x128xf32> to vector<16x128xf32>
    %1001 = vector.shape_cast %998 : vector<16x128xf32> to vector<1x16x128xf32>
    tpu.vector_store %arg12[%c1_428, %c0_429, %c0_430], %1001 {strides = array<i32>} : memref<2x16x128xf32, #tpu.memory_space<vmem>>, vector<1x16x128xf32>,
    %1002 = vector.broadcast %987 : vector<16x1xf32> to vector<16x128xf32>
    %1003 = arith.mulf %1002, %984 : vector<16x128xf32>
    %1004 = arith.truncf %1003 : vector<16x128xf32> to vector<16x128xbf16>
    %1005 = arith.index_cast %947 : i32 to index
    %c0_431 = arith.constant 0 : index
    %c0_432 = arith.constant 0 : index
    %1006 = vector.load %arg10[%1005, %c0_431, %c0_432] : memref<8x16x128xbf16, #tpu.memory_space<vmem>>, vector<1x16x128xbf16>
    %1007 = vector.shape_cast %1006 : vector<1x16x128xbf16> to vector<16x128xbf16>
    %1008 = vector.shape_cast %1004 : vector<16x128xbf16> to vector<1x16x128xbf16>
    tpu.vector_store %arg10[%1005, %c0_431, %c0_432], %1008 {strides = array<i32>} : memref<8x16x128xbf16, #tpu.memory_space<vmem>>, vector<1x16x128xbf16>,
    %c8_i32 = arith.constant 8 : i32
    return
  }
  func.func @transform_0(%arg0: i32, %arg1: i32) -> (i32, i32, i32) {
    %c0_i32 = arith.constant 0 : i32
    %c0_i32_0 = arith.constant 0 : i32
    return %arg1, %arg0, %c0_i32 : i32, i32, i32
  }
  func.func @transform_1(%arg0: i32, %arg1: i32) -> (i32, i32, i32) {
    %c0_i32 = arith.constant 0 : i32
    %0 = arith.subi %c0_i32, %arg1 : i32
    %c0_i32_0 = arith.constant 0 : i32
    %c0_i32_1 = arith.constant 0 : i32
    return %0, %arg0, %c0_i32_0 : i32, i32, i32
  }
  func.func @transform_2(%arg0: i32, %arg1: i32) -> (i32, i32, i32) {
    %c0_i32 = arith.constant 0 : i32
    %c0_i32_0 = arith.constant 0 : i32
    return %arg1, %arg0, %c0_i32 : i32, i32, i32
  }
  func.func @transform_3(%arg0: i32, %arg1: i32) -> (i32, i32, i32) {
    %c0_i32 = arith.constant 0 : i32
    %0 = arith.subi %c0_i32, %arg1 : i32
    %c0_i32_0 = arith.constant 0 : i32
    %c0_i32_1 = arith.constant 0 : i32
    return %0, %arg0, %c0_i32_0 : i32, i32, i32
  }
  func.func @transform_4(%arg0: i32, %arg1: i32) -> (i32, i32, i32) {
    %c0_i32 = arith.constant 0 : i32
    %c0_i32_0 = arith.constant 0 : i32
    %c0_i32_1 = arith.constant 0 : i32
    %c0_i32_2 = arith.constant 0 : i32
    return %c0_i32, %c0_i32_0, %c0_i32_1 : i32, i32, i32
  }
  func.func @transform_5(%arg0: i32, %arg1: i32) -> (i32, i32, i32) {
    %c0_i32 = arith.constant 0 : i32
    %c0_i32_0 = arith.constant 0 : i32
    %c0_i32_1 = arith.constant 0 : i32
    %c0_i32_2 = arith.constant 0 : i32
    return %c0_i32, %c0_i32_0, %c0_i32_1 : i32, i32, i32
  }
  func.func @transform_6(%arg0: i32, %arg1: i32) -> (i32, i32, i32) {
    %c0_i32 = arith.constant 0 : i32
    %c0_i32_0 = arith.constant 0 : i32
    %c0_i32_1 = arith.constant 0 : i32
    %c0_i32_2 = arith.constant 0 : i32
    return %c0_i32, %c0_i32_0, %c0_i32_1 : i32, i32, i32
  }
  func.func @transform_7(%arg0: i32, %arg1: i32) -> (i32, i32, i32) {
    %c0_i32 = arith.constant 0 : i32
    %c0_i32_0 = arith.constant 0 : i32
    return %arg1, %arg0, %c0_i32 : i32, i32, i32
  }
  func.func @transform_8(%arg0: i32, %arg1: i32) -> (i32, i32, i32) {
    %c0_i32 = arith.constant 0 : i32
    %0 = arith.subi %c0_i32, %arg1 : i32
    %c0_i32_0 = arith.constant 0 : i32
    %c0_i32_1 = arith.constant 0 : i32
    return %0, %arg0, %c0_i32_0 : i32, i32, i32
  }
}

</mosaic_0001>

<llo_original>
// kernel: tpu_custom_call.1
$region0: #{tpu_custom_call.1}
  #allocation0 [shape = 'u32[]', space=smem, size = 0x4, offset = 0x4, fixed_abs, tag = 'smem constant byte address 0x4 - core index']
  #allocation1 [shape = 'u32[144,128]{1,0:T(1,128)}', space=vmem, size = 0x12000, scoped, tag = 'internal scratch']
  #allocation2 [shape = 'f32[2,16,128]{2,1,0:T(8,128)}', space=vmem, size = 0x4000, scoped, tag = 'scratch operand']
  #allocation3 [shape = 'f32[2,16,128]{2,1,0:T(8,128)}', space=vmem, size = 0x4000, scoped, tag = 'scratch operand']
  #allocation4 [shape = 'f32[8,16,512]{2,1,0:T(8,128)}', space=vmem, size = 0x40000, scoped, tag = 'scratch operand']
  #allocation5 [shape = 'f32[8,16,512]{2,1,0:T(8,128)}', space=vmem, size = 0x40000, scoped, tag = 'scratch operand']
  %s0 = inlined_call_operand.vmem [shape: f32[8,16,1], index: 0, kind: input, shape index: {}]
  %s1 = inlined_call_operand.vmem [shape: f32[8,16,1], index: 1, kind: input, shape index: {}]
  %s2 = inlined_call_operand.vmem [shape: bf16[8,16,128], index: 2, kind: input, shape index: {}]
  %s3 = inlined_call_operand.vmem [shape: bf16[8,16,128], index: 3, kind: input, shape index: {}]
  %s4 = inlined_call_operand.hbm [shape: bf16[2,128,512], index: 4, kind: input, shape index: {}]
  %s5 = inlined_call_operand.hbm [shape: bf16[2,128,512], index: 5, kind: input, shape index: {}]
  %s6 = inlined_call_operand.vmem [shape: f32[2,1,512], index: 6, kind: input, shape index: {}]
  %s7 = inlined_call_operand.hbm [shape: bf16[8,16,128], index: 7, kind: output, shape index: {0}]
  %s8 = inlined_call_operand.hbm [shape: bf16[8,16,128], index: 8, kind: output, shape index: {1}]
  %9 = xla_tuple %s7, %s8
  %s10 = sld [smem:[#allocation0]]
  $region58: #{tpu_custom_call.1} parent=0
    _
  %s12 = ssub.s32 1, %s10
  %s13 = scalar_select 0, %s12, %s10
  $region1: #{tpu_custom_call.1} parent=0
    #allocation6 [shape = 'u8[262144]{0}', space=vmem, size = 0x40000, scoped, tag = 'input window, operand 4, single buffered']
    #allocation7 [shape = 's32[1]{0}', space=sflag, size = 0x4, scoped, tag = 'scoped memory for tpu_custom_call.1']
    #allocation8 [shape = 's32[1]{0}', space=sflag, size = 0x4, scoped, tag = 'scoped memory for tpu_custom_call.1']
    #allocation9 [shape = 'u8[262144]{0}', space=vmem, size = 0x40000, scoped, tag = 'input window, operand 5, single buffered']
    #allocation10 [shape = 's32[1]{0}', space=sflag, size = 0x4, scoped, tag = 'scoped memory for tpu_custom_call.1']
    #allocation11 [shape = 'u8[32768]{0}', space=vmem, size = 0x8000, scoped, tag = 'output window, operand 0, single buffered']
    #allocation12 [shape = 'u8[32768]{0}', space=vmem, size = 0x8000, scoped, tag = 'output window, operand 1, single buffered']
    #allocation13 [shape = 's32[1]{0}', space=sflag, size = 0x4, scoped, tag = 'scoped memory for tpu_custom_call.1']
    %14 = vsyncpa [#allocation7], 0
    %15 = vsyncpa [#allocation10], 0
    %16 = vsyncpa [#allocation8], 0
    %17 = vsyncpa [#allocation13], 0
    // Predicated region
    $region2: #{tpu_custom_call.1} parent=1 // pred_check
      _
    $region3: #{tpu_custom_call.1} parent=1 // pred_check_branch
      %19 = sbr.rel (0) target = $region5
    $region4: #{tpu_custom_call.1} parent=1 // pred_region
      _
    $region5: #{tpu_custom_call.1} parent=1 // pred_fallthru
      _
    // Predicated region
    $region6: #{tpu_custom_call.1} parent=1 // pred_check
      _
    $region7: #{tpu_custom_call.1} parent=1 // pred_check_branch
      %21 = sbr.rel (0) target = $region9
    $region8: #{tpu_custom_call.1} parent=1 // pred_region
      %s22 = ssub.s32 0, 0
      %s23 = smul.u32 8, %s22
      %p24 = scmp.lt.s32.totalorder %s23, 7
      %s25 = scalar_select %p24, %s23, 7
      %s26 = smul.addr %s25, 2
      %s27 = smul.addr %s26, 8
      %s28 = scalar_lea.vmem %s1, %s27
      %s29 = ssub.s32 0, 0
      %s30 = smul.u32 8, %s29
    $region9: #{tpu_custom_call.1} parent=1 // pred_fallthru
      _
    // Predicated region
    $region10: #{tpu_custom_call.1} parent=1 // pred_check
      _
    $region11: #{tpu_custom_call.1} parent=1 // pred_check_branch
      %32 = sbr.rel (0) target = $region13
    $region12: #{tpu_custom_call.1} parent=1 // pred_region
      _
    $region13: #{tpu_custom_call.1} parent=1 // pred_fallthru
      _
    // Predicated region
    $region14: #{tpu_custom_call.1} parent=1 // pred_check
      _
    $region15: #{tpu_custom_call.1} parent=1 // pred_check_branch
      %34 = sbr.rel (0) target = $region17
    $region16: #{tpu_custom_call.1} parent=1 // pred_region
      %s35 = ssub.s32 0, 0
      %s36 = smul.u32 8, %s35
      %p37 = scmp.lt.s32.totalorder %s36, 7
      %s38 = scalar_select %p37, %s36, 7
      %s39 = smul.addr %s38, 2
      %s40 = smul.addr %s39, 4
      %s41 = scalar_lea.vmem %s3, %s40
      %s42 = ssub.s32 0, 0
      %s43 = smul.u32 8, %s42
    $region17: #{tpu_custom_call.1} parent=1 // pred_fallthru
      _
    // Predicated region
    $region18: #{tpu_custom_call.1} parent=1 // pred_check
      _
    $region19: #{tpu_custom_call.1} parent=1 // pred_check_branch
      %45 = sbr.rel (0) target = $region21
    $region20: #{tpu_custom_call.1} parent=1 // pred_region
      %s47 = ssub.s32 8192, 8192
      %48 = vsyncadd [#allocation7], %s47
      %s49 = sshll.u32 [#allocation6], 4
      %s50 = int_to_ptr.vmem [resolvable:$true] %s49
      %55 = dma.hbm_to_vmem [thread:$0]  %s4, 8192, %s50, [#allocation7], 256, 256, 16
    $region21: #{tpu_custom_call.1} parent=1 // pred_fallthru
      _
    // Predicated region
    $region22: #{tpu_custom_call.1} parent=1 // pred_check
      _
    $region23: #{tpu_custom_call.1} parent=1 // pred_check_branch
      %57 = sbr.rel (0) target = $region25
    $region24: #{tpu_custom_call.1} parent=1 // pred_region
      %s59 = ssub.s32 8192, 8192
      %60 = vsyncadd [#allocation10], %s59
      %s61 = sshll.u32 [#allocation9], 4
      %s62 = int_to_ptr.vmem [resolvable:$true] %s61
      %67 = dma.hbm_to_vmem [thread:$0]  %s5, 8192, %s62, [#allocation10], 256, 256, 16
    $region25: #{tpu_custom_call.1} parent=1 // pred_fallthru
      _
    // Predicated region
    $region26: #{tpu_custom_call.1} parent=1 // pred_check
      _
    $region27: #{tpu_custom_call.1} parent=1 // pred_check_branch
      %69 = sbr.rel (0) target = $region29
    $region28: #{tpu_custom_call.1} parent=1 // pred_region
      _
    $region29: #{tpu_custom_call.1} parent=1 // pred_fallthru
      _
    // Predicated region
    $region30: #{tpu_custom_call.1} parent=1 // pred_check
      _
    $region31: #{tpu_custom_call.1} parent=1 // pred_check_branch
      %71 = sbr.rel (0) target = $region33
    $region32: #{tpu_custom_call.1} parent=1 // pred_region
      %72 = dma.done [#allocation7], 8192
    $region33: #{tpu_custom_call.1} parent=1 // pred_fallthru
      _
    // Predicated region
    $region34: #{tpu_custom_call.1} parent=1 // pred_check
      _
    $region35: #{tpu_custom_call.1} parent=1 // pred_check_branch
      %74 = sbr.rel (0) target = $region37
    $region36: #{tpu_custom_call.1} parent=1 // pred_region
      %75 = dma.done [#allocation10], 8192
    $region37: #{tpu_custom_call.1} parent=1 // pred_fallthru
      _
    %s76 = ssub.s32 0, 0
    %s77 = smul.u32 8, %s76
    %p78 = scmp.lt.s32.totalorder %s77, 7
    %s79 = scalar_select %p78, %s77, 7
    %s80 = smul.addr %s79, 2
    %s81 = smul.addr %s80, 8
    %s82 = scalar_lea.vmem %s1, %s81
    %s83 = ssub.s32 0, 0
    %s84 = smul.u32 8, %s83
    %p85 = scmp.lt.s32.totalorder %s84, 7
    %s86 = scalar_select %p85, %s84, 7
    %s87 = smul.addr %s86, 2
    %s88 = smul.addr %s87, 4
    %s89 = scalar_lea.vmem %s3, %s88
    %s90 = ssub.s32 0, 0
    %s91 = smul.u32 8, %s90
    %p92 = scmp.lt.s32.totalorder %s91, 7
    %s93 = scalar_select %p92, %s91, 7
    %s94 = smul.addr %s93, 2
    %s95 = smul.addr %s94, 8
    %s96 = scalar_lea.vmem %s1, %s95
    %s97 = ssub.s32 0, 0
    %s98 = smul.u32 8, %s97
    %s99 = ssub.s32 0, 0
    %s100 = smul.u32 8, %s99
    %p101 = scmp.lt.s32.totalorder %s100, 7
    %s102 = scalar_select %p101, %s100, 7
    %s103 = smul.addr %s102, 2
    %s104 = smul.addr %s103, 4
    %s105 = scalar_lea.vmem %s3, %s104
    %s106 = ssub.s32 0, 0
    %s107 = smul.u32 8, %s106
    %s108 = ssub.s32 0, 0
    %s109 = smul.u32 8, %s108
    %p111 = scmp.eq.s32.totalorder 0, 0
    // Predicated region
    $region38: #{tpu_custom_call.1} parent=1 // pred_check
      %p112 = pneg %p111
    $region39: #{tpu_custom_call.1} parent=1 // pred_check_branch
      %114 = sbr.rel (%p112) target = $region41
    $region40: #{tpu_custom_call.1} parent=1 // pred_region
      %115 = vst [vmem:[#allocation2] sm:$0xff] 0.0
      %116 = vst [vmem:[#allocation2 + $0x8] sm:$0xff] 0.0
      %117 = vst [vmem:[#allocation2 + $0x10] sm:$0xff] 0.0
      %118 = vst [vmem:[#allocation2 + $0x18] sm:$0xff] 0.0
      %119 = vst [vmem:[#allocation3] sm:$0xff] 0.0
      %120 = vst [vmem:[#allocation3 + $0x8] sm:$0xff] 0.0
      %121 = vst [vmem:[#allocation3 + $0x10] sm:$0xff] 0.0
      %122 = vst [vmem:[#allocation3 + $0x18] sm:$0xff] 0.0
    $region41: #{tpu_custom_call.1} parent=1 // pred_fallthru
      _
    %v123 = vld [vmem:[%s6] sm:$0xf]
    %v124 = vld [vmem:[%s2] sm:$0xf]
    %v125 = vld [vmem:[%s2 + $0x4] sm:$0xf]
    %v126 = vld [vmem:[%s2 + $0x8] sm:$0xf]
    %v127 = vld [vmem:[%s2 + $0xc] sm:$0xf]
    %v128 = vld [vmem:[%s2 + $0x10] sm:$0xf]
    %v129 = vld [vmem:[%s2 + $0x14] sm:$0xf]
    %v130 = vld [vmem:[%s2 + $0x18] sm:$0xf]
    %v131 = vld [vmem:[%s2 + $0x1c] sm:$0xf]
    %v132 = vld [vmem:[%s2 + $0x20] sm:$0xf]
    %v133 = vld [vmem:[%s2 + $0x24] sm:$0xf]
    %v134 = vld [vmem:[%s2 + $0x28] sm:$0xf]
    %v135 = vld [vmem:[%s2 + $0x2c] sm:$0xf]
    %v136 = vld [vmem:[%s2 + $0x30] sm:$0xf]
    %v137 = vld [vmem:[%s2 + $0x34] sm:$0xf]
    %v138 = vld [vmem:[%s2 + $0x38] sm:$0xf]
    %v139 = vld [vmem:[%s2 + $0x3c] sm:$0xf]
    %v140 = vld [vmem:[#allocation6] sm:$0xff]
    %v141 = vld [vmem:[#allocation6 + $0x8] sm:$0xff]
    %v142 = vld [vmem:[#allocation6 + $0x10] sm:$0xff]
    %v143 = vld [vmem:[#allocation6 + $0x18] sm:$0xff]
    %v144 = vld [vmem:[#allocation6 + $0x20] sm:$0xff]
    %v145 = vld [vmem:[#allocation6 + $0x28] sm:$0xff]
    %v146 = vld [vmem:[#allocation6 + $0x30] sm:$0xff]
    %v147 = vld [vmem:[#allocation6 + $0x38] sm:$0xff]
    %v148 = vld [vmem:[#allocation6 + $0x40] sm:$0xff]
    %v149 = vld [vmem:[#allocation6 + $0x48] sm:$0xff]
    %v150 = vld [vmem:[#allocation6 + $0x50] sm:$0xff]
    %v151 = vld [vmem:[#allocation6 + $0x58] sm:$0xff]
    %v152 = vld [vmem:[#allocation6 + $0x60] sm:$0xff]
    %v153 = vld [vmem:[#allocation6 + $0x68] sm:$0xff]
    %v154 = vld [vmem:[#allocation6 + $0x70] sm:$0xff]
    %v155 = vld [vmem:[#allocation6 + $0x78] sm:$0xff]
    %v156 = vld [vmem:[#allocation6 + $0x80] sm:$0xff]
    %v157 = vld [vmem:[#allocation6 + $0x88] sm:$0xff]
    %v158 = vld [vmem:[#allocation6 + $0x90] sm:$0xff]
    %v159 = vld [vmem:[#allocation6 + $0x98] sm:$0xff]
    %v160 = vld [vmem:[#allocation6 + $0xa0] sm:$0xff]
    %v161 = vld [vmem:[#allocation6 + $0xa8] sm:$0xff]
    %v162 = vld [vmem:[#allocation6 + $0xb0] sm:$0xff]
    %v163 = vld [vmem:[#allocation6 + $0xb8] sm:$0xff]
    %v164 = vld [vmem:[#allocation6 + $0xc0] sm:$0xff]
    %v165 = vld [vmem:[#allocation6 + $0xc8] sm:$0xff]
    %v166 = vld [vmem:[#allocation6 + $0xd0] sm:$0xff]
    %v167 = vld [vmem:[#allocation6 + $0xd8] sm:$0xff]
    %v168 = vld [vmem:[#allocation6 + $0xe0] sm:$0xff]
    %v169 = vld [vmem:[#allocation6 + $0xe8] sm:$0xff]
    %v170 = vld [vmem:[#allocation6 + $0xf0] sm:$0xff]
    %v171 = vld [vmem:[#allocation6 + $0xf8] sm:$0xff]
    %v188 = vunpack.c.l.b16 %v124
    %v189 = vunpack.c.l.b16 %v125
    %v190 = vunpack.c.l.b16 %v126
    %v191 = vunpack.c.l.b16 %v127
    %v192 = vunpack.c.l.b16 %v128
    %v193 = vunpack.c.l.b16 %v129
    %v194 = vunpack.c.l.b16 %v130
    %v195 = vunpack.c.l.b16 %v131
    %v196 = vunpack.c.l.b16 %v132
    %v197 = vunpack.c.l.b16 %v133
    %v198 = vunpack.c.l.b16 %v134
    %v199 = vunpack.c.l.b16 %v135
    %v200 = vunpack.c.l.b16 %v136
    %v201 = vunpack.c.l.b16 %v137
    %v202 = vunpack.c.l.b16 %v138
    %v203 = vunpack.c.l.b16 %v139
    %v204 = vpack.c.b16 %v189, %v188
    %v205 = vpack.c.b16 %v191, %v190
    %v206 = vpack.c.b16 %v193, %v192
    %v207 = vpack.c.b16 %v195, %v194
    %v208 = vpack.c.b16 %v197, %v196
    %v209 = vpack.c.b16 %v199, %v198
    %v210 = vpack.c.b16 %v201, %v200
    %v211 = vpack.c.b16 %v203, %v202
    %v252 = vunpack.c.l.b16 %v140
    %v253 = vunpack.c.h.b16 %v140
    %v254 = vunpack.c.l.b16 %v141
    %v255 = vunpack.c.h.b16 %v141
    %v256 = vunpack.c.l.b16 %v142
    %v257 = vunpack.c.h.b16 %v142
    %v258 = vunpack.c.l.b16 %v143
    %v259 = vunpack.c.h.b16 %v143
    %v260 = vunpack.c.l.b16 %v144
    %v261 = vunpack.c.h.b16 %v144
    %v262 = vunpack.c.l.b16 %v145
    %v263 = vunpack.c.h.b16 %v145
    %v264 = vunpack.c.l.b16 %v146
    %v265 = vunpack.c.h.b16 %v146
    %v266 = vunpack.c.l.b16 %v147
    %v267 = vunpack.c.h.b16 %v147
    %v268 = vunpack.c.l.b16 %v148
    %v269 = vunpack.c.h.b16 %v148
    %v270 = vunpack.c.l.b16 %v149
    %v271 = vunpack.c.h.b16 %v149
    %v272 = vunpack.c.l.b16 %v150
    %v273 = vunpack.c.h.b16 %v150
    %v274 = vunpack.c.l.b16 %v151
    %v275 = vunpack.c.h.b16 %v151
    %v276 = vunpack.c.l.b16 %v152
    %v277 = vunpack.c.h.b16 %v152
    %v278 = vunpack.c.l.b16 %v153
    %v279 = vunpack.c.h.b16 %v153
    %v280 = vunpack.c.l.b16 %v154
    %v281 = vunpack.c.h.b16 %v154
    %v282 = vunpack.c.l.b16 %v155
    %v283 = vunpack.c.h.b16 %v155
    %v284 = vunpack.c.l.b16 %v156
    %v285 = vunpack.c.h.b16 %v156
    %v286 = vunpack.c.l.b16 %v157
    %v287 = vunpack.c.h.b16 %v157
    %v288 = vunpack.c.l.b16 %v158
    %v289 = vunpack.c.h.b16 %v158
    %v290 = vunpack.c.l.b16 %v159
    %v291 = vunpack.c.h.b16 %v159
    %v292 = vunpack.c.l.b16 %v160
    %v293 = vunpack.c.h.b16 %v160
    %v294 = vunpack.c.l.b16 %v161
    %v295 = vunpack.c.h.b16 %v161
    %v296 = vunpack.c.l.b16 %v162
    %v297 = vunpack.c.h.b16 %v162
    %v298 = vunpack.c.l.b16 %v163
    %v299 = vunpack.c.h.b16 %v163
    %v300 = vunpack.c.l.b16 %v164
    %v301 = vunpack.c.h.b16 %v164
    %v302 = vunpack.c.l.b16 %v165
    %v303 = vunpack.c.h.b16 %v165
    %v304 = vunpack.c.l.b16 %v166
    %v305 = vunpack.c.h.b16 %v166
    %v306 = vunpack.c.l.b16 %v167
    %v307 = vunpack.c.h.b16 %v167
    %v308 = vunpack.c.l.b16 %v168
    %v309 = vunpack.c.h.b16 %v168
    %v310 = vunpack.c.l.b16 %v169
    %v311 = vunpack.c.h.b16 %v169
    %v312 = vunpack.c.l.b16 %v170
    %v313 = vunpack.c.h.b16 %v170
    %v314 = vunpack.c.l.b16 %v171
    %v315 = vunpack.c.h.b16 %v171
    %v316 = vpack.c.b16 %v256, %v252
    %v317 = vpack.c.b16 %v257, %v253
    %v318 = vpack.c.b16 %v258, %v254
    %v319 = vpack.c.b16 %v259, %v255
    %v320 = vpack.c.b16 %v264, %v260
    %v321 = vpack.c.b16 %v265, %v261
    %v322 = vpack.c.b16 %v266, %v262
    %v323 = vpack.c.b16 %v267, %v263
    %v324 = vpack.c.b16 %v272, %v268
    %v325 = vpack.c.b16 %v273, %v269
    %v326 = vpack.c.b16 %v274, %v270
    %v327 = vpack.c.b16 %v275, %v271
    %v328 = vpack.c.b16 %v280, %v276
    %v329 = vpack.c.b16 %v281, %v277
    %v330 = vpack.c.b16 %v282, %v278
    %v331 = vpack.c.b16 %v283, %v279
    %v332 = vpack.c.b16 %v288, %v284
    %v333 = vpack.c.b16 %v289, %v285
    %v334 = vpack.c.b16 %v290, %v286
    %v335 = vpack.c.b16 %v291, %v287
    %v336 = vpack.c.b16 %v296, %v292
    %v337 = vpack.c.b16 %v297, %v293
    %v338 = vpack.c.b16 %v298, %v294
    %v339 = vpack.c.b16 %v299, %v295
    %v340 = vpack.c.b16 %v304, %v300
    %v341 = vpack.c.b16 %v305, %v301
    %v342 = vpack.c.b16 %v306, %v302
    %v343 = vpack.c.b16 %v307, %v303
    %v344 = vpack.c.b16 %v312, %v308
    %v345 = vpack.c.b16 %v313, %v309
    %v346 = vpack.c.b16 %v314, %v310
    %v347 = vpack.c.b16 %v315, %v311
    %380 = vmatprep.subr.bf16.mxu0 %v317
    %381 = vmatpush1.bf16.msra.mxu0 %v316
    %382 = vmatprep.subr.bf16.mxu0 %v321
    %383 = vmatpush1.bf16.msra.mxu0 %v320
    %384 = vmatprep.subr.bf16.mxu0 %v325
    %385 = vmatpush1.bf16.msra.mxu0 %v324
    %386 = vmatprep.subr.bf16.mxu0 %v329
    %387 = vmatpush1.bf16.msra.mxu0 %v328
    %388 = vmatprep.subr.bf16.mxu0 %v333
    %389 = vmatpush1.bf16.msra.mxu0 %v332
    %390 = vmatprep.subr.bf16.mxu0 %v337
    %391 = vmatpush1.bf16.msra.mxu0 %v336
    %392 = vmatprep.subr.bf16.mxu0 %v341
    %393 = vmatpush1.bf16.msra.mxu0 %v340
    %394 = vmatprep.subr.bf16.mxu0 %v345
    %395 = vmatpush1.bf16.msra.mxu0 %v344
    %396 = vmatprep.subr.bf16.mxu0 0
    %397 = vmatpush1.bf16.msra.mxu0 0
    %398 = vmatprep.subr.bf16.mxu0 0
    %399 = vmatpush1.bf16.msra.mxu0 0
    %400 = vmatprep.subr.bf16.mxu0 0
    %401 = vmatpush1.bf16.msra.mxu0 0
    %402 = vmatprep.subr.bf16.mxu0 0
    %403 = vmatpush1.bf16.msra.mxu0 0
    %404 = vmatprep.subr.bf16.mxu0 0
    %405 = vmatpush1.bf16.msra.mxu0 0
    %406 = vmatprep.subr.bf16.mxu0 0
    %407 = vmatpush1.bf16.msra.mxu0 0
    %408 = vmatprep.subr.bf16.mxu0 0
    %409 = vmatpush1.bf16.msra.mxu0 0
    %410 = vmatprep.subr.bf16.mxu0 0
    %411 = vmatpush1.bf16.msra.mxu0 0
    %412 = vmatprep.mubr.bf16.mxu0 0
    %413 = vmatmul.mubr.bf16.gmra.mrb[0].mxu0 %v204
    %v414 = vpop.f32.mrb[0].mxu0
    %v415 = vadd.f32 0.0, %v414
    %v416 = vpop.f32.mrb[0].mxu0
    %v417 = vadd.f32 0.0, %v416
    %v418 = vpop.f32.mrb[0].mxu0
    %v419 = vadd.f32 0.0, %v418
    %v420 = vpop.f32.mrb[0].mxu0
    %v421 = vadd.f32 0.0, %v420
    %422 = vmatprep.mubr.bf16.mxu0 0
    %423 = vmatmul.mubr.bf16.gmra.mrb[0].mxu0 %v205
    %v424 = vpop.f32.mrb[0].mxu0
    %v425 = vadd.f32 0.0, %v424
    %v426 = vpop.f32.mrb[0].mxu0
    %v427 = vadd.f32 0.0, %v426
    %v428 = vpop.f32.mrb[0].mxu0
    %v429 = vadd.f32 0.0, %v428
    %v430 = vpop.f32.mrb[0].mxu0
    %v431 = vadd.f32 0.0, %v430
    %432 = vmatprep.mubr.bf16.mxu0 0
    %433 = vmatmul.mubr.bf16.gmra.mrb[0].mxu0 %v206
    %v434 = vpop.f32.mrb[0].mxu0
    %v435 = vadd.f32 0.0, %v434
    %v436 = vpop.f32.mrb[0].mxu0
    %v437 = vadd.f32 0.0, %v436
    %v438 = vpop.f32.mrb[0].mxu0
    %v439 = vadd.f32 0.0, %v438
    %v440 = vpop.f32.mrb[0].mxu0
    %v441 = vadd.f32 0.0, %v440
    %442 = vmatprep.mubr.bf16.mxu0 0
    %443 = vmatmul.mubr.bf16.gmra.mrb[0].mxu0 %v207
    %v444 = vpop.f32.mrb[0].mxu0
    %v445 = vadd.f32 0.0, %v444
    %v446 = vpop.f32.mrb[0].mxu0
    %v447 = vadd.f32 0.0, %v446
    %v448 = vpop.f32.mrb[0].mxu0
    %v449 = vadd.f32 0.0, %v448
    %v450 = vpop.f32.mrb[0].mxu0
    %v451 = vadd.f32 0.0, %v450
    %452 = vmatprep.mubr.bf16.mxu0 0
    %453 = vmatmul.mubr.bf16.gmra.mrb[0].mxu0 %v208
    %v454 = vpop.f32.mrb[0].mxu0
    %v455 = vadd.f32 0.0, %v454
    %v456 = vpop.f32.mrb[0].mxu0
    %v457 = vadd.f32 0.0, %v456
    %v458 = vpop.f32.mrb[0].mxu0
    %v459 = vadd.f32 0.0, %v458
    %v460 = vpop.f32.mrb[0].mxu0
    %v461 = vadd.f32 0.0, %v460
    %462 = vmatprep.mubr.bf16.mxu0 0
    %463 = vmatmul.mubr.bf16.gmra.mrb[0].mxu0 %v209
    %v464 = vpop.f32.mrb[0].mxu0
    %v465 = vadd.f32 0.0, %v464
    %v466 = vpop.f32.mrb[0].mxu0
    %v467 = vadd.f32 0.0, %v466
    %v468 = vpop.f32.mrb[0].mxu0
    %v469 = vadd.f32 0.0, %v468
    %v470 = vpop.f32.mrb[0].mxu0
    %v471 = vadd.f32 0.0, %v470
    %472 = vmatprep.mubr.bf16.mxu0 0
    %473 = vmatmul.mubr.bf16.gmra.mrb[0].mxu0 %v210
    %v474 = vpop.f32.mrb[0].mxu0
    %v475 = vadd.f32 0.0, %v474
    %v476 = vpop.f32.mrb[0].mxu0
    %v477 = vadd.f32 0.0, %v476
    %v478 = vpop.f32.mrb[0].mxu0
    %v479 = vadd.f32 0.0, %v478
    %v480 = vpop.f32.mrb[0].mxu0
    %v481 = vadd.f32 0.0, %v480
    %482 = vmatprep.mubr.bf16.mxu0 0
    %483 = vmatmul.mubr.bf16.gmra.mrb[0].mxu0 %v211
    %v484 = vpop.f32.mrb[0].mxu0
    %v485 = vadd.f32 0.0, %v484
    %v486 = vpop.f32.mrb[0].mxu0
    %v487 = vadd.f32 0.0, %v486
    %v488 = vpop.f32.mrb[0].mxu0
    %v489 = vadd.f32 0.0, %v488
    %v490 = vpop.f32.mrb[0].mxu0
    %v491 = vadd.f32 0.0, %v490
    %492 = vdwg.mxu0
    %493 = vmatprep.subr.bf16.mxu0 %v319
    %494 = vmatpush1.bf16.msra.mxu0 %v318
    %495 = vmatprep.subr.bf16.mxu0 %v323
    %496 = vmatpush1.bf16.msra.mxu0 %v322
    %497 = vmatprep.subr.bf16.mxu0 %v327
    %498 = vmatpush1.bf16.msra.mxu0 %v326
    %499 = vmatprep.subr.bf16.mxu0 %v331
    %500 = vmatpush1.bf16.msra.mxu0 %v330
    %501 = vmatprep.subr.bf16.mxu0 %v335
    %502 = vmatpush1.bf16.msra.mxu0 %v334
    %503 = vmatprep.subr.bf16.mxu0 %v339
    %504 = vmatpush1.bf16.msra.mxu0 %v338
    %505 = vmatprep.subr.bf16.mxu0 %v343
    %506 = vmatpush1.bf16.msra.mxu0 %v342
    %507 = vmatprep.subr.bf16.mxu0 %v347
    %508 = vmatpush1.bf16.msra.mxu0 %v346
    %509 = vmatprep.subr.bf16.mxu0 0
    %510 = vmatpush1.bf16.msra.mxu0 0
    %511 = vmatprep.subr.bf16.mxu0 0
    %512 = vmatpush1.bf16.msra.mxu0 0
    %513 = vmatprep.subr.bf16.mxu0 0
    %514 = vmatpush1.bf16.msra.mxu0 0
    %515 = vmatprep.subr.bf16.mxu0 0
    %516 = vmatpush1.bf16.msra.mxu0 0
    %517 = vmatprep.subr.bf16.mxu0 0
    %518 = vmatpush1.bf16.msra.mxu0 0
    %519 = vmatprep.subr.bf16.mxu0 0
    %520 = vmatpush1.bf16.msra.mxu0 0
    %521 = vmatprep.subr.bf16.mxu0 0
    %522 = vmatpush1.bf16.msra.mxu0 0
    %523 = vmatprep.subr.bf16.mxu0 0
    %524 = vmatpush1.bf16.msra.mxu0 0
    %525 = vmatprep.mubr.bf16.mxu0 0
    %526 = vmatmul.mubr.bf16.gmra.mrb[0].mxu0 %v204
    %v527 = vpop.f32.mrb[0].mxu0
    %v528 = vadd.f32 0.0, %v527
    %v529 = vpop.f32.mrb[0].mxu0
    %v530 = vadd.f32 0.0, %v529
    %v531 = vpop.f32.mrb[0].mxu0
    %v532 = vadd.f32 0.0, %v531
    %v533 = vpop.f32.mrb[0].mxu0
    %v534 = vadd.f32 0.0, %v533
    %535 = vmatprep.mubr.bf16.mxu0 0
    %536 = vmatmul.mubr.bf16.gmra.mrb[0].mxu0 %v205
    %v537 = vpop.f32.mrb[0].mxu0
    %v538 = vadd.f32 0.0, %v537
    %v539 = vpop.f32.mrb[0].mxu0
    %v540 = vadd.f32 0.0, %v539
    %v541 = vpop.f32.mrb[0].mxu0
    %v542 = vadd.f32 0.0, %v541
    %v543 = vpop.f32.mrb[0].mxu0
    %v544 = vadd.f32 0.0, %v543
    %545 = vmatprep.mubr.bf16.mxu0 0
    %546 = vmatmul.mubr.bf16.gmra.mrb[0].mxu0 %v206
    %v547 = vpop.f32.mrb[0].mxu0
    %v548 = vadd.f32 0.0, %v547
    %v549 = vpop.f32.mrb[0].mxu0
    %v550 = vadd.f32 0.0, %v549
    %v551 = vpop.f32.mrb[0].mxu0
    %v552 = vadd.f32 0.0, %v551
    %v553 = vpop.f32.mrb[0].mxu0
    %v554 = vadd.f32 0.0, %v553
    %555 = vmatprep.mubr.bf16.mxu0 0
    %556 = vmatmul.mubr.bf16.gmra.mrb[0].mxu0 %v207
    %v557 = vpop.f32.mrb[0].mxu0
    %v558 = vadd.f32 0.0, %v557
    %v559 = vpop.f32.mrb[0].mxu0
    %v560 = vadd.f32 0.0, %v559
    %v561 = vpop.f32.mrb[0].mxu0
    %v562 = vadd.f32 0.0, %v561
    %v563 = vpop.f32.mrb[0].mxu0
    %v564 = vadd.f32 0.0, %v563
    %565 = vmatprep.mubr.bf16.mxu0 0
    %566 = vmatmul.mubr.bf16.gmra.mrb[0].mxu0 %v208
    %v567 = vpop.f32.mrb[0].mxu0
    %v568 = vadd.f32 0.0, %v567
    %v569 = vpop.f32.mrb[0].mxu0
    %v570 = vadd.f32 0.0, %v569
    %v571 = vpop.f32.mrb[0].mxu0
    %v572 = vadd.f32 0.0, %v571
    %v573 = vpop.f32.mrb[0].mxu0
    %v574 = vadd.f32 0.0, %v573
    %575 = vmatprep.mubr.bf16.mxu0 0
    %576 = vmatmul.mubr.bf16.gmra.mrb[0].mxu0 %v209
    %v577 = vpop.f32.mrb[0].mxu0
    %v578 = vadd.f32 0.0, %v577
    %v579 = vpop.f32.mrb[0].mxu0
    %v580 = vadd.f32 0.0, %v579
    %v581 = vpop.f32.mrb[0].mxu0
    %v582 = vadd.f32 0.0, %v581
    %v583 = vpop.f32.mrb[0].mxu0
    %v584 = vadd.f32 0.0, %v583
    %585 = vmatprep.mubr.bf16.mxu0 0
    %586 = vmatmul.mubr.bf16.gmra.mrb[0].mxu0 %v210
    %v587 = vpop.f32.mrb[0].mxu0
    %v588 = vadd.f32 0.0, %v587
    %v589 = vpop.f32.mrb[0].mxu0
    %v590 = vadd.f32 0.0, %v589
    %v591 = vpop.f32.mrb[0].mxu0
    %v592 = vadd.f32 0.0, %v591
    %v593 = vpop.f32.mrb[0].mxu0
    %v594 = vadd.f32 0.0, %v593
    %595 = vmatprep.mubr.bf16.mxu0 0
    %596 = vmatmul.mubr.bf16.gmra.mrb[0].mxu0 %v211
    %v597 = vpop.f32.mrb[0].mxu0
    %v598 = vadd.f32 0.0, %v597
    %v599 = vpop.f32.mrb[0].mxu0
    %v600 = vadd.f32 0.0, %v599
    %v601 = vpop.f32.mrb[0].mxu0
    %v602 = vadd.f32 0.0, %v601
    %v603 = vpop.f32.mrb[0].mxu0
    %v604 = vadd.f32 0.0, %v603
    %605 = vdwg.mxu0
    %v607 = vlaneseq
    %v608 = vshrl.u32 %v607, 7
    %v609 = vsub.s32 0, %v608
    %v610 = vrot.slane %v123, %v609
    %v611 = vlaneseq
    %v612 = vshrl.u32 %v611, 7
    %v613 = vsub.s32 1, %v612
    %v614 = vrot.slane %v123, %v613
    %v615 = vlaneseq
    %v616 = vshrl.u32 %v615, 7
    %v617 = vsub.s32 2, %v616
    %v618 = vrot.slane %v123, %v617
    %v619 = vlaneseq
    %v620 = vshrl.u32 %v619, 7
    %v621 = vsub.s32 3, %v620
    %v622 = vrot.slane %v123, %v621
    %v627 = vadd.f32 %v610, %v415
    %v628 = vadd.f32 %v614, %v417
    %v629 = vadd.f32 %v618, %v528
    %v630 = vadd.f32 %v622, %v530
    %v631 = vadd.f32 %v610, %v419
    %v632 = vadd.f32 %v614, %v421
    %v633 = vadd.f32 %v618, %v532
    %v634 = vadd.f32 %v622, %v534
    %v635 = vadd.f32 %v610, %v425
    %v636 = vadd.f32 %v614, %v427
    %v637 = vadd.f32 %v618, %v538
    %v638 = vadd.f32 %v622, %v540
    %v639 = vadd.f32 %v610, %v429
    %v640 = vadd.f32 %v614, %v431
    %v641 = vadd.f32 %v618, %v542
    %v642 = vadd.f32 %v622, %v544
    %v643 = vadd.f32 %v610, %v435
    %v644 = vadd.f32 %v614, %v437
    %v645 = vadd.f32 %v618, %v548
    %v646 = vadd.f32 %v622, %v550
    %v647 = vadd.f32 %v610, %v439
    %v648 = vadd.f32 %v614, %v441
    %v649 = vadd.f32 %v618, %v552
    %v650 = vadd.f32 %v622, %v554
    %v651 = vadd.f32 %v610, %v445
    %v652 = vadd.f32 %v614, %v447
    %v653 = vadd.f32 %v618, %v558
    %v654 = vadd.f32 %v622, %v560
    %v655 = vadd.f32 %v610, %v449
    %v656 = vadd.f32 %v614, %v451
    %v657 = vadd.f32 %v618, %v562
    %v658 = vadd.f32 %v622, %v564
    %v659 = vadd.f32 %v610, %v455
    %v660 = vadd.f32 %v614, %v457
    %v661 = vadd.f32 %v618, %v568
    %v662 = vadd.f32 %v622, %v570
    %v663 = vadd.f32 %v610, %v459
    %v664 = vadd.f32 %v614, %v461
    %v665 = vadd.f32 %v618, %v572
    %v666 = vadd.f32 %v622, %v574
    %v667 = vadd.f32 %v610, %v465
    %v668 = vadd.f32 %v614, %v467
    %v669 = vadd.f32 %v618, %v578
    %v670 = vadd.f32 %v622, %v580
    %v671 = vadd.f32 %v610, %v469
    %v672 = vadd.f32 %v614, %v471
    %v673 = vadd.f32 %v618, %v582
    %v674 = vadd.f32 %v622, %v584
    %v675 = vadd.f32 %v610, %v475
    %v676 = vadd.f32 %v614, %v477
    %v677 = vadd.f32 %v618, %v588
    %v678 = vadd.f32 %v622, %v590
    %v679 = vadd.f32 %v610, %v479
    %v680 = vadd.f32 %v614, %v481
    %v681 = vadd.f32 %v618, %v592
    %v682 = vadd.f32 %v622, %v594
    %v683 = vadd.f32 %v610, %v485
    %v684 = vadd.f32 %v614, %v487
    %v685 = vadd.f32 %v618, %v598
    %v686 = vadd.f32 %v622, %v600
    %v687 = vadd.f32 %v610, %v489
    %v688 = vadd.f32 %v614, %v491
    %v689 = vadd.f32 %v618, %v602
    %v690 = vadd.f32 %v622, %v604
    %691 = vst [vmem:[#allocation4] sm:$0xff] %v627
    %692 = vst [vmem:[#allocation4 + $0x8] sm:$0xff] %v628
    %693 = vst [vmem:[#allocation4 + $0x10] sm:$0xff] %v629
    %694 = vst [vmem:[#allocation4 + $0x18] sm:$0xff] %v630
    %695 = vst [vmem:[#allocation4 + $0x20] sm:$0xff] %v631
    %696 = vst [vmem:[#allocation4 + $0x28] sm:$0xff] %v632
    %697 = vst [vmem:[#allocation4 + $0x30] sm:$0xff] %v633
    %698 = vst [vmem:[#allocation4 + $0x38] sm:$0xff] %v634
    %699 = vst [vmem:[#allocation4 + $0x40] sm:$0xff] %v635
    %700 = vst [vmem:[#allocation4 + $0x48] sm:$0xff] %v636
    %701 = vst [vmem:[#allocation4 + $0x50] sm:$0xff] %v637
    %702 = vst [vmem:[#allocation4 + $0x58] sm:$0xff] %v638
    %703 = vst [vmem:[#allocation4 + $0x60] sm:$0xff] %v639
    %704 = vst [vmem:[#allocation4 + $0x68] sm:$0xff] %v640
    %705 = vst [vmem:[#allocation4 + $0x70] sm:$0xff] %v641
    %706 = vst [vmem:[#allocation4 + $0x78] sm:$0xff] %v642
    %707 = vst [vmem:[#allocation4 + $0x80] sm:$0xff] %v643
    %708 = vst [vmem:[#allocation4 + $0x88] sm:$0xff] %v644
    %709 = vst [vmem:[#allocation4 + $0x90] sm:$0xff] %v645
    %710 = vst [vmem:[#allocation4 + $0x98] sm:$0xff] %v646
    %711 = vst [vmem:[#allocation4 + $0xa0] sm:$0xff] %v647
    %712 = vst [vmem:[#allocation4 + $0xa8] sm:$0xff] %v648
    %713 = vst [vmem:[#allocation4 + $0xb0] sm:$0xff] %v649
    %714 = vst [vmem:[#allocation4 + $0xb8] sm:$0xff] %v650
    %715 = vst [vmem:[#allocation4 + $0xc0] sm:$0xff] %v651
    %716 = vst [vmem:[#allocation4 + $0xc8] sm:$0xff] %v652
    %717 = vst [vmem:[#allocation4 + $0xd0] sm:$0xff] %v653
    %718 = vst [vmem:[#allocation4 + $0xd8] sm:$0xff] %v654
    %719 = vst [vmem:[#allocation4 + $0xe0] sm:$0xff] %v655
    %720 = vst [vmem:[#allocation4 + $0xe8] sm:$0xff] %v656
    %721 = vst [vmem:[#allocation4 + $0xf0] sm:$0xff] %v657
    %722 = vst [vmem:[#allocation4 + $0xf8] sm:$0xff] %v658
    %723 = vst [vmem:[#allocation4 + $0x100] sm:$0xff] %v659
    %724 = vst [vmem:[#allocation4 + $0x108] sm:$0xff] %v660
    %725 = vst [vmem:[#allocation4 + $0x110] sm:$0xff] %v661
    %726 = vst [vmem:[#allocation4 + $0x118] sm:$0xff] %v662
    %727 = vst [vmem:[#allocation4 + $0x120] sm:$0xff] %v663
    %728 = vst [vmem:[#allocation4 + $0x128] sm:$0xff] %v664
    %729 = vst [vmem:[#allocation4 + $0x130] sm:$0xff] %v665
    %730 = vst [vmem:[#allocation4 + $0x138] sm:$0xff] %v666
    %731 = vst [vmem:[#allocation4 + $0x140] sm:$0xff] %v667
    %732 = vst [vmem:[#allocation4 + $0x148] sm:$0xff] %v668
    %733 = vst [vmem:[#allocation4 + $0x150] sm:$0xff] %v669
    %734 = vst [vmem:[#allocation4 + $0x158] sm:$0xff] %v670
    %735 = vst [vmem:[#allocation4 + $0x160] sm:$0xff] %v671
    %736 = vst [vmem:[#allocation4 + $0x168] sm:$0xff] %v672
    %737 = vst [vmem:[#allocation4 + $0x170] sm:$0xff] %v673
    %738 = vst [vmem:[#allocation4 + $0x178] sm:$0xff] %v674
    %739 = vst [vmem:[#allocation4 + $0x180] sm:$0xff] %v675
    %740 = vst [vmem:[#allocation4 + $0x188] sm:$0xff] %v676
    %741 = vst [vmem:[#allocation4 + $0x190] sm:$0xff] %v677
    %742 = vst [vmem:[#allocation4 + $0x198] sm:$0xff] %v678
    %743 = vst [vmem:[#allocation4 + $0x1a0] sm:$0xff] %v679
    %744 = vst [vmem:[#allocation4 + $0x1a8] sm:$0xff] %v680
    %745 = vst [vmem:[#allocation4 + $0x1b0] sm:$0xff] %v681
    %746 = vst [vmem:[#allocation4 + $0x1b8] sm:$0xff] %v682
    %747 = vst [vmem:[#allocation4 + $0x1c0] sm:$0xff] %v683
    %748 = vst [vmem:[#allocation4 + $0x1c8] sm:$0xff] %v684
    %749 = vst [vmem:[#allocation4 + $0x1d0] sm:$0xff] %v685
    %750 = vst [vmem:[#allocation4 + $0x1d8] sm:$0xff] %v686
    %751 = vst [vmem:[#allocation4 + $0x1e0] sm:$0xff] %v687
    %752 = vst [vmem:[#allocation4 + $0x1e8] sm:$0xff] %v688
    %753 = vst [vmem:[#allocation4 + $0x1f0] sm:$0xff] %v689
    %754 = vst [vmem:[#allocation4 + $0x1f8] sm:$0xff] %v690
    %s755 = scalar_lea.vmem %s6, 4
    %v756 = vld [vmem:[%s755] sm:$0xf]
    %v757 = vld [vmem:[%s105] sm:$0xf]
    %v758 = vld [vmem:[%s105 + $0x4] sm:$0xf]
    %v759 = vld [vmem:[%s105 + $0x8] sm:$0xf]
    %v760 = vld [vmem:[%s105 + $0xc] sm:$0xf]
    %v761 = vld [vmem:[%s105 + $0x10] sm:$0xf]
    %v762 = vld [vmem:[%s105 + $0x14] sm:$0xf]
    %v763 = vld [vmem:[%s105 + $0x18] sm:$0xf]
    %v764 = vld [vmem:[%s105 + $0x1c] sm:$0xf]
    %v765 = vld [vmem:[%s105 + $0x20] sm:$0xf]
    %v766 = vld [vmem:[%s105 + $0x24] sm:$0xf]
    %v767 = vld [vmem:[%s105 + $0x28] sm:$0xf]
    %v768 = vld [vmem:[%s105 + $0x2c] sm:$0xf]
    %v769 = vld [vmem:[%s105 + $0x30] sm:$0xf]
    %v770 = vld [vmem:[%s105 + $0x34] sm:$0xf]
    %v771 = vld [vmem:[%s105 + $0x38] sm:$0xf]
    %v772 = vld [vmem:[%s105 + $0x3c] sm:$0xf]
    %s773 = scalar_lea.vmem [#allocation6], 256
    %v774 = vld [vmem:[%s773] sm:$0xff]
    %v775 = vld [vmem:[%s773 + $0x8] sm:$0xff]
    %v776 = vld [vmem:[%s773 + $0x10] sm:$0xff]
    %v777 = vld [vmem:[%s773 + $0x18] sm:$0xff]
    %v778 = vld [vmem:[%s773 + $0x20] sm:$0xff]
    %v779 = vld [vmem:[%s773 + $0x28] sm:$0xff]
    %v780 = vld [vmem:[%s773 + $0x30] sm:$0xff]
    %v781 = vld [vmem:[%s773 + $0x38] sm:$0xff]
    %v782 = vld [vmem:[%s773 + $0x40] sm:$0xff]
    %v783 = vld [vmem:[%s773 + $0x48] sm:$0xff]
    %v784 = vld [vmem:[%s773 + $0x50] sm:$0xff]
    %v785 = vld [vmem:[%s773 + $0x58] sm:$0xff]
    %v786 = vld [vmem:[%s773 + $0x60] sm:$0xff]
    %v787 = vld [vmem:[%s773 + $0x68] sm:$0xff]
    %v788 = vld [vmem:[%s773 + $0x70] sm:$0xff]
    %v789 = vld [vmem:[%s773 + $0x78] sm:$0xff]
    %v790 = vld [vmem:[%s773 + $0x80] sm:$0xff]
    %v791 = vld [vmem:[%s773 + $0x88] sm:$0xff]
    %v792 = vld [vmem:[%s773 + $0x90] sm:$0xff]
    %v793 = vld [vmem:[%s773 + $0x98] sm:$0xff]
    %v794 = vld [vmem:[%s773 + $0xa0] sm:$0xff]
    %v795 = vld [vmem:[%s773 + $0xa8] sm:$0xff]
    %v796 = vld [vmem:[%s773 + $0xb0] sm:$0xff]
    %v797 = vld [vmem:[%s773 + $0xb8] sm:$0xff]
    %v798 = vld [vmem:[%s773 + $0xc0] sm:$0xff]
    %v799 = vld [vmem:[%s773 + $0xc8] sm:$0xff]
    %v800 = vld [vmem:[%s773 + $0xd0] sm:$0xff]
    %v801 = vld [vmem:[%s773 + $0xd8] sm:$0xff]
    %v802 = vld [vmem:[%s773 + $0xe0] sm:$0xff]
    %v803 = vld [vmem:[%s773 + $0xe8] sm:$0xff]
    %v804 = vld [vmem:[%s773 + $0xf0] sm:$0xff]
    %v805 = vld [vmem:[%s773 + $0xf8] sm:$0xff]
    %v822 = vunpack.c.l.b16 %v757
    %v823 = vunpack.c.l.b16 %v758
    %v824 = vunpack.c.l.b16 %v759
    %v825 = vunpack.c.l.b16 %v760
    %v826 = vunpack.c.l.b16 %v761
    %v827 = vunpack.c.l.b16 %v762
    %v828 = vunpack.c.l.b16 %v763
    %v829 = vunpack.c.l.b16 %v764
    %v830 = vunpack.c.l.b16 %v765
    %v831 = vunpack.c.l.b16 %v766
    %v832 = vunpack.c.l.b16 %v767
    %v833 = vunpack.c.l.b16 %v768
    %v834 = vunpack.c.l.b16 %v769
    %v835 = vunpack.c.l.b16 %v770
    %v836 = vunpack.c.l.b16 %v771
    %v837 = vunpack.c.l.b16 %v772
    %v838 = vpack.c.b16 %v823, %v822
    %v839 = vpack.c.b16 %v825, %v824
    %v840 = vpack.c.b16 %v827, %v826
    %v841 = vpack.c.b16 %v829, %v828
    %v842 = vpack.c.b16 %v831, %v830
    %v843 = vpack.c.b16 %v833, %v832
    %v844 = vpack.c.b16 %v835, %v834
    %v845 = vpack.c.b16 %v837, %v836
    %v886 = vunpack.c.l.b16 %v774
    %v887 = vunpack.c.h.b16 %v774
    %v888 = vunpack.c.l.b16 %v775
    %v889 = vunpack.c.h.b16 %v775
    %v890 = vunpack.c.l.b16 %v776
    %v891 = vunpack.c.h.b16 %v776
    %v892 = vunpack.c.l.b16 %v777
    %v893 = vunpack.c.h.b16 %v777
    %v894 = vunpack.c.l.b16 %v778
    %v895 = vunpack.c.h.b16 %v778
    %v896 = vunpack.c.l.b16 %v779
    %v897 = vunpack.c.h.b16 %v779
    %v898 = vunpack.c.l.b16 %v780
    %v899 = vunpack.c.h.b16 %v780
    %v900 = vunpack.c.l.b16 %v781
    %v901 = vunpack.c.h.b16 %v781
    %v902 = vunpack.c.l.b16 %v782
    %v903 = vunpack.c.h.b16 %v782
    %v904 = vunpack.c.l.b16 %v783
    %v905 = vunpack.c.h.b16 %v783
    %v906 = vunpack.c.l.b16 %v784
    %v907 = vunpack.c.h.b16 %v784
    %v908 = vunpack.c.l.b16 %v785
    %v909 = vunpack.c.h.b16 %v785
    %v910 = vunpack.c.l.b16 %v786
    %v911 = vunpack.c.h.b16 %v786
    %v912 = vunpack.c.l.b16 %v787
    %v913 = vunpack.c.h.b16 %v787
    %v914 = vunpack.c.l.b16 %v788
    %v915 = vunpack.c.h.b16 %v788
    %v916 = vunpack.c.l.b16 %v789
    %v917 = vunpack.c.h.b16 %v789
    %v918 = vunpack.c.l.b16 %v790
    %v919 = vunpack.c.h.b16 %v790
    %v920 = vunpack.c.l.b16 %v791
    %v921 = vunpack.c.h.b16 %v791
    %v922 = vunpack.c.l.b16 %v792
    %v923 = vunpack.c.h.b16 %v792
    %v924 = vunpack.c.l.b16 %v793
    %v925 = vunpack.c.h.b16 %v793
    %v926 = vunpack.c.l.b16 %v794
    %v927 = vunpack.c.h.b16 %v794
    %v928 = vunpack.c.l.b16 %v795
    %v929 = vunpack.c.h.b16 %v795
    %v930 = vunpack.c.l.b16 %v796
    %v931 = vunpack.c.h.b16 %v796
    %v932 = vunpack.c.l.b16 %v797
    %v933 = vunpack.c.h.b16 %v797
    %v934 = vunpack.c.l.b16 %v798
    %v935 = vunpack.c.h.b16 %v798
    %v936 = vunpack.c.l.b16 %v799
    %v937 = vunpack.c.h.b16 %v799
    %v938 = vunpack.c.l.b16 %v800
    %v939 = vunpack.c.h.b16 %v800
    %v940 = vunpack.c.l.b16 %v801
    %v941 = vunpack.c.h.b16 %v801
    %v942 = vunpack.c.l.b16 %v802
    %v943 = vunpack.c.h.b16 %v802
    %v944 = vunpack.c.l.b16 %v803
    %v945 = vunpack.c.h.b16 %v803
    %v946 = vunpack.c.l.b16 %v804
    %v947 = vunpack.c.h.b16 %v804
    %v948 = vunpack.c.l.b16 %v805
    %v949 = vunpack.c.h.b16 %v805
    %v950 = vpack.c.b16 %v890, %v886
    %v951 = vpack.c.b16 %v891, %v887
    %v952 = vpack.c.b16 %v892, %v888
    %v953 = vpack.c.b16 %v893, %v889
    %v954 = vpack.c.b16 %v898, %v894
    %v955 = vpack.c.b16 %v899, %v895
    %v956 = vpack.c.b16 %v900, %v896
    %v957 = vpack.c.b16 %v901, %v897
    %v958 = vpack.c.b16 %v906, %v902
    %v959 = vpack.c.b16 %v907, %v903
    %v960 = vpack.c.b16 %v908, %v904
    %v961 = vpack.c.b16 %v909, %v905
    %v962 = vpack.c.b16 %v914, %v910
    %v963 = vpack.c.b16 %v915, %v911
    %v964 = vpack.c.b16 %v916, %v912
    %v965 = vpack.c.b16 %v917, %v913
    %v966 = vpack.c.b16 %v922, %v918
    %v967 = vpack.c.b16 %v923, %v919
    %v968 = vpack.c.b16 %v924, %v920
    %v969 = vpack.c.b16 %v925, %v921
    %v970 = vpack.c.b16 %v930, %v926
    %v971 = vpack.c.b16 %v931, %v927
    %v972 = vpack.c.b16 %v932, %v928
    %v973 = vpack.c.b16 %v933, %v929
    %v974 = vpack.c.b16 %v938, %v934
    %v975 = vpack.c.b16 %v939, %v935
    %v976 = vpack.c.b16 %v940, %v936
    %v977 = vpack.c.b16 %v941, %v937
    %v978 = vpack.c.b16 %v946, %v942
    %v979 = vpack.c.b16 %v947, %v943
    %v980 = vpack.c.b16 %v948, %v944
    %v981 = vpack.c.b16 %v949, %v945
    %1014 = vmatprep.subr.bf16.mxu0 %v951
    %1015 = vmatpush1.bf16.msra.mxu0 %v950
    %1016 = vmatprep.subr.bf16.mxu0 %v955
    %1017 = vmatpush1.bf16.msra.mxu0 %v954
    %1018 = vmatprep.subr.bf16.mxu0 %v959
    %1019 = vmatpush1.bf16.msra.mxu0 %v958
    %1020 = vmatprep.subr.bf16.mxu0 %v963
    %1021 = vmatpush1.bf16.msra.mxu0 %v962
    %1022 = vmatprep.subr.bf16.mxu0 %v967
    %1023 = vmatpush1.bf16.msra.mxu0 %v966
    %1024 = vmatprep.subr.bf16.mxu0 %v971
    %1025 = vmatpush1.bf16.msra.mxu0 %v970
    %1026 = vmatprep.subr.bf16.mxu0 %v975
    %1027 = vmatpush1.bf16.msra.mxu0 %v974
    %1028 = vmatprep.subr.bf16.mxu0 %v979
    %1029 = vmatpush1.bf16.msra.mxu0 %v978
    %1030 = vmatprep.subr.bf16.mxu0 0
    %1031 = vmatpush1.bf16.msra.mxu0 0
    %1032 = vmatprep.subr.bf16.mxu0 0
    %1033 = vmatpush1.bf16.msra.mxu0 0
    %1034 = vmatprep.subr.bf16.mxu0 0
    %1035 = vmatpush1.bf16.msra.mxu0 0
    %1036 = vmatprep.subr.bf16.mxu0 0
    %1037 = vmatpush1.bf16.msra.mxu0 0
    %1038 = vmatprep.subr.bf16.mxu0 0
    %1039 = vmatpush1.bf16.msra.mxu0 0
    %1040 = vmatprep.subr.bf16.mxu0 0
    %1041 = vmatpush1.bf16.msra.mxu0 0
    %1042 = vmatprep.subr.bf16.mxu0 0
    %1043 = vmatpush1.bf16.msra.mxu0 0
    %1044 = vmatprep.subr.bf16.mxu0 0
    %1045 = vmatpush1.bf16.msra.mxu0 0
    %1046 = vmatprep.mubr.bf16.mxu0 0
    %1047 = vmatmul.mubr.bf16.gmra.mrb[0].mxu0 %v838
    %v1048 = vpop.f32.mrb[0].mxu0
    %v1049 = vadd.f32 0.0, %v1048
    %v1050 = vpop.f32.mrb[0].mxu0
    %v1051 = vadd.f32 0.0, %v1050
    %v1052 = vpop.f32.mrb[0].mxu0
    %v1053 = vadd.f32 0.0, %v1052
    %v1054 = vpop.f32.mrb[0].mxu0
    %v1055 = vadd.f32 0.0, %v1054
    %1056 = vmatprep.mubr.bf16.mxu0 0
    %1057 = vmatmul.mubr.bf16.gmra.mrb[0].mxu0 %v839
    %v1058 = vpop.f32.mrb[0].mxu0
    %v1059 = vadd.f32 0.0, %v1058
    %v1060 = vpop.f32.mrb[0].mxu0
    %v1061 = vadd.f32 0.0, %v1060
    %v1062 = vpop.f32.mrb[0].mxu0
    %v1063 = vadd.f32 0.0, %v1062
    %v1064 = vpop.f32.mrb[0].mxu0
    %v1065 = vadd.f32 0.0, %v1064
    %1066 = vmatprep.mubr.bf16.mxu0 0
    %1067 = vmatmul.mubr.bf16.gmra.mrb[0].mxu0 %v840
    %v1068 = vpop.f32.mrb[0].mxu0
    %v1069 = vadd.f32 0.0, %v1068
    %v1070 = vpop.f32.mrb[0].mxu0
    %v1071 = vadd.f32 0.0, %v1070
    %v1072 = vpop.f32.mrb[0].mxu0
    %v1073 = vadd.f32 0.0, %v1072
    %v1074 = vpop.f32.mrb[0].mxu0
    %v1075 = vadd.f32 0.0, %v1074
    %1076 = vmatprep.mubr.bf16.mxu0 0
    %1077 = vmatmul.mubr.bf16.gmra.mrb[0].mxu0 %v841
    %v1078 = vpop.f32.mrb[0].mxu0
    %v1079 = vadd.f32 0.0, %v1078
    %v1080 = vpop.f32.mrb[0].mxu0
    %v1081 = vadd.f32 0.0, %v1080
    %v1082 = vpop.f32.mrb[0].mxu0
    %v1083 = vadd.f32 0.0, %v1082
    %v1084 = vpop.f32.mrb[0].mxu0
    %v1085 = vadd.f32 0.0, %v1084
    %1086 = vmatprep.mubr.bf16.mxu0 0
    %1087 = vmatmul.mubr.bf16.gmra.mrb[0].mxu0 %v842
    %v1088 = vpop.f32.mrb[0].mxu0
    %v1089 = vadd.f32 0.0, %v1088
    %v1090 = vpop.f32.mrb[0].mxu0
    %v1091 = vadd.f32 0.0, %v1090
    %v1092 = vpop.f32.mrb[0].mxu0
    %v1093 = vadd.f32 0.0, %v1092
    %v1094 = vpop.f32.mrb[0].mxu0
    %v1095 = vadd.f32 0.0, %v1094
    %1096 = vmatprep.mubr.bf16.mxu0 0
    %1097 = vmatmul.mubr.bf16.gmra.mrb[0].mxu0 %v843
    %v1098 = vpop.f32.mrb[0].mxu0
    %v1099 = vadd.f32 0.0, %v1098
    %v1100 = vpop.f32.mrb[0].mxu0
    %v1101 = vadd.f32 0.0, %v1100
    %v1102 = vpop.f32.mrb[0].mxu0
    %v1103 = vadd.f32 0.0, %v1102
    %v1104 = vpop.f32.mrb[0].mxu0
    %v1105 = vadd.f32 0.0, %v1104
    %1106 = vmatprep.mubr.bf16.mxu0 0
    %1107 = vmatmul.mubr.bf16.gmra.mrb[0].mxu0 %v844
    %v1108 = vpop.f32.mrb[0].mxu0
    %v1109 = vadd.f32 0.0, %v1108
    %v1110 = vpop.f32.mrb[0].mxu0
    %v1111 = vadd.f32 0.0, %v1110
    %v1112 = vpop.f32.mrb[0].mxu0
    %v1113 = vadd.f32 0.0, %v1112
    %v1114 = vpop.f32.mrb[0].mxu0
    %v1115 = vadd.f32 0.0, %v1114
    %1116 = vmatprep.mubr.bf16.mxu0 0
    %1117 = vmatmul.mubr.bf16.gmra.mrb[0].mxu0 %v845
    %v1118 = vpop.f32.mrb[0].mxu0
    %v1119 = vadd.f32 0.0, %v1118
    %v1120 = vpop.f32.mrb[0].mxu0
    %v1121 = vadd.f32 0.0, %v1120
    %v1122 = vpop.f32.mrb[0].mxu0
    %v1123 = vadd.f32 0.0, %v1122
    %v1124 = vpop.f32.mrb[0].mxu0
    %v1125 = vadd.f32 0.0, %v1124
    %1126 = vdwg.mxu0
    %1127 = vmatprep.subr.bf16.mxu0 %v953
    %1128 = vmatpush1.bf16.msra.mxu0 %v952
    %1129 = vmatprep.subr.bf16.mxu0 %v957
    %1130 = vmatpush1.bf16.msra.mxu0 %v956
    %1131 = vmatprep.subr.bf16.mxu0 %v961
    %1132 = vmatpush1.bf16.msra.mxu0 %v960
    %1133 = vmatprep.subr.bf16.mxu0 %v965
    %1134 = vmatpush1.bf16.msra.mxu0 %v964
    %1135 = vmatprep.subr.bf16.mxu0 %v969
    %1136 = vmatpush1.bf16.msra.mxu0 %v968
    %1137 = vmatprep.subr.bf16.mxu0 %v973
    %1138 = vmatpush1.bf16.msra.mxu0 %v972
    %1139 = vmatprep.subr.bf16.mxu0 %v977
    %1140 = vmatpush1.bf16.msra.mxu0 %v976
    %1141 = vmatprep.subr.bf16.mxu0 %v981
    %1142 = vmatpush1.bf16.msra.mxu0 %v980
    %1143 = vmatprep.subr.bf16.mxu0 0
    %1144 = vmatpush1.bf16.msra.mxu0 0
    %1145 = vmatprep.subr.bf16.mxu0 0
    %1146 = vmatpush1.bf16.msra.mxu0 0
    %1147 = vmatprep.subr.bf16.mxu0 0
    %1148 = vmatpush1.bf16.msra.mxu0 0
    %1149 = vmatprep.subr.bf16.mxu0 0
    %1150 = vmatpush1.bf16.msra.mxu0 0
    %1151 = vmatprep.subr.bf16.mxu0 0
    %1152 = vmatpush1.bf16.msra.mxu0 0
    %1153 = vmatprep.subr.bf16.mxu0 0
    %1154 = vmatpush1.bf16.msra.mxu0 0
    %1155 = vmatprep.subr.bf16.mxu0 0
    %1156 = vmatpush1.bf16.msra.mxu0 0
    %1157 = vmatprep.subr.bf16.mxu0 0
    %1158 = vmatpush1.bf16.msra.mxu0 0
    %1159 = vmatprep.mubr.bf16.mxu0 0
    %1160 = vmatmul.mubr.bf16.gmra.mrb[0].mxu0 %v838
    %v1161 = vpop.f32.mrb[0].mxu0
    %v1162 = vadd.f32 0.0, %v1161
    %v1163 = vpop.f32.mrb[0].mxu0
    %v1164 = vadd.f32 0.0, %v1163
    %v1165 = vpop.f32.mrb[0].mxu0
    %v1166 = vadd.f32 0.0, %v1165
    %v1167 = vpop.f32.mrb[0].mxu0
    %v1168 = vadd.f32 0.0, %v1167
    %1169 = vmatprep.mubr.bf16.mxu0 0
    %1170 = vmatmul.mubr.bf16.gmra.mrb[0].mxu0 %v839
    %v1171 = vpop.f32.mrb[0].mxu0
    %v1172 = vadd.f32 0.0, %v1171
    %v1173 = vpop.f32.mrb[0].mxu0
    %v1174 = vadd.f32 0.0, %v1173
    %v1175 = vpop.f32.mrb[0].mxu0
    %v1176 = vadd.f32 0.0, %v1175
    %v1177 = vpop.f32.mrb[0].mxu0
    %v1178 = vadd.f32 0.0, %v1177
    %1179 = vmatprep.mubr.bf16.mxu0 0
    %1180 = vmatmul.mubr.bf16.gmra.mrb[0].mxu0 %v840
    %v1181 = vpop.f32.mrb[0].mxu0
    %v1182 = vadd.f32 0.0, %v1181
    %v1183 = vpop.f32.mrb[0].mxu0
    %v1184 = vadd.f32 0.0, %v1183
    %v1185 = vpop.f32.mrb[0].mxu0
    %v1186 = vadd.f32 0.0, %v1185
    %v1187 = vpop.f32.mrb[0].mxu0
    %v1188 = vadd.f32 0.0, %v1187
    %1189 = vmatprep.mubr.bf16.mxu0 0
    %1190 = vmatmul.mubr.bf16.gmra.mrb[0].mxu0 %v841
    %v1191 = vpop.f32.mrb[0].mxu0
    %v1192 = vadd.f32 0.0, %v1191
    %v1193 = vpop.f32.mrb[0].mxu0
    %v1194 = vadd.f32 0.0, %v1193
    %v1195 = vpop.f32.mrb[0].mxu0
    %v1196 = vadd.f32 0.0, %v1195
    %v1197 = vpop.f32.mrb[0].mxu0
    %v1198 = vadd.f32 0.0, %v1197
    %1199 = vmatprep.mubr.bf16.mxu0 0
    %1200 = vmatmul.mubr.bf16.gmra.mrb[0].mxu0 %v842
    %v1201 = vpop.f32.mrb[0].mxu0
    %v1202 = vadd.f32 0.0, %v1201
    %v1203 = vpop.f32.mrb[0].mxu0
    %v1204 = vadd.f32 0.0, %v1203
    %v1205 = vpop.f32.mrb[0].mxu0
    %v1206 = vadd.f32 0.0, %v1205
    %v1207 = vpop.f32.mrb[0].mxu0
    %v1208 = vadd.f32 0.0, %v1207
    %1209 = vmatprep.mubr.bf16.mxu0 0
    %1210 = vmatmul.mubr.bf16.gmra.mrb[0].mxu0 %v843
    %v1211 = vpop.f32.mrb[0].mxu0
    %v1212 = vadd.f32 0.0, %v1211
    %v1213 = vpop.f32.mrb[0].mxu0
    %v1214 = vadd.f32 0.0, %v1213
    %v1215 = vpop.f32.mrb[0].mxu0
    %v1216 = vadd.f32 0.0, %v1215
    %v1217 = vpop.f32.mrb[0].mxu0
    %v1218 = vadd.f32 0.0, %v1217
    %1219 = vmatprep.mubr.bf16.mxu0 0
    %1220 = vmatmul.mubr.bf16.gmra.mrb[0].mxu0 %v844
    %v1221 = vpop.f32.mrb[0].mxu0
    %v1222 = vadd.f32 0.0, %v1221
    %v1223 = vpop.f32.mrb[0].mxu0
    %v1224 = vadd.f32 0.0, %v1223
    %v1225 = vpop.f32.mrb[0].mxu0
    %v1226 = vadd.f32 0.0, %v1225
    %v1227 = vpop.f32.mrb[0].mxu0
    %v1228 = vadd.f32 0.0, %v1227
    %1229 = vmatprep.mubr.bf16.mxu0 0
    %1230 = vmatmul.mubr.bf16.gmra.mrb[0].mxu0 %v845
    %v1231 = vpop.f32.mrb[0].mxu0
    %v1232 = vadd.f32 0.0, %v1231
    %v1233 = vpop.f32.mrb[0].mxu0
    %v1234 = vadd.f32 0.0, %v1233
    %v1235 = vpop.f32.mrb[0].mxu0
    %v1236 = vadd.f32 0.0, %v1235
    %v1237 = vpop.f32.mrb[0].mxu0
    %v1238 = vadd.f32 0.0, %v1237
    %1239 = vdwg.mxu0
    %v1241 = vlaneseq
    %v1242 = vshrl.u32 %v1241, 7
    %v1243 = vsub.s32 0, %v1242
    %v1244 = vrot.slane %v756, %v1243
    %v1245 = vlaneseq
    %v1246 = vshrl.u32 %v1245, 7
    %v1247 = vsub.s32 1, %v1246
    %v1248 = vrot.slane %v756, %v1247
    %v1249 = vlaneseq
    %v1250 = vshrl.u32 %v1249, 7
    %v1251 = vsub.s32 2, %v1250
    %v1252 = vrot.slane %v756, %v1251
    %v1253 = vlaneseq
    %v1254 = vshrl.u32 %v1253, 7
    %v1255 = vsub.s32 3, %v1254
    %v1256 = vrot.slane %v756, %v1255
    %v1261 = vadd.f32 %v1244, %v1049
    %v1262 = vadd.f32 %v1248, %v1051
    %v1263 = vadd.f32 %v1252, %v1162
    %v1264 = vadd.f32 %v1256, %v1164
    %v1265 = vadd.f32 %v1244, %v1053
    %v1266 = vadd.f32 %v1248, %v1055
    %v1267 = vadd.f32 %v1252, %v1166
    %v1268 = vadd.f32 %v1256, %v1168
    %v1269 = vadd.f32 %v1244, %v1059
    %v1270 = vadd.f32 %v1248, %v1061
    %v1271 = vadd.f32 %v1252, %v1172
    %v1272 = vadd.f32 %v1256, %v1174
    %v1273 = vadd.f32 %v1244, %v1063
    %v1274 = vadd.f32 %v1248, %v1065
    %v1275 = vadd.f32 %v1252, %v1176
    %v1276 = vadd.f32 %v1256, %v1178
    %v1277 = vadd.f32 %v1244, %v1069
    %v1278 = vadd.f32 %v1248, %v1071
    %v1279 = vadd.f32 %v1252, %v1182
    %v1280 = vadd.f32 %v1256, %v1184
    %v1281 = vadd.f32 %v1244, %v1073
    %v1282 = vadd.f32 %v1248, %v1075
    %v1283 = vadd.f32 %v1252, %v1186
    %v1284 = vadd.f32 %v1256, %v1188
    %v1285 = vadd.f32 %v1244, %v1079
    %v1286 = vadd.f32 %v1248, %v1081
    %v1287 = vadd.f32 %v1252, %v1192
    %v1288 = vadd.f32 %v1256, %v1194
    %v1289 = vadd.f32 %v1244, %v1083
    %v1290 = vadd.f32 %v1248, %v1085
    %v1291 = vadd.f32 %v1252, %v1196
    %v1292 = vadd.f32 %v1256, %v1198
    %v1293 = vadd.f32 %v1244, %v1089
    %v1294 = vadd.f32 %v1248, %v1091
    %v1295 = vadd.f32 %v1252, %v1202
    %v1296 = vadd.f32 %v1256, %v1204
    %v1297 = vadd.f32 %v1244, %v1093
    %v1298 = vadd.f32 %v1248, %v1095
    %v1299 = vadd.f32 %v1252, %v1206
    %v1300 = vadd.f32 %v1256, %v1208
    %v1301 = vadd.f32 %v1244, %v1099
    %v1302 = vadd.f32 %v1248, %v1101
    %v1303 = vadd.f32 %v1252, %v1212
    %v1304 = vadd.f32 %v1256, %v1214
    %v1305 = vadd.f32 %v1244, %v1103
    %v1306 = vadd.f32 %v1248, %v1105
    %v1307 = vadd.f32 %v1252, %v1216
    %v1308 = vadd.f32 %v1256, %v1218
    %v1309 = vadd.f32 %v1244, %v1109
    %v1310 = vadd.f32 %v1248, %v1111
    %v1311 = vadd.f32 %v1252, %v1222
    %v1312 = vadd.f32 %v1256, %v1224
    %v1313 = vadd.f32 %v1244, %v1113
    %v1314 = vadd.f32 %v1248, %v1115
    %v1315 = vadd.f32 %v1252, %v1226
    %v1316 = vadd.f32 %v1256, %v1228
    %v1317 = vadd.f32 %v1244, %v1119
    %v1318 = vadd.f32 %v1248, %v1121
    %v1319 = vadd.f32 %v1252, %v1232
    %v1320 = vadd.f32 %v1256, %v1234
    %v1321 = vadd.f32 %v1244, %v1123
    %v1322 = vadd.f32 %v1248, %v1125
    %v1323 = vadd.f32 %v1252, %v1236
    %v1324 = vadd.f32 %v1256, %v1238
    %1325 = vst [vmem:[#allocation5] sm:$0xff] %v1261
    %1326 = vst [vmem:[#allocation5 + $0x8] sm:$0xff] %v1262
    %1327 = vst [vmem:[#allocation5 + $0x10] sm:$0xff] %v1263
    %1328 = vst [vmem:[#allocation5 + $0x18] sm:$0xff] %v1264
    %1329 = vst [vmem:[#allocation5 + $0x20] sm:$0xff] %v1265
    %1330 = vst [vmem:[#allocation5 + $0x28] sm:$0xff] %v1266
    %1331 = vst [vmem:[#allocation5 + $0x30] sm:$0xff] %v1267
    %1332 = vst [vmem:[#allocation5 + $0x38] sm:$0xff] %v1268
    %1333 = vst [vmem:[#allocation5 + $0x40] sm:$0xff] %v1269
    %1334 = vst [vmem:[#allocation5 + $0x48] sm:$0xff] %v1270
    %1335 = vst [vmem:[#allocation5 + $0x50] sm:$0xff] %v1271
    %1336 = vst [vmem:[#allocation5 + $0x58] sm:$0xff] %v1272
    %1337 = vst [vmem:[#allocation5 + $0x60] sm:$0xff] %v1273
    %1338 = vst [vmem:[#allocation5 + $0x68] sm:$0xff] %v1274
    %1339 = vst [vmem:[#allocation5 + $0x70] sm:$0xff] %v1275
    %1340 = vst [vmem:[#allocation5 + $0x78] sm:$0xff] %v1276
    %1341 = vst [vmem:[#allocation5 + $0x80] sm:$0xff] %v1277
    %1342 = vst [vmem:[#allocation5 + $0x88] sm:$0xff] %v1278
    %1343 = vst [vmem:[#allocation5 + $0x90] sm:$0xff] %v1279
    %1344 = vst [vmem:[#allocation5 + $0x98] sm:$0xff] %v1280
    %1345 = vst [vmem:[#allocation5 + $0xa0] sm:$0xff] %v1281
    %1346 = vst [vmem:[#allocation5 + $0xa8] sm:$0xff] %v1282
    %1347 = vst [vmem:[#allocation5 + $0xb0] sm:$0xff] %v1283
    %1348 = vst [vmem:[#allocation5 + $0xb8] sm:$0xff] %v1284
    %1349 = vst [vmem:[#allocation5 + $0xc0] sm:$0xff] %v1285
    %1350 = vst [vmem:[#allocation5 + $0xc8] sm:$0xff] %v1286
    %1351 = vst [vmem:[#allocation5 + $0xd0] sm:$0xff] %v1287
    %1352 = vst [vmem:[#allocation5 + $0xd8] sm:$0xff] %v1288
    %1353 = vst [vmem:[#allocation5 + $0xe0] sm:$0xff] %v1289
    %1354 = vst [vmem:[#allocation5 + $0xe8] sm:$0xff] %v1290
    %1355 = vst [vmem:[#allocation5 + $0xf0] sm:$0xff] %v1291
    %1356 = vst [vmem:[#allocation5 + $0xf8] sm:$0xff] %v1292
    %1357 = vst [vmem:[#allocation5 + $0x100] sm:$0xff] %v1293
    %1358 = vst [vmem:[#allocation5 + $0x108] sm:$0xff] %v1294
    %1359 = vst [vmem:[#allocation5 + $0x110] sm:$0xff] %v1295
    %1360 = vst [vmem:[#allocation5 + $0x118] sm:$0xff] %v1296
    %1361 = vst [vmem:[#allocation5 + $0x120] sm:$0xff] %v1297
    %1362 = vst [vmem:[#allocation5 + $0x128] sm:$0xff] %v1298
    %1363 = vst [vmem:[#allocation5 + $0x130] sm:$0xff] %v1299
    %1364 = vst [vmem:[#allocation5 + $0x138] sm:$0xff] %v1300
    %1365 = vst [vmem:[#allocation5 + $0x140] sm:$0xff] %v1301
    %1366 = vst [vmem:[#allocation5 + $0x148] sm:$0xff] %v1302
    %1367 = vst [vmem:[#allocation5 + $0x150] sm:$0xff] %v1303
    %1368 = vst [vmem:[#allocation5 + $0x158] sm:$0xff] %v1304
    %1369 = vst [vmem:[#allocation5 + $0x160] sm:$0xff] %v1305
    %1370 = vst [vmem:[#allocation5 + $0x168] sm:$0xff] %v1306
    %1371 = vst [vmem:[#allocation5 + $0x170] sm:$0xff] %v1307
    %1372 = vst [vmem:[#allocation5 + $0x178] sm:$0xff] %v1308
    %1373 = vst [vmem:[#allocation5 + $0x180] sm:$0xff] %v1309
    %1374 = vst [vmem:[#allocation5 + $0x188] sm:$0xff] %v1310
    %1375 = vst [vmem:[#allocation5 + $0x190] sm:$0xff] %v1311
    %1376 = vst [vmem:[#allocation5 + $0x198] sm:$0xff] %v1312
    %1377 = vst [vmem:[#allocation5 + $0x1a0] sm:$0xff] %v1313
    %1378 = vst [vmem:[#allocation5 + $0x1a8] sm:$0xff] %v1314
    %1379 = vst [vmem:[#allocation5 + $0x1b0] sm:$0xff] %v1315
    %1380 = vst [vmem:[#allocation5 + $0x1b8] sm:$0xff] %v1316
    %1381 = vst [vmem:[#allocation5 + $0x1c0] sm:$0xff] %v1317
    %1382 = vst [vmem:[#allocation5 + $0x1c8] sm:$0xff] %v1318
    %1383 = vst [vmem:[#allocation5 + $0x1d0] sm:$0xff] %v1319
    %1384 = vst [vmem:[#allocation5 + $0x1d8] sm:$0xff] %v1320
    %1385 = vst [vmem:[#allocation5 + $0x1e0] sm:$0xff] %v1321
    %1386 = vst [vmem:[#allocation5 + $0x1e8] sm:$0xff] %v1322
    %1387 = vst [vmem:[#allocation5 + $0x1f0] sm:$0xff] %v1323
    %1388 = vst [vmem:[#allocation5 + $0x1f8] sm:$0xff] %v1324
    %v1389 = vld [vmem:[#allocation2] sm:$0xff]
    %v1390 = vld [vmem:[#allocation2 + $0x8] sm:$0xff]
    %v1391 = vld [vmem:[#allocation3] sm:$0xff]
    %v1392 = vld [vmem:[#allocation3 + $0x8] sm:$0xff]
    %v1393 = vld [vmem:[#allocation4] sm:$0xff]
    %v1394 = vld [vmem:[#allocation4 + $0x8] sm:$0xff]
    %v1395 = vld [vmem:[#allocation4 + $0x10] sm:$0xff]
    %v1396 = vld [vmem:[#allocation4 + $0x18] sm:$0xff]
    %v1397 = vld [vmem:[#allocation4 + $0x20] sm:$0xff]
    %v1398 = vld [vmem:[#allocation4 + $0x28] sm:$0xff]
    %v1399 = vld [vmem:[#allocation4 + $0x30] sm:$0xff]
    %v1400 = vld [vmem:[#allocation4 + $0x38] sm:$0xff]
    %v1401 = vpack.c.bf16 %v1390, %v1389
    %v1402 = vld [vmem:[#allocation9] sm:$0xff]
    %v1403 = vld [vmem:[#allocation9 + $0x8] sm:$0xff]
    %v1404 = vld [vmem:[#allocation9 + $0x10] sm:$0xff]
    %v1405 = vld [vmem:[#allocation9 + $0x18] sm:$0xff]
    %v1406 = vld [vmem:[#allocation9 + $0x20] sm:$0xff]
    %v1407 = vld [vmem:[#allocation9 + $0x28] sm:$0xff]
    %v1408 = vld [vmem:[#allocation9 + $0x30] sm:$0xff]
    %v1409 = vld [vmem:[#allocation9 + $0x38] sm:$0xff]
    %v1410 = vld [vmem:[#allocation9 + $0x40] sm:$0xff]
    %v1411 = vld [vmem:[#allocation9 + $0x48] sm:$0xff]
    %v1412 = vld [vmem:[#allocation9 + $0x50] sm:$0xff]
    %v1413 = vld [vmem:[#allocation9 + $0x58] sm:$0xff]
    %v1414 = vld [vmem:[#allocation9 + $0x60] sm:$0xff]
    %v1415 = vld [vmem:[#allocation9 + $0x68] sm:$0xff]
    %v1416 = vld [vmem:[#allocation9 + $0x70] sm:$0xff]
    %v1417 = vld [vmem:[#allocation9 + $0x78] sm:$0xff]
    %v1418 = vld [vmem:[#allocation9 + $0x80] sm:$0xff]
    %v1419 = vld [vmem:[#allocation9 + $0x88] sm:$0xff]
    %v1420 = vld [vmem:[#allocation9 + $0x90] sm:$0xff]
    %v1421 = vld [vmem:[#allocation9 + $0x98] sm:$0xff]
    %v1422 = vld [vmem:[#allocation9 + $0xa0] sm:$0xff]
    %v1423 = vld [vmem:[#allocation9 + $0xa8] sm:$0xff]
    %v1424 = vld [vmem:[#allocation9 + $0xb0] sm:$0xff]
    %v1425 = vld [vmem:[#allocation9 + $0xb8] sm:$0xff]
    %v1426 = vld [vmem:[#allocation9 + $0xc0] sm:$0xff]
    %v1427 = vld [vmem:[#allocation9 + $0xc8] sm:$0xff]
    %v1428 = vld [vmem:[#allocation9 + $0xd0] sm:$0xff]
    %v1429 = vld [vmem:[#allocation9 + $0xd8] sm:$0xff]
    %v1430 = vld [vmem:[#allocation9 + $0xe0] sm:$0xff]
    %v1431 = vld [vmem:[#allocation9 + $0xe8] sm:$0xff]
    %v1432 = vld [vmem:[#allocation9 + $0xf0] sm:$0xff]
    %v1433 = vld [vmem:[#allocation9 + $0xf8] sm:$0xff]
    %v1466 = vunpack.c.l.b16 %v1402
    %v1467 = vunpack.c.h.b16 %v1402
    %v1468 = vunpack.c.l.b16 %v1403
    %v1469 = vunpack.c.h.b16 %v1403
    %v1470 = vunpack.c.l.b16 %v1404
    %v1471 = vunpack.c.h.b16 %v1404
    %v1472 = vunpack.c.l.b16 %v1405
    %v1473 = vunpack.c.h.b16 %v1405
    %v1474 = vunpack.c.l.b16 %v1406
    %v1475 = vunpack.c.h.b16 %v1406
    %v1476 = vunpack.c.l.b16 %v1407
    %v1477 = vunpack.c.h.b16 %v1407
    %v1478 = vunpack.c.l.b16 %v1408
    %v1479 = vunpack.c.h.b16 %v1408
    %v1480 = vunpack.c.l.b16 %v1409
    %v1481 = vunpack.c.h.b16 %v1409
    %v1482 = vunpack.c.l.b16 %v1410
    %v1483 = vunpack.c.h.b16 %v1410
    %v1484 = vunpack.c.l.b16 %v1411
    %v1485 = vunpack.c.h.b16 %v1411
    %v1486 = vunpack.c.l.b16 %v1412
    %v1487 = vunpack.c.h.b16 %v1412
    %v1488 = vunpack.c.l.b16 %v1413
    %v1489 = vunpack.c.h.b16 %v1413
    %v1490 = vunpack.c.l.b16 %v1414
    %v1491 = vunpack.c.h.b16 %v1414
    %v1492 = vunpack.c.l.b16 %v1415
    %v1493 = vunpack.c.h.b16 %v1415
    %v1494 = vunpack.c.l.b16 %v1416
    %v1495 = vunpack.c.h.b16 %v1416
    %v1496 = vunpack.c.l.b16 %v1417
    %v1497 = vunpack.c.h.b16 %v1417
    %v1498 = vunpack.c.l.b16 %v1418
    %v1499 = vunpack.c.h.b16 %v1418
    %v1500 = vunpack.c.l.b16 %v1419
    %v1501 = vunpack.c.h.b16 %v1419
    %v1502 = vunpack.c.l.b16 %v1420
    %v1503 = vunpack.c.h.b16 %v1420
    %v1504 = vunpack.c.l.b16 %v1421
    %v1505 = vunpack.c.h.b16 %v1421
    %v1506 = vunpack.c.l.b16 %v1422
    %v1507 = vunpack.c.h.b16 %v1422
    %v1508 = vunpack.c.l.b16 %v1423
    %v1509 = vunpack.c.h.b16 %v1423
    %v1510 = vunpack.c.l.b16 %v1424
    %v1511 = vunpack.c.h.b16 %v1424
    %v1512 = vunpack.c.l.b16 %v1425
    %v1513 = vunpack.c.h.b16 %v1425
    %v1514 = vunpack.c.l.b16 %v1426
    %v1515 = vunpack.c.h.b16 %v1426
    %v1516 = vunpack.c.l.b16 %v1427
    %v1517 = vunpack.c.h.b16 %v1427
    %v1518 = vunpack.c.l.b16 %v1428
    %v1519 = vunpack.c.h.b16 %v1428
    %v1520 = vunpack.c.l.b16 %v1429
    %v1521 = vunpack.c.h.b16 %v1429
    %v1522 = vunpack.c.l.b16 %v1430
    %v1523 = vunpack.c.h.b16 %v1430
    %v1524 = vunpack.c.l.b16 %v1431
    %v1525 = vunpack.c.h.b16 %v1431
    %v1526 = vunpack.c.l.b16 %v1432
    %v1527 = vunpack.c.h.b16 %v1432
    %v1528 = vunpack.c.l.b16 %v1433
    %v1529 = vunpack.c.h.b16 %v1433
    %v1530 = vpack.c.b16 %v1470, %v1466
    %v1531 = vpack.c.b16 %v1471, %v1467
    %v1532 = vpack.c.b16 %v1472, %v1468
    %v1533 = vpack.c.b16 %v1473, %v1469
    %v1534 = vpack.c.b16 %v1478, %v1474
    %v1535 = vpack.c.b16 %v1479, %v1475
    %v1536 = vpack.c.b16 %v1480, %v1476
    %v1537 = vpack.c.b16 %v1481, %v1477
    %v1538 = vpack.c.b16 %v1486, %v1482
    %v1539 = vpack.c.b16 %v1487, %v1483
    %v1540 = vpack.c.b16 %v1488, %v1484
    %v1541 = vpack.c.b16 %v1489, %v1485
    %v1542 = vpack.c.b16 %v1494, %v1490
    %v1543 = vpack.c.b16 %v1495, %v1491
    %v1544 = vpack.c.b16 %v1496, %v1492
    %v1545 = vpack.c.b16 %v1497, %v1493
    %v1546 = vpack.c.b16 %v1502, %v1498
    %v1547 = vpack.c.b16 %v1503, %v1499
    %v1548 = vpack.c.b16 %v1504, %v1500
    %v1549 = vpack.c.b16 %v1505, %v1501
    %v1550 = vpack.c.b16 %v1510, %v1506
    %v1551 = vpack.c.b16 %v1511, %v1507
    %v1552 = vpack.c.b16 %v1512, %v1508
    %v1553 = vpack.c.b16 %v1513, %v1509
    %v1554 = vpack.c.b16 %v1518, %v1514
    %v1555 = vpack.c.b16 %v1519, %v1515
    %v1556 = vpack.c.b16 %v1520, %v1516
    %v1557 = vpack.c.b16 %v1521, %v1517
    %v1558 = vpack.c.b16 %v1526, %v1522
    %v1559 = vpack.c.b16 %v1527, %v1523
    %v1560 = vpack.c.b16 %v1528, %v1524
    %v1561 = vpack.c.b16 %v1529, %v1525
    %1594 = vmatprep.subr.bf16.mxu0 %v1531
    %1595 = vmatpush1.bf16.msra.mxu0 %v1530
    %1596 = vmatprep.subr.bf16.mxu0 %v1535
    %1597 = vmatpush1.bf16.msra.mxu0 %v1534
    %1598 = vmatprep.subr.bf16.mxu0 %v1539
    %1599 = vmatpush1.bf16.msra.mxu0 %v1538
    %1600 = vmatprep.subr.bf16.mxu0 %v1543
    %1601 = vmatpush1.bf16.msra.mxu0 %v1542
    %1602 = vmatprep.subr.bf16.mxu0 %v1547
    %1603 = vmatpush1.bf16.msra.mxu0 %v1546
    %1604 = vmatprep.subr.bf16.mxu0 %v1551
    %1605 = vmatpush1.bf16.msra.mxu0 %v1550
    %1606 = vmatprep.subr.bf16.mxu0 %v1555
    %1607 = vmatpush1.bf16.msra.mxu0 %v1554
    %1608 = vmatprep.subr.bf16.mxu0 %v1559
    %1609 = vmatpush1.bf16.msra.mxu0 %v1558
    %1610 = vmatprep.subr.bf16.mxu0 0
    %1611 = vmatpush1.bf16.msra.mxu0 0
    %1612 = vmatprep.subr.bf16.mxu0 0
    %1613 = vmatpush1.bf16.msra.mxu0 0
    %1614 = vmatprep.subr.bf16.mxu0 0
    %1615 = vmatpush1.bf16.msra.mxu0 0
    %1616 = vmatprep.subr.bf16.mxu0 0
    %1617 = vmatpush1.bf16.msra.mxu0 0
    %1618 = vmatprep.subr.bf16.mxu0 0
    %1619 = vmatpush1.bf16.msra.mxu0 0
    %1620 = vmatprep.subr.bf16.mxu0 0
    %1621 = vmatpush1.bf16.msra.mxu0 0
    %1622 = vmatprep.subr.bf16.mxu0 0
    %1623 = vmatpush1.bf16.msra.mxu0 0
    %1624 = vmatprep.subr.bf16.mxu0 0
    %1625 = vmatpush1.bf16.msra.mxu0 0
    %1626 = vmatprep.mubr.bf16.mxu0 0
    %1627 = vmatmul.mubr.bf16.gmra.mrb[0].mxu0 %v1401
    %v1628 = vpop.f32.mrb[0].mxu0
    %v1629 = vadd.f32 0.0, %v1628
    %v1630 = vpop.f32.mrb[0].mxu0
    %v1631 = vadd.f32 0.0, %v1630
    %v1632 = vpop.f32.mrb[0].mxu0
    %v1633 = vadd.f32 0.0, %v1632
    %v1634 = vpop.f32.mrb[0].mxu0
    %v1635 = vadd.f32 0.0, %v1634
    %1636 = vdwg.mxu0
    %1637 = vmatprep.subr.bf16.mxu0 %v1533
    %1638 = vmatpush1.bf16.msra.mxu0 %v1532
    %1639 = vmatprep.subr.bf16.mxu0 %v1537
    %1640 = vmatpush1.bf16.msra.mxu0 %v1536
    %1641 = vmatprep.subr.bf16.mxu0 %v1541
    %1642 = vmatpush1.bf16.msra.mxu0 %v1540
    %1643 = vmatprep.subr.bf16.mxu0 %v1545
    %1644 = vmatpush1.bf16.msra.mxu0 %v1544
    %1645 = vmatprep.subr.bf16.mxu0 %v1549
    %1646 = vmatpush1.bf16.msra.mxu0 %v1548
    %1647 = vmatprep.subr.bf16.mxu0 %v1553
    %1648 = vmatpush1.bf16.msra.mxu0 %v1552
    %1649 = vmatprep.subr.bf16.mxu0 %v1557
    %1650 = vmatpush1.bf16.msra.mxu0 %v1556
    %1651 = vmatprep.subr.bf16.mxu0 %v1561
    %1652 = vmatpush1.bf16.msra.mxu0 %v1560
    %1653 = vmatprep.subr.bf16.mxu0 0
    %1654 = vmatpush1.bf16.msra.mxu0 0
    %1655 = vmatprep.subr.bf16.mxu0 0
    %1656 = vmatpush1.bf16.msra.mxu0 0
    %1657 = vmatprep.subr.bf16.mxu0 0
    %1658 = vmatpush1.bf16.msra.mxu0 0
    %1659 = vmatprep.subr.bf16.mxu0 0
    %1660 = vmatpush1.bf16.msra.mxu0 0
    %1661 = vmatprep.subr.bf16.mxu0 0
    %1662 = vmatpush1.bf16.msra.mxu0 0
    %1663 = vmatprep.subr.bf16.mxu0 0
    %1664 = vmatpush1.bf16.msra.mxu0 0
    %1665 = vmatprep.subr.bf16.mxu0 0
    %1666 = vmatpush1.bf16.msra.mxu0 0
    %1667 = vmatprep.subr.bf16.mxu0 0
    %1668 = vmatpush1.bf16.msra.mxu0 0
    %1669 = vmatprep.mubr.bf16.mxu0 0
    %1670 = vmatmul.mubr.bf16.gmra.mrb[0].mxu0 %v1401
    %v1671 = vpop.f32.mrb[0].mxu0
    %v1672 = vadd.f32 0.0, %v1671
    %v1673 = vpop.f32.mrb[0].mxu0
    %v1674 = vadd.f32 0.0, %v1673
    %v1675 = vpop.f32.mrb[0].mxu0
    %v1676 = vadd.f32 0.0, %v1675
    %v1677 = vpop.f32.mrb[0].mxu0
    %v1678 = vadd.f32 0.0, %v1677
    %1679 = vdwg.mxu0
    %v1680 = vadd.f32 %v1393, %v1629
    %v1681 = vadd.f32 %v1394, %v1631
    %v1682 = vadd.f32 %v1395, %v1672
    %v1683 = vadd.f32 %v1396, %v1674
    %v1684 = vadd.f32 %v1397, %v1633
    %v1685 = vadd.f32 %v1398, %v1635
    %v1686 = vadd.f32 %v1399, %v1676
    %v1687 = vadd.f32 %v1400, %v1678
    %v1688 = vxor.u32 %v1680, 2147483648
    %v1689 = vxor.u32 %v1684, 2147483648
    %v1690 = vmul.f32 %v1688, 1.442695
    %v1691 = vpow.pop %v1690
    %v1692 = vmul.f32 %v1689, 1.442695
    %v1693 = vpow.pop %v1692
    %v1694 = vadd.f32 %v1691, 1.0
    %v1695 = vadd.f32 %v1693, 1.0
    %v1696 = vrcp.pop %v1694
    %v1697 = vmul.f32 1.0, %v1696
    %v1698 = vrcp.pop %v1695
    %v1699 = vmul.f32 1.0, %v1698
    %v1700 = vxor.u32 %v1681, 2147483648
    %v1701 = vxor.u32 %v1685, 2147483648
    %v1702 = vmul.f32 %v1700, 1.442695
    %v1703 = vpow.pop %v1702
    %v1704 = vmul.f32 %v1701, 1.442695
    %v1705 = vpow.pop %v1704
    %v1706 = vadd.f32 %v1703, 1.0
    %v1707 = vadd.f32 %v1705, 1.0
    %v1708 = vrcp.pop %v1706
    %v1709 = vmul.f32 1.0, %v1708
    %v1710 = vrcp.pop %v1707
    %v1711 = vmul.f32 1.0, %v1710
    %v1712 = vtanh.pop %v1682
    %v1713 = vtanh.pop %v1686
    %v1714 = vxor.u32 %v1683, 2147483648
    %v1715 = vxor.u32 %v1687, 2147483648
    %v1716 = vmul.f32 %v1714, 1.442695
    %v1717 = vpow.pop %v1716
    %v1718 = vmul.f32 %v1715, 1.442695
    %v1719 = vpow.pop %v1718
    %v1720 = vadd.f32 %v1717, 1.0
    %v1721 = vadd.f32 %v1719, 1.0
    %v1722 = vrcp.pop %v1720
    %v1723 = vmul.f32 1.0, %v1722
    %v1724 = vrcp.pop %v1721
    %v1725 = vmul.f32 1.0, %v1724
    %v1726 = vmul.f32 %v1709, %v1391
    %v1727 = vmul.f32 %v1711, %v1392
    %v1728 = vmul.f32 %v1697, %v1712
    %v1729 = vmul.f32 %v1699, %v1713
    %v1730 = vadd.f32 %v1726, %v1728
    %v1731 = vadd.f32 %v1727, %v1729
    %v1732 = vtanh.pop %v1730
    %v1733 = vtanh.pop %v1731
    %v1734 = vmul.f32 %v1723, %v1732
    %v1735 = vmul.f32 %v1725, %v1733
    %v1736 = vld [vmem:[%s0] sm:$0xff]
    %v1737 = vld [vmem:[%s0 + $0x8] sm:$0xff]
    %v1738 = vsub.f32 %v1734, %v1389
    %v1739 = vsub.f32 %v1735, %v1390
    %1741 = vset.pattern.permute.xlu0 0
    %1742 = vperm.xlu0 %1741, %v1736
    %v1743 = vpop.permute.xlu0 %1742
    %1746 = vset.pattern.permute.xlu0 0
    %1747 = vperm.xlu0 %1746, %v1737
    %v1748 = vpop.permute.xlu0 %1747
    %v1750 = vmul.f32 %v1743, %v1738
    %v1751 = vmul.f32 %v1748, %v1739
    %v1752 = vadd.f32 %v1389, %v1750
    %v1753 = vadd.f32 %v1390, %v1751
    %1754 = vst [vmem:[#allocation2] sm:$0xff] %v1752
    %1755 = vst [vmem:[#allocation2 + $0x8] sm:$0xff] %v1753
    %v1756 = vsub.f32 %v1730, %v1391
    %v1757 = vsub.f32 %v1731, %v1392
    %v1758 = vmul.f32 %v1743, %v1756
    %v1759 = vmul.f32 %v1748, %v1757
    %v1760 = vadd.f32 %v1391, %v1758
    %v1761 = vadd.f32 %v1392, %v1759
    %1762 = vst [vmem:[#allocation3] sm:$0xff] %v1760
    %1763 = vst [vmem:[#allocation3 + $0x8] sm:$0xff] %v1761
    %v1764 = vmul.f32 %v1743, %v1734
    %v1765 = vmul.f32 %v1748, %v1735
    %v1766 = vpack.c.bf16 %v1765, %v1764
    %v1768 = vunpack.c.l.b16 %v1766
    %v1769 = vunpack.c.h.b16 %v1766
    %v1770 = vpack.c.b16 %v1768, %v1768
    %v1771 = vpack.c.b16 %v1769, %v1769
    %1774 = vst [vmem:[#allocation11] sm:$0xf] %v1770
    %1775 = vst [vmem:[#allocation11 + $0x4] sm:$0xf] %v1771
    %s1776 = scalar_lea.vmem [#allocation2], 16
    %v1777 = vld [vmem:[%s1776] sm:$0xff]
    %v1778 = vld [vmem:[%s1776 + $0x8] sm:$0xff]
    %s1779 = scalar_lea.vmem [#allocation3], 16
    %v1780 = vld [vmem:[%s1779] sm:$0xff]
    %v1781 = vld [vmem:[%s1779 + $0x8] sm:$0xff]
    %s1782 = scalar_lea.vmem [#allocation5], 448
    %v1783 = vld [vmem:[%s1782] sm:$0xff]
    %v1784 = vld [vmem:[%s1782 + $0x8] sm:$0xff]
    %v1785 = vld [vmem:[%s1782 + $0x10] sm:$0xff]
    %v1786 = vld [vmem:[%s1782 + $0x18] sm:$0xff]
    %v1787 = vld [vmem:[%s1782 + $0x20] sm:$0xff]
    %v1788 = vld [vmem:[%s1782 + $0x28] sm:$0xff]
    %v1789 = vld [vmem:[%s1782 + $0x30] sm:$0xff]
    %v1790 = vld [vmem:[%s1782 + $0x38] sm:$0xff]
    %v1791 = vpack.c.bf16 %v1778, %v1777
    %s1792 = scalar_lea.vmem [#allocation9], 256
    %v1793 = vld [vmem:[%s1792] sm:$0xff]
    %v1794 = vld [vmem:[%s1792 + $0x8] sm:$0xff]
    %v1795 = vld [vmem:[%s1792 + $0x10] sm:$0xff]
    %v1796 = vld [vmem:[%s1792 + $0x18] sm:$0xff]
    %v1797 = vld [vmem:[%s1792 + $0x20] sm:$0xff]
    %v1798 = vld [vmem:[%s1792 + $0x28] sm:$0xff]
    %v1799 = vld [vmem:[%s1792 + $0x30] sm:$0xff]
    %v1800 = vld [vmem:[%s1792 + $0x38] sm:$0xff]
    %v1801 = vld [vmem:[%s1792 + $0x40] sm:$0xff]
    %v1802 = vld [vmem:[%s1792 + $0x48] sm:$0xff]
    %v1803 = vld [vmem:[%s1792 + $0x50] sm:$0xff]
    %v1804 = vld [vmem:[%s1792 + $0x58] sm:$0xff]
    %v1805 = vld [vmem:[%s1792 + $0x60] sm:$0xff]
    %v1806 = vld [vmem:[%s1792 + $0x68] sm:$0xff]
    %v1807 = vld [vmem:[%s1792 + $0x70] sm:$0xff]
    %v1808 = vld [vmem:[%s1792 + $0x78] sm:$0xff]
    %v1809 = vld [vmem:[%s1792 + $0x80] sm:$0xff]
    %v1810 = vld [vmem:[%s1792 + $0x88] sm:$0xff]
    %v1811 = vld [vmem:[%s1792 + $0x90] sm:$0xff]
    %v1812 = vld [vmem:[%s1792 + $0x98] sm:$0xff]
    %v1813 = vld [vmem:[%s1792 + $0xa0] sm:$0xff]
    %v1814 = vld [vmem:[%s1792 + $0xa8] sm:$0xff]
    %v1815 = vld [vmem:[%s1792 + $0xb0] sm:$0xff]
    %v1816 = vld [vmem:[%s1792 + $0xb8] sm:$0xff]
    %v1817 = vld [vmem:[%s1792 + $0xc0] sm:$0xff]
    %v1818 = vld [vmem:[%s1792 + $0xc8] sm:$0xff]
    %v1819 = vld [vmem:[%s1792 + $0xd0] sm:$0xff]
    %v1820 = vld [vmem:[%s1792 + $0xd8] sm:$0xff]
    %v1821 = vld [vmem:[%s1792 + $0xe0] sm:$0xff]
    %v1822 = vld [vmem:[%s1792 + $0xe8] sm:$0xff]
    %v1823 = vld [vmem:[%s1792 + $0xf0] sm:$0xff]
    %v1824 = vld [vmem:[%s1792 + $0xf8] sm:$0xff]
    %v1857 = vunpack.c.l.b16 %v1793
    %v1858 = vunpack.c.h.b16 %v1793
    %v1859 = vunpack.c.l.b16 %v1794
    %v1860 = vunpack.c.h.b16 %v1794
    %v1861 = vunpack.c.l.b16 %v1795
    %v1862 = vunpack.c.h.b16 %v1795
    %v1863 = vunpack.c.l.b16 %v1796
    %v1864 = vunpack.c.h.b16 %v1796
    %v1865 = vunpack.c.l.b16 %v1797
    %v1866 = vunpack.c.h.b16 %v1797
    %v1867 = vunpack.c.l.b16 %v1798
    %v1868 = vunpack.c.h.b16 %v1798
    %v1869 = vunpack.c.l.b16 %v1799
    %v1870 = vunpack.c.h.b16 %v1799
    %v1871 = vunpack.c.l.b16 %v1800
    %v1872 = vunpack.c.h.b16 %v1800
    %v1873 = vunpack.c.l.b16 %v1801
    %v1874 = vunpack.c.h.b16 %v1801
    %v1875 = vunpack.c.l.b16 %v1802
    %v1876 = vunpack.c.h.b16 %v1802
    %v1877 = vunpack.c.l.b16 %v1803
    %v1878 = vunpack.c.h.b16 %v1803
    %v1879 = vunpack.c.l.b16 %v1804
    %v1880 = vunpack.c.h.b16 %v1804
    %v1881 = vunpack.c.l.b16 %v1805
    %v1882 = vunpack.c.h.b16 %v1805
    %v1883 = vunpack.c.l.b16 %v1806
    %v1884 = vunpack.c.h.b16 %v1806
    %v1885 = vunpack.c.l.b16 %v1807
    %v1886 = vunpack.c.h.b16 %v1807
    %v1887 = vunpack.c.l.b16 %v1808
    %v1888 = vunpack.c.h.b16 %v1808
    %v1889 = vunpack.c.l.b16 %v1809
    %v1890 = vunpack.c.h.b16 %v1809
    %v1891 = vunpack.c.l.b16 %v1810
    %v1892 = vunpack.c.h.b16 %v1810
    %v1893 = vunpack.c.l.b16 %v1811
    %v1894 = vunpack.c.h.b16 %v1811
    %v1895 = vunpack.c.l.b16 %v1812
    %v1896 = vunpack.c.h.b16 %v1812
    %v1897 = vunpack.c.l.b16 %v1813
    %v1898 = vunpack.c.h.b16 %v1813
    %v1899 = vunpack.c.l.b16 %v1814
    %v1900 = vunpack.c.h.b16 %v1814
    %v1901 = vunpack.c.l.b16 %v1815
    %v1902 = vunpack.c.h.b16 %v1815
    %v1903 = vunpack.c.l.b16 %v1816
    %v1904 = vunpack.c.h.b16 %v1816
    %v1905 = vunpack.c.l.b16 %v1817
    %v1906 = vunpack.c.h.b16 %v1817
    %v1907 = vunpack.c.l.b16 %v1818
    %v1908 = vunpack.c.h.b16 %v1818
    %v1909 = vunpack.c.l.b16 %v1819
    %v1910 = vunpack.c.h.b16 %v1819
    %v1911 = vunpack.c.l.b16 %v1820
    %v1912 = vunpack.c.h.b16 %v1820
    %v1913 = vunpack.c.l.b16 %v1821
    %v1914 = vunpack.c.h.b16 %v1821
    %v1915 = vunpack.c.l.b16 %v1822
    %v1916 = vunpack.c.h.b16 %v1822
    %v1917 = vunpack.c.l.b16 %v1823
    %v1918 = vunpack.c.h.b16 %v1823
    %v1919 = vunpack.c.l.b16 %v1824
    %v1920 = vunpack.c.h.b16 %v1824
    %v1921 = vpack.c.b16 %v1861, %v1857
    %v1922 = vpack.c.b16 %v1862, %v1858
    %v1923 = vpack.c.b16 %v1863, %v1859
    %v1924 = vpack.c.b16 %v1864, %v1860
    %v1925 = vpack.c.b16 %v1869, %v1865
    %v1926 = vpack.c.b16 %v1870, %v1866
    %v1927 = vpack.c.b16 %v1871, %v1867
    %v1928 = vpack.c.b16 %v1872, %v1868
    %v1929 = vpack.c.b16 %v1877, %v1873
    %v1930 = vpack.c.b16 %v1878, %v1874
    %v1931 = vpack.c.b16 %v1879, %v1875
    %v1932 = vpack.c.b16 %v1880, %v1876
    %v1933 = vpack.c.b16 %v1885, %v1881
    %v1934 = vpack.c.b16 %v1886, %v1882
    %v1935 = vpack.c.b16 %v1887, %v1883
    %v1936 = vpack.c.b16 %v1888, %v1884
    %v1937 = vpack.c.b16 %v1893, %v1889
    %v1938 = vpack.c.b16 %v1894, %v1890
    %v1939 = vpack.c.b16 %v1895, %v1891
    %v1940 = vpack.c.b16 %v1896, %v1892
    %v1941 = vpack.c.b16 %v1901, %v1897
    %v1942 = vpack.c.b16 %v1902, %v1898
    %v1943 = vpack.c.b16 %v1903, %v1899
    %v1944 = vpack.c.b16 %v1904, %v1900
    %v1945 = vpack.c.b16 %v1909, %v1905
    %v1946 = vpack.c.b16 %v1910, %v1906
    %v1947 = vpack.c.b16 %v1911, %v1907
    %v1948 = vpack.c.b16 %v1912, %v1908
    %v1949 = vpack.c.b16 %v1917, %v1913
    %v1950 = vpack.c.b16 %v1918, %v1914
    %v1951 = vpack.c.b16 %v1919, %v1915
    %v1952 = vpack.c.b16 %v1920, %v1916
    %1985 = vmatprep.subr.bf16.mxu0 %v1922
    %1986 = vmatpush1.bf16.msra.mxu0 %v1921
    %1987 = vmatprep.subr.bf16.mxu0 %v1926
    %1988 = vmatpush1.bf16.msra.mxu0 %v1925
    %1989 = vmatprep.subr.bf16.mxu0 %v1930
    %1990 = vmatpush1.bf16.msra.mxu0 %v1929
    %1991 = vmatprep.subr.bf16.mxu0 %v1934
    %1992 = vmatpush1.bf16.msra.mxu0 %v1933
    %1993 = vmatprep.subr.bf16.mxu0 %v1938
    %1994 = vmatpush1.bf16.msra.mxu0 %v1937
    %1995 = vmatprep.subr.bf16.mxu0 %v1942
    %1996 = vmatpush1.bf16.msra.mxu0 %v1941
    %1997 = vmatprep.subr.bf16.mxu0 %v1946
    %1998 = vmatpush1.bf16.msra.mxu0 %v1945
    %1999 = vmatprep.subr.bf16.mxu0 %v1950
    %2000 = vmatpush1.bf16.msra.mxu0 %v1949
    %2001 = vmatprep.subr.bf16.mxu0 0
    %2002 = vmatpush1.bf16.msra.mxu0 0
    %2003 = vmatprep.subr.bf16.mxu0 0
    %2004 = vmatpush1.bf16.msra.mxu0 0
    %2005 = vmatprep.subr.bf16.mxu0 0
    %2006 = vmatpush1.bf16.msra.mxu0 0
    %2007 = vmatprep.subr.bf16.mxu0 0
    %2008 = vmatpush1.bf16.msra.mxu0 0
    %2009 = vmatprep.subr.bf16.mxu0 0
    %2010 = vmatpush1.bf16.msra.mxu0 0
    %2011 = vmatprep.subr.bf16.mxu0 0
    %2012 = vmatpush1.bf16.msra.mxu0 0
    %2013 = vmatprep.subr.bf16.mxu0 0
    %2014 = vmatpush1.bf16.msra.mxu0 0
    %2015 = vmatprep.subr.bf16.mxu0 0
    %2016 = vmatpush1.bf16.msra.mxu0 0
    %2017 = vmatprep.mubr.bf16.mxu0 0
    %2018 = vmatmul.mubr.bf16.gmra.mrb[0].mxu0 %v1791
    %v2019 = vpop.f32.mrb[0].mxu0
    %v2020 = vadd.f32 0.0, %v2019
    %v2021 = vpop.f32.mrb[0].mxu0
    %v2022 = vadd.f32 0.0, %v2021
    %v2023 = vpop.f32.mrb[0].mxu0
    %v2024 = vadd.f32 0.0, %v2023
    %v2025 = vpop.f32.mrb[0].mxu0
    %v2026 = vadd.f32 0.0, %v2025
    %2027 = vdwg.mxu0
    %2028 = vmatprep.subr.bf16.mxu0 %v1924
    %2029 = vmatpush1.bf16.msra.mxu0 %v1923
    %2030 = vmatprep.subr.bf16.mxu0 %v1928
    %2031 = vmatpush1.bf16.msra.mxu0 %v1927
    %2032 = vmatprep.subr.bf16.mxu0 %v1932
    %2033 = vmatpush1.bf16.msra.mxu0 %v1931
    %2034 = vmatprep.subr.bf16.mxu0 %v1936
    %2035 = vmatpush1.bf16.msra.mxu0 %v1935
    %2036 = vmatprep.subr.bf16.mxu0 %v1940
    %2037 = vmatpush1.bf16.msra.mxu0 %v1939
    %2038 = vmatprep.subr.bf16.mxu0 %v1944
    %2039 = vmatpush1.bf16.msra.mxu0 %v1943
    %2040 = vmatprep.subr.bf16.mxu0 %v1948
    %2041 = vmatpush1.bf16.msra.mxu0 %v1947
    %2042 = vmatprep.subr.bf16.mxu0 %v1952
    %2043 = vmatpush1.bf16.msra.mxu0 %v1951
    %2044 = vmatprep.subr.bf16.mxu0 0
    %2045 = vmatpush1.bf16.msra.mxu0 0
    %2046 = vmatprep.subr.bf16.mxu0 0
    %2047 = vmatpush1.bf16.msra.mxu0 0
    %2048 = vmatprep.subr.bf16.mxu0 0
    %2049 = vmatpush1.bf16.msra.mxu0 0
    %2050 = vmatprep.subr.bf16.mxu0 0
    %2051 = vmatpush1.bf16.msra.mxu0 0
    %2052 = vmatprep.subr.bf16.mxu0 0
    %2053 = vmatpush1.bf16.msra.mxu0 0
    %2054 = vmatprep.subr.bf16.mxu0 0
    %2055 = vmatpush1.bf16.msra.mxu0 0
    %2056 = vmatprep.subr.bf16.mxu0 0
    %2057 = vmatpush1.bf16.msra.mxu0 0
    %2058 = vmatprep.subr.bf16.mxu0 0
    %2059 = vmatpush1.bf16.msra.mxu0 0
    %2060 = vmatprep.mubr.bf16.mxu0 0
    %2061 = vmatmul.mubr.bf16.gmra.mrb[0].mxu0 %v1791
    %v2062 = vpop.f32.mrb[0].mxu0
    %v2063 = vadd.f32 0.0, %v2062
    %v2064 = vpop.f32.mrb[0].mxu0
    %v2065 = vadd.f32 0.0, %v2064
    %v2066 = vpop.f32.mrb[0].mxu0
    %v2067 = vadd.f32 0.0, %v2066
    %v2068 = vpop.f32.mrb[0].mxu0
    %v2069 = vadd.f32 0.0, %v2068
    %2070 = vdwg.mxu0
    %v2071 = vadd.f32 %v1783, %v2020
    %v2072 = vadd.f32 %v1784, %v2022
    %v2073 = vadd.f32 %v1785, %v2063
    %v2074 = vadd.f32 %v1786, %v2065
    %v2075 = vadd.f32 %v1787, %v2024
    %v2076 = vadd.f32 %v1788, %v2026
    %v2077 = vadd.f32 %v1789, %v2067
    %v2078 = vadd.f32 %v1790, %v2069
    %v2079 = vxor.u32 %v2071, 2147483648
    %v2080 = vxor.u32 %v2075, 2147483648
    %v2081 = vmul.f32 %v2079, 1.442695
    %v2082 = vpow.pop %v2081
    %v2083 = vmul.f32 %v2080, 1.442695
    %v2084 = vpow.pop %v2083
    %v2085 = vadd.f32 %v2082, 1.0
    %v2086 = vadd.f32 %v2084, 1.0
    %v2087 = vrcp.pop %v2085
    %v2088 = vmul.f32 1.0, %v2087
    %v2089 = vrcp.pop %v2086
    %v2090 = vmul.f32 1.0, %v2089
    %v2091 = vxor.u32 %v2072, 2147483648
    %v2092 = vxor.u32 %v2076, 2147483648
    %v2093 = vmul.f32 %v2091, 1.442695
    %v2094 = vpow.pop %v2093
    %v2095 = vmul.f32 %v2092, 1.442695
    %v2096 = vpow.pop %v2095
    %v2097 = vadd.f32 %v2094, 1.0
    %v2098 = vadd.f32 %v2096, 1.0
    %v2099 = vrcp.pop %v2097
    %v2100 = vmul.f32 1.0, %v2099
    %v2101 = vrcp.pop %v2098
    %v2102 = vmul.f32 1.0, %v2101
    %v2103 = vtanh.pop %v2073
    %v2104 = vtanh.pop %v2077
    %v2105 = vxor.u32 %v2074, 2147483648
    %v2106 = vxor.u32 %v2078, 2147483648
    %v2107 = vmul.f32 %v2105, 1.442695
    %v2108 = vpow.pop %v2107
    %v2109 = vmul.f32 %v2106, 1.442695
    %v2110 = vpow.pop %v2109
    %v2111 = vadd.f32 %v2108, 1.0
    %v2112 = vadd.f32 %v2110, 1.0
    %v2113 = vrcp.pop %v2111
    %v2114 = vmul.f32 1.0, %v2113
    %v2115 = vrcp.pop %v2112
    %v2116 = vmul.f32 1.0, %v2115
    %v2117 = vmul.f32 %v2100, %v1780
    %v2118 = vmul.f32 %v2102, %v1781
    %v2119 = vmul.f32 %v2088, %v2103
    %v2120 = vmul.f32 %v2090, %v2104
    %v2121 = vadd.f32 %v2117, %v2119
    %v2122 = vadd.f32 %v2118, %v2120
    %v2123 = vtanh.pop %v2121
    %v2124 = vtanh.pop %v2122
    %v2125 = vmul.f32 %v2114, %v2123
    %v2126 = vmul.f32 %v2116, %v2124
    %s2127 = scalar_lea.vmem %s96, 112
    %v2128 = vld [vmem:[%s2127] sm:$0xff]
    %v2129 = vld [vmem:[%s2127 + $0x8] sm:$0xff]
    %v2130 = vsub.f32 %v2125, %v1777
    %v2131 = vsub.f32 %v2126, %v1778
    %2133 = vset.pattern.permute.xlu0 0
    %2134 = vperm.xlu0 %2133, %v2128
    %v2135 = vpop.permute.xlu0 %2134
    %2138 = vset.pattern.permute.xlu0 0
    %2139 = vperm.xlu0 %2138, %v2129
    %v2140 = vpop.permute.xlu0 %2139
    %v2142 = vmul.f32 %v2135, %v2130
    %v2143 = vmul.f32 %v2140, %v2131
    %v2144 = vadd.f32 %v1777, %v2142
    %v2145 = vadd.f32 %v1778, %v2143
    %2146 = vst [vmem:[%s1776] sm:$0xff] %v2144
    %2147 = vst [vmem:[%s1776 + $0x8] sm:$0xff] %v2145
    %v2148 = vsub.f32 %v2121, %v1780
    %v2149 = vsub.f32 %v2122, %v1781
    %v2150 = vmul.f32 %v2135, %v2148
    %v2151 = vmul.f32 %v2140, %v2149
    %v2152 = vadd.f32 %v1780, %v2150
    %v2153 = vadd.f32 %v1781, %v2151
    %2154 = vst [vmem:[%s1779] sm:$0xff] %v2152
    %2155 = vst [vmem:[%s1779 + $0x8] sm:$0xff] %v2153
    %v2156 = vmul.f32 %v2135, %v2125
    %v2157 = vmul.f32 %v2140, %v2126
    %v2158 = vpack.c.bf16 %v2157, %v2156
    %v2160 = vunpack.c.l.b16 %v2158
    %v2161 = vunpack.c.h.b16 %v2158
    %v2162 = vpack.c.b16 %v2160, %v2160
    %v2163 = vpack.c.b16 %v2161, %v2161
    %s2166 = scalar_lea.vmem [#allocation12], 56
    %2167 = vst [vmem:[%s2166] sm:$0xf] %v2162
    %2168 = vst [vmem:[%s2166 + $0x4] sm:$0xf] %v2163
    %v2169 = vld [vmem:[#allocation2] sm:$0xff]
    %v2170 = vld [vmem:[#allocation2 + $0x8] sm:$0xff]
    %v2171 = vld [vmem:[#allocation3] sm:$0xff]
    %v2172 = vld [vmem:[#allocation3 + $0x8] sm:$0xff]
    %s2173 = scalar_lea.vmem [#allocation4], 64
    %v2174 = vld [vmem:[%s2173] sm:$0xff]
    %v2175 = vld [vmem:[%s2173 + $0x8] sm:$0xff]
    %v2176 = vld [vmem:[%s2173 + $0x10] sm:$0xff]
    %v2177 = vld [vmem:[%s2173 + $0x18] sm:$0xff]
    %v2178 = vld [vmem:[%s2173 + $0x20] sm:$0xff]
    %v2179 = vld [vmem:[%s2173 + $0x28] sm:$0xff]
    %v2180 = vld [vmem:[%s2173 + $0x30] sm:$0xff]
    %v2181 = vld [vmem:[%s2173 + $0x38] sm:$0xff]
    %v2182 = vpack.c.bf16 %v2170, %v2169
    %v2183 = vld [vmem:[#allocation9] sm:$0xff]
    %v2184 = vld [vmem:[#allocation9 + $0x8] sm:$0xff]
    %v2185 = vld [vmem:[#allocation9 + $0x10] sm:$0xff]
    %v2186 = vld [vmem:[#allocation9 + $0x18] sm:$0xff]
    %v2187 = vld [vmem:[#allocation9 + $0x20] sm:$0xff]
    %v2188 = vld [vmem:[#allocation9 + $0x28] sm:$0xff]
    %v2189 = vld [vmem:[#allocation9 + $0x30] sm:$0xff]
    %v2190 = vld [vmem:[#allocation9 + $0x38] sm:$0xff]
    %v2191 = vld [vmem:[#allocation9 + $0x40] sm:$0xff]
    %v2192 = vld [vmem:[#allocation9 + $0x48] sm:$0xff]
    %v2193 = vld [vmem:[#allocation9 + $0x50] sm:$0xff]
    %v2194 = vld [vmem:[#allocation9 + $0x58] sm:$0xff]
    %v2195 = vld [vmem:[#allocation9 + $0x60] sm:$0xff]
    %v2196 = vld [vmem:[#allocation9 + $0x68] sm:$0xff]
    %v2197 = vld [vmem:[#allocation9 + $0x70] sm:$0xff]
    %v2198 = vld [vmem:[#allocation9 + $0x78] sm:$0xff]
    %v2199 = vld [vmem:[#allocation9 + $0x80] sm:$0xff]
    %v2200 = vld [vmem:[#allocation9 + $0x88] sm:$0xff]
    %v2201 = vld [vmem:[#allocation9 + $0x90] sm:$0xff]
    %v2202 = vld [vmem:[#allocation9 + $0x98] sm:$0xff]
    %v2203 = vld [vmem:[#allocation9 + $0xa0] sm:$0xff]
    %v2204 = vld [vmem:[#allocation9 + $0xa8] sm:$0xff]
    %v2205 = vld [vmem:[#allocation9 + $0xb0] sm:$0xff]
    %v2206 = vld [vmem:[#allocation9 + $0xb8] sm:$0xff]
    %v2207 = vld [vmem:[#allocation9 + $0xc0] sm:$0xff]
    %v2208 = vld [vmem:[#allocation9 + $0xc8] sm:$0xff]
    %v2209 = vld [vmem:[#allocation9 + $0xd0] sm:$0xff]
    %v2210 = vld [vmem:[#allocation9 + $0xd8] sm:$0xff]
    %v2211 = vld [vmem:[#allocation9 + $0xe0] sm:$0xff]
    %v2212 = vld [vmem:[#allocation9 + $0xe8] sm:$0xff]
    %v2213 = vld [vmem:[#allocation9 + $0xf0] sm:$0xff]
    %v2214 = vld [vmem:[#allocation9 + $0xf8] sm:$0xff]
    %v2247 = vunpack.c.l.b16 %v2183
    %v2248 = vunpack.c.h.b16 %v2183
    %v2249 = vunpack.c.l.b16 %v2184
    %v2250 = vunpack.c.h.b16 %v2184
    %v2251 = vunpack.c.l.b16 %v2185
    %v2252 = vunpack.c.h.b16 %v2185
    %v2253 = vunpack.c.l.b16 %v2186
    %v2254 = vunpack.c.h.b16 %v2186
    %v2255 = vunpack.c.l.b16 %v2187
    %v2256 = vunpack.c.h.b16 %v2187
    %v2257 = vunpack.c.l.b16 %v2188
    %v2258 = vunpack.c.h.b16 %v2188
    %v2259 = vunpack.c.l.b16 %v2189
    %v2260 = vunpack.c.h.b16 %v2189
    %v2261 = vunpack.c.l.b16 %v2190
    %v2262 = vunpack.c.h.b16 %v2190
    %v2263 = vunpack.c.l.b16 %v2191
    %v2264 = vunpack.c.h.b16 %v2191
    %v2265 = vunpack.c.l.b16 %v2192
    %v2266 = vunpack.c.h.b16 %v2192
    %v2267 = vunpack.c.l.b16 %v2193
    %v2268 = vunpack.c.h.b16 %v2193
    %v2269 = vunpack.c.l.b16 %v2194
    %v2270 = vunpack.c.h.b16 %v2194
    %v2271 = vunpack.c.l.b16 %v2195
    %v2272 = vunpack.c.h.b16 %v2195
    %v2273 = vunpack.c.l.b16 %v2196
    %v2274 = vunpack.c.h.b16 %v2196
    %v2275 = vunpack.c.l.b16 %v2197
    %v2276 = vunpack.c.h.b16 %v2197
    %v2277 = vunpack.c.l.b16 %v2198
    %v2278 = vunpack.c.h.b16 %v2198
    %v2279 = vunpack.c.l.b16 %v2199
    %v2280 = vunpack.c.h.b16 %v2199
    %v2281 = vunpack.c.l.b16 %v2200
    %v2282 = vunpack.c.h.b16 %v2200
    %v2283 = vunpack.c.l.b16 %v2201
    %v2284 = vunpack.c.h.b16 %v2201
    %v2285 = vunpack.c.l.b16 %v2202
    %v2286 = vunpack.c.h.b16 %v2202
    %v2287 = vunpack.c.l.b16 %v2203
    %v2288 = vunpack.c.h.b16 %v2203
    %v2289 = vunpack.c.l.b16 %v2204
    %v2290 = vunpack.c.h.b16 %v2204
    %v2291 = vunpack.c.l.b16 %v2205
    %v2292 = vunpack.c.h.b16 %v2205
    %v2293 = vunpack.c.l.b16 %v2206
    %v2294 = vunpack.c.h.b16 %v2206
    %v2295 = vunpack.c.l.b16 %v2207
    %v2296 = vunpack.c.h.b16 %v2207
    %v2297 = vunpack.c.l.b16 %v2208
    %v2298 = vunpack.c.h.b16 %v2208
    %v2299 = vunpack.c.l.b16 %v2209
    %v2300 = vunpack.c.h.b16 %v2209
    %v2301 = vunpack.c.l.b16 %v2210
    %v2302 = vunpack.c.h.b16 %v2210
    %v2303 = vunpack.c.l.b16 %v2211
    %v2304 = vunpack.c.h.b16 %v2211
    %v2305 = vunpack.c.l.b16 %v2212
    %v2306 = vunpack.c.h.b16 %v2212
    %v2307 = vunpack.c.l.b16 %v2213
    %v2308 = vunpack.c.h.b16 %v2213
    %v2309 = vunpack.c.l.b16 %v2214
    %v2310 = vunpack.c.h.b16 %v2214
    %v2311 = vpack.c.b16 %v2251, %v2247
    %v2312 = vpack.c.b16 %v2252, %v2248
    %v2313 = vpack.c.b16 %v2253, %v2249
    %v2314 = vpack.c.b16 %v2254, %v2250
    %v2315 = vpack.c.b16 %v2259, %v2255
    %v2316 = vpack.c.b16 %v2260, %v2256
    %v2317 = vpack.c.b16 %v2261, %v2257
    %v2318 = vpack.c.b16 %v2262, %v2258
    %v2319 = vpack.c.b16 %v2267, %v2263
    %v2320 = vpack.c.b16 %v2268, %v2264
    %v2321 = vpack.c.b16 %v2269, %v2265
    %v2322 = vpack.c.b16 %v2270, %v2266
    %v2323 = vpack.c.b16 %v2275, %v2271
    %v2324 = vpack.c.b16 %v2276, %v2272
    %v2325 = vpack.c.b16 %v2277, %v2273
    %v2326 = vpack.c.b16 %v2278, %v2274
    %v2327 = vpack.c.b16 %v2283, %v2279
    %v2328 = vpack.c.b16 %v2284, %v2280
    %v2329 = vpack.c.b16 %v2285, %v2281
    %v2330 = vpack.c.b16 %v2286, %v2282
    %v2331 = vpack.c.b16 %v2291, %v2287
    %v2332 = vpack.c.b16 %v2292, %v2288
    %v2333 = vpack.c.b16 %v2293, %v2289
    %v2334 = vpack.c.b16 %v2294, %v2290
    %v2335 = vpack.c.b16 %v2299, %v2295
    %v2336 = vpack.c.b16 %v2300, %v2296
    %v2337 = vpack.c.b16 %v2301, %v2297
    %v2338 = vpack.c.b16 %v2302, %v2298
    %v2339 = vpack.c.b16 %v2307, %v2303
    %v2340 = vpack.c.b16 %v2308, %v2304
    %v2341 = vpack.c.b16 %v2309, %v2305
    %v2342 = vpack.c.b16 %v2310, %v2306
    %2375 = vmatprep.subr.bf16.mxu0 %v2312
    %2376 = vmatpush1.bf16.msra.mxu0 %v2311
    %2377 = vmatprep.subr.bf16.mxu0 %v2316
    %2378 = vmatpush1.bf16.msra.mxu0 %v2315
    %2379 = vmatprep.subr.bf16.mxu0 %v2320
    %2380 = vmatpush1.bf16.msra.mxu0 %v2319
    %2381 = vmatprep.subr.bf16.mxu0 %v2324
    %2382 = vmatpush1.bf16.msra.mxu0 %v2323
    %2383 = vmatprep.subr.bf16.mxu0 %v2328
    %2384 = vmatpush1.bf16.msra.mxu0 %v2327
    %2385 = vmatprep.subr.bf16.mxu0 %v2332
    %2386 = vmatpush1.bf16.msra.mxu0 %v2331
    %2387 = vmatprep.subr.bf16.mxu0 %v2336
    %2388 = vmatpush1.bf16.msra.mxu0 %v2335
    %2389 = vmatprep.subr.bf16.mxu0 %v2340
    %2390 = vmatpush1.bf16.msra.mxu0 %v2339
    %2391 = vmatprep.subr.bf16.mxu0 0
    %2392 = vmatpush1.bf16.msra.mxu0 0
    %2393 = vmatprep.subr.bf16.mxu0 0
    %2394 = vmatpush1.bf16.msra.mxu0 0
    %2395 = vmatprep.subr.bf16.mxu0 0
    %2396 = vmatpush1.bf16.msra.mxu0 0
    %2397 = vmatprep.subr.bf16.mxu0 0
    %2398 = vmatpush1.bf16.msra.mxu0 0
    %2399 = vmatprep.subr.bf16.mxu0 0
    %2400 = vmatpush1.bf16.msra.mxu0 0
    %2401 = vmatprep.subr.bf16.mxu0 0
    %2402 = vmatpush1.bf16.msra.mxu0 0
    %2403 = vmatprep.subr.bf16.mxu0 0
    %2404 = vmatpush1.bf16.msra.mxu0 0
    %2405 = vmatprep.subr.bf16.mxu0 0
    %2406 = vmatpush1.bf16.msra.mxu0 0
    %2407 = vmatprep.mubr.bf16.mxu0 0
    %2408 = vmatmul.mubr.bf16.gmra.mrb[0].mxu0 %v2182
    %v2409 = vpop.f32.mrb[0].mxu0
    %v2410 = vadd.f32 0.0, %v2409
    %v2411 = vpop.f32.mrb[0].mxu0
    %v2412 = vadd.f32 0.0, %v2411
    %v2413 = vpop.f32.mrb[0].mxu0
    %v2414 = vadd.f32 0.0, %v2413
    %v2415 = vpop.f32.mrb[0].mxu0
    %v2416 = vadd.f32 0.0, %v2415
    %2417 = vdwg.mxu0
    %2418 = vmatprep.subr.bf16.mxu0 %v2314
    %2419 = vmatpush1.bf16.msra.mxu0 %v2313
    %2420 = vmatprep.subr.bf16.mxu0 %v2318
    %2421 = vmatpush1.bf16.msra.mxu0 %v2317
    %2422 = vmatprep.subr.bf16.mxu0 %v2322
    %2423 = vmatpush1.bf16.msra.mxu0 %v2321
    %2424 = vmatprep.subr.bf16.mxu0 %v2326
    %2425 = vmatpush1.bf16.msra.mxu0 %v2325
    %2426 = vmatprep.subr.bf16.mxu0 %v2330
    %2427 = vmatpush1.bf16.msra.mxu0 %v2329
    %2428 = vmatprep.subr.bf16.mxu0 %v2334
    %2429 = vmatpush1.bf16.msra.mxu0 %v2333
    %2430 = vmatprep.subr.bf16.mxu0 %v2338
    %2431 = vmatpush1.bf16.msra.mxu0 %v2337
    %2432 = vmatprep.subr.bf16.mxu0 %v2342
    %2433 = vmatpush1.bf16.msra.mxu0 %v2341
    %2434 = vmatprep.subr.bf16.mxu0 0
    %2435 = vmatpush1.bf16.msra.mxu0 0
    %2436 = vmatprep.subr.bf16.mxu0 0
    %2437 = vmatpush1.bf16.msra.mxu0 0
    %2438 = vmatprep.subr.bf16.mxu0 0
    %2439 = vmatpush1.bf16.msra.mxu0 0
    %2440 = vmatprep.subr.bf16.mxu0 0
    %2441 = vmatpush1.bf16.msra.mxu0 0
    %2442 = vmatprep.subr.bf16.mxu0 0
    %2443 = vmatpush1.bf16.msra.mxu0 0
    %2444 = vmatprep.subr.bf16.mxu0 0
    %2445 = vmatpush1.bf16.msra.mxu0 0
    %2446 = vmatprep.subr.bf16.mxu0 0
    %2447 = vmatpush1.bf16.msra.mxu0 0
    %2448 = vmatprep.subr.bf16.mxu0 0
    %2449 = vmatpush1.bf16.msra.mxu0 0
    %2450 = vmatprep.mubr.bf16.mxu0 0
    %2451 = vmatmul.mubr.bf16.gmra.mrb[0].mxu0 %v2182
    %v2452 = vpop.f32.mrb[0].mxu0
    %v2453 = vadd.f32 0.0, %v2452
    %v2454 = vpop.f32.mrb[0].mxu0
    %v2455 = vadd.f32 0.0, %v2454
    %v2456 = vpop.f32.mrb[0].mxu0
    %v2457 = vadd.f32 0.0, %v2456
    %v2458 = vpop.f32.mrb[0].mxu0
    %v2459 = vadd.f32 0.0, %v2458
    %2460 = vdwg.mxu0
    %v2461 = vadd.f32 %v2174, %v2410
    %v2462 = vadd.f32 %v2175, %v2412
    %v2463 = vadd.f32 %v2176, %v2453
    %v2464 = vadd.f32 %v2177, %v2455
    %v2465 = vadd.f32 %v2178, %v2414
    %v2466 = vadd.f32 %v2179, %v2416
    %v2467 = vadd.f32 %v2180, %v2457
    %v2468 = vadd.f32 %v2181, %v2459
    %v2469 = vxor.u32 %v2461, 2147483648
    %v2470 = vxor.u32 %v2465, 2147483648
    %v2471 = vmul.f32 %v2469, 1.442695
    %v2472 = vpow.pop %v2471
    %v2473 = vmul.f32 %v2470, 1.442695
    %v2474 = vpow.pop %v2473
    %v2475 = vadd.f32 %v2472, 1.0
    %v2476 = vadd.f32 %v2474, 1.0
    %v2477 = vrcp.pop %v2475
    %v2478 = vmul.f32 1.0, %v2477
    %v2479 = vrcp.pop %v2476
    %v2480 = vmul.f32 1.0, %v2479
    %v2481 = vxor.u32 %v2462, 2147483648
    %v2482 = vxor.u32 %v2466, 2147483648
    %v2483 = vmul.f32 %v2481, 1.442695
    %v2484 = vpow.pop %v2483
    %v2485 = vmul.f32 %v2482, 1.442695
    %v2486 = vpow.pop %v2485
    %v2487 = vadd.f32 %v2484, 1.0
    %v2488 = vadd.f32 %v2486, 1.0
    %v2489 = vrcp.pop %v2487
    %v2490 = vmul.f32 1.0, %v2489
    %v2491 = vrcp.pop %v2488
    %v2492 = vmul.f32 1.0, %v2491
    %v2493 = vtanh.pop %v2463
    %v2494 = vtanh.pop %v2467
    %v2495 = vxor.u32 %v2464, 2147483648
    %v2496 = vxor.u32 %v2468, 2147483648
    %v2497 = vmul.f32 %v2495, 1.442695
    %v2498 = vpow.pop %v2497
    %v2499 = vmul.f32 %v2496, 1.442695
    %v2500 = vpow.pop %v2499
    %v2501 = vadd.f32 %v2498, 1.0
    %v2502 = vadd.f32 %v2500, 1.0
    %v2503 = vrcp.pop %v2501
    %v2504 = vmul.f32 1.0, %v2503
    %v2505 = vrcp.pop %v2502
    %v2506 = vmul.f32 1.0, %v2505
    %v2507 = vmul.f32 %v2490, %v2171
    %v2508 = vmul.f32 %v2492, %v2172
    %v2509 = vmul.f32 %v2478, %v2493
    %v2510 = vmul.f32 %v2480, %v2494
    %v2511 = vadd.f32 %v2507, %v2509
    %v2512 = vadd.f32 %v2508, %v2510
    %v2513 = vtanh.pop %v2511
    %v2514 = vtanh.pop %v2512
    %v2515 = vmul.f32 %v2504, %v2513
    %v2516 = vmul.f32 %v2506, %v2514
    %s2517 = scalar_lea.vmem %s0, 16
    %v2518 = vld [vmem:[%s2517] sm:$0xff]
    %v2519 = vld [vmem:[%s2517 + $0x8] sm:$0xff]
    %v2520 = vsub.f32 %v2515, %v2169
    %v2521 = vsub.f32 %v2516, %v2170
    %2523 = vset.pattern.permute.xlu0 0
    %2524 = vperm.xlu0 %2523, %v2518
    %v2525 = vpop.permute.xlu0 %2524
    %2528 = vset.pattern.permute.xlu0 0
    %2529 = vperm.xlu0 %2528, %v2519
    %v2530 = vpop.permute.xlu0 %2529
    %v2532 = vmul.f32 %v2525, %v2520
    %v2533 = vmul.f32 %v2530, %v2521
    %v2534 = vadd.f32 %v2169, %v2532
    %v2535 = vadd.f32 %v2170, %v2533
    %2536 = vst [vmem:[#allocation2] sm:$0xff] %v2534
    %2537 = vst [vmem:[#allocation2 + $0x8] sm:$0xff] %v2535
    %v2538 = vsub.f32 %v2511, %v2171
    %v2539 = vsub.f32 %v2512, %v2172
    %v2540 = vmul.f32 %v2525, %v2538
    %v2541 = vmul.f32 %v2530, %v2539
    %v2542 = vadd.f32 %v2171, %v2540
    %v2543 = vadd.f32 %v2172, %v2541
    %2544 = vst [vmem:[#allocation3] sm:$0xff] %v2542
    %2545 = vst [vmem:[#allocation3 + $0x8] sm:$0xff] %v2543
    %v2546 = vmul.f32 %v2525, %v2515
    %v2547 = vmul.f32 %v2530, %v2516
    %v2548 = vpack.c.bf16 %v2547, %v2546
    %v2550 = vunpack.c.l.b16 %v2548
    %v2551 = vunpack.c.h.b16 %v2548
    %v2552 = vpack.c.b16 %v2550, %v2550
    %v2553 = vpack.c.b16 %v2551, %v2551
    %s2556 = scalar_lea.vmem [#allocation11], 8
    %2557 = vst [vmem:[%s2556] sm:$0xf] %v2552
    %2558 = vst [vmem:[%s2556 + $0x4] sm:$0xf] %v2553
    %v2559 = vld [vmem:[%s1776] sm:$0xff]
    %v2560 = vld [vmem:[%s1776 + $0x8] sm:$0xff]
    %v2561 = vld [vmem:[%s1779] sm:$0xff]
    %v2562 = vld [vmem:[%s1779 + $0x8] sm:$0xff]
    %s2563 = scalar_lea.vmem [#allocation5], 384
    %v2564 = vld [vmem:[%s2563] sm:$0xff]
    %v2565 = vld [vmem:[%s2563 + $0x8] sm:$0xff]
    %v2566 = vld [vmem:[%s2563 + $0x10] sm:$0xff]
    %v2567 = vld [vmem:[%s2563 + $0x18] sm:$0xff]
    %v2568 = vld [vmem:[%s2563 + $0x20] sm:$0xff]
    %v2569 = vld [vmem:[%s2563 + $0x28] sm:$0xff]
    %v2570 = vld [vmem:[%s2563 + $0x30] sm:$0xff]
    %v2571 = vld [vmem:[%s2563 + $0x38] sm:$0xff]
    %v2572 = vpack.c.bf16 %v2560, %v2559
    %v2573 = vld [vmem:[%s1792] sm:$0xff]
    %v2574 = vld [vmem:[%s1792 + $0x8] sm:$0xff]
    %v2575 = vld [vmem:[%s1792 + $0x10] sm:$0xff]
    %v2576 = vld [vmem:[%s1792 + $0x18] sm:$0xff]
    %v2577 = vld [vmem:[%s1792 + $0x20] sm:$0xff]
    %v2578 = vld [vmem:[%s1792 + $0x28] sm:$0xff]
    %v2579 = vld [vmem:[%s1792 + $0x30] sm:$0xff]
    %v2580 = vld [vmem:[%s1792 + $0x38] sm:$0xff]
    %v2581 = vld [vmem:[%s1792 + $0x40] sm:$0xff]
    %v2582 = vld [vmem:[%s1792 + $0x48] sm:$0xff]
    %v2583 = vld [vmem:[%s1792 + $0x50] sm:$0xff]
    %v2584 = vld [vmem:[%s1792 + $0x58] sm:$0xff]
    %v2585 = vld [vmem:[%s1792 + $0x60] sm:$0xff]
    %v2586 = vld [vmem:[%s1792 + $0x68] sm:$0xff]
    %v2587 = vld [vmem:[%s1792 + $0x70] sm:$0xff]
    %v2588 = vld [vmem:[%s1792 + $0x78] sm:$0xff]
    %v2589 = vld [vmem:[%s1792 + $0x80] sm:$0xff]
    %v2590 = vld [vmem:[%s1792 + $0x88] sm:$0xff]
    %v2591 = vld [vmem:[%s1792 + $0x90] sm:$0xff]
    %v2592 = vld [vmem:[%s1792 + $0x98] sm:$0xff]
    %v2593 = vld [vmem:[%s1792 + $0xa0] sm:$0xff]
    %v2594 = vld [vmem:[%s1792 + $0xa8] sm:$0xff]
    %v2595 = vld [vmem:[%s1792 + $0xb0] sm:$0xff]
    %v2596 = vld [vmem:[%s1792 + $0xb8] sm:$0xff]
    %v2597 = vld [vmem:[%s1792 + $0xc0] sm:$0xff]
    %v2598 = vld [vmem:[%s1792 + $0xc8] sm:$0xff]
    %v2599 = vld [vmem:[%s1792 + $0xd0] sm:$0xff]
    %v2600 = vld [vmem:[%s1792 + $0xd8] sm:$0xff]
    %v2601 = vld [vmem:[%s1792 + $0xe0] sm:$0xff]
    %v2602 = vld [vmem:[%s1792 + $0xe8] sm:$0xff]
    %v2603 = vld [vmem:[%s1792 + $0xf0] sm:$0xff]
    %v2604 = vld [vmem:[%s1792 + $0xf8] sm:$0xff]
    %v2637 = vunpack.c.l.b16 %v2573
    %v2638 = vunpack.c.h.b16 %v2573
    %v2639 = vunpack.c.l.b16 %v2574
    %v2640 = vunpack.c.h.b16 %v2574
    %v2641 = vunpack.c.l.b16 %v2575
    %v2642 = vunpack.c.h.b16 %v2575
    %v2643 = vunpack.c.l.b16 %v2576
    %v2644 = vunpack.c.h.b16 %v2576
    %v2645 = vunpack.c.l.b16 %v2577
    %v2646 = vunpack.c.h.b16 %v2577
    %v2647 = vunpack.c.l.b16 %v2578
    %v2648 = vunpack.c.h.b16 %v2578
    %v2649 = vunpack.c.l.b16 %v2579
    %v2650 = vunpack.c.h.b16 %v2579
    %v2651 = vunpack.c.l.b16 %v2580
    %v2652 = vunpack.c.h.b16 %v2580
    %v2653 = vunpack.c.l.b16 %v2581
    %v2654 = vunpack.c.h.b16 %v2581
    %v2655 = vunpack.c.l.b16 %v2582
    %v2656 = vunpack.c.h.b16 %v2582
    %v2657 = vunpack.c.l.b16 %v2583
    %v2658 = vunpack.c.h.b16 %v2583
    %v2659 = vunpack.c.l.b16 %v2584
    %v2660 = vunpack.c.h.b16 %v2584
    %v2661 = vunpack.c.l.b16 %v2585
    %v2662 = vunpack.c.h.b16 %v2585
    %v2663 = vunpack.c.l.b16 %v2586
    %v2664 = vunpack.c.h.b16 %v2586
    %v2665 = vunpack.c.l.b16 %v2587
    %v2666 = vunpack.c.h.b16 %v2587
    %v2667 = vunpack.c.l.b16 %v2588
    %v2668 = vunpack.c.h.b16 %v2588
    %v2669 = vunpack.c.l.b16 %v2589
    %v2670 = vunpack.c.h.b16 %v2589
    %v2671 = vunpack.c.l.b16 %v2590
    %v2672 = vunpack.c.h.b16 %v2590
    %v2673 = vunpack.c.l.b16 %v2591
    %v2674 = vunpack.c.h.b16 %v2591
    %v2675 = vunpack.c.l.b16 %v2592
    %v2676 = vunpack.c.h.b16 %v2592
    %v2677 = vunpack.c.l.b16 %v2593
    %v2678 = vunpack.c.h.b16 %v2593
    %v2679 = vunpack.c.l.b16 %v2594
    %v2680 = vunpack.c.h.b16 %v2594
    %v2681 = vunpack.c.l.b16 %v2595
    %v2682 = vunpack.c.h.b16 %v2595
    %v2683 = vunpack.c.l.b16 %v2596
    %v2684 = vunpack.c.h.b16 %v2596
    %v2685 = vunpack.c.l.b16 %v2597
    %v2686 = vunpack.c.h.b16 %v2597
    %v2687 = vunpack.c.l.b16 %v2598
    %v2688 = vunpack.c.h.b16 %v2598
    %v2689 = vunpack.c.l.b16 %v2599
    %v2690 = vunpack.c.h.b16 %v2599
    %v2691 = vunpack.c.l.b16 %v2600
    %v2692 = vunpack.c.h.b16 %v2600
    %v2693 = vunpack.c.l.b16 %v2601
    %v2694 = vunpack.c.h.b16 %v2601
    %v2695 = vunpack.c.l.b16 %v2602
    %v2696 = vunpack.c.h.b16 %v2602
    %v2697 = vunpack.c.l.b16 %v2603
    %v2698 = vunpack.c.h.b16 %v2603
    %v2699 = vunpack.c.l.b16 %v2604
    %v2700 = vunpack.c.h.b16 %v2604
    %v2701 = vpack.c.b16 %v2641, %v2637
    %v2702 = vpack.c.b16 %v2642, %v2638
    %v2703 = vpack.c.b16 %v2643, %v2639
    %v2704 = vpack.c.b16 %v2644, %v2640
    %v2705 = vpack.c.b16 %v2649, %v2645
    %v2706 = vpack.c.b16 %v2650, %v2646
    %v2707 = vpack.c.b16 %v2651, %v2647
    %v2708 = vpack.c.b16 %v2652, %v2648
    %v2709 = vpack.c.b16 %v2657, %v2653
    %v2710 = vpack.c.b16 %v2658, %v2654
    %v2711 = vpack.c.b16 %v2659, %v2655
    %v2712 = vpack.c.b16 %v2660, %v2656
    %v2713 = vpack.c.b16 %v2665, %v2661
    %v2714 = vpack.c.b16 %v2666, %v2662
    %v2715 = vpack.c.b16 %v2667, %v2663
    %v2716 = vpack.c.b16 %v2668, %v2664
    %v2717 = vpack.c.b16 %v2673, %v2669
    %v2718 = vpack.c.b16 %v2674, %v2670
    %v2719 = vpack.c.b16 %v2675, %v2671
    %v2720 = vpack.c.b16 %v2676, %v2672
    %v2721 = vpack.c.b16 %v2681, %v2677
    %v2722 = vpack.c.b16 %v2682, %v2678
    %v2723 = vpack.c.b16 %v2683, %v2679
    %v2724 = vpack.c.b16 %v2684, %v2680
    %v2725 = vpack.c.b16 %v2689, %v2685
    %v2726 = vpack.c.b16 %v2690, %v2686
    %v2727 = vpack.c.b16 %v2691, %v2687
    %v2728 = vpack.c.b16 %v2692, %v2688
    %v2729 = vpack.c.b16 %v2697, %v2693
    %v2730 = vpack.c.b16 %v2698, %v2694
    %v2731 = vpack.c.b16 %v2699, %v2695
    %v2732 = vpack.c.b16 %v2700, %v2696
    %2765 = vmatprep.subr.bf16.mxu0 %v2702
    %2766 = vmatpush1.bf16.msra.mxu0 %v2701
    %2767 = vmatprep.subr.bf16.mxu0 %v2706
    %2768 = vmatpush1.bf16.msra.mxu0 %v2705
    %2769 = vmatprep.subr.bf16.mxu0 %v2710
    %2770 = vmatpush1.bf16.msra.mxu0 %v2709
    %2771 = vmatprep.subr.bf16.mxu0 %v2714
    %2772 = vmatpush1.bf16.msra.mxu0 %v2713
    %2773 = vmatprep.subr.bf16.mxu0 %v2718
    %2774 = vmatpush1.bf16.msra.mxu0 %v2717
    %2775 = vmatprep.subr.bf16.mxu0 %v2722
    %2776 = vmatpush1.bf16.msra.mxu0 %v2721
    %2777 = vmatprep.subr.bf16.mxu0 %v2726
    %2778 = vmatpush1.bf16.msra.mxu0 %v2725
    %2779 = vmatprep.subr.bf16.mxu0 %v2730
    %2780 = vmatpush1.bf16.msra.mxu0 %v2729
    %2781 = vmatprep.subr.bf16.mxu0 0
    %2782 = vmatpush1.bf16.msra.mxu0 0
    %2783 = vmatprep.subr.bf16.mxu0 0
    %2784 = vmatpush1.bf16.msra.mxu0 0
    %2785 = vmatprep.subr.bf16.mxu0 0
    %2786 = vmatpush1.bf16.msra.mxu0 0
    %2787 = vmatprep.subr.bf16.mxu0 0
    %2788 = vmatpush1.bf16.msra.mxu0 0
    %2789 = vmatprep.subr.bf16.mxu0 0
    %2790 = vmatpush1.bf16.msra.mxu0 0
    %2791 = vmatprep.subr.bf16.mxu0 0
    %2792 = vmatpush1.bf16.msra.mxu0 0
    %2793 = vmatprep.subr.bf16.mxu0 0
    %2794 = vmatpush1.bf16.msra.mxu0 0
    %2795 = vmatprep.subr.bf16.mxu0 0
    %2796 = vmatpush1.bf16.msra.mxu0 0
    %2797 = vmatprep.mubr.bf16.mxu0 0
    %2798 = vmatmul.mubr.bf16.gmra.mrb[0].mxu0 %v2572
    %v2799 = vpop.f32.mrb[0].mxu0
    %v2800 = vadd.f32 0.0, %v2799
    %v2801 = vpop.f32.mrb[0].mxu0
    %v2802 = vadd.f32 0.0, %v2801
    %v2803 = vpop.f32.mrb[0].mxu0
    %v2804 = vadd.f32 0.0, %v2803
    %v2805 = vpop.f32.mrb[0].mxu0
    %v2806 = vadd.f32 0.0, %v2805
    %2807 = vdwg.mxu0
    %2808 = vmatprep.subr.bf16.mxu0 %v2704
    %2809 = vmatpush1.bf16.msra.mxu0 %v2703
    %2810 = vmatprep.subr.bf16.mxu0 %v2708
    %2811 = vmatpush1.bf16.msra.mxu0 %v2707
    %2812 = vmatprep.subr.bf16.mxu0 %v2712
    %2813 = vmatpush1.bf16.msra.mxu0 %v2711
    %2814 = vmatprep.subr.bf16.mxu0 %v2716
    %2815 = vmatpush1.bf16.msra.mxu0 %v2715
    %2816 = vmatprep.subr.bf16.mxu0 %v2720
    %2817 = vmatpush1.bf16.msra.mxu0 %v2719
    %2818 = vmatprep.subr.bf16.mxu0 %v2724
    %2819 = vmatpush1.bf16.msra.mxu0 %v2723
    %2820 = vmatprep.subr.bf16.mxu0 %v2728
    %2821 = vmatpush1.bf16.msra.mxu0 %v2727
    %2822 = vmatprep.subr.bf16.mxu0 %v2732
    %2823 = vmatpush1.bf16.msra.mxu0 %v2731
    %2824 = vmatprep.subr.bf16.mxu0 0
    %2825 = vmatpush1.bf16.msra.mxu0 0
    %2826 = vmatprep.subr.bf16.mxu0 0
    %2827 = vmatpush1.bf16.msra.mxu0 0
    %2828 = vmatprep.subr.bf16.mxu0 0
    %2829 = vmatpush1.bf16.msra.mxu0 0
    %2830 = vmatprep.subr.bf16.mxu0 0
    %2831 = vmatpush1.bf16.msra.mxu0 0
    %2832 = vmatprep.subr.bf16.mxu0 0
    %2833 = vmatpush1.bf16.msra.mxu0 0
    %2834 = vmatprep.subr.bf16.mxu0 0
    %2835 = vmatpush1.bf16.msra.mxu0 0
    %2836 = vmatprep.subr.bf16.mxu0 0
    %2837 = vmatpush1.bf16.msra.mxu0 0
    %2838 = vmatprep.subr.bf16.mxu0 0
    %2839 = vmatpush1.bf16.msra.mxu0 0
    %2840 = vmatprep.mubr.bf16.mxu0 0
    %2841 = vmatmul.mubr.bf16.gmra.mrb[0].mxu0 %v2572
    %v2842 = vpop.f32.mrb[0].mxu0
    %v2843 = vadd.f32 0.0, %v2842
    %v2844 = vpop.f32.mrb[0].mxu0
    %v2845 = vadd.f32 0.0, %v2844
    %v2846 = vpop.f32.mrb[0].mxu0
    %v2847 = vadd.f32 0.0, %v2846
    %v2848 = vpop.f32.mrb[0].mxu0
    %v2849 = vadd.f32 0.0, %v2848
    %2850 = vdwg.mxu0
    %v2851 = vadd.f32 %v2564, %v2800
    %v2852 = vadd.f32 %v2565, %v2802
    %v2853 = vadd.f32 %v2566, %v2843
    %v2854 = vadd.f32 %v2567, %v2845
    %v2855 = vadd.f32 %v2568, %v2804
    %v2856 = vadd.f32 %v2569, %v2806
    %v2857 = vadd.f32 %v2570, %v2847
    %v2858 = vadd.f32 %v2571, %v2849
    %v2859 = vxor.u32 %v2851, 2147483648
    %v2860 = vxor.u32 %v2855, 2147483648
    %v2861 = vmul.f32 %v2859, 1.442695
    %v2862 = vpow.pop %v2861
    %v2863 = vmul.f32 %v2860, 1.442695
    %v2864 = vpow.pop %v2863
    %v2865 = vadd.f32 %v2862, 1.0
    %v2866 = vadd.f32 %v2864, 1.0
    %v2867 = vrcp.pop %v2865
    %v2868 = vmul.f32 1.0, %v2867
    %v2869 = vrcp.pop %v2866
    %v2870 = vmul.f32 1.0, %v2869
    %v2871 = vxor.u32 %v2852, 2147483648
    %v2872 = vxor.u32 %v2856, 2147483648
    %v2873 = vmul.f32 %v2871, 1.442695
    %v2874 = vpow.pop %v2873
    %v2875 = vmul.f32 %v2872, 1.442695
    %v2876 = vpow.pop %v2875
    %v2877 = vadd.f32 %v2874, 1.0
    %v2878 = vadd.f32 %v2876, 1.0
    %v2879 = vrcp.pop %v2877
    %v2880 = vmul.f32 1.0, %v2879
    %v2881 = vrcp.pop %v2878
    %v2882 = vmul.f32 1.0, %v2881
    %v2883 = vtanh.pop %v2853
    %v2884 = vtanh.pop %v2857
    %v2885 = vxor.u32 %v2854, 2147483648
    %v2886 = vxor.u32 %v2858, 2147483648
    %v2887 = vmul.f32 %v2885, 1.442695
    %v2888 = vpow.pop %v2887
    %v2889 = vmul.f32 %v2886, 1.442695
    %v2890 = vpow.pop %v2889
    %v2891 = vadd.f32 %v2888, 1.0
    %v2892 = vadd.f32 %v2890, 1.0
    %v2893 = vrcp.pop %v2891
    %v2894 = vmul.f32 1.0, %v2893
    %v2895 = vrcp.pop %v2892
    %v2896 = vmul.f32 1.0, %v2895
    %v2897 = vmul.f32 %v2880, %v2561
    %v2898 = vmul.f32 %v2882, %v2562
    %v2899 = vmul.f32 %v2868, %v2883
    %v2900 = vmul.f32 %v2870, %v2884
    %v2901 = vadd.f32 %v2897, %v2899
    %v2902 = vadd.f32 %v2898, %v2900
    %v2903 = vtanh.pop %v2901
    %v2904 = vtanh.pop %v2902
    %v2905 = vmul.f32 %v2894, %v2903
    %v2906 = vmul.f32 %v2896, %v2904
    %s2907 = scalar_lea.vmem %s96, 96
    %v2908 = vld [vmem:[%s2907] sm:$0xff]
    %v2909 = vld [vmem:[%s2907 + $0x8] sm:$0xff]
    %v2910 = vsub.f32 %v2905, %v2559
    %v2911 = vsub.f32 %v2906, %v2560
    %2913 = vset.pattern.permute.xlu0 0
    %2914 = vperm.xlu0 %2913, %v2908
    %v2915 = vpop.permute.xlu0 %2914
    %2918 = vset.pattern.permute.xlu0 0
    %2919 = vperm.xlu0 %2918, %v2909
    %v2920 = vpop.permute.xlu0 %2919
    %v2922 = vmul.f32 %v2915, %v2910
    %v2923 = vmul.f32 %v2920, %v2911
    %v2924 = vadd.f32 %v2559, %v2922
    %v2925 = vadd.f32 %v2560, %v2923
    %2926 = vst [vmem:[%s1776] sm:$0xff] %v2924
    %2927 = vst [vmem:[%s1776 + $0x8] sm:$0xff] %v2925
    %v2928 = vsub.f32 %v2901, %v2561
    %v2929 = vsub.f32 %v2902, %v2562
    %v2930 = vmul.f32 %v2915, %v2928
    %v2931 = vmul.f32 %v2920, %v2929
    %v2932 = vadd.f32 %v2561, %v2930
    %v2933 = vadd.f32 %v2562, %v2931
    %2934 = vst [vmem:[%s1779] sm:$0xff] %v2932
    %2935 = vst [vmem:[%s1779 + $0x8] sm:$0xff] %v2933
    %v2936 = vmul.f32 %v2915, %v2905
    %v2937 = vmul.f32 %v2920, %v2906
    %v2938 = vpack.c.bf16 %v2937, %v2936
    %v2940 = vunpack.c.l.b16 %v2938
    %v2941 = vunpack.c.h.b16 %v2938
    %v2942 = vpack.c.b16 %v2940, %v2940
    %v2943 = vpack.c.b16 %v2941, %v2941
    %s2946 = scalar_lea.vmem [#allocation12], 48
    %2947 = vst [vmem:[%s2946] sm:$0xf] %v2942
    %2948 = vst [vmem:[%s2946 + $0x4] sm:$0xf] %v2943
    %v2949 = vld [vmem:[#allocation2] sm:$0xff]
    %v2950 = vld [vmem:[#allocation2 + $0x8] sm:$0xff]
    %v2951 = vld [vmem:[#allocation3] sm:$0xff]
    %v2952 = vld [vmem:[#allocation3 + $0x8] sm:$0xff]
    %s2953 = scalar_lea.vmem [#allocation4], 128
    %v2954 = vld [vmem:[%s2953] sm:$0xff]
    %v2955 = vld [vmem:[%s2953 + $0x8] sm:$0xff]
    %v2956 = vld [vmem:[%s2953 + $0x10] sm:$0xff]
    %v2957 = vld [vmem:[%s2953 + $0x18] sm:$0xff]
    %v2958 = vld [vmem:[%s2953 + $0x20] sm:$0xff]
    %v2959 = vld [vmem:[%s2953 + $0x28] sm:$0xff]
    %v2960 = vld [vmem:[%s2953 + $0x30] sm:$0xff]
    %v2961 = vld [vmem:[%s2953 + $0x38] sm:$0xff]
    %v2962 = vpack.c.bf16 %v2950, %v2949
    %v2963 = vld [vmem:[#allocation9] sm:$0xff]
    %v2964 = vld [vmem:[#allocation9 + $0x8] sm:$0xff]
    %v2965 = vld [vmem:[#allocation9 + $0x10] sm:$0xff]
    %v2966 = vld [vmem:[#allocation9 + $0x18] sm:$0xff]
    %v2967 = vld [vmem:[#allocation9 + $0x20] sm:$0xff]
    %v2968 = vld [vmem:[#allocation9 + $0x28] sm:$0xff]
    %v2969 = vld [vmem:[#allocation9 + $0x30] sm:$0xff]
    %v2970 = vld [vmem:[#allocation9 + $0x38] sm:$0xff]
    %v2971 = vld [vmem:[#allocation9 + $0x40] sm:$0xff]
    %v2972 = vld [vmem:[#allocation9 + $0x48] sm:$0xff]
    %v2973 = vld [vmem:[#allocation9 + $0x50] sm:$0xff]
    %v2974 = vld [vmem:[#allocation9 + $0x58] sm:$0xff]
    %v2975 = vld [vmem:[#allocation9 + $0x60] sm:$0xff]
    %v2976 = vld [vmem:[#allocation9 + $0x68] sm:$0xff]
    %v2977 = vld [vmem:[#allocation9 + $0x70] sm:$0xff]
    %v2978 = vld [vmem:[#allocation9 + $0x78] sm:$0xff]
    %v2979 = vld [vmem:[#allocation9 + $0x80] sm:$0xff]
    %v2980 = vld [vmem:[#allocation9 + $0x88] sm:$0xff]
    %v2981 = vld [vmem:[#allocation9 + $0x90] sm:$0xff]
    %v2982 = vld [vmem:[#allocation9 + $0x98] sm:$0xff]
    %v2983 = vld [vmem:[#allocation9 + $0xa0] sm:$0xff]
    %v2984 = vld [vmem:[#allocation9 + $0xa8] sm:$0xff]
    %v2985 = vld [vmem:[#allocation9 + $0xb0] sm:$0xff]
    %v2986 = vld [vmem:[#allocation9 + $0xb8] sm:$0xff]
    %v2987 = vld [vmem:[#allocation9 + $0xc0] sm:$0xff]
    %v2988 = vld [vmem:[#allocation9 + $0xc8] sm:$0xff]
    %v2989 = vld [vmem:[#allocation9 + $0xd0] sm:$0xff]
    %v2990 = vld [vmem:[#allocation9 + $0xd8] sm:$0xff]
    %v2991 = vld [vmem:[#allocation9 + $0xe0] sm:$0xff]
    %v2992 = vld [vmem:[#allocation9 + $0xe8] sm:$0xff]
    %v2993 = vld [vmem:[#allocation9 + $0xf0] sm:$0xff]
    %v2994 = vld [vmem:[#allocation9 + $0xf8] sm:$0xff]
    %v3027 = vunpack.c.l.b16 %v2963
    %v3028 = vunpack.c.h.b16 %v2963
    %v3029 = vunpack.c.l.b16 %v2964
    %v3030 = vunpack.c.h.b16 %v2964
    %v3031 = vunpack.c.l.b16 %v2965
    %v3032 = vunpack.c.h.b16 %v2965
    %v3033 = vunpack.c.l.b16 %v2966
    %v3034 = vunpack.c.h.b16 %v2966
    %v3035 = vunpack.c.l.b16 %v2967
    %v3036 = vunpack.c.h.b16 %v2967
    %v3037 = vunpack.c.l.b16 %v2968
    %v3038 = vunpack.c.h.b16 %v2968
    %v3039 = vunpack.c.l.b16 %v2969
    %v3040 = vunpack.c.h.b16 %v2969
    %v3041 = vunpack.c.l.b16 %v2970
    %v3042 = vunpack.c.h.b16 %v2970
    %v3043 = vunpack.c.l.b16 %v2971
    %v3044 = vunpack.c.h.b16 %v2971
    %v3045 = vunpack.c.l.b16 %v2972
    %v3046 = vunpack.c.h.b16 %v2972
    %v3047 = vunpack.c.l.b16 %v2973
    %v3048 = vunpack.c.h.b16 %v2973
    %v3049 = vunpack.c.l.b16 %v2974
    %v3050 = vunpack.c.h.b16 %v2974
    %v3051 = vunpack.c.l.b16 %v2975
    %v3052 = vunpack.c.h.b16 %v2975
    %v3053 = vunpack.c.l.b16 %v2976
    %v3054 = vunpack.c.h.b16 %v2976
    %v3055 = vunpack.c.l.b16 %v2977
    %v3056 = vunpack.c.h.b16 %v2977
    %v3057 = vunpack.c.l.b16 %v2978
    %v3058 = vunpack.c.h.b16 %v2978
    %v3059 = vunpack.c.l.b16 %v2979
    %v3060 = vunpack.c.h.b16 %v2979
    %v3061 = vunpack.c.l.b16 %v2980
    %v3062 = vunpack.c.h.b16 %v2980
    %v3063 = vunpack.c.l.b16 %v2981
    %v3064 = vunpack.c.h.b16 %v2981
    %v3065 = vunpack.c.l.b16 %v2982
    %v3066 = vunpack.c.h.b16 %v2982
    %v3067 = vunpack.c.l.b16 %v2983
    %v3068 = vunpack.c.h.b16 %v2983
    %v3069 = vunpack.c.l.b16 %v2984
    %v3070 = vunpack.c.h.b16 %v2984
    %v3071 = vunpack.c.l.b16 %v2985
    %v3072 = vunpack.c.h.b16 %v2985
    %v3073 = vunpack.c.l.b16 %v2986
    %v3074 = vunpack.c.h.b16 %v2986
    %v3075 = vunpack.c.l.b16 %v2987
    %v3076 = vunpack.c.h.b16 %v2987
    %v3077 = vunpack.c.l.b16 %v2988
    %v3078 = vunpack.c.h.b16 %v2988
    %v3079 = vunpack.c.l.b16 %v2989
    %v3080 = vunpack.c.h.b16 %v2989
    %v3081 = vunpack.c.l.b16 %v2990
    %v3082 = vunpack.c.h.b16 %v2990
    %v3083 = vunpack.c.l.b16 %v2991
    %v3084 = vunpack.c.h.b16 %v2991
    %v3085 = vunpack.c.l.b16 %v2992
    %v3086 = vunpack.c.h.b16 %v2992
    %v3087 = vunpack.c.l.b16 %v2993
    %v3088 = vunpack.c.h.b16 %v2993
    %v3089 = vunpack.c.l.b16 %v2994
    %v3090 = vunpack.c.h.b16 %v2994
    %v3091 = vpack.c.b16 %v3031, %v3027
    %v3092 = vpack.c.b16 %v3032, %v3028
    %v3093 = vpack.c.b16 %v3033, %v3029
    %v3094 = vpack.c.b16 %v3034, %v3030
    %v3095 = vpack.c.b16 %v3039, %v3035
    %v3096 = vpack.c.b16 %v3040, %v3036
    %v3097 = vpack.c.b16 %v3041, %v3037
    %v3098 = vpack.c.b16 %v3042, %v3038
    %v3099 = vpack.c.b16 %v3047, %v3043
    %v3100 = vpack.c.b16 %v3048, %v3044
    %v3101 = vpack.c.b16 %v3049, %v3045
    %v3102 = vpack.c.b16 %v3050, %v3046
    %v3103 = vpack.c.b16 %v3055, %v3051
    %v3104 = vpack.c.b16 %v3056, %v3052
    %v3105 = vpack.c.b16 %v3057, %v3053
    %v3106 = vpack.c.b16 %v3058, %v3054
    %v3107 = vpack.c.b16 %v3063, %v3059
    %v3108 = vpack.c.b16 %v3064, %v3060
    %v3109 = vpack.c.b16 %v3065, %v3061
    %v3110 = vpack.c.b16 %v3066, %v3062
    %v3111 = vpack.c.b16 %v3071, %v3067
    %v3112 = vpack.c.b16 %v3072, %v3068
    %v3113 = vpack.c.b16 %v3073, %v3069
    %v3114 = vpack.c.b16 %v3074, %v3070
    %v3115 = vpack.c.b16 %v3079, %v3075
    %v3116 = vpack.c.b16 %v3080, %v3076
    %v3117 = vpack.c.b16 %v3081, %v3077
    %v3118 = vpack.c.b16 %v3082, %v3078
    %v3119 = vpack.c.b16 %v3087, %v3083
    %v3120 = vpack.c.b16 %v3088, %v3084
    %v3121 = vpack.c.b16 %v3089, %v3085
    %v3122 = vpack.c.b16 %v3090, %v3086
    %3155 = vmatprep.subr.bf16.mxu0 %v3092
    %3156 = vmatpush1.bf16.msra.mxu0 %v3091
    %3157 = vmatprep.subr.bf16.mxu0 %v3096
    %3158 = vmatpush1.bf16.msra.mxu0 %v3095
    %3159 = vmatprep.subr.bf16.mxu0 %v3100
    %3160 = vmatpush1.bf16.msra.mxu0 %v3099
    %3161 = vmatprep.subr.bf16.mxu0 %v3104
    %3162 = vmatpush1.bf16.msra.mxu0 %v3103
    %3163 = vmatprep.subr.bf16.mxu0 %v3108
    %3164 = vmatpush1.bf16.msra.mxu0 %v3107
    %3165 = vmatprep.subr.bf16.mxu0 %v3112
    %3166 = vmatpush1.bf16.msra.mxu0 %v3111
    %3167 = vmatprep.subr.bf16.mxu0 %v3116
    %3168 = vmatpush1.bf16.msra.mxu0 %v3115
    %3169 = vmatprep.subr.bf16.mxu0 %v3120
    %3170 = vmatpush1.bf16.msra.mxu0 %v3119
    %3171 = vmatprep.subr.bf16.mxu0 0
    %3172 = vmatpush1.bf16.msra.mxu0 0
    %3173 = vmatprep.subr.bf16.mxu0 0
    %3174 = vmatpush1.bf16.msra.mxu0 0
    %3175 = vmatprep.subr.bf16.mxu0 0
    %3176 = vmatpush1.bf16.msra.mxu0 0
    %3177 = vmatprep.subr.bf16.mxu0 0
    %3178 = vmatpush1.bf16.msra.mxu0 0
    %3179 = vmatprep.subr.bf16.mxu0 0
    %3180 = vmatpush1.bf16.msra.mxu0 0
    %3181 = vmatprep.subr.bf16.mxu0 0
    %3182 = vmatpush1.bf16.msra.mxu0 0
    %3183 = vmatprep.subr.bf16.mxu0 0
    %3184 = vmatpush1.bf16.msra.mxu0 0
    %3185 = vmatprep.subr.bf16.mxu0 0
    %3186 = vmatpush1.bf16.msra.mxu0 0
    %3187 = vmatprep.mubr.bf16.mxu0 0
    %3188 = vmatmul.mubr.bf16.gmra.mrb[0].mxu0 %v2962
    %v3189 = vpop.f32.mrb[0].mxu0
    %v3190 = vadd.f32 0.0, %v3189
    %v3191 = vpop.f32.mrb[0].mxu0
    %v3192 = vadd.f32 0.0, %v3191
    %v3193 = vpop.f32.mrb[0].mxu0
    %v3194 = vadd.f32 0.0, %v3193
    %v3195 = vpop.f32.mrb[0].mxu0
    %v3196 = vadd.f32 0.0, %v3195
    %3197 = vdwg.mxu0
    %3198 = vmatprep.subr.bf16.mxu0 %v3094
    %3199 = vmatpush1.bf16.msra.mxu0 %v3093
    %3200 = vmatprep.subr.bf16.mxu0 %v3098
    %3201 = vmatpush1.bf16.msra.mxu0 %v3097
    %3202 = vmatprep.subr.bf16.mxu0 %v3102
    %3203 = vmatpush1.bf16.msra.mxu0 %v3101
    %3204 = vmatprep.subr.bf16.mxu0 %v3106
    %3205 = vmatpush1.bf16.msra.mxu0 %v3105
    %3206 = vmatprep.subr.bf16.mxu0 %v3110
    %3207 = vmatpush1.bf16.msra.mxu0 %v3109
    %3208 = vmatprep.subr.bf16.mxu0 %v3114
    %3209 = vmatpush1.bf16.msra.mxu0 %v3113
    %3210 = vmatprep.subr.bf16.mxu0 %v3118
    %3211 = vmatpush1.bf16.msra.mxu0 %v3117
    %3212 = vmatprep.subr.bf16.mxu0 %v3122
    %3213 = vmatpush1.bf16.msra.mxu0 %v3121
    %3214 = vmatprep.subr.bf16.mxu0 0
    %3215 = vmatpush1.bf16.msra.mxu0 0
    %3216 = vmatprep.subr.bf16.mxu0 0
    %3217 = vmatpush1.bf16.msra.mxu0 0
    %3218 = vmatprep.subr.bf16.mxu0 0
    %3219 = vmatpush1.bf16.msra.mxu0 0
    %3220 = vmatprep.subr.bf16.mxu0 0
    %3221 = vmatpush1.bf16.msra.mxu0 0
    %3222 = vmatprep.subr.bf16.mxu0 0
    %3223 = vmatpush1.bf16.msra.mxu0 0
    %3224 = vmatprep.subr.bf16.mxu0 0
    %3225 = vmatpush1.bf16.msra.mxu0 0
    %3226 = vmatprep.subr.bf16.mxu0 0
    %3227 = vmatpush1.bf16.msra.mxu0 0
    %3228 = vmatprep.subr.bf16.mxu0 0
    %3229 = vmatpush1.bf16.msra.mxu0 0
    %3230 = vmatprep.mubr.bf16.mxu0 0
    %3231 = vmatmul.mubr.bf16.gmra.mrb[0].mxu0 %v2962
    %v3232 = vpop.f32.mrb[0].mxu0
    %v3233 = vadd.f32 0.0, %v3232
    %v3234 = vpop.f32.mrb[0].mxu0
    %v3235 = vadd.f32 0.0, %v3234
    %v3236 = vpop.f32.mrb[0].mxu0
    %v3237 = vadd.f32 0.0, %v3236
    %v3238 = vpop.f32.mrb[0].mxu0
    %v3239 = vadd.f32 0.0, %v3238
    %3240 = vdwg.mxu0
    %v3241 = vadd.f32 %v2954, %v3190
    %v3242 = vadd.f32 %v2955, %v3192
    %v3243 = vadd.f32 %v2956, %v3233
    %v3244 = vadd.f32 %v2957, %v3235
    %v3245 = vadd.f32 %v2958, %v3194
    %v3246 = vadd.f32 %v2959, %v3196
    %v3247 = vadd.f32 %v2960, %v3237
    %v3248 = vadd.f32 %v2961, %v3239
    %v3249 = vxor.u32 %v3241, 2147483648
    %v3250 = vxor.u32 %v3245, 2147483648
    %v3251 = vmul.f32 %v3249, 1.442695
    %v3252 = vpow.pop %v3251
    %v3253 = vmul.f32 %v3250, 1.442695
    %v3254 = vpow.pop %v3253
    %v3255 = vadd.f32 %v3252, 1.0
    %v3256 = vadd.f32 %v3254, 1.0
    %v3257 = vrcp.pop %v3255
    %v3258 = vmul.f32 1.0, %v3257
    %v3259 = vrcp.pop %v3256
    %v3260 = vmul.f32 1.0, %v3259
    %v3261 = vxor.u32 %v3242, 2147483648
    %v3262 = vxor.u32 %v3246, 2147483648
    %v3263 = vmul.f32 %v3261, 1.442695
    %v3264 = vpow.pop %v3263
    %v3265 = vmul.f32 %v3262, 1.442695
    %v3266 = vpow.pop %v3265
    %v3267 = vadd.f32 %v3264, 1.0
    %v3268 = vadd.f32 %v3266, 1.0
    %v3269 = vrcp.pop %v3267
    %v3270 = vmul.f32 1.0, %v3269
    %v3271 = vrcp.pop %v3268
    %v3272 = vmul.f32 1.0, %v3271
    %v3273 = vtanh.pop %v3243
    %v3274 = vtanh.pop %v3247
    %v3275 = vxor.u32 %v3244, 2147483648
    %v3276 = vxor.u32 %v3248, 2147483648
    %v3277 = vmul.f32 %v3275, 1.442695
    %v3278 = vpow.pop %v3277
    %v3279 = vmul.f32 %v3276, 1.442695
    %v3280 = vpow.pop %v3279
    %v3281 = vadd.f32 %v3278, 1.0
    %v3282 = vadd.f32 %v3280, 1.0
    %v3283 = vrcp.pop %v3281
    %v3284 = vmul.f32 1.0, %v3283
    %v3285 = vrcp.pop %v3282
    %v3286 = vmul.f32 1.0, %v3285
    %v3287 = vmul.f32 %v3270, %v2951
    %v3288 = vmul.f32 %v3272, %v2952
    %v3289 = vmul.f32 %v3258, %v3273
    %v3290 = vmul.f32 %v3260, %v3274
    %v3291 = vadd.f32 %v3287, %v3289
    %v3292 = vadd.f32 %v3288, %v3290
    %v3293 = vtanh.pop %v3291
    %v3294 = vtanh.pop %v3292
    %v3295 = vmul.f32 %v3284, %v3293
    %v3296 = vmul.f32 %v3286, %v3294
    %s3297 = scalar_lea.vmem %s0, 32
    %v3298 = vld [vmem:[%s3297] sm:$0xff]
    %v3299 = vld [vmem:[%s3297 + $0x8] sm:$0xff]
    %v3300 = vsub.f32 %v3295, %v2949
    %v3301 = vsub.f32 %v3296, %v2950
    %3303 = vset.pattern.permute.xlu0 0
    %3304 = vperm.xlu0 %3303, %v3298
    %v3305 = vpop.permute.xlu0 %3304
    %3308 = vset.pattern.permute.xlu0 0
    %3309 = vperm.xlu0 %3308, %v3299
    %v3310 = vpop.permute.xlu0 %3309
    %v3312 = vmul.f32 %v3305, %v3300
    %v3313 = vmul.f32 %v3310, %v3301
    %v3314 = vadd.f32 %v2949, %v3312
    %v3315 = vadd.f32 %v2950, %v3313
    %3316 = vst [vmem:[#allocation2] sm:$0xff] %v3314
    %3317 = vst [vmem:[#allocation2 + $0x8] sm:$0xff] %v3315
    %v3318 = vsub.f32 %v3291, %v2951
    %v3319 = vsub.f32 %v3292, %v2952
    %v3320 = vmul.f32 %v3305, %v3318
    %v3321 = vmul.f32 %v3310, %v3319
    %v3322 = vadd.f32 %v2951, %v3320
    %v3323 = vadd.f32 %v2952, %v3321
    %3324 = vst [vmem:[#allocation3] sm:$0xff] %v3322
    %3325 = vst [vmem:[#allocation3 + $0x8] sm:$0xff] %v3323
    %v3326 = vmul.f32 %v3305, %v3295
    %v3327 = vmul.f32 %v3310, %v3296
    %v3328 = vpack.c.bf16 %v3327, %v3326
    %v3330 = vunpack.c.l.b16 %v3328
    %v3331 = vunpack.c.h.b16 %v3328
    %v3332 = vpack.c.b16 %v3330, %v3330
    %v3333 = vpack.c.b16 %v3331, %v3331
    %s3336 = scalar_lea.vmem [#allocation11], 16
    %3337 = vst [vmem:[%s3336] sm:$0xf] %v3332
    %3338 = vst [vmem:[%s3336 + $0x4] sm:$0xf] %v3333
    %v3339 = vld [vmem:[%s1776] sm:$0xff]
    %v3340 = vld [vmem:[%s1776 + $0x8] sm:$0xff]
    %v3341 = vld [vmem:[%s1779] sm:$0xff]
    %v3342 = vld [vmem:[%s1779 + $0x8] sm:$0xff]
    %s3343 = scalar_lea.vmem [#allocation5], 320
    %v3344 = vld [vmem:[%s3343] sm:$0xff]
    %v3345 = vld [vmem:[%s3343 + $0x8] sm:$0xff]
    %v3346 = vld [vmem:[%s3343 + $0x10] sm:$0xff]
    %v3347 = vld [vmem:[%s3343 + $0x18] sm:$0xff]
    %v3348 = vld [vmem:[%s3343 + $0x20] sm:$0xff]
    %v3349 = vld [vmem:[%s3343 + $0x28] sm:$0xff]
    %v3350 = vld [vmem:[%s3343 + $0x30] sm:$0xff]
    %v3351 = vld [vmem:[%s3343 + $0x38] sm:$0xff]
    %v3352 = vpack.c.bf16 %v3340, %v3339
    %v3353 = vld [vmem:[%s1792] sm:$0xff]
    %v3354 = vld [vmem:[%s1792 + $0x8] sm:$0xff]
    %v3355 = vld [vmem:[%s1792 + $0x10] sm:$0xff]
    %v3356 = vld [vmem:[%s1792 + $0x18] sm:$0xff]
    %v3357 = vld [vmem:[%s1792 + $0x20] sm:$0xff]
    %v3358 = vld [vmem:[%s1792 + $0x28] sm:$0xff]
    %v3359 = vld [vmem:[%s1792 + $0x30] sm:$0xff]
    %v3360 = vld [vmem:[%s1792 + $0x38] sm:$0xff]
    %v3361 = vld [vmem:[%s1792 + $0x40] sm:$0xff]
    %v3362 = vld [vmem:[%s1792 + $0x48] sm:$0xff]
    %v3363 = vld [vmem:[%s1792 + $0x50] sm:$0xff]
    %v3364 = vld [vmem:[%s1792 + $0x58] sm:$0xff]
    %v3365 = vld [vmem:[%s1792 + $0x60] sm:$0xff]
    %v3366 = vld [vmem:[%s1792 + $0x68] sm:$0xff]
    %v3367 = vld [vmem:[%s1792 + $0x70] sm:$0xff]
    %v3368 = vld [vmem:[%s1792 + $0x78] sm:$0xff]
    %v3369 = vld [vmem:[%s1792 + $0x80] sm:$0xff]
    %v3370 = vld [vmem:[%s1792 + $0x88] sm:$0xff]
    %v3371 = vld [vmem:[%s1792 + $0x90] sm:$0xff]
    %v3372 = vld [vmem:[%s1792 + $0x98] sm:$0xff]
    %v3373 = vld [vmem:[%s1792 + $0xa0] sm:$0xff]
    %v3374 = vld [vmem:[%s1792 + $0xa8] sm:$0xff]
    %v3375 = vld [vmem:[%s1792 + $0xb0] sm:$0xff]
    %v3376 = vld [vmem:[%s1792 + $0xb8] sm:$0xff]
    %v3377 = vld [vmem:[%s1792 + $0xc0] sm:$0xff]
    %v3378 = vld [vmem:[%s1792 + $0xc8] sm:$0xff]
    %v3379 = vld [vmem:[%s1792 + $0xd0] sm:$0xff]
    %v3380 = vld [vmem:[%s1792 + $0xd8] sm:$0xff]
    %v3381 = vld [vmem:[%s1792 + $0xe0] sm:$0xff]
    %v3382 = vld [vmem:[%s1792 + $0xe8] sm:$0xff]
    %v3383 = vld [vmem:[%s1792 + $0xf0] sm:$0xff]
    %v3384 = vld [vmem:[%s1792 + $0xf8] sm:$0xff]
    %v3417 = vunpack.c.l.b16 %v3353
    %v3418 = vunpack.c.h.b16 %v3353
    %v3419 = vunpack.c.l.b16 %v3354
    %v3420 = vunpack.c.h.b16 %v3354
    %v3421 = vunpack.c.l.b16 %v3355
    %v3422 = vunpack.c.h.b16 %v3355
    %v3423 = vunpack.c.l.b16 %v3356
    %v3424 = vunpack.c.h.b16 %v3356
    %v3425 = vunpack.c.l.b16 %v3357
    %v3426 = vunpack.c.h.b16 %v3357
    %v3427 = vunpack.c.l.b16 %v3358
    %v3428 = vunpack.c.h.b16 %v3358
    %v3429 = vunpack.c.l.b16 %v3359
    %v3430 = vunpack.c.h.b16 %v3359
    %v3431 = vunpack.c.l.b16 %v3360
    %v3432 = vunpack.c.h.b16 %v3360
    %v3433 = vunpack.c.l.b16 %v3361
    %v3434 = vunpack.c.h.b16 %v3361
    %v3435 = vunpack.c.l.b16 %v3362
    %v3436 = vunpack.c.h.b16 %v3362
    %v3437 = vunpack.c.l.b16 %v3363
    %v3438 = vunpack.c.h.b16 %v3363
    %v3439 = vunpack.c.l.b16 %v3364
    %v3440 = vunpack.c.h.b16 %v3364
    %v3441 = vunpack.c.l.b16 %v3365
    %v3442 = vunpack.c.h.b16 %v3365
    %v3443 = vunpack.c.l.b16 %v3366
    %v3444 = vunpack.c.h.b16 %v3366
    %v3445 = vunpack.c.l.b16 %v3367
    %v3446 = vunpack.c.h.b16 %v3367
    %v3447 = vunpack.c.l.b16 %v3368
    %v3448 = vunpack.c.h.b16 %v3368
    %v3449 = vunpack.c.l.b16 %v3369
    %v3450 = vunpack.c.h.b16 %v3369
    %v3451 = vunpack.c.l.b16 %v3370
    %v3452 = vunpack.c.h.b16 %v3370
    %v3453 = vunpack.c.l.b16 %v3371
    %v3454 = vunpack.c.h.b16 %v3371
    %v3455 = vunpack.c.l.b16 %v3372
    %v3456 = vunpack.c.h.b16 %v3372
    %v3457 = vunpack.c.l.b16 %v3373
    %v3458 = vunpack.c.h.b16 %v3373
    %v3459 = vunpack.c.l.b16 %v3374
    %v3460 = vunpack.c.h.b16 %v3374
    %v3461 = vunpack.c.l.b16 %v3375
    %v3462 = vunpack.c.h.b16 %v3375
    %v3463 = vunpack.c.l.b16 %v3376
    %v3464 = vunpack.c.h.b16 %v3376
    %v3465 = vunpack.c.l.b16 %v3377
    %v3466 = vunpack.c.h.b16 %v3377
    %v3467 = vunpack.c.l.b16 %v3378
    %v3468 = vunpack.c.h.b16 %v3378
    %v3469 = vunpack.c.l.b16 %v3379
    %v3470 = vunpack.c.h.b16 %v3379
    %v3471 = vunpack.c.l.b16 %v3380
    %v3472 = vunpack.c.h.b16 %v3380
    %v3473 = vunpack.c.l.b16 %v3381
    %v3474 = vunpack.c.h.b16 %v3381
    %v3475 = vunpack.c.l.b16 %v3382
    %v3476 = vunpack.c.h.b16 %v3382
    %v3477 = vunpack.c.l.b16 %v3383
    %v3478 = vunpack.c.h.b16 %v3383
    %v3479 = vunpack.c.l.b16 %v3384
    %v3480 = vunpack.c.h.b16 %v3384
    %v3481 = vpack.c.b16 %v3421, %v3417
    %v3482 = vpack.c.b16 %v3422, %v3418
    %v3483 = vpack.c.b16 %v3423, %v3419
    %v3484 = vpack.c.b16 %v3424, %v3420
    %v3485 = vpack.c.b16 %v3429, %v3425
    %v3486 = vpack.c.b16 %v3430, %v3426
    %v3487 = vpack.c.b16 %v3431, %v3427
    %v3488 = vpack.c.b16 %v3432, %v3428
    %v3489 = vpack.c.b16 %v3437, %v3433
    %v3490 = vpack.c.b16 %v3438, %v3434
    %v3491 = vpack.c.b16 %v3439, %v3435
    %v3492 = vpack.c.b16 %v3440, %v3436
    %v3493 = vpack.c.b16 %v3445, %v3441
    %v3494 = vpack.c.b16 %v3446, %v3442
    %v3495 = vpack.c.b16 %v3447, %v3443
    %v3496 = vpack.c.b16 %v3448, %v3444
    %v3497 = vpack.c.b16 %v3453, %v3449
    %v3498 = vpack.c.b16 %v3454, %v3450
    %v3499 = vpack.c.b16 %v3455, %v3451
    %v3500 = vpack.c.b16 %v3456, %v3452
    %v3501 = vpack.c.b16 %v3461, %v3457
    %v3502 = vpack.c.b16 %v3462, %v3458
    %v3503 = vpack.c.b16 %v3463, %v3459
    %v3504 = vpack.c.b16 %v3464, %v3460
    %v3505 = vpack.c.b16 %v3469, %v3465
    %v3506 = vpack.c.b16 %v3470, %v3466
    %v3507 = vpack.c.b16 %v3471, %v3467
    %v3508 = vpack.c.b16 %v3472, %v3468
    %v3509 = vpack.c.b16 %v3477, %v3473
    %v3510 = vpack.c.b16 %v3478, %v3474
    %v3511 = vpack.c.b16 %v3479, %v3475
    %v3512 = vpack.c.b16 %v3480, %v3476
    %3545 = vmatprep.subr.bf16.mxu0 %v3482
    %3546 = vmatpush1.bf16.msra.mxu0 %v3481
    %3547 = vmatprep.subr.bf16.mxu0 %v3486
    %3548 = vmatpush1.bf16.msra.mxu0 %v3485
    %3549 = vmatprep.subr.bf16.mxu0 %v3490
    %3550 = vmatpush1.bf16.msra.mxu0 %v3489
    %3551 = vmatprep.subr.bf16.mxu0 %v3494
    %3552 = vmatpush1.bf16.msra.mxu0 %v3493
    %3553 = vmatprep.subr.bf16.mxu0 %v3498
    %3554 = vmatpush1.bf16.msra.mxu0 %v3497
    %3555 = vmatprep.subr.bf16.mxu0 %v3502
    %3556 = vmatpush1.bf16.msra.mxu0 %v3501
    %3557 = vmatprep.subr.bf16.mxu0 %v3506
    %3558 = vmatpush1.bf16.msra.mxu0 %v3505
    %3559 = vmatprep.subr.bf16.mxu0 %v3510
    %3560 = vmatpush1.bf16.msra.mxu0 %v3509
    %3561 = vmatprep.subr.bf16.mxu0 0
    %3562 = vmatpush1.bf16.msra.mxu0 0
    %3563 = vmatprep.subr.bf16.mxu0 0
    %3564 = vmatpush1.bf16.msra.mxu0 0
    %3565 = vmatprep.subr.bf16.mxu0 0
    %3566 = vmatpush1.bf16.msra.mxu0 0
    %3567 = vmatprep.subr.bf16.mxu0 0
    %3568 = vmatpush1.bf16.msra.mxu0 0
    %3569 = vmatprep.subr.bf16.mxu0 0
    %3570 = vmatpush1.bf16.msra.mxu0 0
    %3571 = vmatprep.subr.bf16.mxu0 0
    %3572 = vmatpush1.bf16.msra.mxu0 0
    %3573 = vmatprep.subr.bf16.mxu0 0
    %3574 = vmatpush1.bf16.msra.mxu0 0
    %3575 = vmatprep.subr.bf16.mxu0 0
    %3576 = vmatpush1.bf16.msra.mxu0 0
    %3577 = vmatprep.mubr.bf16.mxu0 0
    %3578 = vmatmul.mubr.bf16.gmra.mrb[0].mxu0 %v3352
    %v3579 = vpop.f32.mrb[0].mxu0
    %v3580 = vadd.f32 0.0, %v3579
    %v3581 = vpop.f32.mrb[0].mxu0
    %v3582 = vadd.f32 0.0, %v3581
    %v3583 = vpop.f32.mrb[0].mxu0
    %v3584 = vadd.f32 0.0, %v3583
    %v3585 = vpop.f32.mrb[0].mxu0
    %v3586 = vadd.f32 0.0, %v3585
    %3587 = vdwg.mxu0
    %3588 = vmatprep.subr.bf16.mxu0 %v3484
    %3589 = vmatpush1.bf16.msra.mxu0 %v3483
    %3590 = vmatprep.subr.bf16.mxu0 %v3488
    %3591 = vmatpush1.bf16.msra.mxu0 %v3487
    %3592 = vmatprep.subr.bf16.mxu0 %v3492
    %3593 = vmatpush1.bf16.msra.mxu0 %v3491
    %3594 = vmatprep.subr.bf16.mxu0 %v3496
    %3595 = vmatpush1.bf16.msra.mxu0 %v3495
    %3596 = vmatprep.subr.bf16.mxu0 %v3500
    %3597 = vmatpush1.bf16.msra.mxu0 %v3499
    %3598 = vmatprep.subr.bf16.mxu0 %v3504
    %3599 = vmatpush1.bf16.msra.mxu0 %v3503
    %3600 = vmatprep.subr.bf16.mxu0 %v3508
    %3601 = vmatpush1.bf16.msra.mxu0 %v3507
    %3602 = vmatprep.subr.bf16.mxu0 %v3512
    %3603 = vmatpush1.bf16.msra.mxu0 %v3511
    %3604 = vmatprep.subr.bf16.mxu0 0
    %3605 = vmatpush1.bf16.msra.mxu0 0
    %3606 = vmatprep.subr.bf16.mxu0 0
    %3607 = vmatpush1.bf16.msra.mxu0 0
    %3608 = vmatprep.subr.bf16.mxu0 0
    %3609 = vmatpush1.bf16.msra.mxu0 0
    %3610 = vmatprep.subr.bf16.mxu0 0
    %3611 = vmatpush1.bf16.msra.mxu0 0
    %3612 = vmatprep.subr.bf16.mxu0 0
    %3613 = vmatpush1.bf16.msra.mxu0 0
    %3614 = vmatprep.subr.bf16.mxu0 0
    %3615 = vmatpush1.bf16.msra.mxu0 0
    %3616 = vmatprep.subr.bf16.mxu0 0
    %3617 = vmatpush1.bf16.msra.mxu0 0
    %3618 = vmatprep.subr.bf16.mxu0 0
    %3619 = vmatpush1.bf16.msra.mxu0 0
    %3620 = vmatprep.mubr.bf16.mxu0 0
    %3621 = vmatmul.mubr.bf16.gmra.mrb[0].mxu0 %v3352
    %v3622 = vpop.f32.mrb[0].mxu0
    %v3623 = vadd.f32 0.0, %v3622
    %v3624 = vpop.f32.mrb[0].mxu0
    %v3625 = vadd.f32 0.0, %v3624
    %v3626 = vpop.f32.mrb[0].mxu0
    %v3627 = vadd.f32 0.0, %v3626
    %v3628 = vpop.f32.mrb[0].mxu0
    %v3629 = vadd.f32 0.0, %v3628
    %3630 = vdwg.mxu0
    %v3631 = vadd.f32 %v3344, %v3580
    %v3632 = vadd.f32 %v3345, %v3582
    %v3633 = vadd.f32 %v3346, %v3623
    %v3634 = vadd.f32 %v3347, %v3625
    %v3635 = vadd.f32 %v3348, %v3584
    %v3636 = vadd.f32 %v3349, %v3586
    %v3637 = vadd.f32 %v3350, %v3627
    %v3638 = vadd.f32 %v3351, %v3629
    %v3639 = vxor.u32 %v3631, 2147483648
    %v3640 = vxor.u32 %v3635, 2147483648
    %v3641 = vmul.f32 %v3639, 1.442695
    %v3642 = vpow.pop %v3641
    %v3643 = vmul.f32 %v3640, 1.442695
    %v3644 = vpow.pop %v3643
    %v3645 = vadd.f32 %v3642, 1.0
    %v3646 = vadd.f32 %v3644, 1.0
    %v3647 = vrcp.pop %v3645
    %v3648 = vmul.f32 1.0, %v3647
    %v3649 = vrcp.pop %v3646
    %v3650 = vmul.f32 1.0, %v3649
    %v3651 = vxor.u32 %v3632, 2147483648
    %v3652 = vxor.u32 %v3636, 2147483648
    %v3653 = vmul.f32 %v3651, 1.442695
    %v3654 = vpow.pop %v3653
    %v3655 = vmul.f32 %v3652, 1.442695
    %v3656 = vpow.pop %v3655
    %v3657 = vadd.f32 %v3654, 1.0
    %v3658 = vadd.f32 %v3656, 1.0
    %v3659 = vrcp.pop %v3657
    %v3660 = vmul.f32 1.0, %v3659
    %v3661 = vrcp.pop %v3658
    %v3662 = vmul.f32 1.0, %v3661
    %v3663 = vtanh.pop %v3633
    %v3664 = vtanh.pop %v3637
    %v3665 = vxor.u32 %v3634, 2147483648
    %v3666 = vxor.u32 %v3638, 2147483648
    %v3667 = vmul.f32 %v3665, 1.442695
    %v3668 = vpow.pop %v3667
    %v3669 = vmul.f32 %v3666, 1.442695
    %v3670 = vpow.pop %v3669
    %v3671 = vadd.f32 %v3668, 1.0
    %v3672 = vadd.f32 %v3670, 1.0
    %v3673 = vrcp.pop %v3671
    %v3674 = vmul.f32 1.0, %v3673
    %v3675 = vrcp.pop %v3672
    %v3676 = vmul.f32 1.0, %v3675
    %v3677 = vmul.f32 %v3660, %v3341
    %v3678 = vmul.f32 %v3662, %v3342
    %v3679 = vmul.f32 %v3648, %v3663
    %v3680 = vmul.f32 %v3650, %v3664
    %v3681 = vadd.f32 %v3677, %v3679
    %v3682 = vadd.f32 %v3678, %v3680
    %v3683 = vtanh.pop %v3681
    %v3684 = vtanh.pop %v3682
    %v3685 = vmul.f32 %v3674, %v3683
    %v3686 = vmul.f32 %v3676, %v3684
    %s3687 = scalar_lea.vmem %s96, 80
    %v3688 = vld [vmem:[%s3687] sm:$0xff]
    %v3689 = vld [vmem:[%s3687 + $0x8] sm:$0xff]
    %v3690 = vsub.f32 %v3685, %v3339
    %v3691 = vsub.f32 %v3686, %v3340
    %3693 = vset.pattern.permute.xlu0 0
    %3694 = vperm.xlu0 %3693, %v3688
    %v3695 = vpop.permute.xlu0 %3694
    %3698 = vset.pattern.permute.xlu0 0
    %3699 = vperm.xlu0 %3698, %v3689
    %v3700 = vpop.permute.xlu0 %3699
    %v3702 = vmul.f32 %v3695, %v3690
    %v3703 = vmul.f32 %v3700, %v3691
    %v3704 = vadd.f32 %v3339, %v3702
    %v3705 = vadd.f32 %v3340, %v3703
    %3706 = vst [vmem:[%s1776] sm:$0xff] %v3704
    %3707 = vst [vmem:[%s1776 + $0x8] sm:$0xff] %v3705
    %v3708 = vsub.f32 %v3681, %v3341
    %v3709 = vsub.f32 %v3682, %v3342
    %v3710 = vmul.f32 %v3695, %v3708
    %v3711 = vmul.f32 %v3700, %v3709
    %v3712 = vadd.f32 %v3341, %v3710
    %v3713 = vadd.f32 %v3342, %v3711
    %3714 = vst [vmem:[%s1779] sm:$0xff] %v3712
    %3715 = vst [vmem:[%s1779 + $0x8] sm:$0xff] %v3713
    %v3716 = vmul.f32 %v3695, %v3685
    %v3717 = vmul.f32 %v3700, %v3686
    %v3718 = vpack.c.bf16 %v3717, %v3716
    %v3720 = vunpack.c.l.b16 %v3718
    %v3721 = vunpack.c.h.b16 %v3718
    %v3722 = vpack.c.b16 %v3720, %v3720
    %v3723 = vpack.c.b16 %v3721, %v3721
    %s3726 = scalar_lea.vmem [#allocation12], 40
    %3727 = vst [vmem:[%s3726] sm:$0xf] %v3722
    %3728 = vst [vmem:[%s3726 + $0x4] sm:$0xf] %v3723
    %v3729 = vld [vmem:[#allocation2] sm:$0xff]
    %v3730 = vld [vmem:[#allocation2 + $0x8] sm:$0xff]
    %v3731 = vld [vmem:[#allocation3] sm:$0xff]
    %v3732 = vld [vmem:[#allocation3 + $0x8] sm:$0xff]
    %s3733 = scalar_lea.vmem [#allocation4], 192
    %v3734 = vld [vmem:[%s3733] sm:$0xff]
    %v3735 = vld [vmem:[%s3733 + $0x8] sm:$0xff]
    %v3736 = vld [vmem:[%s3733 + $0x10] sm:$0xff]
    %v3737 = vld [vmem:[%s3733 + $0x18] sm:$0xff]
    %v3738 = vld [vmem:[%s3733 + $0x20] sm:$0xff]
    %v3739 = vld [vmem:[%s3733 + $0x28] sm:$0xff]
    %v3740 = vld [vmem:[%s3733 + $0x30] sm:$0xff]
    %v3741 = vld [vmem:[%s3733 + $0x38] sm:$0xff]
    %v3742 = vpack.c.bf16 %v3730, %v3729
    %v3743 = vld [vmem:[#allocation9] sm:$0xff]
    %v3744 = vld [vmem:[#allocation9 + $0x8] sm:$0xff]
    %v3745 = vld [vmem:[#allocation9 + $0x10] sm:$0xff]
    %v3746 = vld [vmem:[#allocation9 + $0x18] sm:$0xff]
    %v3747 = vld [vmem:[#allocation9 + $0x20] sm:$0xff]
    %v3748 = vld [vmem:[#allocation9 + $0x28] sm:$0xff]
    %v3749 = vld [vmem:[#allocation9 + $0x30] sm:$0xff]
    %v3750 = vld [vmem:[#allocation9 + $0x38] sm:$0xff]
    %v3751 = vld [vmem:[#allocation9 + $0x40] sm:$0xff]
    %v3752 = vld [vmem:[#allocation9 + $0x48] sm:$0xff]
    %v3753 = vld [vmem:[#allocation9 + $0x50] sm:$0xff]
    %v3754 = vld [vmem:[#allocation9 + $0x58] sm:$0xff]
    %v3755 = vld [vmem:[#allocation9 + $0x60] sm:$0xff]
    %v3756 = vld [vmem:[#allocation9 + $0x68] sm:$0xff]
    %v3757 = vld [vmem:[#allocation9 + $0x70] sm:$0xff]
    %v3758 = vld [vmem:[#allocation9 + $0x78] sm:$0xff]
    %v3759 = vld [vmem:[#allocation9 + $0x80] sm:$0xff]
    %v3760 = vld [vmem:[#allocation9 + $0x88] sm:$0xff]
    %v3761 = vld [vmem:[#allocation9 + $0x90] sm:$0xff]
    %v3762 = vld [vmem:[#allocation9 + $0x98] sm:$0xff]
    %v3763 = vld [vmem:[#allocation9 + $0xa0] sm:$0xff]
    %v3764 = vld [vmem:[#allocation9 + $0xa8] sm:$0xff]
    %v3765 = vld [vmem:[#allocation9 + $0xb0] sm:$0xff]
    %v3766 = vld [vmem:[#allocation9 + $0xb8] sm:$0xff]
    %v3767 = vld [vmem:[#allocation9 + $0xc0] sm:$0xff]
    %v3768 = vld [vmem:[#allocation9 + $0xc8] sm:$0xff]
    %v3769 = vld [vmem:[#allocation9 + $0xd0] sm:$0xff]
    %v3770 = vld [vmem:[#allocation9 + $0xd8] sm:$0xff]
    %v3771 = vld [vmem:[#allocation9 + $0xe0] sm:$0xff]
    %v3772 = vld [vmem:[#allocation9 + $0xe8] sm:$0xff]
    %v3773 = vld [vmem:[#allocation9 + $0xf0] sm:$0xff]
    %v3774 = vld [vmem:[#allocation9 + $0xf8] sm:$0xff]
    %v3807 = vunpack.c.l.b16 %v3743
    %v3808 = vunpack.c.h.b16 %v3743
    %v3809 = vunpack.c.l.b16 %v3744
    %v3810 = vunpack.c.h.b16 %v3744
    %v3811 = vunpack.c.l.b16 %v3745
    %v3812 = vunpack.c.h.b16 %v3745
    %v3813 = vunpack.c.l.b16 %v3746
    %v3814 = vunpack.c.h.b16 %v3746
    %v3815 = vunpack.c.l.b16 %v3747
    %v3816 = vunpack.c.h.b16 %v3747
    %v3817 = vunpack.c.l.b16 %v3748
    %v3818 = vunpack.c.h.b16 %v3748
    %v3819 = vunpack.c.l.b16 %v3749
    %v3820 = vunpack.c.h.b16 %v3749
    %v3821 = vunpack.c.l.b16 %v3750
    %v3822 = vunpack.c.h.b16 %v3750
    %v3823 = vunpack.c.l.b16 %v3751
    %v3824 = vunpack.c.h.b16 %v3751
    %v3825 = vunpack.c.l.b16 %v3752
    %v3826 = vunpack.c.h.b16 %v3752
    %v3827 = vunpack.c.l.b16 %v3753
    %v3828 = vunpack.c.h.b16 %v3753
    %v3829 = vunpack.c.l.b16 %v3754
    %v3830 = vunpack.c.h.b16 %v3754
    %v3831 = vunpack.c.l.b16 %v3755
    %v3832 = vunpack.c.h.b16 %v3755
    %v3833 = vunpack.c.l.b16 %v3756
    %v3834 = vunpack.c.h.b16 %v3756
    %v3835 = vunpack.c.l.b16 %v3757
    %v3836 = vunpack.c.h.b16 %v3757
    %v3837 = vunpack.c.l.b16 %v3758
    %v3838 = vunpack.c.h.b16 %v3758
    %v3839 = vunpack.c.l.b16 %v3759
    %v3840 = vunpack.c.h.b16 %v3759
    %v3841 = vunpack.c.l.b16 %v3760
    %v3842 = vunpack.c.h.b16 %v3760
    %v3843 = vunpack.c.l.b16 %v3761
    %v3844 = vunpack.c.h.b16 %v3761
    %v3845 = vunpack.c.l.b16 %v3762
    %v3846 = vunpack.c.h.b16 %v3762
    %v3847 = vunpack.c.l.b16 %v3763
    %v3848 = vunpack.c.h.b16 %v3763
    %v3849 = vunpack.c.l.b16 %v3764
    %v3850 = vunpack.c.h.b16 %v3764
    %v3851 = vunpack.c.l.b16 %v3765
    %v3852 = vunpack.c.h.b16 %v3765
    %v3853 = vunpack.c.l.b16 %v3766
    %v3854 = vunpack.c.h.b16 %v3766
    %v3855 = vunpack.c.l.b16 %v3767
    %v3856 = vunpack.c.h.b16 %v3767
    %v3857 = vunpack.c.l.b16 %v3768
    %v3858 = vunpack.c.h.b16 %v3768
    %v3859 = vunpack.c.l.b16 %v3769
    %v3860 = vunpack.c.h.b16 %v3769
    %v3861 = vunpack.c.l.b16 %v3770
    %v3862 = vunpack.c.h.b16 %v3770
    %v3863 = vunpack.c.l.b16 %v3771
    %v3864 = vunpack.c.h.b16 %v3771
    %v3865 = vunpack.c.l.b16 %v3772
    %v3866 = vunpack.c.h.b16 %v3772
    %v3867 = vunpack.c.l.b16 %v3773
    %v3868 = vunpack.c.h.b16 %v3773
    %v3869 = vunpack.c.l.b16 %v3774
    %v3870 = vunpack.c.h.b16 %v3774
    %v3871 = vpack.c.b16 %v3811, %v3807
    %v3872 = vpack.c.b16 %v3812, %v3808
    %v3873 = vpack.c.b16 %v3813, %v3809
    %v3874 = vpack.c.b16 %v3814, %v3810
    %v3875 = vpack.c.b16 %v3819, %v3815
    %v3876 = vpack.c.b16 %v3820, %v3816
    %v3877 = vpack.c.b16 %v3821, %v3817
    %v3878 = vpack.c.b16 %v3822, %v3818
    %v3879 = vpack.c.b16 %v3827, %v3823
    %v3880 = vpack.c.b16 %v3828, %v3824
    %v3881 = vpack.c.b16 %v3829, %v3825
    %v3882 = vpack.c.b16 %v3830, %v3826
    %v3883 = vpack.c.b16 %v3835, %v3831
    %v3884 = vpack.c.b16 %v3836, %v3832
    %v3885 = vpack.c.b16 %v3837, %v3833
    %v3886 = vpack.c.b16 %v3838, %v3834
    %v3887 = vpack.c.b16 %v3843, %v3839
    %v3888 = vpack.c.b16 %v3844, %v3840
    %v3889 = vpack.c.b16 %v3845, %v3841
    %v3890 = vpack.c.b16 %v3846, %v3842
    %v3891 = vpack.c.b16 %v3851, %v3847
    %v3892 = vpack.c.b16 %v3852, %v3848
    %v3893 = vpack.c.b16 %v3853, %v3849
    %v3894 = vpack.c.b16 %v3854, %v3850
    %v3895 = vpack.c.b16 %v3859, %v3855
    %v3896 = vpack.c.b16 %v3860, %v3856
    %v3897 = vpack.c.b16 %v3861, %v3857
    %v3898 = vpack.c.b16 %v3862, %v3858
    %v3899 = vpack.c.b16 %v3867, %v3863
    %v3900 = vpack.c.b16 %v3868, %v3864
    %v3901 = vpack.c.b16 %v3869, %v3865
    %v3902 = vpack.c.b16 %v3870, %v3866
    %3935 = vmatprep.subr.bf16.mxu0 %v3872
    %3936 = vmatpush1.bf16.msra.mxu0 %v3871
    %3937 = vmatprep.subr.bf16.mxu0 %v3876
    %3938 = vmatpush1.bf16.msra.mxu0 %v3875
    %3939 = vmatprep.subr.bf16.mxu0 %v3880
    %3940 = vmatpush1.bf16.msra.mxu0 %v3879
    %3941 = vmatprep.subr.bf16.mxu0 %v3884
    %3942 = vmatpush1.bf16.msra.mxu0 %v3883
    %3943 = vmatprep.subr.bf16.mxu0 %v3888
    %3944 = vmatpush1.bf16.msra.mxu0 %v3887
    %3945 = vmatprep.subr.bf16.mxu0 %v3892
    %3946 = vmatpush1.bf16.msra.mxu0 %v3891
    %3947 = vmatprep.subr.bf16.mxu0 %v3896
    %3948 = vmatpush1.bf16.msra.mxu0 %v3895
    %3949 = vmatprep.subr.bf16.mxu0 %v3900
    %3950 = vmatpush1.bf16.msra.mxu0 %v3899
    %3951 = vmatprep.subr.bf16.mxu0 0
    %3952 = vmatpush1.bf16.msra.mxu0 0
    %3953 = vmatprep.subr.bf16.mxu0 0
    %3954 = vmatpush1.bf16.msra.mxu0 0
    %3955 = vmatprep.subr.bf16.mxu0 0
    %3956 = vmatpush1.bf16.msra.mxu0 0
    %3957 = vmatprep.subr.bf16.mxu0 0
    %3958 = vmatpush1.bf16.msra.mxu0 0
    %3959 = vmatprep.subr.bf16.mxu0 0
    %3960 = vmatpush1.bf16.msra.mxu0 0
    %3961 = vmatprep.subr.bf16.mxu0 0
    %3962 = vmatpush1.bf16.msra.mxu0 0
    %3963 = vmatprep.subr.bf16.mxu0 0
    %3964 = vmatpush1.bf16.msra.mxu0 0
    %3965 = vmatprep.subr.bf16.mxu0 0
    %3966 = vmatpush1.bf16.msra.mxu0 0
    %3967 = vmatprep.mubr.bf16.mxu0 0
    %3968 = vmatmul.mubr.bf16.gmra.mrb[0].mxu0 %v3742
    %v3969 = vpop.f32.mrb[0].mxu0
    %v3970 = vadd.f32 0.0, %v3969
    %v3971 = vpop.f32.mrb[0].mxu0
    %v3972 = vadd.f32 0.0, %v3971
    %v3973 = vpop.f32.mrb[0].mxu0
    %v3974 = vadd.f32 0.0, %v3973
    %v3975 = vpop.f32.mrb[0].mxu0
    %v3976 = vadd.f32 0.0, %v3975
    %3977 = vdwg.mxu0
    %3978 = vmatprep.subr.bf16.mxu0 %v3874
    %3979 = vmatpush1.bf16.msra.mxu0 %v3873
    %3980 = vmatprep.subr.bf16.mxu0 %v3878
    %3981 = vmatpush1.bf16.msra.mxu0 %v3877
    %3982 = vmatprep.subr.bf16.mxu0 %v3882
    %3983 = vmatpush1.bf16.msra.mxu0 %v3881
    %3984 = vmatprep.subr.bf16.mxu0 %v3886
    %3985 = vmatpush1.bf16.msra.mxu0 %v3885
    %3986 = vmatprep.subr.bf16.mxu0 %v3890
    %3987 = vmatpush1.bf16.msra.mxu0 %v3889
    %3988 = vmatprep.subr.bf16.mxu0 %v3894
    %3989 = vmatpush1.bf16.msra.mxu0 %v3893
    %3990 = vmatprep.subr.bf16.mxu0 %v3898
    %3991 = vmatpush1.bf16.msra.mxu0 %v3897
    %3992 = vmatprep.subr.bf16.mxu0 %v3902
    %3993 = vmatpush1.bf16.msra.mxu0 %v3901
    %3994 = vmatprep.subr.bf16.mxu0 0
    %3995 = vmatpush1.bf16.msra.mxu0 0
    %3996 = vmatprep.subr.bf16.mxu0 0
    %3997 = vmatpush1.bf16.msra.mxu0 0
    %3998 = vmatprep.subr.bf16.mxu0 0
    %3999 = vmatpush1.bf16.msra.mxu0 0
    %4000 = vmatprep.subr.bf16.mxu0 0
    %4001 = vmatpush1.bf16.msra.mxu0 0
    %4002 = vmatprep.subr.bf16.mxu0 0
    %4003 = vmatpush1.bf16.msra.mxu0 0
    %4004 = vmatprep.subr.bf16.mxu0 0
    %4005 = vmatpush1.bf16.msra.mxu0 0
    %4006 = vmatprep.subr.bf16.mxu0 0
    %4007 = vmatpush1.bf16.msra.mxu0 0
    %4008 = vmatprep.subr.bf16.mxu0 0
    %4009 = vmatpush1.bf16.msra.mxu0 0
    %4010 = vmatprep.mubr.bf16.mxu0 0
    %4011 = vmatmul.mubr.bf16.gmra.mrb[0].mxu0 %v3742
    %v4012 = vpop.f32.mrb[0].mxu0
    %v4013 = vadd.f32 0.0, %v4012
    %v4014 = vpop.f32.mrb[0].mxu0
    %v4015 = vadd.f32 0.0, %v4014
    %v4016 = vpop.f32.mrb[0].mxu0
    %v4017 = vadd.f32 0.0, %v4016
    %v4018 = vpop.f32.mrb[0].mxu0
    %v4019 = vadd.f32 0.0, %v4018
    %4020 = vdwg.mxu0
    %v4021 = vadd.f32 %v3734, %v3970
    %v4022 = vadd.f32 %v3735, %v3972
    %v4023 = vadd.f32 %v3736, %v4013
    %v4024 = vadd.f32 %v3737, %v4015
    %v4025 = vadd.f32 %v3738, %v3974
    %v4026 = vadd.f32 %v3739, %v3976
    %v4027 = vadd.f32 %v3740, %v4017
    %v4028 = vadd.f32 %v3741, %v4019
    %v4029 = vxor.u32 %v4021, 2147483648
    %v4030 = vxor.u32 %v4025, 2147483648
    %v4031 = vmul.f32 %v4029, 1.442695
    %v4032 = vpow.pop %v4031
    %v4033 = vmul.f32 %v4030, 1.442695
    %v4034 = vpow.pop %v4033
    %v4035 = vadd.f32 %v4032, 1.0
    %v4036 = vadd.f32 %v4034, 1.0
    %v4037 = vrcp.pop %v4035
    %v4038 = vmul.f32 1.0, %v4037
    %v4039 = vrcp.pop %v4036
    %v4040 = vmul.f32 1.0, %v4039
    %v4041 = vxor.u32 %v4022, 2147483648
    %v4042 = vxor.u32 %v4026, 2147483648
    %v4043 = vmul.f32 %v4041, 1.442695
    %v4044 = vpow.pop %v4043
    %v4045 = vmul.f32 %v4042, 1.442695
    %v4046 = vpow.pop %v4045
    %v4047 = vadd.f32 %v4044, 1.0
    %v4048 = vadd.f32 %v4046, 1.0
    %v4049 = vrcp.pop %v4047
    %v4050 = vmul.f32 1.0, %v4049
    %v4051 = vrcp.pop %v4048
    %v4052 = vmul.f32 1.0, %v4051
    %v4053 = vtanh.pop %v4023
    %v4054 = vtanh.pop %v4027
    %v4055 = vxor.u32 %v4024, 2147483648
    %v4056 = vxor.u32 %v4028, 2147483648
    %v4057 = vmul.f32 %v4055, 1.442695
    %v4058 = vpow.pop %v4057
    %v4059 = vmul.f32 %v4056, 1.442695
    %v4060 = vpow.pop %v4059
    %v4061 = vadd.f32 %v4058, 1.0
    %v4062 = vadd.f32 %v4060, 1.0
    %v4063 = vrcp.pop %v4061
    %v4064 = vmul.f32 1.0, %v4063
    %v4065 = vrcp.pop %v4062
    %v4066 = vmul.f32 1.0, %v4065
    %v4067 = vmul.f32 %v4050, %v3731
    %v4068 = vmul.f32 %v4052, %v3732
    %v4069 = vmul.f32 %v4038, %v4053
    %v4070 = vmul.f32 %v4040, %v4054
    %v4071 = vadd.f32 %v4067, %v4069
    %v4072 = vadd.f32 %v4068, %v4070
    %v4073 = vtanh.pop %v4071
    %v4074 = vtanh.pop %v4072
    %v4075 = vmul.f32 %v4064, %v4073
    %v4076 = vmul.f32 %v4066, %v4074
    %s4077 = scalar_lea.vmem %s0, 48
    %v4078 = vld [vmem:[%s4077] sm:$0xff]
    %v4079 = vld [vmem:[%s4077 + $0x8] sm:$0xff]
    %v4080 = vsub.f32 %v4075, %v3729
    %v4081 = vsub.f32 %v4076, %v3730
    %4083 = vset.pattern.permute.xlu0 0
    %4084 = vperm.xlu0 %4083, %v4078
    %v4085 = vpop.permute.xlu0 %4084
    %4088 = vset.pattern.permute.xlu0 0
    %4089 = vperm.xlu0 %4088, %v4079
    %v4090 = vpop.permute.xlu0 %4089
    %v4092 = vmul.f32 %v4085, %v4080
    %v4093 = vmul.f32 %v4090, %v4081
    %v4094 = vadd.f32 %v3729, %v4092
    %v4095 = vadd.f32 %v3730, %v4093
    %4096 = vst [vmem:[#allocation2] sm:$0xff] %v4094
    %4097 = vst [vmem:[#allocation2 + $0x8] sm:$0xff] %v4095
    %v4098 = vsub.f32 %v4071, %v3731
    %v4099 = vsub.f32 %v4072, %v3732
    %v4100 = vmul.f32 %v4085, %v4098
    %v4101 = vmul.f32 %v4090, %v4099
    %v4102 = vadd.f32 %v3731, %v4100
    %v4103 = vadd.f32 %v3732, %v4101
    %4104 = vst [vmem:[#allocation3] sm:$0xff] %v4102
    %4105 = vst [vmem:[#allocation3 + $0x8] sm:$0xff] %v4103
    %v4106 = vmul.f32 %v4085, %v4075
    %v4107 = vmul.f32 %v4090, %v4076
    %v4108 = vpack.c.bf16 %v4107, %v4106
    %v4110 = vunpack.c.l.b16 %v4108
    %v4111 = vunpack.c.h.b16 %v4108
    %v4112 = vpack.c.b16 %v4110, %v4110
    %v4113 = vpack.c.b16 %v4111, %v4111
    %s4116 = scalar_lea.vmem [#allocation11], 24
    %4117 = vst [vmem:[%s4116] sm:$0xf] %v4112
    %4118 = vst [vmem:[%s4116 + $0x4] sm:$0xf] %v4113
    %v4119 = vld [vmem:[%s1776] sm:$0xff]
    %v4120 = vld [vmem:[%s1776 + $0x8] sm:$0xff]
    %v4121 = vld [vmem:[%s1779] sm:$0xff]
    %v4122 = vld [vmem:[%s1779 + $0x8] sm:$0xff]
    %s4123 = scalar_lea.vmem [#allocation5], 256
    %v4124 = vld [vmem:[%s4123] sm:$0xff]
    %v4125 = vld [vmem:[%s4123 + $0x8] sm:$0xff]
    %v4126 = vld [vmem:[%s4123 + $0x10] sm:$0xff]
    %v4127 = vld [vmem:[%s4123 + $0x18] sm:$0xff]
    %v4128 = vld [vmem:[%s4123 + $0x20] sm:$0xff]
    %v4129 = vld [vmem:[%s4123 + $0x28] sm:$0xff]
    %v4130 = vld [vmem:[%s4123 + $0x30] sm:$0xff]
    %v4131 = vld [vmem:[%s4123 + $0x38] sm:$0xff]
    %v4132 = vpack.c.bf16 %v4120, %v4119
    %v4133 = vld [vmem:[%s1792] sm:$0xff]
    %v4134 = vld [vmem:[%s1792 + $0x8] sm:$0xff]
    %v4135 = vld [vmem:[%s1792 + $0x10] sm:$0xff]
    %v4136 = vld [vmem:[%s1792 + $0x18] sm:$0xff]
    %v4137 = vld [vmem:[%s1792 + $0x20] sm:$0xff]
    %v4138 = vld [vmem:[%s1792 + $0x28] sm:$0xff]
    %v4139 = vld [vmem:[%s1792 + $0x30] sm:$0xff]
    %v4140 = vld [vmem:[%s1792 + $0x38] sm:$0xff]
    %v4141 = vld [vmem:[%s1792 + $0x40] sm:$0xff]
    %v4142 = vld [vmem:[%s1792 + $0x48] sm:$0xff]
    %v4143 = vld [vmem:[%s1792 + $0x50] sm:$0xff]
    %v4144 = vld [vmem:[%s1792 + $0x58] sm:$0xff]
    %v4145 = vld [vmem:[%s1792 + $0x60] sm:$0xff]
    %v4146 = vld [vmem:[%s1792 + $0x68] sm:$0xff]
    %v4147 = vld [vmem:[%s1792 + $0x70] sm:$0xff]
    %v4148 = vld [vmem:[%s1792 + $0x78] sm:$0xff]
    %v4149 = vld [vmem:[%s1792 + $0x80] sm:$0xff]
    %v4150 = vld [vmem:[%s1792 + $0x88] sm:$0xff]
    %v4151 = vld [vmem:[%s1792 + $0x90] sm:$0xff]
    %v4152 = vld [vmem:[%s1792 + $0x98] sm:$0xff]
    %v4153 = vld [vmem:[%s1792 + $0xa0] sm:$0xff]
    %v4154 = vld [vmem:[%s1792 + $0xa8] sm:$0xff]
    %v4155 = vld [vmem:[%s1792 + $0xb0] sm:$0xff]
    %v4156 = vld [vmem:[%s1792 + $0xb8] sm:$0xff]
    %v4157 = vld [vmem:[%s1792 + $0xc0] sm:$0xff]
    %v4158 = vld [vmem:[%s1792 + $0xc8] sm:$0xff]
    %v4159 = vld [vmem:[%s1792 + $0xd0] sm:$0xff]
    %v4160 = vld [vmem:[%s1792 + $0xd8] sm:$0xff]
    %v4161 = vld [vmem:[%s1792 + $0xe0] sm:$0xff]
    %v4162 = vld [vmem:[%s1792 + $0xe8] sm:$0xff]
    %v4163 = vld [vmem:[%s1792 + $0xf0] sm:$0xff]
    %v4164 = vld [vmem:[%s1792 + $0xf8] sm:$0xff]
    %v4197 = vunpack.c.l.b16 %v4133
    %v4198 = vunpack.c.h.b16 %v4133
    %v4199 = vunpack.c.l.b16 %v4134
    %v4200 = vunpack.c.h.b16 %v4134
    %v4201 = vunpack.c.l.b16 %v4135
    %v4202 = vunpack.c.h.b16 %v4135
    %v4203 = vunpack.c.l.b16 %v4136
    %v4204 = vunpack.c.h.b16 %v4136
    %v4205 = vunpack.c.l.b16 %v4137
    %v4206 = vunpack.c.h.b16 %v4137
    %v4207 = vunpack.c.l.b16 %v4138
    %v4208 = vunpack.c.h.b16 %v4138
    %v4209 = vunpack.c.l.b16 %v4139
    %v4210 = vunpack.c.h.b16 %v4139
    %v4211 = vunpack.c.l.b16 %v4140
    %v4212 = vunpack.c.h.b16 %v4140
    %v4213 = vunpack.c.l.b16 %v4141
    %v4214 = vunpack.c.h.b16 %v4141
    %v4215 = vunpack.c.l.b16 %v4142
    %v4216 = vunpack.c.h.b16 %v4142
    %v4217 = vunpack.c.l.b16 %v4143
    %v4218 = vunpack.c.h.b16 %v4143
    %v4219 = vunpack.c.l.b16 %v4144
    %v4220 = vunpack.c.h.b16 %v4144
    %v4221 = vunpack.c.l.b16 %v4145
    %v4222 = vunpack.c.h.b16 %v4145
    %v4223 = vunpack.c.l.b16 %v4146
    %v4224 = vunpack.c.h.b16 %v4146
    %v4225 = vunpack.c.l.b16 %v4147
    %v4226 = vunpack.c.h.b16 %v4147
    %v4227 = vunpack.c.l.b16 %v4148
    %v4228 = vunpack.c.h.b16 %v4148
    %v4229 = vunpack.c.l.b16 %v4149
    %v4230 = vunpack.c.h.b16 %v4149
    %v4231 = vunpack.c.l.b16 %v4150
    %v4232 = vunpack.c.h.b16 %v4150
    %v4233 = vunpack.c.l.b16 %v4151
    %v4234 = vunpack.c.h.b16 %v4151
    %v4235 = vunpack.c.l.b16 %v4152
    %v4236 = vunpack.c.h.b16 %v4152
    %v4237 = vunpack.c.l.b16 %v4153
    %v4238 = vunpack.c.h.b16 %v4153
    %v4239 = vunpack.c.l.b16 %v4154
    %v4240 = vunpack.c.h.b16 %v4154
    %v4241 = vunpack.c.l.b16 %v4155
    %v4242 = vunpack.c.h.b16 %v4155
    %v4243 = vunpack.c.l.b16 %v4156
    %v4244 = vunpack.c.h.b16 %v4156
    %v4245 = vunpack.c.l.b16 %v4157
    %v4246 = vunpack.c.h.b16 %v4157
    %v4247 = vunpack.c.l.b16 %v4158
    %v4248 = vunpack.c.h.b16 %v4158
    %v4249 = vunpack.c.l.b16 %v4159
    %v4250 = vunpack.c.h.b16 %v4159
    %v4251 = vunpack.c.l.b16 %v4160
    %v4252 = vunpack.c.h.b16 %v4160
    %v4253 = vunpack.c.l.b16 %v4161
    %v4254 = vunpack.c.h.b16 %v4161
    %v4255 = vunpack.c.l.b16 %v4162
    %v4256 = vunpack.c.h.b16 %v4162
    %v4257 = vunpack.c.l.b16 %v4163
    %v4258 = vunpack.c.h.b16 %v4163
    %v4259 = vunpack.c.l.b16 %v4164
    %v4260 = vunpack.c.h.b16 %v4164
    %v4261 = vpack.c.b16 %v4201, %v4197
    %v4262 = vpack.c.b16 %v4202, %v4198
    %v4263 = vpack.c.b16 %v4203, %v4199
    %v4264 = vpack.c.b16 %v4204, %v4200
    %v4265 = vpack.c.b16 %v4209, %v4205
    %v4266 = vpack.c.b16 %v4210, %v4206
    %v4267 = vpack.c.b16 %v4211, %v4207
    %v4268 = vpack.c.b16 %v4212, %v4208
    %v4269 = vpack.c.b16 %v4217, %v4213
    %v4270 = vpack.c.b16 %v4218, %v4214
    %v4271 = vpack.c.b16 %v4219, %v4215
    %v4272 = vpack.c.b16 %v4220, %v4216
    %v4273 = vpack.c.b16 %v4225, %v4221
    %v4274 = vpack.c.b16 %v4226, %v4222
    %v4275 = vpack.c.b16 %v4227, %v4223
    %v4276 = vpack.c.b16 %v4228, %v4224
    %v4277 = vpack.c.b16 %v4233, %v4229
    %v4278 = vpack.c.b16 %v4234, %v4230
    %v4279 = vpack.c.b16 %v4235, %v4231
    %v4280 = vpack.c.b16 %v4236, %v4232
    %v4281 = vpack.c.b16 %v4241, %v4237
    %v4282 = vpack.c.b16 %v4242, %v4238
    %v4283 = vpack.c.b16 %v4243, %v4239
    %v4284 = vpack.c.b16 %v4244, %v4240
    %v4285 = vpack.c.b16 %v4249, %v4245
    %v4286 = vpack.c.b16 %v4250, %v4246
    %v4287 = vpack.c.b16 %v4251, %v4247
    %v4288 = vpack.c.b16 %v4252, %v4248
    %v4289 = vpack.c.b16 %v4257, %v4253
    %v4290 = vpack.c.b16 %v4258, %v4254
    %v4291 = vpack.c.b16 %v4259, %v4255
    %v4292 = vpack.c.b16 %v4260, %v4256
    %4325 = vmatprep.subr.bf16.mxu0 %v4262
    %4326 = vmatpush1.bf16.msra.mxu0 %v4261
    %4327 = vmatprep.subr.bf16.mxu0 %v4266
    %4328 = vmatpush1.bf16.msra.mxu0 %v4265
    %4329 = vmatprep.subr.bf16.mxu0 %v4270
    %4330 = vmatpush1.bf16.msra.mxu0 %v4269
    %4331 = vmatprep.subr.bf16.mxu0 %v4274
    %4332 = vmatpush1.bf16.msra.mxu0 %v4273
    %4333 = vmatprep.subr.bf16.mxu0 %v4278
    %4334 = vmatpush1.bf16.msra.mxu0 %v4277
    %4335 = vmatprep.subr.bf16.mxu0 %v4282
    %4336 = vmatpush1.bf16.msra.mxu0 %v4281
    %4337 = vmatprep.subr.bf16.mxu0 %v4286
    %4338 = vmatpush1.bf16.msra.mxu0 %v4285
    %4339 = vmatprep.subr.bf16.mxu0 %v4290
    %4340 = vmatpush1.bf16.msra.mxu0 %v4289
    %4341 = vmatprep.subr.bf16.mxu0 0
    %4342 = vmatpush1.bf16.msra.mxu0 0
    %4343 = vmatprep.subr.bf16.mxu0 0
    %4344 = vmatpush1.bf16.msra.mxu0 0
    %4345 = vmatprep.subr.bf16.mxu0 0
    %4346 = vmatpush1.bf16.msra.mxu0 0
    %4347 = vmatprep.subr.bf16.mxu0 0
    %4348 = vmatpush1.bf16.msra.mxu0 0
    %4349 = vmatprep.subr.bf16.mxu0 0
    %4350 = vmatpush1.bf16.msra.mxu0 0
    %4351 = vmatprep.subr.bf16.mxu0 0
    %4352 = vmatpush1.bf16.msra.mxu0 0
    %4353 = vmatprep.subr.bf16.mxu0 0
    %4354 = vmatpush1.bf16.msra.mxu0 0
    %4355 = vmatprep.subr.bf16.mxu0 0
    %4356 = vmatpush1.bf16.msra.mxu0 0
    %4357 = vmatprep.mubr.bf16.mxu0 0
    %4358 = vmatmul.mubr.bf16.gmra.mrb[0].mxu0 %v4132
    %v4359 = vpop.f32.mrb[0].mxu0
    %v4360 = vadd.f32 0.0, %v4359
    %v4361 = vpop.f32.mrb[0].mxu0
    %v4362 = vadd.f32 0.0, %v4361
    %v4363 = vpop.f32.mrb[0].mxu0
    %v4364 = vadd.f32 0.0, %v4363
    %v4365 = vpop.f32.mrb[0].mxu0
    %v4366 = vadd.f32 0.0, %v4365
    %4367 = vdwg.mxu0
    %4368 = vmatprep.subr.bf16.mxu0 %v4264
    %4369 = vmatpush1.bf16.msra.mxu0 %v4263
    %4370 = vmatprep.subr.bf16.mxu0 %v4268
    %4371 = vmatpush1.bf16.msra.mxu0 %v4267
    %4372 = vmatprep.subr.bf16.mxu0 %v4272
    %4373 = vmatpush1.bf16.msra.mxu0 %v4271
    %4374 = vmatprep.subr.bf16.mxu0 %v4276
    %4375 = vmatpush1.bf16.msra.mxu0 %v4275
    %4376 = vmatprep.subr.bf16.mxu0 %v4280
    %4377 = vmatpush1.bf16.msra.mxu0 %v4279
    %4378 = vmatprep.subr.bf16.mxu0 %v4284
    %4379 = vmatpush1.bf16.msra.mxu0 %v4283
    %4380 = vmatprep.subr.bf16.mxu0 %v4288
    %4381 = vmatpush1.bf16.msra.mxu0 %v4287
    %4382 = vmatprep.subr.bf16.mxu0 %v4292
    %4383 = vmatpush1.bf16.msra.mxu0 %v4291
    %4384 = vmatprep.subr.bf16.mxu0 0
    %4385 = vmatpush1.bf16.msra.mxu0 0
    %4386 = vmatprep.subr.bf16.mxu0 0
    %4387 = vmatpush1.bf16.msra.mxu0 0
    %4388 = vmatprep.subr.bf16.mxu0 0
    %4389 = vmatpush1.bf16.msra.mxu0 0
    %4390 = vmatprep.subr.bf16.mxu0 0
    %4391 = vmatpush1.bf16.msra.mxu0 0
    %4392 = vmatprep.subr.bf16.mxu0 0
    %4393 = vmatpush1.bf16.msra.mxu0 0
    %4394 = vmatprep.subr.bf16.mxu0 0
    %4395 = vmatpush1.bf16.msra.mxu0 0
    %4396 = vmatprep.subr.bf16.mxu0 0
    %4397 = vmatpush1.bf16.msra.mxu0 0
    %4398 = vmatprep.subr.bf16.mxu0 0
    %4399 = vmatpush1.bf16.msra.mxu0 0
    %4400 = vmatprep.mubr.bf16.mxu0 0
    %4401 = vmatmul.mubr.bf16.gmra.mrb[0].mxu0 %v4132
    %v4402 = vpop.f32.mrb[0].mxu0
    %v4403 = vadd.f32 0.0, %v4402
    %v4404 = vpop.f32.mrb[0].mxu0
    %v4405 = vadd.f32 0.0, %v4404
    %v4406 = vpop.f32.mrb[0].mxu0
    %v4407 = vadd.f32 0.0, %v4406
    %v4408 = vpop.f32.mrb[0].mxu0
    %v4409 = vadd.f32 0.0, %v4408
    %4410 = vdwg.mxu0
    %v4411 = vadd.f32 %v4124, %v4360
    %v4412 = vadd.f32 %v4125, %v4362
    %v4413 = vadd.f32 %v4126, %v4403
    %v4414 = vadd.f32 %v4127, %v4405
    %v4415 = vadd.f32 %v4128, %v4364
    %v4416 = vadd.f32 %v4129, %v4366
    %v4417 = vadd.f32 %v4130, %v4407
    %v4418 = vadd.f32 %v4131, %v4409
    %v4419 = vxor.u32 %v4411, 2147483648
    %v4420 = vxor.u32 %v4415, 2147483648
    %v4421 = vmul.f32 %v4419, 1.442695
    %v4422 = vpow.pop %v4421
    %v4423 = vmul.f32 %v4420, 1.442695
    %v4424 = vpow.pop %v4423
    %v4425 = vadd.f32 %v4422, 1.0
    %v4426 = vadd.f32 %v4424, 1.0
    %v4427 = vrcp.pop %v4425
    %v4428 = vmul.f32 1.0, %v4427
    %v4429 = vrcp.pop %v4426
    %v4430 = vmul.f32 1.0, %v4429
    %v4431 = vxor.u32 %v4412, 2147483648
    %v4432 = vxor.u32 %v4416, 2147483648
    %v4433 = vmul.f32 %v4431, 1.442695
    %v4434 = vpow.pop %v4433
    %v4435 = vmul.f32 %v4432, 1.442695
    %v4436 = vpow.pop %v4435
    %v4437 = vadd.f32 %v4434, 1.0
    %v4438 = vadd.f32 %v4436, 1.0
    %v4439 = vrcp.pop %v4437
    %v4440 = vmul.f32 1.0, %v4439
    %v4441 = vrcp.pop %v4438
    %v4442 = vmul.f32 1.0, %v4441
    %v4443 = vtanh.pop %v4413
    %v4444 = vtanh.pop %v4417
    %v4445 = vxor.u32 %v4414, 2147483648
    %v4446 = vxor.u32 %v4418, 2147483648
    %v4447 = vmul.f32 %v4445, 1.442695
    %v4448 = vpow.pop %v4447
    %v4449 = vmul.f32 %v4446, 1.442695
    %v4450 = vpow.pop %v4449
    %v4451 = vadd.f32 %v4448, 1.0
    %v4452 = vadd.f32 %v4450, 1.0
    %v4453 = vrcp.pop %v4451
    %v4454 = vmul.f32 1.0, %v4453
    %v4455 = vrcp.pop %v4452
    %v4456 = vmul.f32 1.0, %v4455
    %v4457 = vmul.f32 %v4440, %v4121
    %v4458 = vmul.f32 %v4442, %v4122
    %v4459 = vmul.f32 %v4428, %v4443
    %v4460 = vmul.f32 %v4430, %v4444
    %v4461 = vadd.f32 %v4457, %v4459
    %v4462 = vadd.f32 %v4458, %v4460
    %v4463 = vtanh.pop %v4461
    %v4464 = vtanh.pop %v4462
    %v4465 = vmul.f32 %v4454, %v4463
    %v4466 = vmul.f32 %v4456, %v4464
    %s4467 = scalar_lea.vmem %s96, 64
    %v4468 = vld [vmem:[%s4467] sm:$0xff]
    %v4469 = vld [vmem:[%s4467 + $0x8] sm:$0xff]
    %v4470 = vsub.f32 %v4465, %v4119
    %v4471 = vsub.f32 %v4466, %v4120
    %4473 = vset.pattern.permute.xlu0 0
    %4474 = vperm.xlu0 %4473, %v4468
    %v4475 = vpop.permute.xlu0 %4474
    %4478 = vset.pattern.permute.xlu0 0
    %4479 = vperm.xlu0 %4478, %v4469
    %v4480 = vpop.permute.xlu0 %4479
    %v4482 = vmul.f32 %v4475, %v4470
    %v4483 = vmul.f32 %v4480, %v4471
    %v4484 = vadd.f32 %v4119, %v4482
    %v4485 = vadd.f32 %v4120, %v4483
    %4486 = vst [vmem:[%s1776] sm:$0xff] %v4484
    %4487 = vst [vmem:[%s1776 + $0x8] sm:$0xff] %v4485
    %v4488 = vsub.f32 %v4461, %v4121
    %v4489 = vsub.f32 %v4462, %v4122
    %v4490 = vmul.f32 %v4475, %v4488
    %v4491 = vmul.f32 %v4480, %v4489
    %v4492 = vadd.f32 %v4121, %v4490
    %v4493 = vadd.f32 %v4122, %v4491
    %4494 = vst [vmem:[%s1779] sm:$0xff] %v4492
    %4495 = vst [vmem:[%s1779 + $0x8] sm:$0xff] %v4493
    %v4496 = vmul.f32 %v4475, %v4465
    %v4497 = vmul.f32 %v4480, %v4466
    %v4498 = vpack.c.bf16 %v4497, %v4496
    %v4500 = vunpack.c.l.b16 %v4498
    %v4501 = vunpack.c.h.b16 %v4498
    %v4502 = vpack.c.b16 %v4500, %v4500
    %v4503 = vpack.c.b16 %v4501, %v4501
    %s4506 = scalar_lea.vmem [#allocation12], 32
    %4507 = vst [vmem:[%s4506] sm:$0xf] %v4502
    %4508 = vst [vmem:[%s4506 + $0x4] sm:$0xf] %v4503
    %v4509 = vld [vmem:[#allocation2] sm:$0xff]
    %v4510 = vld [vmem:[#allocation2 + $0x8] sm:$0xff]
    %v4511 = vld [vmem:[#allocation3] sm:$0xff]
    %v4512 = vld [vmem:[#allocation3 + $0x8] sm:$0xff]
    %s4513 = scalar_lea.vmem [#allocation4], 256
    %v4514 = vld [vmem:[%s4513] sm:$0xff]
    %v4515 = vld [vmem:[%s4513 + $0x8] sm:$0xff]
    %v4516 = vld [vmem:[%s4513 + $0x10] sm:$0xff]
    %v4517 = vld [vmem:[%s4513 + $0x18] sm:$0xff]
    %v4518 = vld [vmem:[%s4513 + $0x20] sm:$0xff]
    %v4519 = vld [vmem:[%s4513 + $0x28] sm:$0xff]
    %v4520 = vld [vmem:[%s4513 + $0x30] sm:$0xff]
    %v4521 = vld [vmem:[%s4513 + $0x38] sm:$0xff]
    %v4522 = vpack.c.bf16 %v4510, %v4509
    %v4523 = vld [vmem:[#allocation9] sm:$0xff]
    %v4524 = vld [vmem:[#allocation9 + $0x8] sm:$0xff]
    %v4525 = vld [vmem:[#allocation9 + $0x10] sm:$0xff]
    %v4526 = vld [vmem:[#allocation9 + $0x18] sm:$0xff]
    %v4527 = vld [vmem:[#allocation9 + $0x20] sm:$0xff]
    %v4528 = vld [vmem:[#allocation9 + $0x28] sm:$0xff]
    %v4529 = vld [vmem:[#allocation9 + $0x30] sm:$0xff]
    %v4530 = vld [vmem:[#allocation9 + $0x38] sm:$0xff]
    %v4531 = vld [vmem:[#allocation9 + $0x40] sm:$0xff]
    %v4532 = vld [vmem:[#allocation9 + $0x48] sm:$0xff]
    %v4533 = vld [vmem:[#allocation9 + $0x50] sm:$0xff]
    %v4534 = vld [vmem:[#allocation9 + $0x58] sm:$0xff]
    %v4535 = vld [vmem:[#allocation9 + $0x60] sm:$0xff]
    %v4536 = vld [vmem:[#allocation9 + $0x68] sm:$0xff]
    %v4537 = vld [vmem:[#allocation9 + $0x70] sm:$0xff]
    %v4538 = vld [vmem:[#allocation9 + $0x78] sm:$0xff]
    %v4539 = vld [vmem:[#allocation9 + $0x80] sm:$0xff]
    %v4540 = vld [vmem:[#allocation9 + $0x88] sm:$0xff]
    %v4541 = vld [vmem:[#allocation9 + $0x90] sm:$0xff]
    %v4542 = vld [vmem:[#allocation9 + $0x98] sm:$0xff]
    %v4543 = vld [vmem:[#allocation9 + $0xa0] sm:$0xff]
    %v4544 = vld [vmem:[#allocation9 + $0xa8] sm:$0xff]
    %v4545 = vld [vmem:[#allocation9 + $0xb0] sm:$0xff]
    %v4546 = vld [vmem:[#allocation9 + $0xb8] sm:$0xff]
    %v4547 = vld [vmem:[#allocation9 + $0xc0] sm:$0xff]
    %v4548 = vld [vmem:[#allocation9 + $0xc8] sm:$0xff]
    %v4549 = vld [vmem:[#allocation9 + $0xd0] sm:$0xff]
    %v4550 = vld [vmem:[#allocation9 + $0xd8] sm:$0xff]
    %v4551 = vld [vmem:[#allocation9 + $0xe0] sm:$0xff]
    %v4552 = vld [vmem:[#allocation9 + $0xe8] sm:$0xff]
    %v4553 = vld [vmem:[#allocation9 + $0xf0] sm:$0xff]
    %v4554 = vld [vmem:[#allocation9 + $0xf8] sm:$0xff]
    %v4587 = vunpack.c.l.b16 %v4523
    %v4588 = vunpack.c.h.b16 %v4523
    %v4589 = vunpack.c.l.b16 %v4524
    %v4590 = vunpack.c.h.b16 %v4524
    %v4591 = vunpack.c.l.b16 %v4525
    %v4592 = vunpack.c.h.b16 %v4525
    %v4593 = vunpack.c.l.b16 %v4526
    %v4594 = vunpack.c.h.b16 %v4526
    %v4595 = vunpack.c.l.b16 %v4527
    %v4596 = vunpack.c.h.b16 %v4527
    %v4597 = vunpack.c.l.b16 %v4528
    %v4598 = vunpack.c.h.b16 %v4528
    %v4599 = vunpack.c.l.b16 %v4529
    %v4600 = vunpack.c.h.b16 %v4529
    %v4601 = vunpack.c.l.b16 %v4530
    %v4602 = vunpack.c.h.b16 %v4530
    %v4603 = vunpack.c.l.b16 %v4531
    %v4604 = vunpack.c.h.b16 %v4531
    %v4605 = vunpack.c.l.b16 %v4532
    %v4606 = vunpack.c.h.b16 %v4532
    %v4607 = vunpack.c.l.b16 %v4533
    %v4608 = vunpack.c.h.b16 %v4533
    %v4609 = vunpack.c.l.b16 %v4534
    %v4610 = vunpack.c.h.b16 %v4534
    %v4611 = vunpack.c.l.b16 %v4535
    %v4612 = vunpack.c.h.b16 %v4535
    %v4613 = vunpack.c.l.b16 %v4536
    %v4614 = vunpack.c.h.b16 %v4536
    %v4615 = vunpack.c.l.b16 %v4537
    %v4616 = vunpack.c.h.b16 %v4537
    %v4617 = vunpack.c.l.b16 %v4538
    %v4618 = vunpack.c.h.b16 %v4538
    %v4619 = vunpack.c.l.b16 %v4539
    %v4620 = vunpack.c.h.b16 %v4539
    %v4621 = vunpack.c.l.b16 %v4540
    %v4622 = vunpack.c.h.b16 %v4540
    %v4623 = vunpack.c.l.b16 %v4541
    %v4624 = vunpack.c.h.b16 %v4541
    %v4625 = vunpack.c.l.b16 %v4542
    %v4626 = vunpack.c.h.b16 %v4542
    %v4627 = vunpack.c.l.b16 %v4543
    %v4628 = vunpack.c.h.b16 %v4543
    %v4629 = vunpack.c.l.b16 %v4544
    %v4630 = vunpack.c.h.b16 %v4544
    %v4631 = vunpack.c.l.b16 %v4545
    %v4632 = vunpack.c.h.b16 %v4545
    %v4633 = vunpack.c.l.b16 %v4546
    %v4634 = vunpack.c.h.b16 %v4546
    %v4635 = vunpack.c.l.b16 %v4547
    %v4636 = vunpack.c.h.b16 %v4547
    %v4637 = vunpack.c.l.b16 %v4548
    %v4638 = vunpack.c.h.b16 %v4548
    %v4639 = vunpack.c.l.b16 %v4549
    %v4640 = vunpack.c.h.b16 %v4549
    %v4641 = vunpack.c.l.b16 %v4550
    %v4642 = vunpack.c.h.b16 %v4550
    %v4643 = vunpack.c.l.b16 %v4551
    %v4644 = vunpack.c.h.b16 %v4551
    %v4645 = vunpack.c.l.b16 %v4552
    %v4646 = vunpack.c.h.b16 %v4552
    %v4647 = vunpack.c.l.b16 %v4553
    %v4648 = vunpack.c.h.b16 %v4553
    %v4649 = vunpack.c.l.b16 %v4554
    %v4650 = vunpack.c.h.b16 %v4554
    %v4651 = vpack.c.b16 %v4591, %v4587
    %v4652 = vpack.c.b16 %v4592, %v4588
    %v4653 = vpack.c.b16 %v4593, %v4589
    %v4654 = vpack.c.b16 %v4594, %v4590
    %v4655 = vpack.c.b16 %v4599, %v4595
    %v4656 = vpack.c.b16 %v4600, %v4596
    %v4657 = vpack.c.b16 %v4601, %v4597
    %v4658 = vpack.c.b16 %v4602, %v4598
    %v4659 = vpack.c.b16 %v4607, %v4603
    %v4660 = vpack.c.b16 %v4608, %v4604
    %v4661 = vpack.c.b16 %v4609, %v4605
    %v4662 = vpack.c.b16 %v4610, %v4606
    %v4663 = vpack.c.b16 %v4615, %v4611
    %v4664 = vpack.c.b16 %v4616, %v4612
    %v4665 = vpack.c.b16 %v4617, %v4613
    %v4666 = vpack.c.b16 %v4618, %v4614
    %v4667 = vpack.c.b16 %v4623, %v4619
    %v4668 = vpack.c.b16 %v4624, %v4620
    %v4669 = vpack.c.b16 %v4625, %v4621
    %v4670 = vpack.c.b16 %v4626, %v4622
    %v4671 = vpack.c.b16 %v4631, %v4627
    %v4672 = vpack.c.b16 %v4632, %v4628
    %v4673 = vpack.c.b16 %v4633, %v4629
    %v4674 = vpack.c.b16 %v4634, %v4630
    %v4675 = vpack.c.b16 %v4639, %v4635
    %v4676 = vpack.c.b16 %v4640, %v4636
    %v4677 = vpack.c.b16 %v4641, %v4637
    %v4678 = vpack.c.b16 %v4642, %v4638
    %v4679 = vpack.c.b16 %v4647, %v4643
    %v4680 = vpack.c.b16 %v4648, %v4644
    %v4681 = vpack.c.b16 %v4649, %v4645
    %v4682 = vpack.c.b16 %v4650, %v4646
    %4715 = vmatprep.subr.bf16.mxu0 %v4652
    %4716 = vmatpush1.bf16.msra.mxu0 %v4651
    %4717 = vmatprep.subr.bf16.mxu0 %v4656
    %4718 = vmatpush1.bf16.msra.mxu0 %v4655
    %4719 = vmatprep.subr.bf16.mxu0 %v4660
    %4720 = vmatpush1.bf16.msra.mxu0 %v4659
    %4721 = vmatprep.subr.bf16.mxu0 %v4664
    %4722 = vmatpush1.bf16.msra.mxu0 %v4663
    %4723 = vmatprep.subr.bf16.mxu0 %v4668
    %4724 = vmatpush1.bf16.msra.mxu0 %v4667
    %4725 = vmatprep.subr.bf16.mxu0 %v4672
    %4726 = vmatpush1.bf16.msra.mxu0 %v4671
    %4727 = vmatprep.subr.bf16.mxu0 %v4676
    %4728 = vmatpush1.bf16.msra.mxu0 %v4675
    %4729 = vmatprep.subr.bf16.mxu0 %v4680
    %4730 = vmatpush1.bf16.msra.mxu0 %v4679
    %4731 = vmatprep.subr.bf16.mxu0 0
    %4732 = vmatpush1.bf16.msra.mxu0 0
    %4733 = vmatprep.subr.bf16.mxu0 0
    %4734 = vmatpush1.bf16.msra.mxu0 0
    %4735 = vmatprep.subr.bf16.mxu0 0
    %4736 = vmatpush1.bf16.msra.mxu0 0
    %4737 = vmatprep.subr.bf16.mxu0 0
    %4738 = vmatpush1.bf16.msra.mxu0 0
    %4739 = vmatprep.subr.bf16.mxu0 0
    %4740 = vmatpush1.bf16.msra.mxu0 0
    %4741 = vmatprep.subr.bf16.mxu0 0
    %4742 = vmatpush1.bf16.msra.mxu0 0
    %4743 = vmatprep.subr.bf16.mxu0 0
    %4744 = vmatpush1.bf16.msra.mxu0 0
    %4745 = vmatprep.subr.bf16.mxu0 0
    %4746 = vmatpush1.bf16.msra.mxu0 0
    %4747 = vmatprep.mubr.bf16.mxu0 0
    %4748 = vmatmul.mubr.bf16.gmra.mrb[0].mxu0 %v4522
    %v4749 = vpop.f32.mrb[0].mxu0
    %v4750 = vadd.f32 0.0, %v4749
    %v4751 = vpop.f32.mrb[0].mxu0
    %v4752 = vadd.f32 0.0, %v4751
    %v4753 = vpop.f32.mrb[0].mxu0
    %v4754 = vadd.f32 0.0, %v4753
    %v4755 = vpop.f32.mrb[0].mxu0
    %v4756 = vadd.f32 0.0, %v4755
    %4757 = vdwg.mxu0
    %4758 = vmatprep.subr.bf16.mxu0 %v4654
    %4759 = vmatpush1.bf16.msra.mxu0 %v4653
    %4760 = vmatprep.subr.bf16.mxu0 %v4658
    %4761 = vmatpush1.bf16.msra.mxu0 %v4657
    %4762 = vmatprep.subr.bf16.mxu0 %v4662
    %4763 = vmatpush1.bf16.msra.mxu0 %v4661
    %4764 = vmatprep.subr.bf16.mxu0 %v4666
    %4765 = vmatpush1.bf16.msra.mxu0 %v4665
    %4766 = vmatprep.subr.bf16.mxu0 %v4670
    %4767 = vmatpush1.bf16.msra.mxu0 %v4669
    %4768 = vmatprep.subr.bf16.mxu0 %v4674
    %4769 = vmatpush1.bf16.msra.mxu0 %v4673
    %4770 = vmatprep.subr.bf16.mxu0 %v4678
    %4771 = vmatpush1.bf16.msra.mxu0 %v4677
    %4772 = vmatprep.subr.bf16.mxu0 %v4682
    %4773 = vmatpush1.bf16.msra.mxu0 %v4681
    %4774 = vmatprep.subr.bf16.mxu0 0
    %4775 = vmatpush1.bf16.msra.mxu0 0
    %4776 = vmatprep.subr.bf16.mxu0 0
    %4777 = vmatpush1.bf16.msra.mxu0 0
    %4778 = vmatprep.subr.bf16.mxu0 0
    %4779 = vmatpush1.bf16.msra.mxu0 0
    %4780 = vmatprep.subr.bf16.mxu0 0
    %4781 = vmatpush1.bf16.msra.mxu0 0
    %4782 = vmatprep.subr.bf16.mxu0 0
    %4783 = vmatpush1.bf16.msra.mxu0 0
    %4784 = vmatprep.subr.bf16.mxu0 0
    %4785 = vmatpush1.bf16.msra.mxu0 0
    %4786 = vmatprep.subr.bf16.mxu0 0
    %4787 = vmatpush1.bf16.msra.mxu0 0
    %4788 = vmatprep.subr.bf16.mxu0 0
    %4789 = vmatpush1.bf16.msra.mxu0 0
    %4790 = vmatprep.mubr.bf16.mxu0 0
    %4791 = vmatmul.mubr.bf16.gmra.mrb[0].mxu0 %v4522
    %v4792 = vpop.f32.mrb[0].mxu0
    %v4793 = vadd.f32 0.0, %v4792
    %v4794 = vpop.f32.mrb[0].mxu0
    %v4795 = vadd.f32 0.0, %v4794
    %v4796 = vpop.f32.mrb[0].mxu0
    %v4797 = vadd.f32 0.0, %v4796
    %v4798 = vpop.f32.mrb[0].mxu0
    %v4799 = vadd.f32 0.0, %v4798
    %4800 = vdwg.mxu0
    %v4801 = vadd.f32 %v4514, %v4750
    %v4802 = vadd.f32 %v4515, %v4752
    %v4803 = vadd.f32 %v4516, %v4793
    %v4804 = vadd.f32 %v4517, %v4795
    %v4805 = vadd.f32 %v4518, %v4754
    %v4806 = vadd.f32 %v4519, %v4756
    %v4807 = vadd.f32 %v4520, %v4797
    %v4808 = vadd.f32 %v4521, %v4799
    %v4809 = vxor.u32 %v4801, 2147483648
    %v4810 = vxor.u32 %v4805, 2147483648
    %v4811 = vmul.f32 %v4809, 1.442695
    %v4812 = vpow.pop %v4811
    %v4813 = vmul.f32 %v4810, 1.442695
    %v4814 = vpow.pop %v4813
    %v4815 = vadd.f32 %v4812, 1.0
    %v4816 = vadd.f32 %v4814, 1.0
    %v4817 = vrcp.pop %v4815
    %v4818 = vmul.f32 1.0, %v4817
    %v4819 = vrcp.pop %v4816
    %v4820 = vmul.f32 1.0, %v4819
    %v4821 = vxor.u32 %v4802, 2147483648
    %v4822 = vxor.u32 %v4806, 2147483648
    %v4823 = vmul.f32 %v4821, 1.442695
    %v4824 = vpow.pop %v4823
    %v4825 = vmul.f32 %v4822, 1.442695
    %v4826 = vpow.pop %v4825
    %v4827 = vadd.f32 %v4824, 1.0
    %v4828 = vadd.f32 %v4826, 1.0
    %v4829 = vrcp.pop %v4827
    %v4830 = vmul.f32 1.0, %v4829
    %v4831 = vrcp.pop %v4828
    %v4832 = vmul.f32 1.0, %v4831
    %v4833 = vtanh.pop %v4803
    %v4834 = vtanh.pop %v4807
    %v4835 = vxor.u32 %v4804, 2147483648
    %v4836 = vxor.u32 %v4808, 2147483648
    %v4837 = vmul.f32 %v4835, 1.442695
    %v4838 = vpow.pop %v4837
    %v4839 = vmul.f32 %v4836, 1.442695
    %v4840 = vpow.pop %v4839
    %v4841 = vadd.f32 %v4838, 1.0
    %v4842 = vadd.f32 %v4840, 1.0
    %v4843 = vrcp.pop %v4841
    %v4844 = vmul.f32 1.0, %v4843
    %v4845 = vrcp.pop %v4842
    %v4846 = vmul.f32 1.0, %v4845
    %v4847 = vmul.f32 %v4830, %v4511
    %v4848 = vmul.f32 %v4832, %v4512
    %v4849 = vmul.f32 %v4818, %v4833
    %v4850 = vmul.f32 %v4820, %v4834
    %v4851 = vadd.f32 %v4847, %v4849
    %v4852 = vadd.f32 %v4848, %v4850
    %v4853 = vtanh.pop %v4851
    %v4854 = vtanh.pop %v4852
    %v4855 = vmul.f32 %v4844, %v4853
    %v4856 = vmul.f32 %v4846, %v4854
    %s4857 = scalar_lea.vmem %s0, 64
    %v4858 = vld [vmem:[%s4857] sm:$0xff]
    %v4859 = vld [vmem:[%s4857 + $0x8] sm:$0xff]
    %v4860 = vsub.f32 %v4855, %v4509
    %v4861 = vsub.f32 %v4856, %v4510
    %4863 = vset.pattern.permute.xlu0 0
    %4864 = vperm.xlu0 %4863, %v4858
    %v4865 = vpop.permute.xlu0 %4864
    %4868 = vset.pattern.permute.xlu0 0
    %4869 = vperm.xlu0 %4868, %v4859
    %v4870 = vpop.permute.xlu0 %4869
    %v4872 = vmul.f32 %v4865, %v4860
    %v4873 = vmul.f32 %v4870, %v4861
    %v4874 = vadd.f32 %v4509, %v4872
    %v4875 = vadd.f32 %v4510, %v4873
    %4876 = vst [vmem:[#allocation2] sm:$0xff] %v4874
    %4877 = vst [vmem:[#allocation2 + $0x8] sm:$0xff] %v4875
    %v4878 = vsub.f32 %v4851, %v4511
    %v4879 = vsub.f32 %v4852, %v4512
    %v4880 = vmul.f32 %v4865, %v4878
    %v4881 = vmul.f32 %v4870, %v4879
    %v4882 = vadd.f32 %v4511, %v4880
    %v4883 = vadd.f32 %v4512, %v4881
    %4884 = vst [vmem:[#allocation3] sm:$0xff] %v4882
    %4885 = vst [vmem:[#allocation3 + $0x8] sm:$0xff] %v4883
    %v4886 = vmul.f32 %v4865, %v4855
    %v4887 = vmul.f32 %v4870, %v4856
    %v4888 = vpack.c.bf16 %v4887, %v4886
    %v4890 = vunpack.c.l.b16 %v4888
    %v4891 = vunpack.c.h.b16 %v4888
    %v4892 = vpack.c.b16 %v4890, %v4890
    %v4893 = vpack.c.b16 %v4891, %v4891
    %s4896 = scalar_lea.vmem [#allocation11], 32
    %4897 = vst [vmem:[%s4896] sm:$0xf] %v4892
    %4898 = vst [vmem:[%s4896 + $0x4] sm:$0xf] %v4893
    %v4899 = vld [vmem:[%s1776] sm:$0xff]
    %v4900 = vld [vmem:[%s1776 + $0x8] sm:$0xff]
    %v4901 = vld [vmem:[%s1779] sm:$0xff]
    %v4902 = vld [vmem:[%s1779 + $0x8] sm:$0xff]
    %s4903 = scalar_lea.vmem [#allocation5], 192
    %v4904 = vld [vmem:[%s4903] sm:$0xff]
    %v4905 = vld [vmem:[%s4903 + $0x8] sm:$0xff]
    %v4906 = vld [vmem:[%s4903 + $0x10] sm:$0xff]
    %v4907 = vld [vmem:[%s4903 + $0x18] sm:$0xff]
    %v4908 = vld [vmem:[%s4903 + $0x20] sm:$0xff]
    %v4909 = vld [vmem:[%s4903 + $0x28] sm:$0xff]
    %v4910 = vld [vmem:[%s4903 + $0x30] sm:$0xff]
    %v4911 = vld [vmem:[%s4903 + $0x38] sm:$0xff]
    %v4912 = vpack.c.bf16 %v4900, %v4899
    %v4913 = vld [vmem:[%s1792] sm:$0xff]
    %v4914 = vld [vmem:[%s1792 + $0x8] sm:$0xff]
    %v4915 = vld [vmem:[%s1792 + $0x10] sm:$0xff]
    %v4916 = vld [vmem:[%s1792 + $0x18] sm:$0xff]
    %v4917 = vld [vmem:[%s1792 + $0x20] sm:$0xff]
    %v4918 = vld [vmem:[%s1792 + $0x28] sm:$0xff]
    %v4919 = vld [vmem:[%s1792 + $0x30] sm:$0xff]
    %v4920 = vld [vmem:[%s1792 + $0x38] sm:$0xff]
    %v4921 = vld [vmem:[%s1792 + $0x40] sm:$0xff]
    %v4922 = vld [vmem:[%s1792 + $0x48] sm:$0xff]
    %v4923 = vld [vmem:[%s1792 + $0x50] sm:$0xff]
    %v4924 = vld [vmem:[%s1792 + $0x58] sm:$0xff]
    %v4925 = vld [vmem:[%s1792 + $0x60] sm:$0xff]
    %v4926 = vld [vmem:[%s1792 + $0x68] sm:$0xff]
    %v4927 = vld [vmem:[%s1792 + $0x70] sm:$0xff]
    %v4928 = vld [vmem:[%s1792 + $0x78] sm:$0xff]
    %v4929 = vld [vmem:[%s1792 + $0x80] sm:$0xff]
    %v4930 = vld [vmem:[%s1792 + $0x88] sm:$0xff]
    %v4931 = vld [vmem:[%s1792 + $0x90] sm:$0xff]
    %v4932 = vld [vmem:[%s1792 + $0x98] sm:$0xff]
    %v4933 = vld [vmem:[%s1792 + $0xa0] sm:$0xff]
    %v4934 = vld [vmem:[%s1792 + $0xa8] sm:$0xff]
    %v4935 = vld [vmem:[%s1792 + $0xb0] sm:$0xff]
    %v4936 = vld [vmem:[%s1792 + $0xb8] sm:$0xff]
    %v4937 = vld [vmem:[%s1792 + $0xc0] sm:$0xff]
    %v4938 = vld [vmem:[%s1792 + $0xc8] sm:$0xff]
    %v4939 = vld [vmem:[%s1792 + $0xd0] sm:$0xff]
    %v4940 = vld [vmem:[%s1792 + $0xd8] sm:$0xff]
    %v4941 = vld [vmem:[%s1792 + $0xe0] sm:$0xff]
    %v4942 = vld [vmem:[%s1792 + $0xe8] sm:$0xff]
    %v4943 = vld [vmem:[%s1792 + $0xf0] sm:$0xff]
    %v4944 = vld [vmem:[%s1792 + $0xf8] sm:$0xff]
    %v4977 = vunpack.c.l.b16 %v4913
    %v4978 = vunpack.c.h.b16 %v4913
    %v4979 = vunpack.c.l.b16 %v4914
    %v4980 = vunpack.c.h.b16 %v4914
    %v4981 = vunpack.c.l.b16 %v4915
    %v4982 = vunpack.c.h.b16 %v4915
    %v4983 = vunpack.c.l.b16 %v4916
    %v4984 = vunpack.c.h.b16 %v4916
    %v4985 = vunpack.c.l.b16 %v4917
    %v4986 = vunpack.c.h.b16 %v4917
    %v4987 = vunpack.c.l.b16 %v4918
    %v4988 = vunpack.c.h.b16 %v4918
    %v4989 = vunpack.c.l.b16 %v4919
    %v4990 = vunpack.c.h.b16 %v4919
    %v4991 = vunpack.c.l.b16 %v4920
    %v4992 = vunpack.c.h.b16 %v4920
    %v4993 = vunpack.c.l.b16 %v4921
    %v4994 = vunpack.c.h.b16 %v4921
    %v4995 = vunpack.c.l.b16 %v4922
    %v4996 = vunpack.c.h.b16 %v4922
    %v4997 = vunpack.c.l.b16 %v4923
    %v4998 = vunpack.c.h.b16 %v4923
    %v4999 = vunpack.c.l.b16 %v4924
    %v5000 = vunpack.c.h.b16 %v4924
    %v5001 = vunpack.c.l.b16 %v4925
    %v5002 = vunpack.c.h.b16 %v4925
    %v5003 = vunpack.c.l.b16 %v4926
    %v5004 = vunpack.c.h.b16 %v4926
    %v5005 = vunpack.c.l.b16 %v4927
    %v5006 = vunpack.c.h.b16 %v4927
    %v5007 = vunpack.c.l.b16 %v4928
    %v5008 = vunpack.c.h.b16 %v4928
    %v5009 = vunpack.c.l.b16 %v4929
    %v5010 = vunpack.c.h.b16 %v4929
    %v5011 = vunpack.c.l.b16 %v4930
    %v5012 = vunpack.c.h.b16 %v4930
    %v5013 = vunpack.c.l.b16 %v4931
    %v5014 = vunpack.c.h.b16 %v4931
    %v5015 = vunpack.c.l.b16 %v4932
    %v5016 = vunpack.c.h.b16 %v4932
    %v5017 = vunpack.c.l.b16 %v4933
    %v5018 = vunpack.c.h.b16 %v4933
    %v5019 = vunpack.c.l.b16 %v4934
    %v5020 = vunpack.c.h.b16 %v4934
    %v5021 = vunpack.c.l.b16 %v4935
    %v5022 = vunpack.c.h.b16 %v4935
    %v5023 = vunpack.c.l.b16 %v4936
    %v5024 = vunpack.c.h.b16 %v4936
    %v5025 = vunpack.c.l.b16 %v4937
    %v5026 = vunpack.c.h.b16 %v4937
    %v5027 = vunpack.c.l.b16 %v4938
    %v5028 = vunpack.c.h.b16 %v4938
    %v5029 = vunpack.c.l.b16 %v4939
    %v5030 = vunpack.c.h.b16 %v4939
    %v5031 = vunpack.c.l.b16 %v4940
    %v5032 = vunpack.c.h.b16 %v4940
    %v5033 = vunpack.c.l.b16 %v4941
    %v5034 = vunpack.c.h.b16 %v4941
    %v5035 = vunpack.c.l.b16 %v4942
    %v5036 = vunpack.c.h.b16 %v4942
    %v5037 = vunpack.c.l.b16 %v4943
    %v5038 = vunpack.c.h.b16 %v4943
    %v5039 = vunpack.c.l.b16 %v4944
    %v5040 = vunpack.c.h.b16 %v4944
    %v5041 = vpack.c.b16 %v4981, %v4977
    %v5042 = vpack.c.b16 %v4982, %v4978
    %v5043 = vpack.c.b16 %v4983, %v4979
    %v5044 = vpack.c.b16 %v4984, %v4980
    %v5045 = vpack.c.b16 %v4989, %v4985
    %v5046 = vpack.c.b16 %v4990, %v4986
    %v5047 = vpack.c.b16 %v4991, %v4987
    %v5048 = vpack.c.b16 %v4992, %v4988
    %v5049 = vpack.c.b16 %v4997, %v4993
    %v5050 = vpack.c.b16 %v4998, %v4994
    %v5051 = vpack.c.b16 %v4999, %v4995
    %v5052 = vpack.c.b16 %v5000, %v4996
    %v5053 = vpack.c.b16 %v5005, %v5001
    %v5054 = vpack.c.b16 %v5006, %v5002
    %v5055 = vpack.c.b16 %v5007, %v5003
    %v5056 = vpack.c.b16 %v5008, %v5004
    %v5057 = vpack.c.b16 %v5013, %v5009
    %v5058 = vpack.c.b16 %v5014, %v5010
    %v5059 = vpack.c.b16 %v5015, %v5011
    %v5060 = vpack.c.b16 %v5016, %v5012
    %v5061 = vpack.c.b16 %v5021, %v5017
    %v5062 = vpack.c.b16 %v5022, %v5018
    %v5063 = vpack.c.b16 %v5023, %v5019
    %v5064 = vpack.c.b16 %v5024, %v5020
    %v5065 = vpack.c.b16 %v5029, %v5025
    %v5066 = vpack.c.b16 %v5030, %v5026
    %v5067 = vpack.c.b16 %v5031, %v5027
    %v5068 = vpack.c.b16 %v5032, %v5028
    %v5069 = vpack.c.b16 %v5037, %v5033
    %v5070 = vpack.c.b16 %v5038, %v5034
    %v5071 = vpack.c.b16 %v5039, %v5035
    %v5072 = vpack.c.b16 %v5040, %v5036
    %5105 = vmatprep.subr.bf16.mxu0 %v5042
    %5106 = vmatpush1.bf16.msra.mxu0 %v5041
    %5107 = vmatprep.subr.bf16.mxu0 %v5046
    %5108 = vmatpush1.bf16.msra.mxu0 %v5045
    %5109 = vmatprep.subr.bf16.mxu0 %v5050
    %5110 = vmatpush1.bf16.msra.mxu0 %v5049
    %5111 = vmatprep.subr.bf16.mxu0 %v5054
    %5112 = vmatpush1.bf16.msra.mxu0 %v5053
    %5113 = vmatprep.subr.bf16.mxu0 %v5058
    %5114 = vmatpush1.bf16.msra.mxu0 %v5057
    %5115 = vmatprep.subr.bf16.mxu0 %v5062
    %5116 = vmatpush1.bf16.msra.mxu0 %v5061
    %5117 = vmatprep.subr.bf16.mxu0 %v5066
    %5118 = vmatpush1.bf16.msra.mxu0 %v5065
    %5119 = vmatprep.subr.bf16.mxu0 %v5070
    %5120 = vmatpush1.bf16.msra.mxu0 %v5069
    %5121 = vmatprep.subr.bf16.mxu0 0
    %5122 = vmatpush1.bf16.msra.mxu0 0
    %5123 = vmatprep.subr.bf16.mxu0 0
    %5124 = vmatpush1.bf16.msra.mxu0 0
    %5125 = vmatprep.subr.bf16.mxu0 0
    %5126 = vmatpush1.bf16.msra.mxu0 0
    %5127 = vmatprep.subr.bf16.mxu0 0
    %5128 = vmatpush1.bf16.msra.mxu0 0
    %5129 = vmatprep.subr.bf16.mxu0 0
    %5130 = vmatpush1.bf16.msra.mxu0 0
    %5131 = vmatprep.subr.bf16.mxu0 0
    %5132 = vmatpush1.bf16.msra.mxu0 0
    %5133 = vmatprep.subr.bf16.mxu0 0
    %5134 = vmatpush1.bf16.msra.mxu0 0
    %5135 = vmatprep.subr.bf16.mxu0 0
    %5136 = vmatpush1.bf16.msra.mxu0 0
    %5137 = vmatprep.mubr.bf16.mxu0 0
    %5138 = vmatmul.mubr.bf16.gmra.mrb[0].mxu0 %v4912
    %v5139 = vpop.f32.mrb[0].mxu0
    %v5140 = vadd.f32 0.0, %v5139
    %v5141 = vpop.f32.mrb[0].mxu0
    %v5142 = vadd.f32 0.0, %v5141
    %v5143 = vpop.f32.mrb[0].mxu0
    %v5144 = vadd.f32 0.0, %v5143
    %v5145 = vpop.f32.mrb[0].mxu0
    %v5146 = vadd.f32 0.0, %v5145
    %5147 = vdwg.mxu0
    %5148 = vmatprep.subr.bf16.mxu0 %v5044
    %5149 = vmatpush1.bf16.msra.mxu0 %v5043
    %5150 = vmatprep.subr.bf16.mxu0 %v5048
    %5151 = vmatpush1.bf16.msra.mxu0 %v5047
    %5152 = vmatprep.subr.bf16.mxu0 %v5052
    %5153 = vmatpush1.bf16.msra.mxu0 %v5051
    %5154 = vmatprep.subr.bf16.mxu0 %v5056
    %5155 = vmatpush1.bf16.msra.mxu0 %v5055
    %5156 = vmatprep.subr.bf16.mxu0 %v5060
    %5157 = vmatpush1.bf16.msra.mxu0 %v5059
    %5158 = vmatprep.subr.bf16.mxu0 %v5064
    %5159 = vmatpush1.bf16.msra.mxu0 %v5063
    %5160 = vmatprep.subr.bf16.mxu0 %v5068
    %5161 = vmatpush1.bf16.msra.mxu0 %v5067
    %5162 = vmatprep.subr.bf16.mxu0 %v5072
    %5163 = vmatpush1.bf16.msra.mxu0 %v5071
    %5164 = vmatprep.subr.bf16.mxu0 0
    %5165 = vmatpush1.bf16.msra.mxu0 0
    %5166 = vmatprep.subr.bf16.mxu0 0
    %5167 = vmatpush1.bf16.msra.mxu0 0
    %5168 = vmatprep.subr.bf16.mxu0 0
    %5169 = vmatpush1.bf16.msra.mxu0 0
    %5170 = vmatprep.subr.bf16.mxu0 0
    %5171 = vmatpush1.bf16.msra.mxu0 0
    %5172 = vmatprep.subr.bf16.mxu0 0
    %5173 = vmatpush1.bf16.msra.mxu0 0
    %5174 = vmatprep.subr.bf16.mxu0 0
    %5175 = vmatpush1.bf16.msra.mxu0 0
    %5176 = vmatprep.subr.bf16.mxu0 0
    %5177 = vmatpush1.bf16.msra.mxu0 0
    %5178 = vmatprep.subr.bf16.mxu0 0
    %5179 = vmatpush1.bf16.msra.mxu0 0
    %5180 = vmatprep.mubr.bf16.mxu0 0
    %5181 = vmatmul.mubr.bf16.gmra.mrb[0].mxu0 %v4912
    %v5182 = vpop.f32.mrb[0].mxu0
    %v5183 = vadd.f32 0.0, %v5182
    %v5184 = vpop.f32.mrb[0].mxu0
    %v5185 = vadd.f32 0.0, %v5184
    %v5186 = vpop.f32.mrb[0].mxu0
    %v5187 = vadd.f32 0.0, %v5186
    %v5188 = vpop.f32.mrb[0].mxu0
    %v5189 = vadd.f32 0.0, %v5188
    %5190 = vdwg.mxu0
    %v5191 = vadd.f32 %v4904, %v5140
    %v5192 = vadd.f32 %v4905, %v5142
    %v5193 = vadd.f32 %v4906, %v5183
    %v5194 = vadd.f32 %v4907, %v5185
    %v5195 = vadd.f32 %v4908, %v5144
    %v5196 = vadd.f32 %v4909, %v5146
    %v5197 = vadd.f32 %v4910, %v5187
    %v5198 = vadd.f32 %v4911, %v5189
    %v5199 = vxor.u32 %v5191, 2147483648
    %v5200 = vxor.u32 %v5195, 2147483648
    %v5201 = vmul.f32 %v5199, 1.442695
    %v5202 = vpow.pop %v5201
    %v5203 = vmul.f32 %v5200, 1.442695
    %v5204 = vpow.pop %v5203
    %v5205 = vadd.f32 %v5202, 1.0
    %v5206 = vadd.f32 %v5204, 1.0
    %v5207 = vrcp.pop %v5205
    %v5208 = vmul.f32 1.0, %v5207
    %v5209 = vrcp.pop %v5206
    %v5210 = vmul.f32 1.0, %v5209
    %v5211 = vxor.u32 %v5192, 2147483648
    %v5212 = vxor.u32 %v5196, 2147483648
    %v5213 = vmul.f32 %v5211, 1.442695
    %v5214 = vpow.pop %v5213
    %v5215 = vmul.f32 %v5212, 1.442695
    %v5216 = vpow.pop %v5215
    %v5217 = vadd.f32 %v5214, 1.0
    %v5218 = vadd.f32 %v5216, 1.0
    %v5219 = vrcp.pop %v5217
    %v5220 = vmul.f32 1.0, %v5219
    %v5221 = vrcp.pop %v5218
    %v5222 = vmul.f32 1.0, %v5221
    %v5223 = vtanh.pop %v5193
    %v5224 = vtanh.pop %v5197
    %v5225 = vxor.u32 %v5194, 2147483648
    %v5226 = vxor.u32 %v5198, 2147483648
    %v5227 = vmul.f32 %v5225, 1.442695
    %v5228 = vpow.pop %v5227
    %v5229 = vmul.f32 %v5226, 1.442695
    %v5230 = vpow.pop %v5229
    %v5231 = vadd.f32 %v5228, 1.0
    %v5232 = vadd.f32 %v5230, 1.0
    %v5233 = vrcp.pop %v5231
    %v5234 = vmul.f32 1.0, %v5233
    %v5235 = vrcp.pop %v5232
    %v5236 = vmul.f32 1.0, %v5235
    %v5237 = vmul.f32 %v5220, %v4901
    %v5238 = vmul.f32 %v5222, %v4902
    %v5239 = vmul.f32 %v5208, %v5223
    %v5240 = vmul.f32 %v5210, %v5224
    %v5241 = vadd.f32 %v5237, %v5239
    %v5242 = vadd.f32 %v5238, %v5240
    %v5243 = vtanh.pop %v5241
    %v5244 = vtanh.pop %v5242
    %v5245 = vmul.f32 %v5234, %v5243
    %v5246 = vmul.f32 %v5236, %v5244
    %s5247 = scalar_lea.vmem %s96, 48
    %v5248 = vld [vmem:[%s5247] sm:$0xff]
    %v5249 = vld [vmem:[%s5247 + $0x8] sm:$0xff]
    %v5250 = vsub.f32 %v5245, %v4899
    %v5251 = vsub.f32 %v5246, %v4900
    %5253 = vset.pattern.permute.xlu0 0
    %5254 = vperm.xlu0 %5253, %v5248
    %v5255 = vpop.permute.xlu0 %5254
    %5258 = vset.pattern.permute.xlu0 0
    %5259 = vperm.xlu0 %5258, %v5249
    %v5260 = vpop.permute.xlu0 %5259
    %v5262 = vmul.f32 %v5255, %v5250
    %v5263 = vmul.f32 %v5260, %v5251
    %v5264 = vadd.f32 %v4899, %v5262
    %v5265 = vadd.f32 %v4900, %v5263
    %5266 = vst [vmem:[%s1776] sm:$0xff] %v5264
    %5267 = vst [vmem:[%s1776 + $0x8] sm:$0xff] %v5265
    %v5268 = vsub.f32 %v5241, %v4901
    %v5269 = vsub.f32 %v5242, %v4902
    %v5270 = vmul.f32 %v5255, %v5268
    %v5271 = vmul.f32 %v5260, %v5269
    %v5272 = vadd.f32 %v4901, %v5270
    %v5273 = vadd.f32 %v4902, %v5271
    %5274 = vst [vmem:[%s1779] sm:$0xff] %v5272
    %5275 = vst [vmem:[%s1779 + $0x8] sm:$0xff] %v5273
    %v5276 = vmul.f32 %v5255, %v5245
    %v5277 = vmul.f32 %v5260, %v5246
    %v5278 = vpack.c.bf16 %v5277, %v5276
    %v5280 = vunpack.c.l.b16 %v5278
    %v5281 = vunpack.c.h.b16 %v5278
    %v5282 = vpack.c.b16 %v5280, %v5280
    %v5283 = vpack.c.b16 %v5281, %v5281
    %s5286 = scalar_lea.vmem [#allocation12], 24
    %5287 = vst [vmem:[%s5286] sm:$0xf] %v5282
    %5288 = vst [vmem:[%s5286 + $0x4] sm:$0xf] %v5283
    %v5289 = vld [vmem:[#allocation2] sm:$0xff]
    %v5290 = vld [vmem:[#allocation2 + $0x8] sm:$0xff]
    %v5291 = vld [vmem:[#allocation3] sm:$0xff]
    %v5292 = vld [vmem:[#allocation3 + $0x8] sm:$0xff]
    %s5293 = scalar_lea.vmem [#allocation4], 320
    %v5294 = vld [vmem:[%s5293] sm:$0xff]
    %v5295 = vld [vmem:[%s5293 + $0x8] sm:$0xff]
    %v5296 = vld [vmem:[%s5293 + $0x10] sm:$0xff]
    %v5297 = vld [vmem:[%s5293 + $0x18] sm:$0xff]
    %v5298 = vld [vmem:[%s5293 + $0x20] sm:$0xff]
    %v5299 = vld [vmem:[%s5293 + $0x28] sm:$0xff]
    %v5300 = vld [vmem:[%s5293 + $0x30] sm:$0xff]
    %v5301 = vld [vmem:[%s5293 + $0x38] sm:$0xff]
    %v5302 = vpack.c.bf16 %v5290, %v5289
    %v5303 = vld [vmem:[#allocation9] sm:$0xff]
    %v5304 = vld [vmem:[#allocation9 + $0x8] sm:$0xff]
    %v5305 = vld [vmem:[#allocation9 + $0x10] sm:$0xff]
    %v5306 = vld [vmem:[#allocation9 + $0x18] sm:$0xff]
    %v5307 = vld [vmem:[#allocation9 + $0x20] sm:$0xff]
    %v5308 = vld [vmem:[#allocation9 + $0x28] sm:$0xff]
    %v5309 = vld [vmem:[#allocation9 + $0x30] sm:$0xff]
    %v5310 = vld [vmem:[#allocation9 + $0x38] sm:$0xff]
    %v5311 = vld [vmem:[#allocation9 + $0x40] sm:$0xff]
    %v5312 = vld [vmem:[#allocation9 + $0x48] sm:$0xff]
    %v5313 = vld [vmem:[#allocation9 + $0x50] sm:$0xff]
    %v5314 = vld [vmem:[#allocation9 + $0x58] sm:$0xff]
    %v5315 = vld [vmem:[#allocation9 + $0x60] sm:$0xff]
    %v5316 = vld [vmem:[#allocation9 + $0x68] sm:$0xff]
    %v5317 = vld [vmem:[#allocation9 + $0x70] sm:$0xff]
    %v5318 = vld [vmem:[#allocation9 + $0x78] sm:$0xff]
    %v5319 = vld [vmem:[#allocation9 + $0x80] sm:$0xff]
    %v5320 = vld [vmem:[#allocation9 + $0x88] sm:$0xff]
    %v5321 = vld [vmem:[#allocation9 + $0x90] sm:$0xff]
    %v5322 = vld [vmem:[#allocation9 + $0x98] sm:$0xff]
    %v5323 = vld [vmem:[#allocation9 + $0xa0] sm:$0xff]
    %v5324 = vld [vmem:[#allocation9 + $0xa8] sm:$0xff]
    %v5325 = vld [vmem:[#allocation9 + $0xb0] sm:$0xff]
    %v5326 = vld [vmem:[#allocation9 + $0xb8] sm:$0xff]
    %v5327 = vld [vmem:[#allocation9 + $0xc0] sm:$0xff]
    %v5328 = vld [vmem:[#allocation9 + $0xc8] sm:$0xff]
    %v5329 = vld [vmem:[#allocation9 + $0xd0] sm:$0xff]
    %v5330 = vld [vmem:[#allocation9 + $0xd8] sm:$0xff]
    %v5331 = vld [vmem:[#allocation9 + $0xe0] sm:$0xff]
    %v5332 = vld [vmem:[#allocation9 + $0xe8] sm:$0xff]
    %v5333 = vld [vmem:[#allocation9 + $0xf0] sm:$0xff]
    %v5334 = vld [vmem:[#allocation9 + $0xf8] sm:$0xff]
    %v5367 = vunpack.c.l.b16 %v5303
    %v5368 = vunpack.c.h.b16 %v5303
    %v5369 = vunpack.c.l.b16 %v5304
    %v5370 = vunpack.c.h.b16 %v5304
    %v5371 = vunpack.c.l.b16 %v5305
    %v5372 = vunpack.c.h.b16 %v5305
    %v5373 = vunpack.c.l.b16 %v5306
    %v5374 = vunpack.c.h.b16 %v5306
    %v5375 = vunpack.c.l.b16 %v5307
    %v5376 = vunpack.c.h.b16 %v5307
    %v5377 = vunpack.c.l.b16 %v5308
    %v5378 = vunpack.c.h.b16 %v5308
    %v5379 = vunpack.c.l.b16 %v5309
    %v5380 = vunpack.c.h.b16 %v5309
    %v5381 = vunpack.c.l.b16 %v5310
    %v5382 = vunpack.c.h.b16 %v5310
    %v5383 = vunpack.c.l.b16 %v5311
    %v5384 = vunpack.c.h.b16 %v5311
    %v5385 = vunpack.c.l.b16 %v5312
    %v5386 = vunpack.c.h.b16 %v5312
    %v5387 = vunpack.c.l.b16 %v5313
    %v5388 = vunpack.c.h.b16 %v5313
    %v5389 = vunpack.c.l.b16 %v5314
    %v5390 = vunpack.c.h.b16 %v5314
    %v5391 = vunpack.c.l.b16 %v5315
    %v5392 = vunpack.c.h.b16 %v5315
    %v5393 = vunpack.c.l.b16 %v5316
    %v5394 = vunpack.c.h.b16 %v5316
    %v5395 = vunpack.c.l.b16 %v5317
    %v5396 = vunpack.c.h.b16 %v5317
    %v5397 = vunpack.c.l.b16 %v5318
    %v5398 = vunpack.c.h.b16 %v5318
    %v5399 = vunpack.c.l.b16 %v5319
    %v5400 = vunpack.c.h.b16 %v5319
    %v5401 = vunpack.c.l.b16 %v5320
    %v5402 = vunpack.c.h.b16 %v5320
    %v5403 = vunpack.c.l.b16 %v5321
    %v5404 = vunpack.c.h.b16 %v5321
    %v5405 = vunpack.c.l.b16 %v5322
    %v5406 = vunpack.c.h.b16 %v5322
    %v5407 = vunpack.c.l.b16 %v5323
    %v5408 = vunpack.c.h.b16 %v5323
    %v5409 = vunpack.c.l.b16 %v5324
    %v5410 = vunpack.c.h.b16 %v5324
    %v5411 = vunpack.c.l.b16 %v5325
    %v5412 = vunpack.c.h.b16 %v5325
    %v5413 = vunpack.c.l.b16 %v5326
    %v5414 = vunpack.c.h.b16 %v5326
    %v5415 = vunpack.c.l.b16 %v5327
    %v5416 = vunpack.c.h.b16 %v5327
    %v5417 = vunpack.c.l.b16 %v5328
    %v5418 = vunpack.c.h.b16 %v5328
    %v5419 = vunpack.c.l.b16 %v5329
    %v5420 = vunpack.c.h.b16 %v5329
    %v5421 = vunpack.c.l.b16 %v5330
    %v5422 = vunpack.c.h.b16 %v5330
    %v5423 = vunpack.c.l.b16 %v5331
    %v5424 = vunpack.c.h.b16 %v5331
    %v5425 = vunpack.c.l.b16 %v5332
    %v5426 = vunpack.c.h.b16 %v5332
    %v5427 = vunpack.c.l.b16 %v5333
    %v5428 = vunpack.c.h.b16 %v5333
    %v5429 = vunpack.c.l.b16 %v5334
    %v5430 = vunpack.c.h.b16 %v5334
    %v5431 = vpack.c.b16 %v5371, %v5367
    %v5432 = vpack.c.b16 %v5372, %v5368
    %v5433 = vpack.c.b16 %v5373, %v5369
    %v5434 = vpack.c.b16 %v5374, %v5370
    %v5435 = vpack.c.b16 %v5379, %v5375
    %v5436 = vpack.c.b16 %v5380, %v5376
    %v5437 = vpack.c.b16 %v5381, %v5377
    %v5438 = vpack.c.b16 %v5382, %v5378
    %v5439 = vpack.c.b16 %v5387, %v5383
    %v5440 = vpack.c.b16 %v5388, %v5384
    %v5441 = vpack.c.b16 %v5389, %v5385
    %v5442 = vpack.c.b16 %v5390, %v5386
    %v5443 = vpack.c.b16 %v5395, %v5391
    %v5444 = vpack.c.b16 %v5396, %v5392
    %v5445 = vpack.c.b16 %v5397, %v5393
    %v5446 = vpack.c.b16 %v5398, %v5394
    %v5447 = vpack.c.b16 %v5403, %v5399
    %v5448 = vpack.c.b16 %v5404, %v5400
    %v5449 = vpack.c.b16 %v5405, %v5401
    %v5450 = vpack.c.b16 %v5406, %v5402
    %v5451 = vpack.c.b16 %v5411, %v5407
    %v5452 = vpack.c.b16 %v5412, %v5408
    %v5453 = vpack.c.b16 %v5413, %v5409
    %v5454 = vpack.c.b16 %v5414, %v5410
    %v5455 = vpack.c.b16 %v5419, %v5415
    %v5456 = vpack.c.b16 %v5420, %v5416
    %v5457 = vpack.c.b16 %v5421, %v5417
    %v5458 = vpack.c.b16 %v5422, %v5418
    %v5459 = vpack.c.b16 %v5427, %v5423
    %v5460 = vpack.c.b16 %v5428, %v5424
    %v5461 = vpack.c.b16 %v5429, %v5425
    %v5462 = vpack.c.b16 %v5430, %v5426
    %5495 = vmatprep.subr.bf16.mxu0 %v5432
    %5496 = vmatpush1.bf16.msra.mxu0 %v5431
    %5497 = vmatprep.subr.bf16.mxu0 %v5436
    %5498 = vmatpush1.bf16.msra.mxu0 %v5435
    %5499 = vmatprep.subr.bf16.mxu0 %v5440
    %5500 = vmatpush1.bf16.msra.mxu0 %v5439
    %5501 = vmatprep.subr.bf16.mxu0 %v5444
    %5502 = vmatpush1.bf16.msra.mxu0 %v5443
    %5503 = vmatprep.subr.bf16.mxu0 %v5448
    %5504 = vmatpush1.bf16.msra.mxu0 %v5447
    %5505 = vmatprep.subr.bf16.mxu0 %v5452
    %5506 = vmatpush1.bf16.msra.mxu0 %v5451
    %5507 = vmatprep.subr.bf16.mxu0 %v5456
    %5508 = vmatpush1.bf16.msra.mxu0 %v5455
    %5509 = vmatprep.subr.bf16.mxu0 %v5460
    %5510 = vmatpush1.bf16.msra.mxu0 %v5459
    %5511 = vmatprep.subr.bf16.mxu0 0
    %5512 = vmatpush1.bf16.msra.mxu0 0
    %5513 = vmatprep.subr.bf16.mxu0 0
    %5514 = vmatpush1.bf16.msra.mxu0 0
    %5515 = vmatprep.subr.bf16.mxu0 0
    %5516 = vmatpush1.bf16.msra.mxu0 0
    %5517 = vmatprep.subr.bf16.mxu0 0
    %5518 = vmatpush1.bf16.msra.mxu0 0
    %5519 = vmatprep.subr.bf16.mxu0 0
    %5520 = vmatpush1.bf16.msra.mxu0 0
    %5521 = vmatprep.subr.bf16.mxu0 0
    %5522 = vmatpush1.bf16.msra.mxu0 0
    %5523 = vmatprep.subr.bf16.mxu0 0
    %5524 = vmatpush1.bf16.msra.mxu0 0
    %5525 = vmatprep.subr.bf16.mxu0 0
    %5526 = vmatpush1.bf16.msra.mxu0 0
    %5527 = vmatprep.mubr.bf16.mxu0 0
    %5528 = vmatmul.mubr.bf16.gmra.mrb[0].mxu0 %v5302
    %v5529 = vpop.f32.mrb[0].mxu0
    %v5530 = vadd.f32 0.0, %v5529
    %v5531 = vpop.f32.mrb[0].mxu0
    %v5532 = vadd.f32 0.0, %v5531
    %v5533 = vpop.f32.mrb[0].mxu0
    %v5534 = vadd.f32 0.0, %v5533
    %v5535 = vpop.f32.mrb[0].mxu0
    %v5536 = vadd.f32 0.0, %v5535
    %5537 = vdwg.mxu0
    %5538 = vmatprep.subr.bf16.mxu0 %v5434
    %5539 = vmatpush1.bf16.msra.mxu0 %v5433
    %5540 = vmatprep.subr.bf16.mxu0 %v5438
    %5541 = vmatpush1.bf16.msra.mxu0 %v5437
    %5542 = vmatprep.subr.bf16.mxu0 %v5442
    %5543 = vmatpush1.bf16.msra.mxu0 %v5441
    %5544 = vmatprep.subr.bf16.mxu0 %v5446
    %5545 = vmatpush1.bf16.msra.mxu0 %v5445
    %5546 = vmatprep.subr.bf16.mxu0 %v5450
    %5547 = vmatpush1.bf16.msra.mxu0 %v5449
    %5548 = vmatprep.subr.bf16.mxu0 %v5454
    %5549 = vmatpush1.bf16.msra.mxu0 %v5453
    %5550 = vmatprep.subr.bf16.mxu0 %v5458
    %5551 = vmatpush1.bf16.msra.mxu0 %v5457
    %5552 = vmatprep.subr.bf16.mxu0 %v5462
    %5553 = vmatpush1.bf16.msra.mxu0 %v5461
    %5554 = vmatprep.subr.bf16.mxu0 0
    %5555 = vmatpush1.bf16.msra.mxu0 0
    %5556 = vmatprep.subr.bf16.mxu0 0
    %5557 = vmatpush1.bf16.msra.mxu0 0
    %5558 = vmatprep.subr.bf16.mxu0 0
    %5559 = vmatpush1.bf16.msra.mxu0 0
    %5560 = vmatprep.subr.bf16.mxu0 0
    %5561 = vmatpush1.bf16.msra.mxu0 0
    %5562 = vmatprep.subr.bf16.mxu0 0
    %5563 = vmatpush1.bf16.msra.mxu0 0
    %5564 = vmatprep.subr.bf16.mxu0 0
    %5565 = vmatpush1.bf16.msra.mxu0 0
    %5566 = vmatprep.subr.bf16.mxu0 0
    %5567 = vmatpush1.bf16.msra.mxu0 0
    %5568 = vmatprep.subr.bf16.mxu0 0
    %5569 = vmatpush1.bf16.msra.mxu0 0
    %5570 = vmatprep.mubr.bf16.mxu0 0
    %5571 = vmatmul.mubr.bf16.gmra.mrb[0].mxu0 %v5302
    %v5572 = vpop.f32.mrb[0].mxu0
    %v5573 = vadd.f32 0.0, %v5572
    %v5574 = vpop.f32.mrb[0].mxu0
    %v5575 = vadd.f32 0.0, %v5574
    %v5576 = vpop.f32.mrb[0].mxu0
    %v5577 = vadd.f32 0.0, %v5576
    %v5578 = vpop.f32.mrb[0].mxu0
    %v5579 = vadd.f32 0.0, %v5578
    %5580 = vdwg.mxu0
    %v5581 = vadd.f32 %v5294, %v5530
    %v5582 = vadd.f32 %v5295, %v5532
    %v5583 = vadd.f32 %v5296, %v5573
    %v5584 = vadd.f32 %v5297, %v5575
    %v5585 = vadd.f32 %v5298, %v5534
    %v5586 = vadd.f32 %v5299, %v5536
    %v5587 = vadd.f32 %v5300, %v5577
    %v5588 = vadd.f32 %v5301, %v5579
    %v5589 = vxor.u32 %v5581, 2147483648
    %v5590 = vxor.u32 %v5585, 2147483648
    %v5591 = vmul.f32 %v5589, 1.442695
    %v5592 = vpow.pop %v5591
    %v5593 = vmul.f32 %v5590, 1.442695
    %v5594 = vpow.pop %v5593
    %v5595 = vadd.f32 %v5592, 1.0
    %v5596 = vadd.f32 %v5594, 1.0
    %v5597 = vrcp.pop %v5595
    %v5598 = vmul.f32 1.0, %v5597
    %v5599 = vrcp.pop %v5596
    %v5600 = vmul.f32 1.0, %v5599
    %v5601 = vxor.u32 %v5582, 2147483648
    %v5602 = vxor.u32 %v5586, 2147483648
    %v5603 = vmul.f32 %v5601, 1.442695
    %v5604 = vpow.pop %v5603
    %v5605 = vmul.f32 %v5602, 1.442695
    %v5606 = vpow.pop %v5605
    %v5607 = vadd.f32 %v5604, 1.0
    %v5608 = vadd.f32 %v5606, 1.0
    %v5609 = vrcp.pop %v5607
    %v5610 = vmul.f32 1.0, %v5609
    %v5611 = vrcp.pop %v5608
    %v5612 = vmul.f32 1.0, %v5611
    %v5613 = vtanh.pop %v5583
    %v5614 = vtanh.pop %v5587
    %v5615 = vxor.u32 %v5584, 2147483648
    %v5616 = vxor.u32 %v5588, 2147483648
    %v5617 = vmul.f32 %v5615, 1.442695
    %v5618 = vpow.pop %v5617
    %v5619 = vmul.f32 %v5616, 1.442695
    %v5620 = vpow.pop %v5619
    %v5621 = vadd.f32 %v5618, 1.0
    %v5622 = vadd.f32 %v5620, 1.0
    %v5623 = vrcp.pop %v5621
    %v5624 = vmul.f32 1.0, %v5623
    %v5625 = vrcp.pop %v5622
    %v5626 = vmul.f32 1.0, %v5625
    %v5627 = vmul.f32 %v5610, %v5291
    %v5628 = vmul.f32 %v5612, %v5292
    %v5629 = vmul.f32 %v5598, %v5613
    %v5630 = vmul.f32 %v5600, %v5614
    %v5631 = vadd.f32 %v5627, %v5629
    %v5632 = vadd.f32 %v5628, %v5630
    %v5633 = vtanh.pop %v5631
    %v5634 = vtanh.pop %v5632
    %v5635 = vmul.f32 %v5624, %v5633
    %v5636 = vmul.f32 %v5626, %v5634
    %s5637 = scalar_lea.vmem %s0, 80
    %v5638 = vld [vmem:[%s5637] sm:$0xff]
    %v5639 = vld [vmem:[%s5637 + $0x8] sm:$0xff]
    %v5640 = vsub.f32 %v5635, %v5289
    %v5641 = vsub.f32 %v5636, %v5290
    %5643 = vset.pattern.permute.xlu0 0
    %5644 = vperm.xlu0 %5643, %v5638
    %v5645 = vpop.permute.xlu0 %5644
    %5648 = vset.pattern.permute.xlu0 0
    %5649 = vperm.xlu0 %5648, %v5639
    %v5650 = vpop.permute.xlu0 %5649
    %v5652 = vmul.f32 %v5645, %v5640
    %v5653 = vmul.f32 %v5650, %v5641
    %v5654 = vadd.f32 %v5289, %v5652
    %v5655 = vadd.f32 %v5290, %v5653
    %5656 = vst [vmem:[#allocation2] sm:$0xff] %v5654
    %5657 = vst [vmem:[#allocation2 + $0x8] sm:$0xff] %v5655
    %v5658 = vsub.f32 %v5631, %v5291
    %v5659 = vsub.f32 %v5632, %v5292
    %v5660 = vmul.f32 %v5645, %v5658
    %v5661 = vmul.f32 %v5650, %v5659
    %v5662 = vadd.f32 %v5291, %v5660
    %v5663 = vadd.f32 %v5292, %v5661
    %5664 = vst [vmem:[#allocation3] sm:$0xff] %v5662
    %5665 = vst [vmem:[#allocation3 + $0x8] sm:$0xff] %v5663
    %v5666 = vmul.f32 %v5645, %v5635
    %v5667 = vmul.f32 %v5650, %v5636
    %v5668 = vpack.c.bf16 %v5667, %v5666
    %v5670 = vunpack.c.l.b16 %v5668
    %v5671 = vunpack.c.h.b16 %v5668
    %v5672 = vpack.c.b16 %v5670, %v5670
    %v5673 = vpack.c.b16 %v5671, %v5671
    %s5676 = scalar_lea.vmem [#allocation11], 40
    %5677 = vst [vmem:[%s5676] sm:$0xf] %v5672
    %5678 = vst [vmem:[%s5676 + $0x4] sm:$0xf] %v5673
    %v5679 = vld [vmem:[%s1776] sm:$0xff]
    %v5680 = vld [vmem:[%s1776 + $0x8] sm:$0xff]
    %v5681 = vld [vmem:[%s1779] sm:$0xff]
    %v5682 = vld [vmem:[%s1779 + $0x8] sm:$0xff]
    %s5683 = scalar_lea.vmem [#allocation5], 128
    %v5684 = vld [vmem:[%s5683] sm:$0xff]
    %v5685 = vld [vmem:[%s5683 + $0x8] sm:$0xff]
    %v5686 = vld [vmem:[%s5683 + $0x10] sm:$0xff]
    %v5687 = vld [vmem:[%s5683 + $0x18] sm:$0xff]
    %v5688 = vld [vmem:[%s5683 + $0x20] sm:$0xff]
    %v5689 = vld [vmem:[%s5683 + $0x28] sm:$0xff]
    %v5690 = vld [vmem:[%s5683 + $0x30] sm:$0xff]
    %v5691 = vld [vmem:[%s5683 + $0x38] sm:$0xff]
    %v5692 = vpack.c.bf16 %v5680, %v5679
    %v5693 = vld [vmem:[%s1792] sm:$0xff]
    %v5694 = vld [vmem:[%s1792 + $0x8] sm:$0xff]
    %v5695 = vld [vmem:[%s1792 + $0x10] sm:$0xff]
    %v5696 = vld [vmem:[%s1792 + $0x18] sm:$0xff]
    %v5697 = vld [vmem:[%s1792 + $0x20] sm:$0xff]
    %v5698 = vld [vmem:[%s1792 + $0x28] sm:$0xff]
    %v5699 = vld [vmem:[%s1792 + $0x30] sm:$0xff]
    %v5700 = vld [vmem:[%s1792 + $0x38] sm:$0xff]
    %v5701 = vld [vmem:[%s1792 + $0x40] sm:$0xff]
    %v5702 = vld [vmem:[%s1792 + $0x48] sm:$0xff]
    %v5703 = vld [vmem:[%s1792 + $0x50] sm:$0xff]
    %v5704 = vld [vmem:[%s1792 + $0x58] sm:$0xff]
    %v5705 = vld [vmem:[%s1792 + $0x60] sm:$0xff]
    %v5706 = vld [vmem:[%s1792 + $0x68] sm:$0xff]
    %v5707 = vld [vmem:[%s1792 + $0x70] sm:$0xff]
    %v5708 = vld [vmem:[%s1792 + $0x78] sm:$0xff]
    %v5709 = vld [vmem:[%s1792 + $0x80] sm:$0xff]
    %v5710 = vld [vmem:[%s1792 + $0x88] sm:$0xff]
    %v5711 = vld [vmem:[%s1792 + $0x90] sm:$0xff]
    %v5712 = vld [vmem:[%s1792 + $0x98] sm:$0xff]
    %v5713 = vld [vmem:[%s1792 + $0xa0] sm:$0xff]
    %v5714 = vld [vmem:[%s1792 + $0xa8] sm:$0xff]
    %v5715 = vld [vmem:[%s1792 + $0xb0] sm:$0xff]
    %v5716 = vld [vmem:[%s1792 + $0xb8] sm:$0xff]
    %v5717 = vld [vmem:[%s1792 + $0xc0] sm:$0xff]
    %v5718 = vld [vmem:[%s1792 + $0xc8] sm:$0xff]
    %v5719 = vld [vmem:[%s1792 + $0xd0] sm:$0xff]
    %v5720 = vld [vmem:[%s1792 + $0xd8] sm:$0xff]
    %v5721 = vld [vmem:[%s1792 + $0xe0] sm:$0xff]
    %v5722 = vld [vmem:[%s1792 + $0xe8] sm:$0xff]
    %v5723 = vld [vmem:[%s1792 + $0xf0] sm:$0xff]
    %v5724 = vld [vmem:[%s1792 + $0xf8] sm:$0xff]
    %v5757 = vunpack.c.l.b16 %v5693
    %v5758 = vunpack.c.h.b16 %v5693
    %v5759 = vunpack.c.l.b16 %v5694
    %v5760 = vunpack.c.h.b16 %v5694
    %v5761 = vunpack.c.l.b16 %v5695
    %v5762 = vunpack.c.h.b16 %v5695
    %v5763 = vunpack.c.l.b16 %v5696
    %v5764 = vunpack.c.h.b16 %v5696
    %v5765 = vunpack.c.l.b16 %v5697
    %v5766 = vunpack.c.h.b16 %v5697
    %v5767 = vunpack.c.l.b16 %v5698
    %v5768 = vunpack.c.h.b16 %v5698
    %v5769 = vunpack.c.l.b16 %v5699
    %v5770 = vunpack.c.h.b16 %v5699
    %v5771 = vunpack.c.l.b16 %v5700
    %v5772 = vunpack.c.h.b16 %v5700
    %v5773 = vunpack.c.l.b16 %v5701
    %v5774 = vunpack.c.h.b16 %v5701
    %v5775 = vunpack.c.l.b16 %v5702
    %v5776 = vunpack.c.h.b16 %v5702
    %v5777 = vunpack.c.l.b16 %v5703
    %v5778 = vunpack.c.h.b16 %v5703
    %v5779 = vunpack.c.l.b16 %v5704
    %v5780 = vunpack.c.h.b16 %v5704
    %v5781 = vunpack.c.l.b16 %v5705
    %v5782 = vunpack.c.h.b16 %v5705
    %v5783 = vunpack.c.l.b16 %v5706
    %v5784 = vunpack.c.h.b16 %v5706
    %v5785 = vunpack.c.l.b16 %v5707
    %v5786 = vunpack.c.h.b16 %v5707
    %v5787 = vunpack.c.l.b16 %v5708
    %v5788 = vunpack.c.h.b16 %v5708
    %v5789 = vunpack.c.l.b16 %v5709
    %v5790 = vunpack.c.h.b16 %v5709
    %v5791 = vunpack.c.l.b16 %v5710
    %v5792 = vunpack.c.h.b16 %v5710
    %v5793 = vunpack.c.l.b16 %v5711
    %v5794 = vunpack.c.h.b16 %v5711
    %v5795 = vunpack.c.l.b16 %v5712
    %v5796 = vunpack.c.h.b16 %v5712
    %v5797 = vunpack.c.l.b16 %v5713
    %v5798 = vunpack.c.h.b16 %v5713
    %v5799 = vunpack.c.l.b16 %v5714
    %v5800 = vunpack.c.h.b16 %v5714
    %v5801 = vunpack.c.l.b16 %v5715
    %v5802 = vunpack.c.h.b16 %v5715
    %v5803 = vunpack.c.l.b16 %v5716
    %v5804 = vunpack.c.h.b16 %v5716
    %v5805 = vunpack.c.l.b16 %v5717
    %v5806 = vunpack.c.h.b16 %v5717
    %v5807 = vunpack.c.l.b16 %v5718
    %v5808 = vunpack.c.h.b16 %v5718
    %v5809 = vunpack.c.l.b16 %v5719
    %v5810 = vunpack.c.h.b16 %v5719
    %v5811 = vunpack.c.l.b16 %v5720
    %v5812 = vunpack.c.h.b16 %v5720
    %v5813 = vunpack.c.l.b16 %v5721
    %v5814 = vunpack.c.h.b16 %v5721
    %v5815 = vunpack.c.l.b16 %v5722
    %v5816 = vunpack.c.h.b16 %v5722
    %v5817 = vunpack.c.l.b16 %v5723
    %v5818 = vunpack.c.h.b16 %v5723
    %v5819 = vunpack.c.l.b16 %v5724
    %v5820 = vunpack.c.h.b16 %v5724
    %v5821 = vpack.c.b16 %v5761, %v5757
    %v5822 = vpack.c.b16 %v5762, %v5758
    %v5823 = vpack.c.b16 %v5763, %v5759
    %v5824 = vpack.c.b16 %v5764, %v5760
    %v5825 = vpack.c.b16 %v5769, %v5765
    %v5826 = vpack.c.b16 %v5770, %v5766
    %v5827 = vpack.c.b16 %v5771, %v5767
    %v5828 = vpack.c.b16 %v5772, %v5768
    %v5829 = vpack.c.b16 %v5777, %v5773
    %v5830 = vpack.c.b16 %v5778, %v5774
    %v5831 = vpack.c.b16 %v5779, %v5775
    %v5832 = vpack.c.b16 %v5780, %v5776
    %v5833 = vpack.c.b16 %v5785, %v5781
    %v5834 = vpack.c.b16 %v5786, %v5782
    %v5835 = vpack.c.b16 %v5787, %v5783
    %v5836 = vpack.c.b16 %v5788, %v5784
    %v5837 = vpack.c.b16 %v5793, %v5789
    %v5838 = vpack.c.b16 %v5794, %v5790
    %v5839 = vpack.c.b16 %v5795, %v5791
    %v5840 = vpack.c.b16 %v5796, %v5792
    %v5841 = vpack.c.b16 %v5801, %v5797
    %v5842 = vpack.c.b16 %v5802, %v5798
    %v5843 = vpack.c.b16 %v5803, %v5799
    %v5844 = vpack.c.b16 %v5804, %v5800
    %v5845 = vpack.c.b16 %v5809, %v5805
    %v5846 = vpack.c.b16 %v5810, %v5806
    %v5847 = vpack.c.b16 %v5811, %v5807
    %v5848 = vpack.c.b16 %v5812, %v5808
    %v5849 = vpack.c.b16 %v5817, %v5813
    %v5850 = vpack.c.b16 %v5818, %v5814
    %v5851 = vpack.c.b16 %v5819, %v5815
    %v5852 = vpack.c.b16 %v5820, %v5816
    %5885 = vmatprep.subr.bf16.mxu0 %v5822
    %5886 = vmatpush1.bf16.msra.mxu0 %v5821
    %5887 = vmatprep.subr.bf16.mxu0 %v5826
    %5888 = vmatpush1.bf16.msra.mxu0 %v5825
    %5889 = vmatprep.subr.bf16.mxu0 %v5830
    %5890 = vmatpush1.bf16.msra.mxu0 %v5829
    %5891 = vmatprep.subr.bf16.mxu0 %v5834
    %5892 = vmatpush1.bf16.msra.mxu0 %v5833
    %5893 = vmatprep.subr.bf16.mxu0 %v5838
    %5894 = vmatpush1.bf16.msra.mxu0 %v5837
    %5895 = vmatprep.subr.bf16.mxu0 %v5842
    %5896 = vmatpush1.bf16.msra.mxu0 %v5841
    %5897 = vmatprep.subr.bf16.mxu0 %v5846
    %5898 = vmatpush1.bf16.msra.mxu0 %v5845
    %5899 = vmatprep.subr.bf16.mxu0 %v5850
    %5900 = vmatpush1.bf16.msra.mxu0 %v5849
    %5901 = vmatprep.subr.bf16.mxu0 0
    %5902 = vmatpush1.bf16.msra.mxu0 0
    %5903 = vmatprep.subr.bf16.mxu0 0
    %5904 = vmatpush1.bf16.msra.mxu0 0
    %5905 = vmatprep.subr.bf16.mxu0 0
    %5906 = vmatpush1.bf16.msra.mxu0 0
    %5907 = vmatprep.subr.bf16.mxu0 0
    %5908 = vmatpush1.bf16.msra.mxu0 0
    %5909 = vmatprep.subr.bf16.mxu0 0
    %5910 = vmatpush1.bf16.msra.mxu0 0
    %5911 = vmatprep.subr.bf16.mxu0 0
    %5912 = vmatpush1.bf16.msra.mxu0 0
    %5913 = vmatprep.subr.bf16.mxu0 0
    %5914 = vmatpush1.bf16.msra.mxu0 0
    %5915 = vmatprep.subr.bf16.mxu0 0
    %5916 = vmatpush1.bf16.msra.mxu0 0
    %5917 = vmatprep.mubr.bf16.mxu0 0
    %5918 = vmatmul.mubr.bf16.gmra.mrb[0].mxu0 %v5692
    %v5919 = vpop.f32.mrb[0].mxu0
    %v5920 = vadd.f32 0.0, %v5919
    %v5921 = vpop.f32.mrb[0].mxu0
    %v5922 = vadd.f32 0.0, %v5921
    %v5923 = vpop.f32.mrb[0].mxu0
    %v5924 = vadd.f32 0.0, %v5923
    %v5925 = vpop.f32.mrb[0].mxu0
    %v5926 = vadd.f32 0.0, %v5925
    %5927 = vdwg.mxu0
    %5928 = vmatprep.subr.bf16.mxu0 %v5824
    %5929 = vmatpush1.bf16.msra.mxu0 %v5823
    %5930 = vmatprep.subr.bf16.mxu0 %v5828
    %5931 = vmatpush1.bf16.msra.mxu0 %v5827
    %5932 = vmatprep.subr.bf16.mxu0 %v5832
    %5933 = vmatpush1.bf16.msra.mxu0 %v5831
    %5934 = vmatprep.subr.bf16.mxu0 %v5836
    %5935 = vmatpush1.bf16.msra.mxu0 %v5835
    %5936 = vmatprep.subr.bf16.mxu0 %v5840
    %5937 = vmatpush1.bf16.msra.mxu0 %v5839
    %5938 = vmatprep.subr.bf16.mxu0 %v5844
    %5939 = vmatpush1.bf16.msra.mxu0 %v5843
    %5940 = vmatprep.subr.bf16.mxu0 %v5848
    %5941 = vmatpush1.bf16.msra.mxu0 %v5847
    %5942 = vmatprep.subr.bf16.mxu0 %v5852
    %5943 = vmatpush1.bf16.msra.mxu0 %v5851
    %5944 = vmatprep.subr.bf16.mxu0 0
    %5945 = vmatpush1.bf16.msra.mxu0 0
    %5946 = vmatprep.subr.bf16.mxu0 0
    %5947 = vmatpush1.bf16.msra.mxu0 0
    %5948 = vmatprep.subr.bf16.mxu0 0
    %5949 = vmatpush1.bf16.msra.mxu0 0
    %5950 = vmatprep.subr.bf16.mxu0 0
    %5951 = vmatpush1.bf16.msra.mxu0 0
    %5952 = vmatprep.subr.bf16.mxu0 0
    %5953 = vmatpush1.bf16.msra.mxu0 0
    %5954 = vmatprep.subr.bf16.mxu0 0
    %5955 = vmatpush1.bf16.msra.mxu0 0
    %5956 = vmatprep.subr.bf16.mxu0 0
    %5957 = vmatpush1.bf16.msra.mxu0 0
    %5958 = vmatprep.subr.bf16.mxu0 0
    %5959 = vmatpush1.bf16.msra.mxu0 0
    %5960 = vmatprep.mubr.bf16.mxu0 0
    %5961 = vmatmul.mubr.bf16.gmra.mrb[0].mxu0 %v5692
    %v5962 = vpop.f32.mrb[0].mxu0
    %v5963 = vadd.f32 0.0, %v5962
    %v5964 = vpop.f32.mrb[0].mxu0
    %v5965 = vadd.f32 0.0, %v5964
    %v5966 = vpop.f32.mrb[0].mxu0
    %v5967 = vadd.f32 0.0, %v5966
    %v5968 = vpop.f32.mrb[0].mxu0
    %v5969 = vadd.f32 0.0, %v5968
    %5970 = vdwg.mxu0
    %v5971 = vadd.f32 %v5684, %v5920
    %v5972 = vadd.f32 %v5685, %v5922
    %v5973 = vadd.f32 %v5686, %v5963
    %v5974 = vadd.f32 %v5687, %v5965
    %v5975 = vadd.f32 %v5688, %v5924
    %v5976 = vadd.f32 %v5689, %v5926
    %v5977 = vadd.f32 %v5690, %v5967
    %v5978 = vadd.f32 %v5691, %v5969
    %v5979 = vxor.u32 %v5971, 2147483648
    %v5980 = vxor.u32 %v5975, 2147483648
    %v5981 = vmul.f32 %v5979, 1.442695
    %v5982 = vpow.pop %v5981
    %v5983 = vmul.f32 %v5980, 1.442695
    %v5984 = vpow.pop %v5983
    %v5985 = vadd.f32 %v5982, 1.0
    %v5986 = vadd.f32 %v5984, 1.0
    %v5987 = vrcp.pop %v5985
    %v5988 = vmul.f32 1.0, %v5987
    %v5989 = vrcp.pop %v5986
    %v5990 = vmul.f32 1.0, %v5989
    %v5991 = vxor.u32 %v5972, 2147483648
    %v5992 = vxor.u32 %v5976, 2147483648
    %v5993 = vmul.f32 %v5991, 1.442695
    %v5994 = vpow.pop %v5993
    %v5995 = vmul.f32 %v5992, 1.442695
    %v5996 = vpow.pop %v5995
    %v5997 = vadd.f32 %v5994, 1.0
    %v5998 = vadd.f32 %v5996, 1.0
    %v5999 = vrcp.pop %v5997
    %v6000 = vmul.f32 1.0, %v5999
    %v6001 = vrcp.pop %v5998
    %v6002 = vmul.f32 1.0, %v6001
    %v6003 = vtanh.pop %v5973
    %v6004 = vtanh.pop %v5977
    %v6005 = vxor.u32 %v5974, 2147483648
    %v6006 = vxor.u32 %v5978, 2147483648
    %v6007 = vmul.f32 %v6005, 1.442695
    %v6008 = vpow.pop %v6007
    %v6009 = vmul.f32 %v6006, 1.442695
    %v6010 = vpow.pop %v6009
    %v6011 = vadd.f32 %v6008, 1.0
    %v6012 = vadd.f32 %v6010, 1.0
    %v6013 = vrcp.pop %v6011
    %v6014 = vmul.f32 1.0, %v6013
    %v6015 = vrcp.pop %v6012
    %v6016 = vmul.f32 1.0, %v6015
    %v6017 = vmul.f32 %v6000, %v5681
    %v6018 = vmul.f32 %v6002, %v5682
    %v6019 = vmul.f32 %v5988, %v6003
    %v6020 = vmul.f32 %v5990, %v6004
    %v6021 = vadd.f32 %v6017, %v6019
    %v6022 = vadd.f32 %v6018, %v6020
    %v6023 = vtanh.pop %v6021
    %v6024 = vtanh.pop %v6022
    %v6025 = vmul.f32 %v6014, %v6023
    %v6026 = vmul.f32 %v6016, %v6024
    %s6027 = scalar_lea.vmem %s96, 32
    %v6028 = vld [vmem:[%s6027] sm:$0xff]
    %v6029 = vld [vmem:[%s6027 + $0x8] sm:$0xff]
    %v6030 = vsub.f32 %v6025, %v5679
    %v6031 = vsub.f32 %v6026, %v5680
    %6033 = vset.pattern.permute.xlu0 0
    %6034 = vperm.xlu0 %6033, %v6028
    %v6035 = vpop.permute.xlu0 %6034
    %6038 = vset.pattern.permute.xlu0 0
    %6039 = vperm.xlu0 %6038, %v6029
    %v6040 = vpop.permute.xlu0 %6039
    %v6042 = vmul.f32 %v6035, %v6030
    %v6043 = vmul.f32 %v6040, %v6031
    %v6044 = vadd.f32 %v5679, %v6042
    %v6045 = vadd.f32 %v5680, %v6043
    %6046 = vst [vmem:[%s1776] sm:$0xff] %v6044
    %6047 = vst [vmem:[%s1776 + $0x8] sm:$0xff] %v6045
    %v6048 = vsub.f32 %v6021, %v5681
    %v6049 = vsub.f32 %v6022, %v5682
    %v6050 = vmul.f32 %v6035, %v6048
    %v6051 = vmul.f32 %v6040, %v6049
    %v6052 = vadd.f32 %v5681, %v6050
    %v6053 = vadd.f32 %v5682, %v6051
    %6054 = vst [vmem:[%s1779] sm:$0xff] %v6052
    %6055 = vst [vmem:[%s1779 + $0x8] sm:$0xff] %v6053
    %v6056 = vmul.f32 %v6035, %v6025
    %v6057 = vmul.f32 %v6040, %v6026
    %v6058 = vpack.c.bf16 %v6057, %v6056
    %v6060 = vunpack.c.l.b16 %v6058
    %v6061 = vunpack.c.h.b16 %v6058
    %v6062 = vpack.c.b16 %v6060, %v6060
    %v6063 = vpack.c.b16 %v6061, %v6061
    %s6066 = scalar_lea.vmem [#allocation12], 16
    %6067 = vst [vmem:[%s6066] sm:$0xf] %v6062
    %6068 = vst [vmem:[%s6066 + $0x4] sm:$0xf] %v6063
    %v6069 = vld [vmem:[#allocation2] sm:$0xff]
    %v6070 = vld [vmem:[#allocation2 + $0x8] sm:$0xff]
    %v6071 = vld [vmem:[#allocation3] sm:$0xff]
    %v6072 = vld [vmem:[#allocation3 + $0x8] sm:$0xff]
    %s6073 = scalar_lea.vmem [#allocation4], 384
    %v6074 = vld [vmem:[%s6073] sm:$0xff]
    %v6075 = vld [vmem:[%s6073 + $0x8] sm:$0xff]
    %v6076 = vld [vmem:[%s6073 + $0x10] sm:$0xff]
    %v6077 = vld [vmem:[%s6073 + $0x18] sm:$0xff]
    %v6078 = vld [vmem:[%s6073 + $0x20] sm:$0xff]
    %v6079 = vld [vmem:[%s6073 + $0x28] sm:$0xff]
    %v6080 = vld [vmem:[%s6073 + $0x30] sm:$0xff]
    %v6081 = vld [vmem:[%s6073 + $0x38] sm:$0xff]
    %v6082 = vpack.c.bf16 %v6070, %v6069
    %v6083 = vld [vmem:[#allocation9] sm:$0xff]
    %v6084 = vld [vmem:[#allocation9 + $0x8] sm:$0xff]
    %v6085 = vld [vmem:[#allocation9 + $0x10] sm:$0xff]
    %v6086 = vld [vmem:[#allocation9 + $0x18] sm:$0xff]
    %v6087 = vld [vmem:[#allocation9 + $0x20] sm:$0xff]
    %v6088 = vld [vmem:[#allocation9 + $0x28] sm:$0xff]
    %v6089 = vld [vmem:[#allocation9 + $0x30] sm:$0xff]
    %v6090 = vld [vmem:[#allocation9 + $0x38] sm:$0xff]
    %v6091 = vld [vmem:[#allocation9 + $0x40] sm:$0xff]
    %v6092 = vld [vmem:[#allocation9 + $0x48] sm:$0xff]
    %v6093 = vld [vmem:[#allocation9 + $0x50] sm:$0xff]
    %v6094 = vld [vmem:[#allocation9 + $0x58] sm:$0xff]
    %v6095 = vld [vmem:[#allocation9 + $0x60] sm:$0xff]
    %v6096 = vld [vmem:[#allocation9 + $0x68] sm:$0xff]
    %v6097 = vld [vmem:[#allocation9 + $0x70] sm:$0xff]
    %v6098 = vld [vmem:[#allocation9 + $0x78] sm:$0xff]
    %v6099 = vld [vmem:[#allocation9 + $0x80] sm:$0xff]
    %v6100 = vld [vmem:[#allocation9 + $0x88] sm:$0xff]
    %v6101 = vld [vmem:[#allocation9 + $0x90] sm:$0xff]
    %v6102 = vld [vmem:[#allocation9 + $0x98] sm:$0xff]
    %v6103 = vld [vmem:[#allocation9 + $0xa0] sm:$0xff]
    %v6104 = vld [vmem:[#allocation9 + $0xa8] sm:$0xff]
    %v6105 = vld [vmem:[#allocation9 + $0xb0] sm:$0xff]
    %v6106 = vld [vmem:[#allocation9 + $0xb8] sm:$0xff]
    %v6107 = vld [vmem:[#allocation9 + $0xc0] sm:$0xff]
    %v6108 = vld [vmem:[#allocation9 + $0xc8] sm:$0xff]
    %v6109 = vld [vmem:[#allocation9 + $0xd0] sm:$0xff]
    %v6110 = vld [vmem:[#allocation9 + $0xd8] sm:$0xff]
    %v6111 = vld [vmem:[#allocation9 + $0xe0] sm:$0xff]
    %v6112 = vld [vmem:[#allocation9 + $0xe8] sm:$0xff]
    %v6113 = vld [vmem:[#allocation9 + $0xf0] sm:$0xff]
    %v6114 = vld [vmem:[#allocation9 + $0xf8] sm:$0xff]
    %v6147 = vunpack.c.l.b16 %v6083
    %v6148 = vunpack.c.h.b16 %v6083
    %v6149 = vunpack.c.l.b16 %v6084
    %v6150 = vunpack.c.h.b16 %v6084
    %v6151 = vunpack.c.l.b16 %v6085
    %v6152 = vunpack.c.h.b16 %v6085
    %v6153 = vunpack.c.l.b16 %v6086
    %v6154 = vunpack.c.h.b16 %v6086
    %v6155 = vunpack.c.l.b16 %v6087
    %v6156 = vunpack.c.h.b16 %v6087
    %v6157 = vunpack.c.l.b16 %v6088
    %v6158 = vunpack.c.h.b16 %v6088
    %v6159 = vunpack.c.l.b16 %v6089
    %v6160 = vunpack.c.h.b16 %v6089
    %v6161 = vunpack.c.l.b16 %v6090
    %v6162 = vunpack.c.h.b16 %v6090
    %v6163 = vunpack.c.l.b16 %v6091
    %v6164 = vunpack.c.h.b16 %v6091
    %v6165 = vunpack.c.l.b16 %v6092
    %v6166 = vunpack.c.h.b16 %v6092
    %v6167 = vunpack.c.l.b16 %v6093
    %v6168 = vunpack.c.h.b16 %v6093
    %v6169 = vunpack.c.l.b16 %v6094
    %v6170 = vunpack.c.h.b16 %v6094
    %v6171 = vunpack.c.l.b16 %v6095
    %v6172 = vunpack.c.h.b16 %v6095
    %v6173 = vunpack.c.l.b16 %v6096
    %v6174 = vunpack.c.h.b16 %v6096
    %v6175 = vunpack.c.l.b16 %v6097
    %v6176 = vunpack.c.h.b16 %v6097
    %v6177 = vunpack.c.l.b16 %v6098
    %v6178 = vunpack.c.h.b16 %v6098
    %v6179 = vunpack.c.l.b16 %v6099
    %v6180 = vunpack.c.h.b16 %v6099
    %v6181 = vunpack.c.l.b16 %v6100
    %v6182 = vunpack.c.h.b16 %v6100
    %v6183 = vunpack.c.l.b16 %v6101
    %v6184 = vunpack.c.h.b16 %v6101
    %v6185 = vunpack.c.l.b16 %v6102
    %v6186 = vunpack.c.h.b16 %v6102
    %v6187 = vunpack.c.l.b16 %v6103
    %v6188 = vunpack.c.h.b16 %v6103
    %v6189 = vunpack.c.l.b16 %v6104
    %v6190 = vunpack.c.h.b16 %v6104
    %v6191 = vunpack.c.l.b16 %v6105
    %v6192 = vunpack.c.h.b16 %v6105
    %v6193 = vunpack.c.l.b16 %v6106
    %v6194 = vunpack.c.h.b16 %v6106
    %v6195 = vunpack.c.l.b16 %v6107
    %v6196 = vunpack.c.h.b16 %v6107
    %v6197 = vunpack.c.l.b16 %v6108
    %v6198 = vunpack.c.h.b16 %v6108
    %v6199 = vunpack.c.l.b16 %v6109
    %v6200 = vunpack.c.h.b16 %v6109
    %v6201 = vunpack.c.l.b16 %v6110
    %v6202 = vunpack.c.h.b16 %v6110
    %v6203 = vunpack.c.l.b16 %v6111
    %v6204 = vunpack.c.h.b16 %v6111
    %v6205 = vunpack.c.l.b16 %v6112
    %v6206 = vunpack.c.h.b16 %v6112
    %v6207 = vunpack.c.l.b16 %v6113
    %v6208 = vunpack.c.h.b16 %v6113
    %v6209 = vunpack.c.l.b16 %v6114
    %v6210 = vunpack.c.h.b16 %v6114
    %v6211 = vpack.c.b16 %v6151, %v6147
    %v6212 = vpack.c.b16 %v6152, %v6148
    %v6213 = vpack.c.b16 %v6153, %v6149
    %v6214 = vpack.c.b16 %v6154, %v6150
    %v6215 = vpack.c.b16 %v6159, %v6155
    %v6216 = vpack.c.b16 %v6160, %v6156
    %v6217 = vpack.c.b16 %v6161, %v6157
    %v6218 = vpack.c.b16 %v6162, %v6158
    %v6219 = vpack.c.b16 %v6167, %v6163
    %v6220 = vpack.c.b16 %v6168, %v6164
    %v6221 = vpack.c.b16 %v6169, %v6165
    %v6222 = vpack.c.b16 %v6170, %v6166
    %v6223 = vpack.c.b16 %v6175, %v6171
    %v6224 = vpack.c.b16 %v6176, %v6172
    %v6225 = vpack.c.b16 %v6177, %v6173
    %v6226 = vpack.c.b16 %v6178, %v6174
    %v6227 = vpack.c.b16 %v6183, %v6179
    %v6228 = vpack.c.b16 %v6184, %v6180
    %v6229 = vpack.c.b16 %v6185, %v6181
    %v6230 = vpack.c.b16 %v6186, %v6182
    %v6231 = vpack.c.b16 %v6191, %v6187
    %v6232 = vpack.c.b16 %v6192, %v6188
    %v6233 = vpack.c.b16 %v6193, %v6189
    %v6234 = vpack.c.b16 %v6194, %v6190
    %v6235 = vpack.c.b16 %v6199, %v6195
    %v6236 = vpack.c.b16 %v6200, %v6196
    %v6237 = vpack.c.b16 %v6201, %v6197
    %v6238 = vpack.c.b16 %v6202, %v6198
    %v6239 = vpack.c.b16 %v6207, %v6203
    %v6240 = vpack.c.b16 %v6208, %v6204
    %v6241 = vpack.c.b16 %v6209, %v6205
    %v6242 = vpack.c.b16 %v6210, %v6206
    %6275 = vmatprep.subr.bf16.mxu0 %v6212
    %6276 = vmatpush1.bf16.msra.mxu0 %v6211
    %6277 = vmatprep.subr.bf16.mxu0 %v6216
    %6278 = vmatpush1.bf16.msra.mxu0 %v6215
    %6279 = vmatprep.subr.bf16.mxu0 %v6220
    %6280 = vmatpush1.bf16.msra.mxu0 %v6219
    %6281 = vmatprep.subr.bf16.mxu0 %v6224
    %6282 = vmatpush1.bf16.msra.mxu0 %v6223
    %6283 = vmatprep.subr.bf16.mxu0 %v6228
    %6284 = vmatpush1.bf16.msra.mxu0 %v6227
    %6285 = vmatprep.subr.bf16.mxu0 %v6232
    %6286 = vmatpush1.bf16.msra.mxu0 %v6231
    %6287 = vmatprep.subr.bf16.mxu0 %v6236
    %6288 = vmatpush1.bf16.msra.mxu0 %v6235
    %6289 = vmatprep.subr.bf16.mxu0 %v6240
    %6290 = vmatpush1.bf16.msra.mxu0 %v6239
    %6291 = vmatprep.subr.bf16.mxu0 0
    %6292 = vmatpush1.bf16.msra.mxu0 0
    %6293 = vmatprep.subr.bf16.mxu0 0
    %6294 = vmatpush1.bf16.msra.mxu0 0
    %6295 = vmatprep.subr.bf16.mxu0 0
    %6296 = vmatpush1.bf16.msra.mxu0 0
    %6297 = vmatprep.subr.bf16.mxu0 0
    %6298 = vmatpush1.bf16.msra.mxu0 0
    %6299 = vmatprep.subr.bf16.mxu0 0
    %6300 = vmatpush1.bf16.msra.mxu0 0
    %6301 = vmatprep.subr.bf16.mxu0 0
    %6302 = vmatpush1.bf16.msra.mxu0 0
    %6303 = vmatprep.subr.bf16.mxu0 0
    %6304 = vmatpush1.bf16.msra.mxu0 0
    %6305 = vmatprep.subr.bf16.mxu0 0
    %6306 = vmatpush1.bf16.msra.mxu0 0
    %6307 = vmatprep.mubr.bf16.mxu0 0
    %6308 = vmatmul.mubr.bf16.gmra.mrb[0].mxu0 %v6082
    %v6309 = vpop.f32.mrb[0].mxu0
    %v6310 = vadd.f32 0.0, %v6309
    %v6311 = vpop.f32.mrb[0].mxu0
    %v6312 = vadd.f32 0.0, %v6311
    %v6313 = vpop.f32.mrb[0].mxu0
    %v6314 = vadd.f32 0.0, %v6313
    %v6315 = vpop.f32.mrb[0].mxu0
    %v6316 = vadd.f32 0.0, %v6315
    %6317 = vdwg.mxu0
    %6318 = vmatprep.subr.bf16.mxu0 %v6214
    %6319 = vmatpush1.bf16.msra.mxu0 %v6213
    %6320 = vmatprep.subr.bf16.mxu0 %v6218
    %6321 = vmatpush1.bf16.msra.mxu0 %v6217
    %6322 = vmatprep.subr.bf16.mxu0 %v6222
    %6323 = vmatpush1.bf16.msra.mxu0 %v6221
    %6324 = vmatprep.subr.bf16.mxu0 %v6226
    %6325 = vmatpush1.bf16.msra.mxu0 %v6225
    %6326 = vmatprep.subr.bf16.mxu0 %v6230
    %6327 = vmatpush1.bf16.msra.mxu0 %v6229
    %6328 = vmatprep.subr.bf16.mxu0 %v6234
    %6329 = vmatpush1.bf16.msra.mxu0 %v6233
    %6330 = vmatprep.subr.bf16.mxu0 %v6238
    %6331 = vmatpush1.bf16.msra.mxu0 %v6237
    %6332 = vmatprep.subr.bf16.mxu0 %v6242
    %6333 = vmatpush1.bf16.msra.mxu0 %v6241
    %6334 = vmatprep.subr.bf16.mxu0 0
    %6335 = vmatpush1.bf16.msra.mxu0 0
    %6336 = vmatprep.subr.bf16.mxu0 0
    %6337 = vmatpush1.bf16.msra.mxu0 0
    %6338 = vmatprep.subr.bf16.mxu0 0
    %6339 = vmatpush1.bf16.msra.mxu0 0
    %6340 = vmatprep.subr.bf16.mxu0 0
    %6341 = vmatpush1.bf16.msra.mxu0 0
    %6342 = vmatprep.subr.bf16.mxu0 0
    %6343 = vmatpush1.bf16.msra.mxu0 0
    %6344 = vmatprep.subr.bf16.mxu0 0
    %6345 = vmatpush1.bf16.msra.mxu0 0
    %6346 = vmatprep.subr.bf16.mxu0 0
    %6347 = vmatpush1.bf16.msra.mxu0 0
    %6348 = vmatprep.subr.bf16.mxu0 0
    %6349 = vmatpush1.bf16.msra.mxu0 0
    %6350 = vmatprep.mubr.bf16.mxu0 0
    %6351 = vmatmul.mubr.bf16.gmra.mrb[0].mxu0 %v6082
    %v6352 = vpop.f32.mrb[0].mxu0
    %v6353 = vadd.f32 0.0, %v6352
    %v6354 = vpop.f32.mrb[0].mxu0
    %v6355 = vadd.f32 0.0, %v6354
    %v6356 = vpop.f32.mrb[0].mxu0
    %v6357 = vadd.f32 0.0, %v6356
    %v6358 = vpop.f32.mrb[0].mxu0
    %v6359 = vadd.f32 0.0, %v6358
    %6360 = vdwg.mxu0
    %v6361 = vadd.f32 %v6074, %v6310
    %v6362 = vadd.f32 %v6075, %v6312
    %v6363 = vadd.f32 %v6076, %v6353
    %v6364 = vadd.f32 %v6077, %v6355
    %v6365 = vadd.f32 %v6078, %v6314
    %v6366 = vadd.f32 %v6079, %v6316
    %v6367 = vadd.f32 %v6080, %v6357
    %v6368 = vadd.f32 %v6081, %v6359
    %v6369 = vxor.u32 %v6361, 2147483648
    %v6370 = vxor.u32 %v6365, 2147483648
    %v6371 = vmul.f32 %v6369, 1.442695
    %v6372 = vpow.pop %v6371
    %v6373 = vmul.f32 %v6370, 1.442695
    %v6374 = vpow.pop %v6373
    %v6375 = vadd.f32 %v6372, 1.0
    %v6376 = vadd.f32 %v6374, 1.0
    %v6377 = vrcp.pop %v6375
    %v6378 = vmul.f32 1.0, %v6377
    %v6379 = vrcp.pop %v6376
    %v6380 = vmul.f32 1.0, %v6379
    %v6381 = vxor.u32 %v6362, 2147483648
    %v6382 = vxor.u32 %v6366, 2147483648
    %v6383 = vmul.f32 %v6381, 1.442695
    %v6384 = vpow.pop %v6383
    %v6385 = vmul.f32 %v6382, 1.442695
    %v6386 = vpow.pop %v6385
    %v6387 = vadd.f32 %v6384, 1.0
    %v6388 = vadd.f32 %v6386, 1.0
    %v6389 = vrcp.pop %v6387
    %v6390 = vmul.f32 1.0, %v6389
    %v6391 = vrcp.pop %v6388
    %v6392 = vmul.f32 1.0, %v6391
    %v6393 = vtanh.pop %v6363
    %v6394 = vtanh.pop %v6367
    %v6395 = vxor.u32 %v6364, 2147483648
    %v6396 = vxor.u32 %v6368, 2147483648
    %v6397 = vmul.f32 %v6395, 1.442695
    %v6398 = vpow.pop %v6397
    %v6399 = vmul.f32 %v6396, 1.442695
    %v6400 = vpow.pop %v6399
    %v6401 = vadd.f32 %v6398, 1.0
    %v6402 = vadd.f32 %v6400, 1.0
    %v6403 = vrcp.pop %v6401
    %v6404 = vmul.f32 1.0, %v6403
    %v6405 = vrcp.pop %v6402
    %v6406 = vmul.f32 1.0, %v6405
    %v6407 = vmul.f32 %v6390, %v6071
    %v6408 = vmul.f32 %v6392, %v6072
    %v6409 = vmul.f32 %v6378, %v6393
    %v6410 = vmul.f32 %v6380, %v6394
    %v6411 = vadd.f32 %v6407, %v6409
    %v6412 = vadd.f32 %v6408, %v6410
    %v6413 = vtanh.pop %v6411
    %v6414 = vtanh.pop %v6412
    %v6415 = vmul.f32 %v6404, %v6413
    %v6416 = vmul.f32 %v6406, %v6414
    %s6417 = scalar_lea.vmem %s0, 96
    %v6418 = vld [vmem:[%s6417] sm:$0xff]
    %v6419 = vld [vmem:[%s6417 + $0x8] sm:$0xff]
    %v6420 = vsub.f32 %v6415, %v6069
    %v6421 = vsub.f32 %v6416, %v6070
    %6423 = vset.pattern.permute.xlu0 0
    %6424 = vperm.xlu0 %6423, %v6418
    %v6425 = vpop.permute.xlu0 %6424
    %6428 = vset.pattern.permute.xlu0 0
    %6429 = vperm.xlu0 %6428, %v6419
    %v6430 = vpop.permute.xlu0 %6429
    %v6432 = vmul.f32 %v6425, %v6420
    %v6433 = vmul.f32 %v6430, %v6421
    %v6434 = vadd.f32 %v6069, %v6432
    %v6435 = vadd.f32 %v6070, %v6433
    %6436 = vst [vmem:[#allocation2] sm:$0xff] %v6434
    %6437 = vst [vmem:[#allocation2 + $0x8] sm:$0xff] %v6435
    %v6438 = vsub.f32 %v6411, %v6071
    %v6439 = vsub.f32 %v6412, %v6072
    %v6440 = vmul.f32 %v6425, %v6438
    %v6441 = vmul.f32 %v6430, %v6439
    %v6442 = vadd.f32 %v6071, %v6440
    %v6443 = vadd.f32 %v6072, %v6441
    %6444 = vst [vmem:[#allocation3] sm:$0xff] %v6442
    %6445 = vst [vmem:[#allocation3 + $0x8] sm:$0xff] %v6443
    %v6446 = vmul.f32 %v6425, %v6415
    %v6447 = vmul.f32 %v6430, %v6416
    %v6448 = vpack.c.bf16 %v6447, %v6446
    %v6450 = vunpack.c.l.b16 %v6448
    %v6451 = vunpack.c.h.b16 %v6448
    %v6452 = vpack.c.b16 %v6450, %v6450
    %v6453 = vpack.c.b16 %v6451, %v6451
    %s6456 = scalar_lea.vmem [#allocation11], 48
    %6457 = vst [vmem:[%s6456] sm:$0xf] %v6452
    %6458 = vst [vmem:[%s6456 + $0x4] sm:$0xf] %v6453
    %v6459 = vld [vmem:[%s1776] sm:$0xff]
    %v6460 = vld [vmem:[%s1776 + $0x8] sm:$0xff]
    %v6461 = vld [vmem:[%s1779] sm:$0xff]
    %v6462 = vld [vmem:[%s1779 + $0x8] sm:$0xff]
    %s6463 = scalar_lea.vmem [#allocation5], 64
    %v6464 = vld [vmem:[%s6463] sm:$0xff]
    %v6465 = vld [vmem:[%s6463 + $0x8] sm:$0xff]
    %v6466 = vld [vmem:[%s6463 + $0x10] sm:$0xff]
    %v6467 = vld [vmem:[%s6463 + $0x18] sm:$0xff]
    %v6468 = vld [vmem:[%s6463 + $0x20] sm:$0xff]
    %v6469 = vld [vmem:[%s6463 + $0x28] sm:$0xff]
    %v6470 = vld [vmem:[%s6463 + $0x30] sm:$0xff]
    %v6471 = vld [vmem:[%s6463 + $0x38] sm:$0xff]
    %v6472 = vpack.c.bf16 %v6460, %v6459
    %v6473 = vld [vmem:[%s1792] sm:$0xff]
    %v6474 = vld [vmem:[%s1792 + $0x8] sm:$0xff]
    %v6475 = vld [vmem:[%s1792 + $0x10] sm:$0xff]
    %v6476 = vld [vmem:[%s1792 + $0x18] sm:$0xff]
    %v6477 = vld [vmem:[%s1792 + $0x20] sm:$0xff]
    %v6478 = vld [vmem:[%s1792 + $0x28] sm:$0xff]
    %v6479 = vld [vmem:[%s1792 + $0x30] sm:$0xff]
    %v6480 = vld [vmem:[%s1792 + $0x38] sm:$0xff]
    %v6481 = vld [vmem:[%s1792 + $0x40] sm:$0xff]
    %v6482 = vld [vmem:[%s1792 + $0x48] sm:$0xff]
    %v6483 = vld [vmem:[%s1792 + $0x50] sm:$0xff]
    %v6484 = vld [vmem:[%s1792 + $0x58] sm:$0xff]
    %v6485 = vld [vmem:[%s1792 + $0x60] sm:$0xff]
    %v6486 = vld [vmem:[%s1792 + $0x68] sm:$0xff]
    %v6487 = vld [vmem:[%s1792 + $0x70] sm:$0xff]
    %v6488 = vld [vmem:[%s1792 + $0x78] sm:$0xff]
    %v6489 = vld [vmem:[%s1792 + $0x80] sm:$0xff]
    %v6490 = vld [vmem:[%s1792 + $0x88] sm:$0xff]
    %v6491 = vld [vmem:[%s1792 + $0x90] sm:$0xff]
    %v6492 = vld [vmem:[%s1792 + $0x98] sm:$0xff]
    %v6493 = vld [vmem:[%s1792 + $0xa0] sm:$0xff]
    %v6494 = vld [vmem:[%s1792 + $0xa8] sm:$0xff]
    %v6495 = vld [vmem:[%s1792 + $0xb0] sm:$0xff]
    %v6496 = vld [vmem:[%s1792 + $0xb8] sm:$0xff]
    %v6497 = vld [vmem:[%s1792 + $0xc0] sm:$0xff]
    %v6498 = vld [vmem:[%s1792 + $0xc8] sm:$0xff]
    %v6499 = vld [vmem:[%s1792 + $0xd0] sm:$0xff]
    %v6500 = vld [vmem:[%s1792 + $0xd8] sm:$0xff]
    %v6501 = vld [vmem:[%s1792 + $0xe0] sm:$0xff]
    %v6502 = vld [vmem:[%s1792 + $0xe8] sm:$0xff]
    %v6503 = vld [vmem:[%s1792 + $0xf0] sm:$0xff]
    %v6504 = vld [vmem:[%s1792 + $0xf8] sm:$0xff]
    %v6537 = vunpack.c.l.b16 %v6473
    %v6538 = vunpack.c.h.b16 %v6473
    %v6539 = vunpack.c.l.b16 %v6474
    %v6540 = vunpack.c.h.b16 %v6474
    %v6541 = vunpack.c.l.b16 %v6475
    %v6542 = vunpack.c.h.b16 %v6475
    %v6543 = vunpack.c.l.b16 %v6476
    %v6544 = vunpack.c.h.b16 %v6476
    %v6545 = vunpack.c.l.b16 %v6477
    %v6546 = vunpack.c.h.b16 %v6477
    %v6547 = vunpack.c.l.b16 %v6478
    %v6548 = vunpack.c.h.b16 %v6478
    %v6549 = vunpack.c.l.b16 %v6479
    %v6550 = vunpack.c.h.b16 %v6479
    %v6551 = vunpack.c.l.b16 %v6480
    %v6552 = vunpack.c.h.b16 %v6480
    %v6553 = vunpack.c.l.b16 %v6481
    %v6554 = vunpack.c.h.b16 %v6481
    %v6555 = vunpack.c.l.b16 %v6482
    %v6556 = vunpack.c.h.b16 %v6482
    %v6557 = vunpack.c.l.b16 %v6483
    %v6558 = vunpack.c.h.b16 %v6483
    %v6559 = vunpack.c.l.b16 %v6484
    %v6560 = vunpack.c.h.b16 %v6484
    %v6561 = vunpack.c.l.b16 %v6485
    %v6562 = vunpack.c.h.b16 %v6485
    %v6563 = vunpack.c.l.b16 %v6486
    %v6564 = vunpack.c.h.b16 %v6486
    %v6565 = vunpack.c.l.b16 %v6487
    %v6566 = vunpack.c.h.b16 %v6487
    %v6567 = vunpack.c.l.b16 %v6488
    %v6568 = vunpack.c.h.b16 %v6488
    %v6569 = vunpack.c.l.b16 %v6489
    %v6570 = vunpack.c.h.b16 %v6489
    %v6571 = vunpack.c.l.b16 %v6490
    %v6572 = vunpack.c.h.b16 %v6490
    %v6573 = vunpack.c.l.b16 %v6491
    %v6574 = vunpack.c.h.b16 %v6491
    %v6575 = vunpack.c.l.b16 %v6492
    %v6576 = vunpack.c.h.b16 %v6492
    %v6577 = vunpack.c.l.b16 %v6493
    %v6578 = vunpack.c.h.b16 %v6493
    %v6579 = vunpack.c.l.b16 %v6494
    %v6580 = vunpack.c.h.b16 %v6494
    %v6581 = vunpack.c.l.b16 %v6495
    %v6582 = vunpack.c.h.b16 %v6495
    %v6583 = vunpack.c.l.b16 %v6496
    %v6584 = vunpack.c.h.b16 %v6496
    %v6585 = vunpack.c.l.b16 %v6497
    %v6586 = vunpack.c.h.b16 %v6497
    %v6587 = vunpack.c.l.b16 %v6498
    %v6588 = vunpack.c.h.b16 %v6498
    %v6589 = vunpack.c.l.b16 %v6499
    %v6590 = vunpack.c.h.b16 %v6499
    %v6591 = vunpack.c.l.b16 %v6500
    %v6592 = vunpack.c.h.b16 %v6500
    %v6593 = vunpack.c.l.b16 %v6501
    %v6594 = vunpack.c.h.b16 %v6501
    %v6595 = vunpack.c.l.b16 %v6502
    %v6596 = vunpack.c.h.b16 %v6502
    %v6597 = vunpack.c.l.b16 %v6503
    %v6598 = vunpack.c.h.b16 %v6503
    %v6599 = vunpack.c.l.b16 %v6504
    %v6600 = vunpack.c.h.b16 %v6504
    %v6601 = vpack.c.b16 %v6541, %v6537
    %v6602 = vpack.c.b16 %v6542, %v6538
    %v6603 = vpack.c.b16 %v6543, %v6539
    %v6604 = vpack.c.b16 %v6544, %v6540
    %v6605 = vpack.c.b16 %v6549, %v6545
    %v6606 = vpack.c.b16 %v6550, %v6546
    %v6607 = vpack.c.b16 %v6551, %v6547
    %v6608 = vpack.c.b16 %v6552, %v6548
    %v6609 = vpack.c.b16 %v6557, %v6553
    %v6610 = vpack.c.b16 %v6558, %v6554
    %v6611 = vpack.c.b16 %v6559, %v6555
    %v6612 = vpack.c.b16 %v6560, %v6556
    %v6613 = vpack.c.b16 %v6565, %v6561
    %v6614 = vpack.c.b16 %v6566, %v6562
    %v6615 = vpack.c.b16 %v6567, %v6563
    %v6616 = vpack.c.b16 %v6568, %v6564
    %v6617 = vpack.c.b16 %v6573, %v6569
    %v6618 = vpack.c.b16 %v6574, %v6570
    %v6619 = vpack.c.b16 %v6575, %v6571
    %v6620 = vpack.c.b16 %v6576, %v6572
    %v6621 = vpack.c.b16 %v6581, %v6577
    %v6622 = vpack.c.b16 %v6582, %v6578
    %v6623 = vpack.c.b16 %v6583, %v6579
    %v6624 = vpack.c.b16 %v6584, %v6580
    %v6625 = vpack.c.b16 %v6589, %v6585
    %v6626 = vpack.c.b16 %v6590, %v6586
    %v6627 = vpack.c.b16 %v6591, %v6587
    %v6628 = vpack.c.b16 %v6592, %v6588
    %v6629 = vpack.c.b16 %v6597, %v6593
    %v6630 = vpack.c.b16 %v6598, %v6594
    %v6631 = vpack.c.b16 %v6599, %v6595
    %v6632 = vpack.c.b16 %v6600, %v6596
    %6665 = vmatprep.subr.bf16.mxu0 %v6602
    %6666 = vmatpush1.bf16.msra.mxu0 %v6601
    %6667 = vmatprep.subr.bf16.mxu0 %v6606
    %6668 = vmatpush1.bf16.msra.mxu0 %v6605
    %6669 = vmatprep.subr.bf16.mxu0 %v6610
    %6670 = vmatpush1.bf16.msra.mxu0 %v6609
    %6671 = vmatprep.subr.bf16.mxu0 %v6614
    %6672 = vmatpush1.bf16.msra.mxu0 %v6613
    %6673 = vmatprep.subr.bf16.mxu0 %v6618
    %6674 = vmatpush1.bf16.msra.mxu0 %v6617
    %6675 = vmatprep.subr.bf16.mxu0 %v6622
    %6676 = vmatpush1.bf16.msra.mxu0 %v6621
    %6677 = vmatprep.subr.bf16.mxu0 %v6626
    %6678 = vmatpush1.bf16.msra.mxu0 %v6625
    %6679 = vmatprep.subr.bf16.mxu0 %v6630
    %6680 = vmatpush1.bf16.msra.mxu0 %v6629
    %6681 = vmatprep.subr.bf16.mxu0 0
    %6682 = vmatpush1.bf16.msra.mxu0 0
    %6683 = vmatprep.subr.bf16.mxu0 0
    %6684 = vmatpush1.bf16.msra.mxu0 0
    %6685 = vmatprep.subr.bf16.mxu0 0
    %6686 = vmatpush1.bf16.msra.mxu0 0
    %6687 = vmatprep.subr.bf16.mxu0 0
    %6688 = vmatpush1.bf16.msra.mxu0 0
    %6689 = vmatprep.subr.bf16.mxu0 0
    %6690 = vmatpush1.bf16.msra.mxu0 0
    %6691 = vmatprep.subr.bf16.mxu0 0
    %6692 = vmatpush1.bf16.msra.mxu0 0
    %6693 = vmatprep.subr.bf16.mxu0 0
    %6694 = vmatpush1.bf16.msra.mxu0 0
    %6695 = vmatprep.subr.bf16.mxu0 0
    %6696 = vmatpush1.bf16.msra.mxu0 0
    %6697 = vmatprep.mubr.bf16.mxu0 0
    %6698 = vmatmul.mubr.bf16.gmra.mrb[0].mxu0 %v6472
    %v6699 = vpop.f32.mrb[0].mxu0
    %v6700 = vadd.f32 0.0, %v6699
    %v6701 = vpop.f32.mrb[0].mxu0
    %v6702 = vadd.f32 0.0, %v6701
    %v6703 = vpop.f32.mrb[0].mxu0
    %v6704 = vadd.f32 0.0, %v6703
    %v6705 = vpop.f32.mrb[0].mxu0
    %v6706 = vadd.f32 0.0, %v6705
    %6707 = vdwg.mxu0
    %6708 = vmatprep.subr.bf16.mxu0 %v6604
    %6709 = vmatpush1.bf16.msra.mxu0 %v6603
    %6710 = vmatprep.subr.bf16.mxu0 %v6608
    %6711 = vmatpush1.bf16.msra.mxu0 %v6607
    %6712 = vmatprep.subr.bf16.mxu0 %v6612
    %6713 = vmatpush1.bf16.msra.mxu0 %v6611
    %6714 = vmatprep.subr.bf16.mxu0 %v6616
    %6715 = vmatpush1.bf16.msra.mxu0 %v6615
    %6716 = vmatprep.subr.bf16.mxu0 %v6620
    %6717 = vmatpush1.bf16.msra.mxu0 %v6619
    %6718 = vmatprep.subr.bf16.mxu0 %v6624
    %6719 = vmatpush1.bf16.msra.mxu0 %v6623
    %6720 = vmatprep.subr.bf16.mxu0 %v6628
    %6721 = vmatpush1.bf16.msra.mxu0 %v6627
    %6722 = vmatprep.subr.bf16.mxu0 %v6632
    %6723 = vmatpush1.bf16.msra.mxu0 %v6631
    %6724 = vmatprep.subr.bf16.mxu0 0
    %6725 = vmatpush1.bf16.msra.mxu0 0
    %6726 = vmatprep.subr.bf16.mxu0 0
    %6727 = vmatpush1.bf16.msra.mxu0 0
    %6728 = vmatprep.subr.bf16.mxu0 0
    %6729 = vmatpush1.bf16.msra.mxu0 0
    %6730 = vmatprep.subr.bf16.mxu0 0
    %6731 = vmatpush1.bf16.msra.mxu0 0
    %6732 = vmatprep.subr.bf16.mxu0 0
    %6733 = vmatpush1.bf16.msra.mxu0 0
    %6734 = vmatprep.subr.bf16.mxu0 0
    %6735 = vmatpush1.bf16.msra.mxu0 0
    %6736 = vmatprep.subr.bf16.mxu0 0
    %6737 = vmatpush1.bf16.msra.mxu0 0
    %6738 = vmatprep.subr.bf16.mxu0 0
    %6739 = vmatpush1.bf16.msra.mxu0 0
    %6740 = vmatprep.mubr.bf16.mxu0 0
    %6741 = vmatmul.mubr.bf16.gmra.mrb[0].mxu0 %v6472
    %v6742 = vpop.f32.mrb[0].mxu0
    %v6743 = vadd.f32 0.0, %v6742
    %v6744 = vpop.f32.mrb[0].mxu0
    %v6745 = vadd.f32 0.0, %v6744
    %v6746 = vpop.f32.mrb[0].mxu0
    %v6747 = vadd.f32 0.0, %v6746
    %v6748 = vpop.f32.mrb[0].mxu0
    %v6749 = vadd.f32 0.0, %v6748
    %6750 = vdwg.mxu0
    %v6751 = vadd.f32 %v6464, %v6700
    %v6752 = vadd.f32 %v6465, %v6702
    %v6753 = vadd.f32 %v6466, %v6743
    %v6754 = vadd.f32 %v6467, %v6745
    %v6755 = vadd.f32 %v6468, %v6704
    %v6756 = vadd.f32 %v6469, %v6706
    %v6757 = vadd.f32 %v6470, %v6747
    %v6758 = vadd.f32 %v6471, %v6749
    %v6759 = vxor.u32 %v6751, 2147483648
    %v6760 = vxor.u32 %v6755, 2147483648
    %v6761 = vmul.f32 %v6759, 1.442695
    %v6762 = vpow.pop %v6761
    %v6763 = vmul.f32 %v6760, 1.442695
    %v6764 = vpow.pop %v6763
    %v6765 = vadd.f32 %v6762, 1.0
    %v6766 = vadd.f32 %v6764, 1.0
    %v6767 = vrcp.pop %v6765
    %v6768 = vmul.f32 1.0, %v6767
    %v6769 = vrcp.pop %v6766
    %v6770 = vmul.f32 1.0, %v6769
    %v6771 = vxor.u32 %v6752, 2147483648
    %v6772 = vxor.u32 %v6756, 2147483648
    %v6773 = vmul.f32 %v6771, 1.442695
    %v6774 = vpow.pop %v6773
    %v6775 = vmul.f32 %v6772, 1.442695
    %v6776 = vpow.pop %v6775
    %v6777 = vadd.f32 %v6774, 1.0
    %v6778 = vadd.f32 %v6776, 1.0
    %v6779 = vrcp.pop %v6777
    %v6780 = vmul.f32 1.0, %v6779
    %v6781 = vrcp.pop %v6778
    %v6782 = vmul.f32 1.0, %v6781
    %v6783 = vtanh.pop %v6753
    %v6784 = vtanh.pop %v6757
    %v6785 = vxor.u32 %v6754, 2147483648
    %v6786 = vxor.u32 %v6758, 2147483648
    %v6787 = vmul.f32 %v6785, 1.442695
    %v6788 = vpow.pop %v6787
    %v6789 = vmul.f32 %v6786, 1.442695
    %v6790 = vpow.pop %v6789
    %v6791 = vadd.f32 %v6788, 1.0
    %v6792 = vadd.f32 %v6790, 1.0
    %v6793 = vrcp.pop %v6791
    %v6794 = vmul.f32 1.0, %v6793
    %v6795 = vrcp.pop %v6792
    %v6796 = vmul.f32 1.0, %v6795
    %v6797 = vmul.f32 %v6780, %v6461
    %v6798 = vmul.f32 %v6782, %v6462
    %v6799 = vmul.f32 %v6768, %v6783
    %v6800 = vmul.f32 %v6770, %v6784
    %v6801 = vadd.f32 %v6797, %v6799
    %v6802 = vadd.f32 %v6798, %v6800
    %v6803 = vtanh.pop %v6801
    %v6804 = vtanh.pop %v6802
    %v6805 = vmul.f32 %v6794, %v6803
    %v6806 = vmul.f32 %v6796, %v6804
    %s6807 = scalar_lea.vmem %s96, 16
    %v6808 = vld [vmem:[%s6807] sm:$0xff]
    %v6809 = vld [vmem:[%s6807 + $0x8] sm:$0xff]
    %v6810 = vsub.f32 %v6805, %v6459
    %v6811 = vsub.f32 %v6806, %v6460
    %6813 = vset.pattern.permute.xlu0 0
    %6814 = vperm.xlu0 %6813, %v6808
    %v6815 = vpop.permute.xlu0 %6814
    %6818 = vset.pattern.permute.xlu0 0
    %6819 = vperm.xlu0 %6818, %v6809
    %v6820 = vpop.permute.xlu0 %6819
    %v6822 = vmul.f32 %v6815, %v6810
    %v6823 = vmul.f32 %v6820, %v6811
    %v6824 = vadd.f32 %v6459, %v6822
    %v6825 = vadd.f32 %v6460, %v6823
    %6826 = vst [vmem:[%s1776] sm:$0xff] %v6824
    %6827 = vst [vmem:[%s1776 + $0x8] sm:$0xff] %v6825
    %v6828 = vsub.f32 %v6801, %v6461
    %v6829 = vsub.f32 %v6802, %v6462
    %v6830 = vmul.f32 %v6815, %v6828
    %v6831 = vmul.f32 %v6820, %v6829
    %v6832 = vadd.f32 %v6461, %v6830
    %v6833 = vadd.f32 %v6462, %v6831
    %6834 = vst [vmem:[%s1779] sm:$0xff] %v6832
    %6835 = vst [vmem:[%s1779 + $0x8] sm:$0xff] %v6833
    %v6836 = vmul.f32 %v6815, %v6805
    %v6837 = vmul.f32 %v6820, %v6806
    %v6838 = vpack.c.bf16 %v6837, %v6836
    %v6840 = vunpack.c.l.b16 %v6838
    %v6841 = vunpack.c.h.b16 %v6838
    %v6842 = vpack.c.b16 %v6840, %v6840
    %v6843 = vpack.c.b16 %v6841, %v6841
    %s6846 = scalar_lea.vmem [#allocation12], 8
    %6847 = vst [vmem:[%s6846] sm:$0xf] %v6842
    %6848 = vst [vmem:[%s6846 + $0x4] sm:$0xf] %v6843
    %v6849 = vld [vmem:[#allocation2] sm:$0xff]
    %v6850 = vld [vmem:[#allocation2 + $0x8] sm:$0xff]
    %v6851 = vld [vmem:[#allocation3] sm:$0xff]
    %v6852 = vld [vmem:[#allocation3 + $0x8] sm:$0xff]
    %s6853 = scalar_lea.vmem [#allocation4], 448
    %v6854 = vld [vmem:[%s6853] sm:$0xff]
    %v6855 = vld [vmem:[%s6853 + $0x8] sm:$0xff]
    %v6856 = vld [vmem:[%s6853 + $0x10] sm:$0xff]
    %v6857 = vld [vmem:[%s6853 + $0x18] sm:$0xff]
    %v6858 = vld [vmem:[%s6853 + $0x20] sm:$0xff]
    %v6859 = vld [vmem:[%s6853 + $0x28] sm:$0xff]
    %v6860 = vld [vmem:[%s6853 + $0x30] sm:$0xff]
    %v6861 = vld [vmem:[%s6853 + $0x38] sm:$0xff]
    %v6862 = vpack.c.bf16 %v6850, %v6849
    %v6863 = vld [vmem:[#allocation9] sm:$0xff]
    %v6864 = vld [vmem:[#allocation9 + $0x8] sm:$0xff]
    %v6865 = vld [vmem:[#allocation9 + $0x10] sm:$0xff]
    %v6866 = vld [vmem:[#allocation9 + $0x18] sm:$0xff]
    %v6867 = vld [vmem:[#allocation9 + $0x20] sm:$0xff]
    %v6868 = vld [vmem:[#allocation9 + $0x28] sm:$0xff]
    %v6869 = vld [vmem:[#allocation9 + $0x30] sm:$0xff]
    %v6870 = vld [vmem:[#allocation9 + $0x38] sm:$0xff]
    %v6871 = vld [vmem:[#allocation9 + $0x40] sm:$0xff]
    %v6872 = vld [vmem:[#allocation9 + $0x48] sm:$0xff]
    %v6873 = vld [vmem:[#allocation9 + $0x50] sm:$0xff]
    %v6874 = vld [vmem:[#allocation9 + $0x58] sm:$0xff]
    %v6875 = vld [vmem:[#allocation9 + $0x60] sm:$0xff]
    %v6876 = vld [vmem:[#allocation9 + $0x68] sm:$0xff]
    %v6877 = vld [vmem:[#allocation9 + $0x70] sm:$0xff]
    %v6878 = vld [vmem:[#allocation9 + $0x78] sm:$0xff]
    %v6879 = vld [vmem:[#allocation9 + $0x80] sm:$0xff]
    %v6880 = vld [vmem:[#allocation9 + $0x88] sm:$0xff]
    %v6881 = vld [vmem:[#allocation9 + $0x90] sm:$0xff]
    %v6882 = vld [vmem:[#allocation9 + $0x98] sm:$0xff]
    %v6883 = vld [vmem:[#allocation9 + $0xa0] sm:$0xff]
    %v6884 = vld [vmem:[#allocation9 + $0xa8] sm:$0xff]
    %v6885 = vld [vmem:[#allocation9 + $0xb0] sm:$0xff]
    %v6886 = vld [vmem:[#allocation9 + $0xb8] sm:$0xff]
    %v6887 = vld [vmem:[#allocation9 + $0xc0] sm:$0xff]
    %v6888 = vld [vmem:[#allocation9 + $0xc8] sm:$0xff]
    %v6889 = vld [vmem:[#allocation9 + $0xd0] sm:$0xff]
    %v6890 = vld [vmem:[#allocation9 + $0xd8] sm:$0xff]
    %v6891 = vld [vmem:[#allocation9 + $0xe0] sm:$0xff]
    %v6892 = vld [vmem:[#allocation9 + $0xe8] sm:$0xff]
    %v6893 = vld [vmem:[#allocation9 + $0xf0] sm:$0xff]
    %v6894 = vld [vmem:[#allocation9 + $0xf8] sm:$0xff]
    %v6927 = vunpack.c.l.b16 %v6863
    %v6928 = vunpack.c.h.b16 %v6863
    %v6929 = vunpack.c.l.b16 %v6864
    %v6930 = vunpack.c.h.b16 %v6864
    %v6931 = vunpack.c.l.b16 %v6865
    %v6932 = vunpack.c.h.b16 %v6865
    %v6933 = vunpack.c.l.b16 %v6866
    %v6934 = vunpack.c.h.b16 %v6866
    %v6935 = vunpack.c.l.b16 %v6867
    %v6936 = vunpack.c.h.b16 %v6867
    %v6937 = vunpack.c.l.b16 %v6868
    %v6938 = vunpack.c.h.b16 %v6868
    %v6939 = vunpack.c.l.b16 %v6869
    %v6940 = vunpack.c.h.b16 %v6869
    %v6941 = vunpack.c.l.b16 %v6870
    %v6942 = vunpack.c.h.b16 %v6870
    %v6943 = vunpack.c.l.b16 %v6871
    %v6944 = vunpack.c.h.b16 %v6871
    %v6945 = vunpack.c.l.b16 %v6872
    %v6946 = vunpack.c.h.b16 %v6872
    %v6947 = vunpack.c.l.b16 %v6873
    %v6948 = vunpack.c.h.b16 %v6873
    %v6949 = vunpack.c.l.b16 %v6874
    %v6950 = vunpack.c.h.b16 %v6874
    %v6951 = vunpack.c.l.b16 %v6875
    %v6952 = vunpack.c.h.b16 %v6875
    %v6953 = vunpack.c.l.b16 %v6876
    %v6954 = vunpack.c.h.b16 %v6876
    %v6955 = vunpack.c.l.b16 %v6877
    %v6956 = vunpack.c.h.b16 %v6877
    %v6957 = vunpack.c.l.b16 %v6878
    %v6958 = vunpack.c.h.b16 %v6878
    %v6959 = vunpack.c.l.b16 %v6879
    %v6960 = vunpack.c.h.b16 %v6879
    %v6961 = vunpack.c.l.b16 %v6880
    %v6962 = vunpack.c.h.b16 %v6880
    %v6963 = vunpack.c.l.b16 %v6881
    %v6964 = vunpack.c.h.b16 %v6881
    %v6965 = vunpack.c.l.b16 %v6882
    %v6966 = vunpack.c.h.b16 %v6882
    %v6967 = vunpack.c.l.b16 %v6883
    %v6968 = vunpack.c.h.b16 %v6883
    %v6969 = vunpack.c.l.b16 %v6884
    %v6970 = vunpack.c.h.b16 %v6884
    %v6971 = vunpack.c.l.b16 %v6885
    %v6972 = vunpack.c.h.b16 %v6885
    %v6973 = vunpack.c.l.b16 %v6886
    %v6974 = vunpack.c.h.b16 %v6886
    %v6975 = vunpack.c.l.b16 %v6887
    %v6976 = vunpack.c.h.b16 %v6887
    %v6977 = vunpack.c.l.b16 %v6888
    %v6978 = vunpack.c.h.b16 %v6888
    %v6979 = vunpack.c.l.b16 %v6889
    %v6980 = vunpack.c.h.b16 %v6889
    %v6981 = vunpack.c.l.b16 %v6890
    %v6982 = vunpack.c.h.b16 %v6890
    %v6983 = vunpack.c.l.b16 %v6891
    %v6984 = vunpack.c.h.b16 %v6891
    %v6985 = vunpack.c.l.b16 %v6892
    %v6986 = vunpack.c.h.b16 %v6892
    %v6987 = vunpack.c.l.b16 %v6893
    %v6988 = vunpack.c.h.b16 %v6893
    %v6989 = vunpack.c.l.b16 %v6894
    %v6990 = vunpack.c.h.b16 %v6894
    %v6991 = vpack.c.b16 %v6931, %v6927
    %v6992 = vpack.c.b16 %v6932, %v6928
    %v6993 = vpack.c.b16 %v6933, %v6929
    %v6994 = vpack.c.b16 %v6934, %v6930
    %v6995 = vpack.c.b16 %v6939, %v6935
    %v6996 = vpack.c.b16 %v6940, %v6936
    %v6997 = vpack.c.b16 %v6941, %v6937
    %v6998 = vpack.c.b16 %v6942, %v6938
    %v6999 = vpack.c.b16 %v6947, %v6943
    %v7000 = vpack.c.b16 %v6948, %v6944
    %v7001 = vpack.c.b16 %v6949, %v6945
    %v7002 = vpack.c.b16 %v6950, %v6946
    %v7003 = vpack.c.b16 %v6955, %v6951
    %v7004 = vpack.c.b16 %v6956, %v6952
    %v7005 = vpack.c.b16 %v6957, %v6953
    %v7006 = vpack.c.b16 %v6958, %v6954
    %v7007 = vpack.c.b16 %v6963, %v6959
    %v7008 = vpack.c.b16 %v6964, %v6960
    %v7009 = vpack.c.b16 %v6965, %v6961
    %v7010 = vpack.c.b16 %v6966, %v6962
    %v7011 = vpack.c.b16 %v6971, %v6967
    %v7012 = vpack.c.b16 %v6972, %v6968
    %v7013 = vpack.c.b16 %v6973, %v6969
    %v7014 = vpack.c.b16 %v6974, %v6970
    %v7015 = vpack.c.b16 %v6979, %v6975
    %v7016 = vpack.c.b16 %v6980, %v6976
    %v7017 = vpack.c.b16 %v6981, %v6977
    %v7018 = vpack.c.b16 %v6982, %v6978
    %v7019 = vpack.c.b16 %v6987, %v6983
    %v7020 = vpack.c.b16 %v6988, %v6984
    %v7021 = vpack.c.b16 %v6989, %v6985
    %v7022 = vpack.c.b16 %v6990, %v6986
    %7055 = vmatprep.subr.bf16.mxu0 %v6992
    %7056 = vmatpush1.bf16.msra.mxu0 %v6991
    %7057 = vmatprep.subr.bf16.mxu0 %v6996
    %7058 = vmatpush1.bf16.msra.mxu0 %v6995
    %7059 = vmatprep.subr.bf16.mxu0 %v7000
    %7060 = vmatpush1.bf16.msra.mxu0 %v6999
    %7061 = vmatprep.subr.bf16.mxu0 %v7004
    %7062 = vmatpush1.bf16.msra.mxu0 %v7003
    %7063 = vmatprep.subr.bf16.mxu0 %v7008
    %7064 = vmatpush1.bf16.msra.mxu0 %v7007
    %7065 = vmatprep.subr.bf16.mxu0 %v7012
    %7066 = vmatpush1.bf16.msra.mxu0 %v7011
    %7067 = vmatprep.subr.bf16.mxu0 %v7016
    %7068 = vmatpush1.bf16.msra.mxu0 %v7015
    %7069 = vmatprep.subr.bf16.mxu0 %v7020
    %7070 = vmatpush1.bf16.msra.mxu0 %v7019
    %7071 = vmatprep.subr.bf16.mxu0 0
    %7072 = vmatpush1.bf16.msra.mxu0 0
    %7073 = vmatprep.subr.bf16.mxu0 0
    %7074 = vmatpush1.bf16.msra.mxu0 0
    %7075 = vmatprep.subr.bf16.mxu0 0
    %7076 = vmatpush1.bf16.msra.mxu0 0
    %7077 = vmatprep.subr.bf16.mxu0 0
    %7078 = vmatpush1.bf16.msra.mxu0 0
    %7079 = vmatprep.subr.bf16.mxu0 0
    %7080 = vmatpush1.bf16.msra.mxu0 0
    %7081 = vmatprep.subr.bf16.mxu0 0
    %7082 = vmatpush1.bf16.msra.mxu0 0
    %7083 = vmatprep.subr.bf16.mxu0 0
    %7084 = vmatpush1.bf16.msra.mxu0 0
    %7085 = vmatprep.subr.bf16.mxu0 0
    %7086 = vmatpush1.bf16.msra.mxu0 0
    %7087 = vmatprep.mubr.bf16.mxu0 0
    %7088 = vmatmul.mubr.bf16.gmra.mrb[0].mxu0 %v6862
    %v7089 = vpop.f32.mrb[0].mxu0
    %v7090 = vadd.f32 0.0, %v7089
    %v7091 = vpop.f32.mrb[0].mxu0
    %v7092 = vadd.f32 0.0, %v7091
    %v7093 = vpop.f32.mrb[0].mxu0
    %v7094 = vadd.f32 0.0, %v7093
    %v7095 = vpop.f32.mrb[0].mxu0
    %v7096 = vadd.f32 0.0, %v7095
    %7097 = vdwg.mxu0
    %7098 = vmatprep.subr.bf16.mxu0 %v6994
    %7099 = vmatpush1.bf16.msra.mxu0 %v6993
    %7100 = vmatprep.subr.bf16.mxu0 %v6998
    %7101 = vmatpush1.bf16.msra.mxu0 %v6997
    %7102 = vmatprep.subr.bf16.mxu0 %v7002
    %7103 = vmatpush1.bf16.msra.mxu0 %v7001
    %7104 = vmatprep.subr.bf16.mxu0 %v7006
    %7105 = vmatpush1.bf16.msra.mxu0 %v7005
    %7106 = vmatprep.subr.bf16.mxu0 %v7010
    %7107 = vmatpush1.bf16.msra.mxu0 %v7009
    %7108 = vmatprep.subr.bf16.mxu0 %v7014
    %7109 = vmatpush1.bf16.msra.mxu0 %v7013
    %7110 = vmatprep.subr.bf16.mxu0 %v7018
    %7111 = vmatpush1.bf16.msra.mxu0 %v7017
    %7112 = vmatprep.subr.bf16.mxu0 %v7022
    %7113 = vmatpush1.bf16.msra.mxu0 %v7021
    %7114 = vmatprep.subr.bf16.mxu0 0
    %7115 = vmatpush1.bf16.msra.mxu0 0
    %7116 = vmatprep.subr.bf16.mxu0 0
    %7117 = vmatpush1.bf16.msra.mxu0 0
    %7118 = vmatprep.subr.bf16.mxu0 0
    %7119 = vmatpush1.bf16.msra.mxu0 0
    %7120 = vmatprep.subr.bf16.mxu0 0
    %7121 = vmatpush1.bf16.msra.mxu0 0
    %7122 = vmatprep.subr.bf16.mxu0 0
    %7123 = vmatpush1.bf16.msra.mxu0 0
    %7124 = vmatprep.subr.bf16.mxu0 0
    %7125 = vmatpush1.bf16.msra.mxu0 0
    %7126 = vmatprep.subr.bf16.mxu0 0
    %7127 = vmatpush1.bf16.msra.mxu0 0
    %7128 = vmatprep.subr.bf16.mxu0 0
    %7129 = vmatpush1.bf16.msra.mxu0 0
    %7130 = vmatprep.mubr.bf16.mxu0 0
    %7131 = vmatmul.mubr.bf16.gmra.mrb[0].mxu0 %v6862
    %v7132 = vpop.f32.mrb[0].mxu0
    %v7133 = vadd.f32 0.0, %v7132
    %v7134 = vpop.f32.mrb[0].mxu0
    %v7135 = vadd.f32 0.0, %v7134
    %v7136 = vpop.f32.mrb[0].mxu0
    %v7137 = vadd.f32 0.0, %v7136
    %v7138 = vpop.f32.mrb[0].mxu0
    %v7139 = vadd.f32 0.0, %v7138
    %7140 = vdwg.mxu0
    %v7141 = vadd.f32 %v6854, %v7090
    %v7142 = vadd.f32 %v6855, %v7092
    %v7143 = vadd.f32 %v6856, %v7133
    %v7144 = vadd.f32 %v6857, %v7135
    %v7145 = vadd.f32 %v6858, %v7094
    %v7146 = vadd.f32 %v6859, %v7096
    %v7147 = vadd.f32 %v6860, %v7137
    %v7148 = vadd.f32 %v6861, %v7139
    %v7149 = vxor.u32 %v7141, 2147483648
    %v7150 = vxor.u32 %v7145, 2147483648
    %v7151 = vmul.f32 %v7149, 1.442695
    %v7152 = vpow.pop %v7151
    %v7153 = vmul.f32 %v7150, 1.442695
    %v7154 = vpow.pop %v7153
    %v7155 = vadd.f32 %v7152, 1.0
    %v7156 = vadd.f32 %v7154, 1.0
    %v7157 = vrcp.pop %v7155
    %v7158 = vmul.f32 1.0, %v7157
    %v7159 = vrcp.pop %v7156
    %v7160 = vmul.f32 1.0, %v7159
    %v7161 = vxor.u32 %v7142, 2147483648
    %v7162 = vxor.u32 %v7146, 2147483648
    %v7163 = vmul.f32 %v7161, 1.442695
    %v7164 = vpow.pop %v7163
    %v7165 = vmul.f32 %v7162, 1.442695
    %v7166 = vpow.pop %v7165
    %v7167 = vadd.f32 %v7164, 1.0
    %v7168 = vadd.f32 %v7166, 1.0
    %v7169 = vrcp.pop %v7167
    %v7170 = vmul.f32 1.0, %v7169
    %v7171 = vrcp.pop %v7168
    %v7172 = vmul.f32 1.0, %v7171
    %v7173 = vtanh.pop %v7143
    %v7174 = vtanh.pop %v7147
    %v7175 = vxor.u32 %v7144, 2147483648
    %v7176 = vxor.u32 %v7148, 2147483648
    %v7177 = vmul.f32 %v7175, 1.442695
    %v7178 = vpow.pop %v7177
    %v7179 = vmul.f32 %v7176, 1.442695
    %v7180 = vpow.pop %v7179
    %v7181 = vadd.f32 %v7178, 1.0
    %v7182 = vadd.f32 %v7180, 1.0
    %v7183 = vrcp.pop %v7181
    %v7184 = vmul.f32 1.0, %v7183
    %v7185 = vrcp.pop %v7182
    %v7186 = vmul.f32 1.0, %v7185
    %v7187 = vmul.f32 %v7170, %v6851
    %v7188 = vmul.f32 %v7172, %v6852
    %v7189 = vmul.f32 %v7158, %v7173
    %v7190 = vmul.f32 %v7160, %v7174
    %v7191 = vadd.f32 %v7187, %v7189
    %v7192 = vadd.f32 %v7188, %v7190
    %v7193 = vtanh.pop %v7191
    %v7194 = vtanh.pop %v7192
    %v7195 = vmul.f32 %v7184, %v7193
    %v7196 = vmul.f32 %v7186, %v7194
    %s7197 = scalar_lea.vmem %s0, 112
    %v7198 = vld [vmem:[%s7197] sm:$0xff]
    %v7199 = vld [vmem:[%s7197 + $0x8] sm:$0xff]
    %v7200 = vsub.f32 %v7195, %v6849
    %v7201 = vsub.f32 %v7196, %v6850
    %7203 = vset.pattern.permute.xlu0 0
    %7204 = vperm.xlu0 %7203, %v7198
    %v7205 = vpop.permute.xlu0 %7204
    %7208 = vset.pattern.permute.xlu0 0
    %7209 = vperm.xlu0 %7208, %v7199
    %v7210 = vpop.permute.xlu0 %7209
    %v7212 = vmul.f32 %v7205, %v7200
    %v7213 = vmul.f32 %v7210, %v7201
    %v7214 = vadd.f32 %v6849, %v7212
    %v7215 = vadd.f32 %v6850, %v7213
    %7216 = vst [vmem:[#allocation2] sm:$0xff] %v7214
    %7217 = vst [vmem:[#allocation2 + $0x8] sm:$0xff] %v7215
    %v7218 = vsub.f32 %v7191, %v6851
    %v7219 = vsub.f32 %v7192, %v6852
    %v7220 = vmul.f32 %v7205, %v7218
    %v7221 = vmul.f32 %v7210, %v7219
    %v7222 = vadd.f32 %v6851, %v7220
    %v7223 = vadd.f32 %v6852, %v7221
    %7224 = vst [vmem:[#allocation3] sm:$0xff] %v7222
    %7225 = vst [vmem:[#allocation3 + $0x8] sm:$0xff] %v7223
    %v7226 = vmul.f32 %v7205, %v7195
    %v7227 = vmul.f32 %v7210, %v7196
    %v7228 = vpack.c.bf16 %v7227, %v7226
    %v7230 = vunpack.c.l.b16 %v7228
    %v7231 = vunpack.c.h.b16 %v7228
    %v7232 = vpack.c.b16 %v7230, %v7230
    %v7233 = vpack.c.b16 %v7231, %v7231
    %s7236 = scalar_lea.vmem [#allocation11], 56
    %7237 = vst [vmem:[%s7236] sm:$0xf] %v7232
    %7238 = vst [vmem:[%s7236 + $0x4] sm:$0xf] %v7233
    %v7239 = vld [vmem:[%s1776] sm:$0xff]
    %v7240 = vld [vmem:[%s1776 + $0x8] sm:$0xff]
    %v7241 = vld [vmem:[%s1779] sm:$0xff]
    %v7242 = vld [vmem:[%s1779 + $0x8] sm:$0xff]
    %v7243 = vld [vmem:[#allocation5] sm:$0xff]
    %v7244 = vld [vmem:[#allocation5 + $0x8] sm:$0xff]
    %v7245 = vld [vmem:[#allocation5 + $0x10] sm:$0xff]
    %v7246 = vld [vmem:[#allocation5 + $0x18] sm:$0xff]
    %v7247 = vld [vmem:[#allocation5 + $0x20] sm:$0xff]
    %v7248 = vld [vmem:[#allocation5 + $0x28] sm:$0xff]
    %v7249 = vld [vmem:[#allocation5 + $0x30] sm:$0xff]
    %v7250 = vld [vmem:[#allocation5 + $0x38] sm:$0xff]
    %v7251 = vpack.c.bf16 %v7240, %v7239
    %v7252 = vld [vmem:[%s1792] sm:$0xff]
    %v7253 = vld [vmem:[%s1792 + $0x8] sm:$0xff]
    %v7254 = vld [vmem:[%s1792 + $0x10] sm:$0xff]
    %v7255 = vld [vmem:[%s1792 + $0x18] sm:$0xff]
    %v7256 = vld [vmem:[%s1792 + $0x20] sm:$0xff]
    %v7257 = vld [vmem:[%s1792 + $0x28] sm:$0xff]
    %v7258 = vld [vmem:[%s1792 + $0x30] sm:$0xff]
    %v7259 = vld [vmem:[%s1792 + $0x38] sm:$0xff]
    %v7260 = vld [vmem:[%s1792 + $0x40] sm:$0xff]
    %v7261 = vld [vmem:[%s1792 + $0x48] sm:$0xff]
    %v7262 = vld [vmem:[%s1792 + $0x50] sm:$0xff]
    %v7263 = vld [vmem:[%s1792 + $0x58] sm:$0xff]
    %v7264 = vld [vmem:[%s1792 + $0x60] sm:$0xff]
    %v7265 = vld [vmem:[%s1792 + $0x68] sm:$0xff]
    %v7266 = vld [vmem:[%s1792 + $0x70] sm:$0xff]
    %v7267 = vld [vmem:[%s1792 + $0x78] sm:$0xff]
    %v7268 = vld [vmem:[%s1792 + $0x80] sm:$0xff]
    %v7269 = vld [vmem:[%s1792 + $0x88] sm:$0xff]
    %v7270 = vld [vmem:[%s1792 + $0x90] sm:$0xff]
    %v7271 = vld [vmem:[%s1792 + $0x98] sm:$0xff]
    %v7272 = vld [vmem:[%s1792 + $0xa0] sm:$0xff]
    %v7273 = vld [vmem:[%s1792 + $0xa8] sm:$0xff]
    %v7274 = vld [vmem:[%s1792 + $0xb0] sm:$0xff]
    %v7275 = vld [vmem:[%s1792 + $0xb8] sm:$0xff]
    %v7276 = vld [vmem:[%s1792 + $0xc0] sm:$0xff]
    %v7277 = vld [vmem:[%s1792 + $0xc8] sm:$0xff]
    %v7278 = vld [vmem:[%s1792 + $0xd0] sm:$0xff]
    %v7279 = vld [vmem:[%s1792 + $0xd8] sm:$0xff]
    %v7280 = vld [vmem:[%s1792 + $0xe0] sm:$0xff]
    %v7281 = vld [vmem:[%s1792 + $0xe8] sm:$0xff]
    %v7282 = vld [vmem:[%s1792 + $0xf0] sm:$0xff]
    %v7283 = vld [vmem:[%s1792 + $0xf8] sm:$0xff]
    %v7316 = vunpack.c.l.b16 %v7252
    %v7317 = vunpack.c.h.b16 %v7252
    %v7318 = vunpack.c.l.b16 %v7253
    %v7319 = vunpack.c.h.b16 %v7253
    %v7320 = vunpack.c.l.b16 %v7254
    %v7321 = vunpack.c.h.b16 %v7254
    %v7322 = vunpack.c.l.b16 %v7255
    %v7323 = vunpack.c.h.b16 %v7255
    %v7324 = vunpack.c.l.b16 %v7256
    %v7325 = vunpack.c.h.b16 %v7256
    %v7326 = vunpack.c.l.b16 %v7257
    %v7327 = vunpack.c.h.b16 %v7257
    %v7328 = vunpack.c.l.b16 %v7258
    %v7329 = vunpack.c.h.b16 %v7258
    %v7330 = vunpack.c.l.b16 %v7259
    %v7331 = vunpack.c.h.b16 %v7259
    %v7332 = vunpack.c.l.b16 %v7260
    %v7333 = vunpack.c.h.b16 %v7260
    %v7334 = vunpack.c.l.b16 %v7261
    %v7335 = vunpack.c.h.b16 %v7261
    %v7336 = vunpack.c.l.b16 %v7262
    %v7337 = vunpack.c.h.b16 %v7262
    %v7338 = vunpack.c.l.b16 %v7263
    %v7339 = vunpack.c.h.b16 %v7263
    %v7340 = vunpack.c.l.b16 %v7264
    %v7341 = vunpack.c.h.b16 %v7264
    %v7342 = vunpack.c.l.b16 %v7265
    %v7343 = vunpack.c.h.b16 %v7265
    %v7344 = vunpack.c.l.b16 %v7266
    %v7345 = vunpack.c.h.b16 %v7266
    %v7346 = vunpack.c.l.b16 %v7267
    %v7347 = vunpack.c.h.b16 %v7267
    %v7348 = vunpack.c.l.b16 %v7268
    %v7349 = vunpack.c.h.b16 %v7268
    %v7350 = vunpack.c.l.b16 %v7269
    %v7351 = vunpack.c.h.b16 %v7269
    %v7352 = vunpack.c.l.b16 %v7270
    %v7353 = vunpack.c.h.b16 %v7270
    %v7354 = vunpack.c.l.b16 %v7271
    %v7355 = vunpack.c.h.b16 %v7271
    %v7356 = vunpack.c.l.b16 %v7272
    %v7357 = vunpack.c.h.b16 %v7272
    %v7358 = vunpack.c.l.b16 %v7273
    %v7359 = vunpack.c.h.b16 %v7273
    %v7360 = vunpack.c.l.b16 %v7274
    %v7361 = vunpack.c.h.b16 %v7274
    %v7362 = vunpack.c.l.b16 %v7275
    %v7363 = vunpack.c.h.b16 %v7275
    %v7364 = vunpack.c.l.b16 %v7276
    %v7365 = vunpack.c.h.b16 %v7276
    %v7366 = vunpack.c.l.b16 %v7277
    %v7367 = vunpack.c.h.b16 %v7277
    %v7368 = vunpack.c.l.b16 %v7278
    %v7369 = vunpack.c.h.b16 %v7278
    %v7370 = vunpack.c.l.b16 %v7279
    %v7371 = vunpack.c.h.b16 %v7279
    %v7372 = vunpack.c.l.b16 %v7280
    %v7373 = vunpack.c.h.b16 %v7280
    %v7374 = vunpack.c.l.b16 %v7281
    %v7375 = vunpack.c.h.b16 %v7281
    %v7376 = vunpack.c.l.b16 %v7282
    %v7377 = vunpack.c.h.b16 %v7282
    %v7378 = vunpack.c.l.b16 %v7283
    %v7379 = vunpack.c.h.b16 %v7283
    %v7380 = vpack.c.b16 %v7320, %v7316
    %v7381 = vpack.c.b16 %v7321, %v7317
    %v7382 = vpack.c.b16 %v7322, %v7318
    %v7383 = vpack.c.b16 %v7323, %v7319
    %v7384 = vpack.c.b16 %v7328, %v7324
    %v7385 = vpack.c.b16 %v7329, %v7325
    %v7386 = vpack.c.b16 %v7330, %v7326
    %v7387 = vpack.c.b16 %v7331, %v7327
    %v7388 = vpack.c.b16 %v7336, %v7332
    %v7389 = vpack.c.b16 %v7337, %v7333
    %v7390 = vpack.c.b16 %v7338, %v7334
    %v7391 = vpack.c.b16 %v7339, %v7335
    %v7392 = vpack.c.b16 %v7344, %v7340
    %v7393 = vpack.c.b16 %v7345, %v7341
    %v7394 = vpack.c.b16 %v7346, %v7342
    %v7395 = vpack.c.b16 %v7347, %v7343
    %v7396 = vpack.c.b16 %v7352, %v7348
    %v7397 = vpack.c.b16 %v7353, %v7349
    %v7398 = vpack.c.b16 %v7354, %v7350
    %v7399 = vpack.c.b16 %v7355, %v7351
    %v7400 = vpack.c.b16 %v7360, %v7356
    %v7401 = vpack.c.b16 %v7361, %v7357
    %v7402 = vpack.c.b16 %v7362, %v7358
    %v7403 = vpack.c.b16 %v7363, %v7359
    %v7404 = vpack.c.b16 %v7368, %v7364
    %v7405 = vpack.c.b16 %v7369, %v7365
    %v7406 = vpack.c.b16 %v7370, %v7366
    %v7407 = vpack.c.b16 %v7371, %v7367
    %v7408 = vpack.c.b16 %v7376, %v7372
    %v7409 = vpack.c.b16 %v7377, %v7373
    %v7410 = vpack.c.b16 %v7378, %v7374
    %v7411 = vpack.c.b16 %v7379, %v7375
    %7444 = vmatprep.subr.bf16.mxu0 %v7381
    %7445 = vmatpush1.bf16.msra.mxu0 %v7380
    %7446 = vmatprep.subr.bf16.mxu0 %v7385
    %7447 = vmatpush1.bf16.msra.mxu0 %v7384
    %7448 = vmatprep.subr.bf16.mxu0 %v7389
    %7449 = vmatpush1.bf16.msra.mxu0 %v7388
    %7450 = vmatprep.subr.bf16.mxu0 %v7393
    %7451 = vmatpush1.bf16.msra.mxu0 %v7392
    %7452 = vmatprep.subr.bf16.mxu0 %v7397
    %7453 = vmatpush1.bf16.msra.mxu0 %v7396
    %7454 = vmatprep.subr.bf16.mxu0 %v7401
    %7455 = vmatpush1.bf16.msra.mxu0 %v7400
    %7456 = vmatprep.subr.bf16.mxu0 %v7405
    %7457 = vmatpush1.bf16.msra.mxu0 %v7404
    %7458 = vmatprep.subr.bf16.mxu0 %v7409
    %7459 = vmatpush1.bf16.msra.mxu0 %v7408
    %7460 = vmatprep.subr.bf16.mxu0 0
    %7461 = vmatpush1.bf16.msra.mxu0 0
    %7462 = vmatprep.subr.bf16.mxu0 0
    %7463 = vmatpush1.bf16.msra.mxu0 0
    %7464 = vmatprep.subr.bf16.mxu0 0
    %7465 = vmatpush1.bf16.msra.mxu0 0
    %7466 = vmatprep.subr.bf16.mxu0 0
    %7467 = vmatpush1.bf16.msra.mxu0 0
    %7468 = vmatprep.subr.bf16.mxu0 0
    %7469 = vmatpush1.bf16.msra.mxu0 0
    %7470 = vmatprep.subr.bf16.mxu0 0
    %7471 = vmatpush1.bf16.msra.mxu0 0
    %7472 = vmatprep.subr.bf16.mxu0 0
    %7473 = vmatpush1.bf16.msra.mxu0 0
    %7474 = vmatprep.subr.bf16.mxu0 0
    %7475 = vmatpush1.bf16.msra.mxu0 0
    %7476 = vmatprep.mubr.bf16.mxu0 0
    %7477 = vmatmul.mubr.bf16.gmra.mrb[0].mxu0 %v7251
    %v7478 = vpop.f32.mrb[0].mxu0
    %v7479 = vadd.f32 0.0, %v7478
    %v7480 = vpop.f32.mrb[0].mxu0
    %v7481 = vadd.f32 0.0, %v7480
    %v7482 = vpop.f32.mrb[0].mxu0
    %v7483 = vadd.f32 0.0, %v7482
    %v7484 = vpop.f32.mrb[0].mxu0
    %v7485 = vadd.f32 0.0, %v7484
    %7486 = vdwg.mxu0
    %7487 = vmatprep.subr.bf16.mxu0 %v7383
    %7488 = vmatpush1.bf16.msra.mxu0 %v7382
    %7489 = vmatprep.subr.bf16.mxu0 %v7387
    %7490 = vmatpush1.bf16.msra.mxu0 %v7386
    %7491 = vmatprep.subr.bf16.mxu0 %v7391
    %7492 = vmatpush1.bf16.msra.mxu0 %v7390
    %7493 = vmatprep.subr.bf16.mxu0 %v7395
    %7494 = vmatpush1.bf16.msra.mxu0 %v7394
    %7495 = vmatprep.subr.bf16.mxu0 %v7399
    %7496 = vmatpush1.bf16.msra.mxu0 %v7398
    %7497 = vmatprep.subr.bf16.mxu0 %v7403
    %7498 = vmatpush1.bf16.msra.mxu0 %v7402
    %7499 = vmatprep.subr.bf16.mxu0 %v7407
    %7500 = vmatpush1.bf16.msra.mxu0 %v7406
    %7501 = vmatprep.subr.bf16.mxu0 %v7411
    %7502 = vmatpush1.bf16.msra.mxu0 %v7410
    %7503 = vmatprep.subr.bf16.mxu0 0
    %7504 = vmatpush1.bf16.msra.mxu0 0
    %7505 = vmatprep.subr.bf16.mxu0 0
    %7506 = vmatpush1.bf16.msra.mxu0 0
    %7507 = vmatprep.subr.bf16.mxu0 0
    %7508 = vmatpush1.bf16.msra.mxu0 0
    %7509 = vmatprep.subr.bf16.mxu0 0
    %7510 = vmatpush1.bf16.msra.mxu0 0
    %7511 = vmatprep.subr.bf16.mxu0 0
    %7512 = vmatpush1.bf16.msra.mxu0 0
    %7513 = vmatprep.subr.bf16.mxu0 0
    %7514 = vmatpush1.bf16.msra.mxu0 0
    %7515 = vmatprep.subr.bf16.mxu0 0
    %7516 = vmatpush1.bf16.msra.mxu0 0
    %7517 = vmatprep.subr.bf16.mxu0 0
    %7518 = vmatpush1.bf16.msra.mxu0 0
    %7519 = vmatprep.mubr.bf16.mxu0 0
    %7520 = vmatmul.mubr.bf16.gmra.mrb[0].mxu0 %v7251
    %v7521 = vpop.f32.mrb[0].mxu0
    %v7522 = vadd.f32 0.0, %v7521
    %v7523 = vpop.f32.mrb[0].mxu0
    %v7524 = vadd.f32 0.0, %v7523
    %v7525 = vpop.f32.mrb[0].mxu0
    %v7526 = vadd.f32 0.0, %v7525
    %v7527 = vpop.f32.mrb[0].mxu0
    %v7528 = vadd.f32 0.0, %v7527
    %7529 = vdwg.mxu0
    %v7530 = vadd.f32 %v7243, %v7479
    %v7531 = vadd.f32 %v7244, %v7481
    %v7532 = vadd.f32 %v7245, %v7522
    %v7533 = vadd.f32 %v7246, %v7524
    %v7534 = vadd.f32 %v7247, %v7483
    %v7535 = vadd.f32 %v7248, %v7485
    %v7536 = vadd.f32 %v7249, %v7526
    %v7537 = vadd.f32 %v7250, %v7528
    %v7538 = vxor.u32 %v7530, 2147483648
    %v7539 = vxor.u32 %v7534, 2147483648
    %v7540 = vmul.f32 %v7538, 1.442695
    %v7541 = vpow.pop %v7540
    %v7542 = vmul.f32 %v7539, 1.442695
    %v7543 = vpow.pop %v7542
    %v7544 = vadd.f32 %v7541, 1.0
    %v7545 = vadd.f32 %v7543, 1.0
    %v7546 = vrcp.pop %v7544
    %v7547 = vmul.f32 1.0, %v7546
    %v7548 = vrcp.pop %v7545
    %v7549 = vmul.f32 1.0, %v7548
    %v7550 = vxor.u32 %v7531, 2147483648
    %v7551 = vxor.u32 %v7535, 2147483648
    %v7552 = vmul.f32 %v7550, 1.442695
    %v7553 = vpow.pop %v7552
    %v7554 = vmul.f32 %v7551, 1.442695
    %v7555 = vpow.pop %v7554
    %v7556 = vadd.f32 %v7553, 1.0
    %v7557 = vadd.f32 %v7555, 1.0
    %v7558 = vrcp.pop %v7556
    %v7559 = vmul.f32 1.0, %v7558
    %v7560 = vrcp.pop %v7557
    %v7561 = vmul.f32 1.0, %v7560
    %v7562 = vtanh.pop %v7532
    %v7563 = vtanh.pop %v7536
    %v7564 = vxor.u32 %v7533, 2147483648
    %v7565 = vxor.u32 %v7537, 2147483648
    %v7566 = vmul.f32 %v7564, 1.442695
    %v7567 = vpow.pop %v7566
    %v7568 = vmul.f32 %v7565, 1.442695
    %v7569 = vpow.pop %v7568
    %v7570 = vadd.f32 %v7567, 1.0
    %v7571 = vadd.f32 %v7569, 1.0
    %v7572 = vrcp.pop %v7570
    %v7573 = vmul.f32 1.0, %v7572
    %v7574 = vrcp.pop %v7571
    %v7575 = vmul.f32 1.0, %v7574
    %v7576 = vmul.f32 %v7559, %v7241
    %v7577 = vmul.f32 %v7561, %v7242
    %v7578 = vmul.f32 %v7547, %v7562
    %v7579 = vmul.f32 %v7549, %v7563
    %v7580 = vadd.f32 %v7576, %v7578
    %v7581 = vadd.f32 %v7577, %v7579
    %v7582 = vtanh.pop %v7580
    %v7583 = vtanh.pop %v7581
    %v7584 = vmul.f32 %v7573, %v7582
    %v7585 = vmul.f32 %v7575, %v7583
    %v7586 = vld [vmem:[%s96] sm:$0xff]
    %v7587 = vld [vmem:[%s96 + $0x8] sm:$0xff]
    %v7588 = vsub.f32 %v7584, %v7239
    %v7589 = vsub.f32 %v7585, %v7240
    %7591 = vset.pattern.permute.xlu0 0
    %7592 = vperm.xlu0 %7591, %v7586
    %v7593 = vpop.permute.xlu0 %7592
    %7596 = vset.pattern.permute.xlu0 0
    %7597 = vperm.xlu0 %7596, %v7587
    %v7598 = vpop.permute.xlu0 %7597
    %v7600 = vmul.f32 %v7593, %v7588
    %v7601 = vmul.f32 %v7598, %v7589
    %v7602 = vadd.f32 %v7239, %v7600
    %v7603 = vadd.f32 %v7240, %v7601
    %7604 = vst [vmem:[%s1776] sm:$0xff] %v7602
    %7605 = vst [vmem:[%s1776 + $0x8] sm:$0xff] %v7603
    %v7606 = vsub.f32 %v7580, %v7241
    %v7607 = vsub.f32 %v7581, %v7242
    %v7608 = vmul.f32 %v7593, %v7606
    %v7609 = vmul.f32 %v7598, %v7607
    %v7610 = vadd.f32 %v7241, %v7608
    %v7611 = vadd.f32 %v7242, %v7609
    %7612 = vst [vmem:[%s1779] sm:$0xff] %v7610
    %7613 = vst [vmem:[%s1779 + $0x8] sm:$0xff] %v7611
    %v7614 = vmul.f32 %v7593, %v7584
    %v7615 = vmul.f32 %v7598, %v7585
    %v7616 = vpack.c.bf16 %v7615, %v7614
    %v7618 = vunpack.c.l.b16 %v7616
    %v7619 = vunpack.c.h.b16 %v7616
    %v7620 = vpack.c.b16 %v7618, %v7618
    %v7621 = vpack.c.b16 %v7619, %v7619
    %7624 = vst [vmem:[#allocation12] sm:$0xf] %v7620
    %7625 = vst [vmem:[#allocation12 + $0x4] sm:$0xf] %v7621
    // Predicated region
    $region42: #{tpu_custom_call.1} parent=1 // pred_check
      _
    $region43: #{tpu_custom_call.1} parent=1 // pred_check_branch
      %7627 = sbr.rel (0) target = $region45
    $region44: #{tpu_custom_call.1} parent=1 // pred_region
      %s7629 = ssub.s32 1024, 1024
      %7630 = vsyncadd [#allocation8], %s7629
      %s7631 = sshll.u32 [#allocation11], 4
      %s7632 = int_to_ptr.vmem [resolvable:$true] %s7631
      %7637 = dma.vmem_to_hbm [thread:$0]  %s7632, 1024, %s7, [#allocation8], 64, 64, 4
    $region45: #{tpu_custom_call.1} parent=1 // pred_fallthru
      _
    // Predicated region
    $region46: #{tpu_custom_call.1} parent=1 // pred_check
      _
    $region47: #{tpu_custom_call.1} parent=1 // pred_check_branch
      %7639 = sbr.rel (0) target = $region49
    $region48: #{tpu_custom_call.1} parent=1 // pred_region
      %s7640 = ssub.s32 0, 0
      %s7641 = smul.u32 8, %s7640
      %s7643 = ssub.s32 1024, 1024
      %7644 = vsyncadd [#allocation13], %s7643
      %s7645 = smul.addr %s7641, 2
      %s7646 = smul.addr %s7645, 64
      %s7647 = scalar_lea.hbm %s8, %s7646
      %s7648 = sshll.u32 [#allocation12], 4
      %s7649 = int_to_ptr.vmem [resolvable:$true] %s7648
      %7654 = dma.vmem_to_hbm [thread:$0]  %s7649, 1024, %s7647, [#allocation13], 64, 64, 4
    $region49: #{tpu_custom_call.1} parent=1 // pred_fallthru
      _
    // Predicated region
    $region50: #{tpu_custom_call.1} parent=1 // pred_check
      _
    $region51: #{tpu_custom_call.1} parent=1 // pred_check_branch
      %7656 = sbr.rel (0) target = $region53
    $region52: #{tpu_custom_call.1} parent=1 // pred_region
      %7657 = dma.done [#allocation8], 1024
    $region53: #{tpu_custom_call.1} parent=1 // pred_fallthru
      _
    // Predicated region
    $region54: #{tpu_custom_call.1} parent=1 // pred_check
      _
    $region55: #{tpu_custom_call.1} parent=1 // pred_check_branch
      %7659 = sbr.rel (0) target = $region57
    $region56: #{tpu_custom_call.1} parent=1 // pred_region
      %7660 = dma.done [#allocation13], 1024
    $region57: #{tpu_custom_call.1} parent=1 // pred_fallthru
      _
    %7661 = vsyncpa [#allocation7], 1
    %7662 = vsyncpa [#allocation10], 1
    %7663 = vsyncpa [#allocation8], 1
    %7664 = vsyncpa [#allocation13], 1

</llo_original>
